<compile_context>
chip_gen: v6e
topology: v6e:2x2x1
jax: 0.10.0
libtpu: 0.0.40
codegen_flags: <defaults>
</compile_context>

<pallas_src>
import functools
import math

import jax
import jax.numpy as jnp
import numpy as np
from jax.experimental import pallas as pl
from jax.experimental.pallas import tpu as pltpu


def _stagenet_kernel(
    L, C, K, U,
    # inputs
    x_ref, t_ref, w_ref, b_ref, m1_ref, m2_ref,
    sw_ref, sb_ref, rsw_ref, rsb_ref, cwf_ref, cb_ref, utk_ref,
    # outputs
    out_ref, dist_ref,
    # scratch (carried across grid steps)
    c_sc, h_sc, hwin_sc, dwin_sc,
):
    H = L * C

    @pl.when(pl.program_id(0) == 0)
    def _init():
        c_sc[...] = jnp.zeros_like(c_sc)
        h_sc[...] = jnp.zeros_like(h_sc)
        hwin_sc[...] = jnp.zeros_like(hwin_sc)
        dwin_sc[...] = jnp.zeros_like(dwin_sc)

    # hoist full weight loads out of the unrolled time loop
    w = w_ref[...]          # (D+H+1, G_pad) fused gate weight
    bias = b_ref[...]       # (1, G_pad)
    m1 = m1_ref[...]        # (L, H+1)  [cumax l2r broadcast | dist column]
    m2 = m2_ref[...]        # (L, H)    cumax r2l broadcast
    sw = sw_ref[...]        # (H, H//6)
    sb = sb_ref[...]
    rsw = rsw_ref[...]      # (H//6, H)
    rsb = rsb_ref[...]
    cwf = cwf_ref[...]      # (K*H, H) conv weight, temporal-major rows
    cb = cb_ref[...]
    utk = utk_ref[...]      # (K, K) cumsum-as-matmul over the window

    # statically unrolled recurrence over the U timesteps of this chunk
    for u in range(U):
        x_t = x_ref[:, u, :]               # (B, D)
        interval = t_ref[:, u, :]          # (B, 1)
        h_last = h_sc[...]                 # (B, H)
        c_last = c_sc[...]                 # (B, H)

        # fused kernel([x, dt]) + recurrent_kernel([h, dt]) : one MXU call
        xh = jnp.concatenate([x_t, h_last, interval], axis=-1)   # (B, D+H+1)
        x_out = jnp.dot(xh.astype(w.dtype), w,
                        preferred_element_type=jnp.float32) + bias  # (B, G_pad)

        s_f = jax.nn.softmax(x_out[:, :L], axis=-1)
        s_i = jax.nn.softmax(x_out[:, L:2 * L], axis=-1)
        r_f = jnp.dot(s_f, m1, preferred_element_type=jnp.float32)   # (B, H+1)
        fm_b = r_f[:, :H]                                            # l2r cumax, broadcast
        cur_dist = 1.0 - r_f[:, H:H + 1]                             # (B, 1)
        # r2l cumax: flip(cumsum(softmax(flip(x)))) == 1 - cumsum(s) + s
        im_b = 1.0 - jnp.dot(s_i, m2, preferred_element_type=jnp.float32)

        f_gate = jax.nn.sigmoid(x_out[:, 2 * L:2 * L + H])
        i_gate = jax.nn.sigmoid(x_out[:, 2 * L + H:2 * L + 2 * H])
        o_gate = jax.nn.sigmoid(x_out[:, 2 * L + 2 * H:2 * L + 3 * H])
        c_in = jnp.tanh(x_out[:, 2 * L + 3 * H:2 * L + 4 * H])

        overlap = fm_b * im_b
        c_new = (overlap * (f_gate * c_last + i_gate * c_in)
                 + (fm_b - overlap) * c_last
                 + (im_b - overlap) * c_in)
        h_new = o_gate * jnp.tanh(c_new)
        c_sc[...] = c_new
        h_sc[...] = h_new

        # ring-buffer write of newest h; slot index is static because U % K == 0
        hwin_sc[u % K] = h_new

        # distance window kept in temporal order (tiny (B, K) shift)
        if K > 1:
            new_d = jnp.concatenate([dwin_sc[:, 1:], cur_dist], axis=1)  # (B, K)
        else:
            new_d = cur_dist
        dwin_sc[...] = new_d

        # stage-aware reweighting: softmax(cumsum(distance)) over the window
        cum_d = jnp.dot(new_d, utk, preferred_element_type=jnp.float32)
        wdist = jax.nn.softmax(cum_d, axis=-1)                           # (B, K)

        # gather the window in temporal order (static ring slots), weight it,
        # and fuse the Conv1d into one (B, K*H) @ (K*H, H) matmul
        pieces = []
        for p in range(K):
            slot = (u + p + 1) % K
            pieces.append(hwin_sc[slot] * wdist[:, p:p + 1])             # (B, H)
        acc = pieces[0]
        for p in range(1, K):
            acc = acc + pieces[p]
        local_theme = acc * (1.0 / K)                                    # mean over window
        weighted_flat = jnp.concatenate(pieces, axis=-1)                 # (B, K*H)

        theme = jnp.dot(local_theme.astype(sw.dtype), sw,
                        preferred_element_type=jnp.float32) + sb
        theme = jnp.maximum(theme, 0.0)
        theme = jnp.dot(theme.astype(rsw.dtype), rsw,
                        preferred_element_type=jnp.float32) + rsb
        theme = jax.nn.sigmoid(theme)                                    # (B, H)

        conv_out = jnp.dot(weighted_flat.astype(cwf.dtype), cwf,
                           preferred_element_type=jnp.float32) + cb      # (B, H)

        out_ref[:, u, :] = theme * conv_out + h_new    # rnn_outputs + origin_h
        dist_ref[:, u, :] = cur_dist


def stagenet_forward(x, time, params, *, chunk_size, levels, conv_size,
                     steps_per_block=8, mxu_dtype=jnp.float32):
    B, T, D = x.shape
    C, L, K = chunk_size, levels, conv_size
    H = C * L
    G = 4 * H + 2 * L
    Gp = -(-G // 128) * 128          # pad gate width to full lanes

    # timestep chunk: multiple of 8 (sublane tiling of (U, ...) blocks) and of
    # K (so ring-buffer slots are static under unrolling)
    base = (8 * K) // math.gcd(8, K)
    U = base * max(1, -(-steps_per_block // base))
    T_pad = -(-T // U) * U
    B_pad = -(-B // 8) * 8           # fill all 8 sublanes of each vreg row

    f32 = jnp.float32
    x_p = jnp.pad(x.astype(f32), ((0, B_pad - B), (0, T_pad - T), (0, 0)))
    t_p = jnp.pad(time.astype(f32), ((0, B_pad - B), (0, T_pad - T)),
                  constant_values=1.0)
    t3 = t_p.reshape(B_pad, T_pad, 1)

    # ---- parameter plumbing (glue): fuse / fold / pre-transpose weights ----
    kw = params["kernel_w"].astype(f32)        # (G, D+1)
    rw = params["recurrent_w"].astype(f32)     # (G, H+1)
    W = jnp.zeros((D + H + 1, Gp), f32)
    W = W.at[:D, :G].set(kw[:, :D].T)
    W = W.at[D:D + H, :G].set(rw[:, :H].T)
    W = W.at[D + H, :G].set(kw[:, D] + rw[:, H])          # fused interval column
    bvec = jnp.zeros((1, Gp), f32).at[0, :G].set(
        params["kernel_b"].astype(f32) + params["recurrent_b"].astype(f32))

    utl = jnp.triu(jnp.ones((L, L), f32))                  # cumsum-as-matmul (levels)
    e = (jnp.arange(H)[None, :] // C == jnp.arange(L)[:, None]).astype(f32)  # (L, H)
    m1 = jnp.concatenate([utl @ e, (utl @ jnp.ones((L, 1), f32)) / L], axis=1)  # (L, H+1)
    m2 = (utl - jnp.eye(L, dtype=f32)) @ e                 # (L, H)
    utk = jnp.triu(jnp.ones((K, K), f32))                  # cumsum-as-matmul (window)

    sw = params["scale_w"].astype(f32).T                   # (H, H//6)
    sb = params["scale_b"].astype(f32).reshape(1, -1)
    rsw = params["rescale_w"].astype(f32).T                # (H//6, H)
    rsb = params["rescale_b"].astype(f32).reshape(1, H)
    cwf = jnp.transpose(params["conv_w"].astype(f32), (2, 1, 0)).reshape(K * H, H)
    cb = params["conv_b"].astype(f32).reshape(1, H)

    # bf16 MXU operands (recommended on v6e/v7x); default f32 keeps v5e exactness
    W, sw, rsw, cwf = (W.astype(mxu_dtype), sw.astype(mxu_dtype),
                       rsw.astype(mxu_dtype), cwf.astype(mxu_dtype))

    def full_spec(a):
        n = a.ndim
        return pl.BlockSpec(a.shape, lambda c, _n=n: (0,) * _n)

    grid_spec = pltpu.PrefetchScalarGridSpec(
        num_scalar_prefetch=0,
        grid=(T_pad // U,),
        in_specs=[
            pl.BlockSpec((B_pad, U, D), lambda c: (0, c, 0)),   # x chunk
            pl.BlockSpec((B_pad, U, 1), lambda c: (0, c, 0)),   # time chunk
            full_spec(W), full_spec(bvec), full_spec(m1), full_spec(m2),
            full_spec(sw), full_spec(sb), full_spec(rsw), full_spec(rsb),
            full_spec(cwf), full_spec(cb), full_spec(utk),
        ],
        out_specs=[
            pl.BlockSpec((B_pad, U, H), lambda c: (0, c, 0)),   # outputs chunk
            pl.BlockSpec((B_pad, U, 1), lambda c: (0, c, 0)),   # distance chunk
        ],
        scratch_shapes=[
            pltpu.VMEM((B_pad, H), jnp.float32),      # c state
            pltpu.VMEM((B_pad, H), jnp.float32),      # h state
            pltpu.VMEM((K, B_pad, H), jnp.float32),   # ring buffer of h window
            pltpu.VMEM((B_pad, K), jnp.float32),      # distance window (temporal)
        ],
    )

    kernel = functools.partial(_stagenet_kernel, L, C, K, U)
    out_p, dist_p = pl.pallas_call(
        kernel,
        out_shape=(
            jax.ShapeDtypeStruct((B_pad, T_pad, H), jnp.float32),
            jax.ShapeDtypeStruct((B_pad, T_pad, 1), jnp.float32),
        ),
        grid_spec=grid_spec,
        compiler_params=pltpu.CompilerParams(
            dimension_semantics=("arbitrary",)),   # sequential time recurrence
    )(x_p, t3, W, bvec, m1, m2, sw, sb, rsw, rsb, cwf, cb, utk)

    output = out_p[:B, :T, :]
    distance = dist_p[:B, :T, 0].T               # (T, B), matches torch.stack(distance)
    last_output = output[:, -1, :]               # get_last_visit with mask=None
    return last_output, output, distance


def stagenet_reference(x, time, p, *, chunk_size, levels, conv_size):
    """Pure-JAX mirror of the PyTorch forward (eval mode), for verification."""
    B, T, D = x.shape
    C, L, K = chunk_size, levels, conv_size
    H = C * L
    c = jnp.zeros((B, H)); h = jnp.zeros((B, H))
    tmp_h = jnp.zeros((K, B, H)); tmp_dis = jnp.zeros((K, B))
    outs, origin, dist = [], [], []
    for t in range(T):
        x_t = x[:, t, :]; interval = time[:, t:t + 1]
        xo = jnp.concatenate([x_t, interval], -1) @ p["kernel_w"].T + p["kernel_b"]
        xo = xo + jnp.concatenate([h, interval], -1) @ p["recurrent_w"].T + p["recurrent_b"]
        fm = jnp.cumsum(jax.nn.softmax(xo[:, :L], -1), -1)
        zf = xo[:, L:2 * L][:, ::-1]
        im = jnp.cumsum(jax.nn.softmax(zf, -1), -1)[:, ::-1]
        rest = xo[:, 2 * L:].reshape(B, 4 * L, C)
        f_g = jax.nn.sigmoid(rest[:, :L]); i_g = jax.nn.sigmoid(rest[:, L:2 * L])
        o_g = jax.nn.sigmoid(rest[:, 2 * L:3 * L]); c_in = jnp.tanh(rest[:, 3 * L:])
        c_l = c.reshape(B, L, C)
        fm3 = fm[:, :, None]; im3 = im[:, :, None]
        ov = fm3 * im3
        c3 = ov * (f_g * c_l + i_g * c_in) + (fm3 - ov) * c_l + (im3 - ov) * c_in
        h3 = o_g * jnp.tanh(c3)
        c = c3.reshape(B, H); h = h3.reshape(B, H)
        cur_dist = 1.0 - jnp.mean(fm, -1)
        origin.append(h); dist.append(cur_dist)
        tmp_h = jnp.concatenate([tmp_h[1:], h[None]], 0)
        tmp_dis = jnp.concatenate([tmp_dis[1:], cur_dist[None]], 0)
        local_dis = jax.nn.softmax(jnp.cumsum(tmp_dis.T, 1), 1)
        local_h = jnp.transpose(tmp_h, (1, 2, 0)) * local_dis[:, None, :]   # (B,H,K)
        theme = jnp.mean(local_h, -1)
        theme = jax.nn.relu(theme @ p["scale_w"].T + p["scale_b"])
        theme = jax.nn.sigmoid(theme @ p["rescale_w"].T + p["rescale_b"])
        conv = jnp.einsum("bik,oik->bo", local_h, p["conv_w"]) + p["conv_b"]
        outs.append(theme * conv)
    origin = jnp.stack(origin, 1)
    rnn = jnp.stack(outs, 1) + origin
    return rnn[:, -1, :], rnn, jnp.stack(dist, 0)


if __name__ == "__main__":
    B, T, D = 2, 8, 16
    chunk_size, levels, conv_size = 8, 3, 4
    H = chunk_size * levels
    G = 4 * H + 2 * levels

    key = jax.random.PRNGKey(0)
    ks = jax.random.split(key, 10)
    params = {
        "kernel_w": 0.1 * jax.random.normal(ks[0], (G, D + 1), jnp.float32),
        "kernel_b": jnp.zeros((G,), jnp.float32),
        "recurrent_w": 0.1 * jax.random.normal(ks[1], (G, H + 1), jnp.float32),
        "recurrent_b": jnp.zeros((G,), jnp.float32),
        "scale_w": 0.1 * jax.random.normal(ks[2], (H // 6, H), jnp.float32),
        "scale_b": 0.01 * jax.random.normal(ks[3], (H // 6,), jnp.float32),
        "rescale_w": 0.1 * jax.random.normal(ks[4], (H, H // 6), jnp.float32),
        "rescale_b": 0.01 * jax.random.normal(ks[5], (H,), jnp.float32),
        "conv_w": 0.1 * jax.random.normal(ks[6], (H, H, conv_size), jnp.float32),
        "conv_b": 0.01 * jax.random.normal(ks[7], (H,), jnp.float32),
    }

    x = jax.random.normal(ks[8], (B, T, D), jnp.float32)
    time = jnp.abs(jax.random.normal(ks[9], (B, T), jnp.float32)) + 0.5

    last, out, dist = stagenet_forward(
        x, time, params,
        chunk_size=chunk_size, levels=levels, conv_size=conv_size)
    jax.block_until_ready((last, out, dist))

    ref_last, ref_out, ref_dist = stagenet_reference(
        x, time, params,
        chunk_size=chunk_size, levels=levels, conv_size=conv_size)

    assert last.shape == (B, H) and out.shape == (B, T, H) and dist.shape == (T, B)
    np.testing.assert_allclose(np.asarray(out), np.asarray(ref_out), rtol=3e-3, atol=3e-3)
    np.testing.assert_allclose(np.asarray(last), np.asarray(ref_last), rtol=3e-3, atol=3e-3)
    np.testing.assert_allclose(np.asarray(dist), np.asarray(ref_dist), rtol=3e-3, atol=3e-3)

    print("KERNEL_OK")
</pallas_src>

<mosaic_0001>
module attributes {stable_mosaic.version = 11 : i64} {
  func.func @_stagenet_kernel(%arg0: i32, %arg1: memref<8x8x16xf32, #tpu.memory_space<vmem>>, %arg2: memref<8x8x1xf32, #tpu.memory_space<vmem>>, %arg3: memref<41x128xf32, #tpu.memory_space<vmem>>, %arg4: memref<1x128xf32, #tpu.memory_space<vmem>>, %arg5: memref<3x25xf32, #tpu.memory_space<vmem>>, %arg6: memref<3x24xf32, #tpu.memory_space<vmem>>, %arg7: memref<24x4xf32, #tpu.memory_space<vmem>>, %arg8: memref<1x4xf32, #tpu.memory_space<vmem>>, %arg9: memref<4x24xf32, #tpu.memory_space<vmem>>, %arg10: memref<1x24xf32, #tpu.memory_space<vmem>>, %arg11: memref<96x24xf32, #tpu.memory_space<vmem>>, %arg12: memref<1x24xf32, #tpu.memory_space<vmem>>, %arg13: memref<4x4xf32, #tpu.memory_space<vmem>>, %arg14: memref<8x8x24xf32, #tpu.memory_space<vmem>>, %arg15: memref<8x8x1xf32, #tpu.memory_space<vmem>>, %arg16: memref<8x24xf32, #tpu.memory_space<vmem>>, %arg17: memref<8x24xf32, #tpu.memory_space<vmem>>, %arg18: memref<4x8x24xf32, #tpu.memory_space<vmem>>, %arg19: memref<8x4xf32, #tpu.memory_space<vmem>>) attributes {dimension_semantics = [#tpu.dimension_semantics<arbitrary>], iteration_bounds = array<i64: 1>, scalar_prefetch = 0 : i64, scratch_operands = 4 : i64, tpu.core_type = #tpu.core_type<tc>, window_params = [{transform_indices = @transform_0, window_bounds = array<i64: 8, 8, 16>}, {transform_indices = @transform_1, window_bounds = array<i64: 8, 8, 1>}, {pipeline_mode = #tpu.pipeline_mode<synchronous>, transform_indices = @transform_2, window_bounds = array<i64: 41, 128>}, {pipeline_mode = #tpu.pipeline_mode<synchronous>, transform_indices = @transform_3, window_bounds = array<i64: 1, 128>}, {pipeline_mode = #tpu.pipeline_mode<synchronous>, transform_indices = @transform_4, window_bounds = array<i64: 3, 25>}, {pipeline_mode = #tpu.pipeline_mode<synchronous>, transform_indices = @transform_5, window_bounds = array<i64: 3, 24>}, {pipeline_mode = #tpu.pipeline_mode<synchronous>, transform_indices = @transform_6, window_bounds = array<i64: 24, 4>}, {pipeline_mode = #tpu.pipeline_mode<synchronous>, transform_indices = @transform_7, window_bounds = array<i64: 1, 4>}, {pipeline_mode = #tpu.pipeline_mode<synchronous>, transform_indices = @transform_8, window_bounds = array<i64: 4, 24>}, {pipeline_mode = #tpu.pipeline_mode<synchronous>, transform_indices = @transform_9, window_bounds = array<i64: 1, 24>}, {pipeline_mode = #tpu.pipeline_mode<synchronous>, transform_indices = @transform_10, window_bounds = array<i64: 96, 24>}, {pipeline_mode = #tpu.pipeline_mode<synchronous>, transform_indices = @transform_11, window_bounds = array<i64: 1, 24>}, {pipeline_mode = #tpu.pipeline_mode<synchronous>, transform_indices = @transform_12, window_bounds = array<i64: 4, 4>}, {transform_indices = @transform_13, window_bounds = array<i64: 8, 8, 24>}, {transform_indices = @transform_14, window_bounds = array<i64: 8, 8, 1>}]} {
    %c0_i32 = arith.constant 0 : i32
    %0 = arith.cmpi eq, %arg0, %c0_i32 : i32
    %1 = arith.extui %0 : i1 to i32
    %c0_i32_0 = arith.constant 0 : i32
    %2 = arith.cmpi ne, %1, %c0_i32_0 : i32
    scf.if %2 {
      %cst_518 = arith.constant 0.000000e+00 : f32
      %1174 = vector.broadcast %cst_518 : f32 to vector<8x24xf32>
      %c0_519 = arith.constant 0 : index
      %c0_520 = arith.constant 0 : index
      %1175 = vector.load %arg16[%c0_519, %c0_520] : memref<8x24xf32, #tpu.memory_space<vmem>>, vector<8x24xf32>
      tpu.vector_store %arg16[%c0_519, %c0_520], %1174 {strides = array<i32>} : memref<8x24xf32, #tpu.memory_space<vmem>>, vector<8x24xf32>,
      %cst_521 = arith.constant 0.000000e+00 : f32
      %1176 = vector.broadcast %cst_521 : f32 to vector<8x24xf32>
      %c0_522 = arith.constant 0 : index
      %c0_523 = arith.constant 0 : index
      %1177 = vector.load %arg17[%c0_522, %c0_523] : memref<8x24xf32, #tpu.memory_space<vmem>>, vector<8x24xf32>
      tpu.vector_store %arg17[%c0_522, %c0_523], %1176 {strides = array<i32>} : memref<8x24xf32, #tpu.memory_space<vmem>>, vector<8x24xf32>,
      %cst_524 = arith.constant 0.000000e+00 : f32
      %1178 = vector.broadcast %cst_524 : f32 to vector<4x8x24xf32>
      %c0_525 = arith.constant 0 : index
      %c0_526 = arith.constant 0 : index
      %c0_527 = arith.constant 0 : index
      %1179 = vector.load %arg18[%c0_525, %c0_526, %c0_527] : memref<4x8x24xf32, #tpu.memory_space<vmem>>, vector<4x8x24xf32>
      tpu.vector_store %arg18[%c0_525, %c0_526, %c0_527], %1178 {strides = array<i32>} : memref<4x8x24xf32, #tpu.memory_space<vmem>>, vector<4x8x24xf32>,
      %cst_528 = arith.constant 0.000000e+00 : f32
      %1180 = vector.broadcast %cst_528 : f32 to vector<8x4xf32>
      %c0_529 = arith.constant 0 : index
      %c0_530 = arith.constant 0 : index
      %1181 = vector.load %arg19[%c0_529, %c0_530] : memref<8x4xf32, #tpu.memory_space<vmem>>, vector<8x4xf32>
      tpu.vector_store %arg19[%c0_529, %c0_530], %1180 {strides = array<i32>} : memref<8x4xf32, #tpu.memory_space<vmem>>, vector<8x4xf32>,
    } else {
    }
    %c0 = arith.constant 0 : index
    %c0_1 = arith.constant 0 : index
    %3 = vector.load %arg3[%c0, %c0_1] : memref<41x128xf32, #tpu.memory_space<vmem>>, vector<41x128xf32>
    %c0_2 = arith.constant 0 : index
    %c0_3 = arith.constant 0 : index
    %4 = vector.load %arg4[%c0_2, %c0_3] : memref<1x128xf32, #tpu.memory_space<vmem>>, vector<1x128xf32>
    %c0_4 = arith.constant 0 : index
    %c0_5 = arith.constant 0 : index
    %5 = vector.load %arg5[%c0_4, %c0_5] : memref<3x25xf32, #tpu.memory_space<vmem>>, vector<3x25xf32>
    %c0_6 = arith.constant 0 : index
    %c0_7 = arith.constant 0 : index
    %6 = vector.load %arg6[%c0_6, %c0_7] : memref<3x24xf32, #tpu.memory_space<vmem>>, vector<3x24xf32>
    %c0_8 = arith.constant 0 : index
    %c0_9 = arith.constant 0 : index
    %7 = vector.load %arg7[%c0_8, %c0_9] : memref<24x4xf32, #tpu.memory_space<vmem>>, vector<24x4xf32>
    %c0_10 = arith.constant 0 : index
    %c0_11 = arith.constant 0 : index
    %8 = vector.load %arg8[%c0_10, %c0_11] : memref<1x4xf32, #tpu.memory_space<vmem>>, vector<1x4xf32>
    %c0_12 = arith.constant 0 : index
    %c0_13 = arith.constant 0 : index
    %9 = vector.load %arg9[%c0_12, %c0_13] : memref<4x24xf32, #tpu.memory_space<vmem>>, vector<4x24xf32>
    %c0_14 = arith.constant 0 : index
    %c0_15 = arith.constant 0 : index
    %10 = vector.load %arg10[%c0_14, %c0_15] : memref<1x24xf32, #tpu.memory_space<vmem>>, vector<1x24xf32>
    %c0_16 = arith.constant 0 : index
    %c0_17 = arith.constant 0 : index
    %11 = vector.load %arg11[%c0_16, %c0_17] : memref<96x24xf32, #tpu.memory_space<vmem>>, vector<96x24xf32>
    %c0_18 = arith.constant 0 : index
    %c0_19 = arith.constant 0 : index
    %12 = vector.load %arg12[%c0_18, %c0_19] : memref<1x24xf32, #tpu.memory_space<vmem>>, vector<1x24xf32>
    %c0_20 = arith.constant 0 : index
    %c0_21 = arith.constant 0 : index
    %13 = vector.load %arg13[%c0_20, %c0_21] : memref<4x4xf32, #tpu.memory_space<vmem>>, vector<4x4xf32>
    %c0_22 = arith.constant 0 : index
    %c0_23 = arith.constant 0 : index
    %c0_24 = arith.constant 0 : index
    %14 = vector.load %arg1[%c0_22, %c0_23, %c0_24] : memref<8x8x16xf32, #tpu.memory_space<vmem>>, vector<8x1x16xf32>
    %15 = vector.shape_cast %14 : vector<8x1x16xf32> to vector<8x16xf32>
    %c0_25 = arith.constant 0 : index
    %c0_26 = arith.constant 0 : index
    %c0_27 = arith.constant 0 : index
    %16 = vector.load %arg2[%c0_25, %c0_26, %c0_27] : memref<8x8x1xf32, #tpu.memory_space<vmem>>, vector<8x1x1xf32>
    %17 = vector.shape_cast %16 : vector<8x1x1xf32> to vector<8x1xf32>
    %c0_28 = arith.constant 0 : index
    %c0_29 = arith.constant 0 : index
    %18 = vector.load %arg17[%c0_28, %c0_29] : memref<8x24xf32, #tpu.memory_space<vmem>>, vector<8x24xf32>
    %c0_30 = arith.constant 0 : index
    %c0_31 = arith.constant 0 : index
    %19 = vector.load %arg16[%c0_30, %c0_31] : memref<8x24xf32, #tpu.memory_space<vmem>>, vector<8x24xf32>
    %20 = tpu.concatenate %15, %18, %17 in 1 : vector<8x16xf32>, vector<8x24xf32>, vector<8x1xf32> -> vector<8x41xf32>
    %cst = arith.constant dense<0.000000e+00> : vector<8x128xf32>
    %21 = tpu.matmul %20, %3, %cst {dimension_numbers = #tpu.dot_dimension_numbers<[1], [0], [0], [1], [0, 0, 1, 1], [], []>} : vector<8x41xf32>, vector<41x128xf32>, vector<8x128xf32> -> vector<8x128xf32>
    %22 = vector.broadcast %4 : vector<1x128xf32> to vector<8x128xf32>
    %23 = arith.addf %21, %22 : vector<8x128xf32>
    %24 = vector.extract_strided_slice %23 {offsets = [0, 0], sizes = [8, 3], strides = [1, 1]} : vector<8x128xf32> to vector<8x3xf32>
    %cst_32 = arith.constant dense<0xFF800000> : vector<8xf32>
    %25 = vector.multi_reduction <maximumf>, %24, %cst_32 [1] : vector<8x3xf32> to vector<8xf32>
    %cst_33 = arith.constant 0xFF800000 : f32
    %26 = vector.broadcast %cst_33 : f32 to vector<8xf32>
    %27 = arith.maximumf %26, %25 : vector<8xf32>
    %28 = vector.shape_cast %27 : vector<8xf32> to vector<8x1xf32>
    %29 = vector.broadcast %28 : vector<8x1xf32> to vector<8x3xf32>
    %30 = arith.subf %24, %29 : vector<8x3xf32>
    %31 = math.exp %30 : vector<8x3xf32>
    %cst_34 = arith.constant dense<0.000000e+00> : vector<8xf32>
    %32 = vector.multi_reduction <add>, %31, %cst_34 [1] : vector<8x3xf32> to vector<8xf32>
    %33 = vector.shape_cast %32 : vector<8xf32> to vector<8x1xf32>
    %34 = vector.broadcast %33 : vector<8x1xf32> to vector<8x3xf32>
    %35 = arith.divf %31, %34 : vector<8x3xf32>
    %36 = vector.extract_strided_slice %23 {offsets = [0, 3], sizes = [8, 3], strides = [1, 1]} : vector<8x128xf32> to vector<8x3xf32>
    %cst_35 = arith.constant dense<0xFF800000> : vector<8xf32>
    %37 = vector.multi_reduction <maximumf>, %36, %cst_35 [1] : vector<8x3xf32> to vector<8xf32>
    %cst_36 = arith.constant 0xFF800000 : f32
    %38 = vector.broadcast %cst_36 : f32 to vector<8xf32>
    %39 = arith.maximumf %38, %37 : vector<8xf32>
    %40 = vector.shape_cast %39 : vector<8xf32> to vector<8x1xf32>
    %41 = vector.broadcast %40 : vector<8x1xf32> to vector<8x3xf32>
    %42 = arith.subf %36, %41 : vector<8x3xf32>
    %43 = math.exp %42 : vector<8x3xf32>
    %cst_37 = arith.constant dense<0.000000e+00> : vector<8xf32>
    %44 = vector.multi_reduction <add>, %43, %cst_37 [1] : vector<8x3xf32> to vector<8xf32>
    %45 = vector.shape_cast %44 : vector<8xf32> to vector<8x1xf32>
    %46 = vector.broadcast %45 : vector<8x1xf32> to vector<8x3xf32>
    %47 = arith.divf %43, %46 : vector<8x3xf32>
    %cst_38 = arith.constant dense<0.000000e+00> : vector<8x25xf32>
    %48 = tpu.matmul %35, %5, %cst_38 {dimension_numbers = #tpu.dot_dimension_numbers<[1], [0], [0], [1], [0, 0, 1, 1], [], []>} : vector<8x3xf32>, vector<3x25xf32>, vector<8x25xf32> -> vector<8x25xf32>
    %49 = vector.extract_strided_slice %48 {offsets = [0, 0], sizes = [8, 24], strides = [1, 1]} : vector<8x25xf32> to vector<8x24xf32>
    %50 = vector.extract_strided_slice %48 {offsets = [0, 24], sizes = [8, 1], strides = [1, 1]} : vector<8x25xf32> to vector<8x1xf32>
    %cst_39 = arith.constant 1.000000e+00 : f32
    %51 = vector.broadcast %cst_39 : f32 to vector<8x1xf32>
    %52 = arith.subf %51, %50 : vector<8x1xf32>
    %cst_40 = arith.constant dense<0.000000e+00> : vector<8x24xf32>
    %53 = tpu.matmul %47, %6, %cst_40 {dimension_numbers = #tpu.dot_dimension_numbers<[1], [0], [0], [1], [0, 0, 1, 1], [], []>} : vector<8x3xf32>, vector<3x24xf32>, vector<8x24xf32> -> vector<8x24xf32>
    %cst_41 = arith.constant 1.000000e+00 : f32
    %54 = vector.broadcast %cst_41 : f32 to vector<8x24xf32>
    %55 = arith.subf %54, %53 : vector<8x24xf32>
    %56 = vector.extract_strided_slice %23 {offsets = [0, 6], sizes = [8, 24], strides = [1, 1]} : vector<8x128xf32> to vector<8x24xf32>
    %57 = arith.negf %56 : vector<8x24xf32>
    %58 = math.exp %57 : vector<8x24xf32>
    %cst_42 = arith.constant 1.000000e+00 : f32
    %59 = vector.broadcast %cst_42 : f32 to vector<8x24xf32>
    %60 = arith.addf %59, %58 : vector<8x24xf32>
    %61 = arith.divf %59, %60 : vector<8x24xf32>
    %62 = vector.extract_strided_slice %23 {offsets = [0, 30], sizes = [8, 24], strides = [1, 1]} : vector<8x128xf32> to vector<8x24xf32>
    %63 = arith.negf %62 : vector<8x24xf32>
    %64 = math.exp %63 : vector<8x24xf32>
    %cst_43 = arith.constant 1.000000e+00 : f32
    %65 = vector.broadcast %cst_43 : f32 to vector<8x24xf32>
    %66 = arith.addf %65, %64 : vector<8x24xf32>
    %67 = arith.divf %65, %66 : vector<8x24xf32>
    %68 = vector.extract_strided_slice %23 {offsets = [0, 54], sizes = [8, 24], strides = [1, 1]} : vector<8x128xf32> to vector<8x24xf32>
    %69 = arith.negf %68 : vector<8x24xf32>
    %70 = math.exp %69 : vector<8x24xf32>
    %cst_44 = arith.constant 1.000000e+00 : f32
    %71 = vector.broadcast %cst_44 : f32 to vector<8x24xf32>
    %72 = arith.addf %71, %70 : vector<8x24xf32>
    %73 = arith.divf %71, %72 : vector<8x24xf32>
    %74 = vector.extract_strided_slice %23 {offsets = [0, 78], sizes = [8, 24], strides = [1, 1]} : vector<8x128xf32> to vector<8x24xf32>
    %75 = math.tanh %74 : vector<8x24xf32>
    %76 = arith.mulf %49, %55 : vector<8x24xf32>
    %77 = arith.mulf %61, %19 : vector<8x24xf32>
    %78 = arith.mulf %67, %75 : vector<8x24xf32>
    %79 = arith.addf %77, %78 : vector<8x24xf32>
    %80 = arith.mulf %76, %79 : vector<8x24xf32>
    %81 = arith.subf %49, %76 : vector<8x24xf32>
    %82 = arith.mulf %81, %19 : vector<8x24xf32>
    %83 = arith.addf %80, %82 : vector<8x24xf32>
    %84 = arith.subf %55, %76 : vector<8x24xf32>
    %85 = arith.mulf %84, %75 : vector<8x24xf32>
    %86 = arith.addf %83, %85 : vector<8x24xf32>
    %87 = math.tanh %86 : vector<8x24xf32>
    %88 = arith.mulf %73, %87 : vector<8x24xf32>
    %c0_45 = arith.constant 0 : index
    %c0_46 = arith.constant 0 : index
    %89 = vector.load %arg16[%c0_45, %c0_46] : memref<8x24xf32, #tpu.memory_space<vmem>>, vector<8x24xf32>
    tpu.vector_store %arg16[%c0_45, %c0_46], %86 {strides = array<i32>} : memref<8x24xf32, #tpu.memory_space<vmem>>, vector<8x24xf32>,
    %c0_47 = arith.constant 0 : index
    %c0_48 = arith.constant 0 : index
    %90 = vector.load %arg17[%c0_47, %c0_48] : memref<8x24xf32, #tpu.memory_space<vmem>>, vector<8x24xf32>
    tpu.vector_store %arg17[%c0_47, %c0_48], %88 {strides = array<i32>} : memref<8x24xf32, #tpu.memory_space<vmem>>, vector<8x24xf32>,
    %c0_49 = arith.constant 0 : index
    %c0_50 = arith.constant 0 : index
    %c0_51 = arith.constant 0 : index
    %91 = vector.load %arg18[%c0_49, %c0_50, %c0_51] : memref<4x8x24xf32, #tpu.memory_space<vmem>>, vector<1x8x24xf32>
    %92 = vector.shape_cast %91 : vector<1x8x24xf32> to vector<8x24xf32>
    %93 = vector.shape_cast %88 : vector<8x24xf32> to vector<1x8x24xf32>
    tpu.vector_store %arg18[%c0_49, %c0_50, %c0_51], %93 {strides = array<i32>} : memref<4x8x24xf32, #tpu.memory_space<vmem>>, vector<1x8x24xf32>,
    %c0_52 = arith.constant 0 : index
    %c1 = arith.constant 1 : index
    %94 = vector.load %arg19[%c0_52, %c1] : memref<8x4xf32, #tpu.memory_space<vmem>>, vector<8x3xf32>
    %95 = tpu.concatenate %94, %52 in 1 : vector<8x3xf32>, vector<8x1xf32> -> vector<8x4xf32>
    %c0_53 = arith.constant 0 : index
    %c0_54 = arith.constant 0 : index
    %96 = vector.load %arg19[%c0_53, %c0_54] : memref<8x4xf32, #tpu.memory_space<vmem>>, vector<8x4xf32>
    tpu.vector_store %arg19[%c0_53, %c0_54], %95 {strides = array<i32>} : memref<8x4xf32, #tpu.memory_space<vmem>>, vector<8x4xf32>,
    %cst_55 = arith.constant dense<0.000000e+00> : vector<8x4xf32>
    %97 = tpu.matmul %95, %13, %cst_55 {dimension_numbers = #tpu.dot_dimension_numbers<[1], [0], [0], [1], [0, 0, 1, 1], [], []>} : vector<8x4xf32>, vector<4x4xf32>, vector<8x4xf32> -> vector<8x4xf32>
    %cst_56 = arith.constant dense<0xFF800000> : vector<8xf32>
    %98 = vector.multi_reduction <maximumf>, %97, %cst_56 [1] : vector<8x4xf32> to vector<8xf32>
    %cst_57 = arith.constant 0xFF800000 : f32
    %99 = vector.broadcast %cst_57 : f32 to vector<8xf32>
    %100 = arith.maximumf %99, %98 : vector<8xf32>
    %101 = vector.shape_cast %100 : vector<8xf32> to vector<8x1xf32>
    %102 = vector.broadcast %101 : vector<8x1xf32> to vector<8x4xf32>
    %103 = arith.subf %97, %102 : vector<8x4xf32>
    %104 = math.exp %103 : vector<8x4xf32>
    %cst_58 = arith.constant dense<0.000000e+00> : vector<8xf32>
    %105 = vector.multi_reduction <add>, %104, %cst_58 [1] : vector<8x4xf32> to vector<8xf32>
    %106 = vector.shape_cast %105 : vector<8xf32> to vector<8x1xf32>
    %107 = vector.broadcast %106 : vector<8x1xf32> to vector<8x4xf32>
    %108 = arith.divf %104, %107 : vector<8x4xf32>
    %c1_59 = arith.constant 1 : index
    %c0_60 = arith.constant 0 : index
    %c0_61 = arith.constant 0 : index
    %109 = vector.load %arg18[%c1_59, %c0_60, %c0_61] : memref<4x8x24xf32, #tpu.memory_space<vmem>>, vector<1x8x24xf32>
    %110 = vector.shape_cast %109 : vector<1x8x24xf32> to vector<8x24xf32>
    %111 = vector.extract_strided_slice %108 {offsets = [0, 0], sizes = [8, 1], strides = [1, 1]} : vector<8x4xf32> to vector<8x1xf32>
    %112 = vector.broadcast %111 : vector<8x1xf32> to vector<8x24xf32>
    %113 = arith.mulf %110, %112 : vector<8x24xf32>
    %c2 = arith.constant 2 : index
    %c0_62 = arith.constant 0 : index
    %c0_63 = arith.constant 0 : index
    %114 = vector.load %arg18[%c2, %c0_62, %c0_63] : memref<4x8x24xf32, #tpu.memory_space<vmem>>, vector<1x8x24xf32>
    %115 = vector.shape_cast %114 : vector<1x8x24xf32> to vector<8x24xf32>
    %116 = vector.extract_strided_slice %108 {offsets = [0, 1], sizes = [8, 1], strides = [1, 1]} : vector<8x4xf32> to vector<8x1xf32>
    %117 = vector.broadcast %116 : vector<8x1xf32> to vector<8x24xf32>
    %118 = arith.mulf %115, %117 : vector<8x24xf32>
    %c3 = arith.constant 3 : index
    %c0_64 = arith.constant 0 : index
    %c0_65 = arith.constant 0 : index
    %119 = vector.load %arg18[%c3, %c0_64, %c0_65] : memref<4x8x24xf32, #tpu.memory_space<vmem>>, vector<1x8x24xf32>
    %120 = vector.shape_cast %119 : vector<1x8x24xf32> to vector<8x24xf32>
    %121 = vector.extract_strided_slice %108 {offsets = [0, 2], sizes = [8, 1], strides = [1, 1]} : vector<8x4xf32> to vector<8x1xf32>
    %122 = vector.broadcast %121 : vector<8x1xf32> to vector<8x24xf32>
    %123 = arith.mulf %120, %122 : vector<8x24xf32>
    %c0_66 = arith.constant 0 : index
    %c0_67 = arith.constant 0 : index
    %c0_68 = arith.constant 0 : index
    %124 = vector.load %arg18[%c0_66, %c0_67, %c0_68] : memref<4x8x24xf32, #tpu.memory_space<vmem>>, vector<1x8x24xf32>
    %125 = vector.shape_cast %124 : vector<1x8x24xf32> to vector<8x24xf32>
    %126 = vector.extract_strided_slice %108 {offsets = [0, 3], sizes = [8, 1], strides = [1, 1]} : vector<8x4xf32> to vector<8x1xf32>
    %127 = vector.broadcast %126 : vector<8x1xf32> to vector<8x24xf32>
    %128 = arith.mulf %125, %127 : vector<8x24xf32>
    %129 = arith.addf %113, %118 : vector<8x24xf32>
    %130 = arith.addf %129, %123 : vector<8x24xf32>
    %131 = arith.addf %130, %128 : vector<8x24xf32>
    %cst_69 = arith.constant 2.500000e-01 : f32
    %132 = vector.broadcast %cst_69 : f32 to vector<8x24xf32>
    %133 = arith.mulf %131, %132 : vector<8x24xf32>
    %134 = tpu.concatenate %113, %118, %123, %128 in 1 : vector<8x24xf32>, vector<8x24xf32>, vector<8x24xf32>, vector<8x24xf32> -> vector<8x96xf32>
    %cst_70 = arith.constant dense<0.000000e+00> : vector<8x4xf32>
    %135 = tpu.matmul %133, %7, %cst_70 {dimension_numbers = #tpu.dot_dimension_numbers<[1], [0], [0], [1], [0, 0, 1, 1], [], []>} : vector<8x24xf32>, vector<24x4xf32>, vector<8x4xf32> -> vector<8x4xf32>
    %136 = vector.broadcast %8 : vector<1x4xf32> to vector<8x4xf32>
    %137 = arith.addf %135, %136 : vector<8x4xf32>
    %cst_71 = arith.constant 0.000000e+00 : f32
    %138 = vector.broadcast %cst_71 : f32 to vector<8x4xf32>
    %139 = arith.maximumf %137, %138 : vector<8x4xf32>
    %cst_72 = arith.constant dense<0.000000e+00> : vector<8x24xf32>
    %140 = tpu.matmul %139, %9, %cst_72 {dimension_numbers = #tpu.dot_dimension_numbers<[1], [0], [0], [1], [0, 0, 1, 1], [], []>} : vector<8x4xf32>, vector<4x24xf32>, vector<8x24xf32> -> vector<8x24xf32>
    %141 = vector.broadcast %10 : vector<1x24xf32> to vector<8x24xf32>
    %142 = arith.addf %140, %141 : vector<8x24xf32>
    %143 = arith.negf %142 : vector<8x24xf32>
    %144 = math.exp %143 : vector<8x24xf32>
    %cst_73 = arith.constant 1.000000e+00 : f32
    %145 = vector.broadcast %cst_73 : f32 to vector<8x24xf32>
    %146 = arith.addf %145, %144 : vector<8x24xf32>
    %147 = arith.divf %145, %146 : vector<8x24xf32>
    %cst_74 = arith.constant dense<0.000000e+00> : vector<8x24xf32>
    %148 = tpu.matmul %134, %11, %cst_74 {dimension_numbers = #tpu.dot_dimension_numbers<[1], [0], [0], [1], [0, 0, 1, 1], [], []>} : vector<8x96xf32>, vector<96x24xf32>, vector<8x24xf32> -> vector<8x24xf32>
    %149 = vector.broadcast %12 : vector<1x24xf32> to vector<8x24xf32>
    %150 = arith.addf %148, %149 : vector<8x24xf32>
    %151 = arith.mulf %147, %150 : vector<8x24xf32>
    %152 = arith.addf %151, %88 : vector<8x24xf32>
    %c0_75 = arith.constant 0 : index
    %c0_76 = arith.constant 0 : index
    %c0_77 = arith.constant 0 : index
    %153 = vector.load %arg14[%c0_75, %c0_76, %c0_77] : memref<8x8x24xf32, #tpu.memory_space<vmem>>, vector<8x1x24xf32>
    %154 = vector.shape_cast %153 : vector<8x1x24xf32> to vector<8x24xf32>
    %155 = vector.shape_cast %152 : vector<8x24xf32> to vector<8x1x24xf32>
    tpu.vector_store %arg14[%c0_75, %c0_76, %c0_77], %155 {strides = array<i32>} : memref<8x8x24xf32, #tpu.memory_space<vmem>>, vector<8x1x24xf32>,
    %c0_78 = arith.constant 0 : index
    %c0_79 = arith.constant 0 : index
    %c0_80 = arith.constant 0 : index
    %156 = vector.load %arg15[%c0_78, %c0_79, %c0_80] : memref<8x8x1xf32, #tpu.memory_space<vmem>>, vector<8x1x1xf32>
    %157 = vector.shape_cast %156 : vector<8x1x1xf32> to vector<8x1xf32>
    %158 = vector.shape_cast %52 : vector<8x1xf32> to vector<8x1x1xf32>
    tpu.vector_store %arg15[%c0_78, %c0_79, %c0_80], %158 {strides = array<i32>} : memref<8x8x1xf32, #tpu.memory_space<vmem>>, vector<8x1x1xf32>,
    %c0_81 = arith.constant 0 : index
    %c1_82 = arith.constant 1 : index
    %c0_83 = arith.constant 0 : index
    %159 = vector.load %arg1[%c0_81, %c1_82, %c0_83] : memref<8x8x16xf32, #tpu.memory_space<vmem>>, vector<8x1x16xf32>
    %160 = vector.shape_cast %159 : vector<8x1x16xf32> to vector<8x16xf32>
    %c0_84 = arith.constant 0 : index
    %c1_85 = arith.constant 1 : index
    %c0_86 = arith.constant 0 : index
    %161 = vector.load %arg2[%c0_84, %c1_85, %c0_86] : memref<8x8x1xf32, #tpu.memory_space<vmem>>, vector<8x1x1xf32>
    %162 = vector.shape_cast %161 : vector<8x1x1xf32> to vector<8x1xf32>
    %c0_87 = arith.constant 0 : index
    %c0_88 = arith.constant 0 : index
    %163 = vector.load %arg17[%c0_87, %c0_88] : memref<8x24xf32, #tpu.memory_space<vmem>>, vector<8x24xf32>
    %c0_89 = arith.constant 0 : index
    %c0_90 = arith.constant 0 : index
    %164 = vector.load %arg16[%c0_89, %c0_90] : memref<8x24xf32, #tpu.memory_space<vmem>>, vector<8x24xf32>
    %165 = tpu.concatenate %160, %163, %162 in 1 : vector<8x16xf32>, vector<8x24xf32>, vector<8x1xf32> -> vector<8x41xf32>
    %cst_91 = arith.constant dense<0.000000e+00> : vector<8x128xf32>
    %166 = tpu.matmul %165, %3, %cst_91 {dimension_numbers = #tpu.dot_dimension_numbers<[1], [0], [0], [1], [0, 0, 1, 1], [], []>} : vector<8x41xf32>, vector<41x128xf32>, vector<8x128xf32> -> vector<8x128xf32>
    %167 = vector.broadcast %4 : vector<1x128xf32> to vector<8x128xf32>
    %168 = arith.addf %166, %167 : vector<8x128xf32>
    %169 = vector.extract_strided_slice %168 {offsets = [0, 0], sizes = [8, 3], strides = [1, 1]} : vector<8x128xf32> to vector<8x3xf32>
    %cst_92 = arith.constant dense<0xFF800000> : vector<8xf32>
    %170 = vector.multi_reduction <maximumf>, %169, %cst_92 [1] : vector<8x3xf32> to vector<8xf32>
    %cst_93 = arith.constant 0xFF800000 : f32
    %171 = vector.broadcast %cst_93 : f32 to vector<8xf32>
    %172 = arith.maximumf %171, %170 : vector<8xf32>
    %173 = vector.shape_cast %172 : vector<8xf32> to vector<8x1xf32>
    %174 = vector.broadcast %173 : vector<8x1xf32> to vector<8x3xf32>
    %175 = arith.subf %169, %174 : vector<8x3xf32>
    %176 = math.exp %175 : vector<8x3xf32>
    %cst_94 = arith.constant dense<0.000000e+00> : vector<8xf32>
    %177 = vector.multi_reduction <add>, %176, %cst_94 [1] : vector<8x3xf32> to vector<8xf32>
    %178 = vector.shape_cast %177 : vector<8xf32> to vector<8x1xf32>
    %179 = vector.broadcast %178 : vector<8x1xf32> to vector<8x3xf32>
    %180 = arith.divf %176, %179 : vector<8x3xf32>
    %181 = vector.extract_strided_slice %168 {offsets = [0, 3], sizes = [8, 3], strides = [1, 1]} : vector<8x128xf32> to vector<8x3xf32>
    %cst_95 = arith.constant dense<0xFF800000> : vector<8xf32>
    %182 = vector.multi_reduction <maximumf>, %181, %cst_95 [1] : vector<8x3xf32> to vector<8xf32>
    %cst_96 = arith.constant 0xFF800000 : f32
    %183 = vector.broadcast %cst_96 : f32 to vector<8xf32>
    %184 = arith.maximumf %183, %182 : vector<8xf32>
    %185 = vector.shape_cast %184 : vector<8xf32> to vector<8x1xf32>
    %186 = vector.broadcast %185 : vector<8x1xf32> to vector<8x3xf32>
    %187 = arith.subf %181, %186 : vector<8x3xf32>
    %188 = math.exp %187 : vector<8x3xf32>
    %cst_97 = arith.constant dense<0.000000e+00> : vector<8xf32>
    %189 = vector.multi_reduction <add>, %188, %cst_97 [1] : vector<8x3xf32> to vector<8xf32>
    %190 = vector.shape_cast %189 : vector<8xf32> to vector<8x1xf32>
    %191 = vector.broadcast %190 : vector<8x1xf32> to vector<8x3xf32>
    %192 = arith.divf %188, %191 : vector<8x3xf32>
    %cst_98 = arith.constant dense<0.000000e+00> : vector<8x25xf32>
    %193 = tpu.matmul %180, %5, %cst_98 {dimension_numbers = #tpu.dot_dimension_numbers<[1], [0], [0], [1], [0, 0, 1, 1], [], []>} : vector<8x3xf32>, vector<3x25xf32>, vector<8x25xf32> -> vector<8x25xf32>
    %194 = vector.extract_strided_slice %193 {offsets = [0, 0], sizes = [8, 24], strides = [1, 1]} : vector<8x25xf32> to vector<8x24xf32>
    %195 = vector.extract_strided_slice %193 {offsets = [0, 24], sizes = [8, 1], strides = [1, 1]} : vector<8x25xf32> to vector<8x1xf32>
    %cst_99 = arith.constant 1.000000e+00 : f32
    %196 = vector.broadcast %cst_99 : f32 to vector<8x1xf32>
    %197 = arith.subf %196, %195 : vector<8x1xf32>
    %cst_100 = arith.constant dense<0.000000e+00> : vector<8x24xf32>
    %198 = tpu.matmul %192, %6, %cst_100 {dimension_numbers = #tpu.dot_dimension_numbers<[1], [0], [0], [1], [0, 0, 1, 1], [], []>} : vector<8x3xf32>, vector<3x24xf32>, vector<8x24xf32> -> vector<8x24xf32>
    %cst_101 = arith.constant 1.000000e+00 : f32
    %199 = vector.broadcast %cst_101 : f32 to vector<8x24xf32>
    %200 = arith.subf %199, %198 : vector<8x24xf32>
    %201 = vector.extract_strided_slice %168 {offsets = [0, 6], sizes = [8, 24], strides = [1, 1]} : vector<8x128xf32> to vector<8x24xf32>
    %202 = arith.negf %201 : vector<8x24xf32>
    %203 = math.exp %202 : vector<8x24xf32>
    %cst_102 = arith.constant 1.000000e+00 : f32
    %204 = vector.broadcast %cst_102 : f32 to vector<8x24xf32>
    %205 = arith.addf %204, %203 : vector<8x24xf32>
    %206 = arith.divf %204, %205 : vector<8x24xf32>
    %207 = vector.extract_strided_slice %168 {offsets = [0, 30], sizes = [8, 24], strides = [1, 1]} : vector<8x128xf32> to vector<8x24xf32>
    %208 = arith.negf %207 : vector<8x24xf32>
    %209 = math.exp %208 : vector<8x24xf32>
    %cst_103 = arith.constant 1.000000e+00 : f32
    %210 = vector.broadcast %cst_103 : f32 to vector<8x24xf32>
    %211 = arith.addf %210, %209 : vector<8x24xf32>
    %212 = arith.divf %210, %211 : vector<8x24xf32>
    %213 = vector.extract_strided_slice %168 {offsets = [0, 54], sizes = [8, 24], strides = [1, 1]} : vector<8x128xf32> to vector<8x24xf32>
    %214 = arith.negf %213 : vector<8x24xf32>
    %215 = math.exp %214 : vector<8x24xf32>
    %cst_104 = arith.constant 1.000000e+00 : f32
    %216 = vector.broadcast %cst_104 : f32 to vector<8x24xf32>
    %217 = arith.addf %216, %215 : vector<8x24xf32>
    %218 = arith.divf %216, %217 : vector<8x24xf32>
    %219 = vector.extract_strided_slice %168 {offsets = [0, 78], sizes = [8, 24], strides = [1, 1]} : vector<8x128xf32> to vector<8x24xf32>
    %220 = math.tanh %219 : vector<8x24xf32>
    %221 = arith.mulf %194, %200 : vector<8x24xf32>
    %222 = arith.mulf %206, %164 : vector<8x24xf32>
    %223 = arith.mulf %212, %220 : vector<8x24xf32>
    %224 = arith.addf %222, %223 : vector<8x24xf32>
    %225 = arith.mulf %221, %224 : vector<8x24xf32>
    %226 = arith.subf %194, %221 : vector<8x24xf32>
    %227 = arith.mulf %226, %164 : vector<8x24xf32>
    %228 = arith.addf %225, %227 : vector<8x24xf32>
    %229 = arith.subf %200, %221 : vector<8x24xf32>
    %230 = arith.mulf %229, %220 : vector<8x24xf32>
    %231 = arith.addf %228, %230 : vector<8x24xf32>
    %232 = math.tanh %231 : vector<8x24xf32>
    %233 = arith.mulf %218, %232 : vector<8x24xf32>
    %c0_105 = arith.constant 0 : index
    %c0_106 = arith.constant 0 : index
    %234 = vector.load %arg16[%c0_105, %c0_106] : memref<8x24xf32, #tpu.memory_space<vmem>>, vector<8x24xf32>
    tpu.vector_store %arg16[%c0_105, %c0_106], %231 {strides = array<i32>} : memref<8x24xf32, #tpu.memory_space<vmem>>, vector<8x24xf32>,
    %c0_107 = arith.constant 0 : index
    %c0_108 = arith.constant 0 : index
    %235 = vector.load %arg17[%c0_107, %c0_108] : memref<8x24xf32, #tpu.memory_space<vmem>>, vector<8x24xf32>
    tpu.vector_store %arg17[%c0_107, %c0_108], %233 {strides = array<i32>} : memref<8x24xf32, #tpu.memory_space<vmem>>, vector<8x24xf32>,
    %c1_109 = arith.constant 1 : index
    %c0_110 = arith.constant 0 : index
    %c0_111 = arith.constant 0 : index
    %236 = vector.load %arg18[%c1_109, %c0_110, %c0_111] : memref<4x8x24xf32, #tpu.memory_space<vmem>>, vector<1x8x24xf32>
    %237 = vector.shape_cast %236 : vector<1x8x24xf32> to vector<8x24xf32>
    %238 = vector.shape_cast %233 : vector<8x24xf32> to vector<1x8x24xf32>
    tpu.vector_store %arg18[%c1_109, %c0_110, %c0_111], %238 {strides = array<i32>} : memref<4x8x24xf32, #tpu.memory_space<vmem>>, vector<1x8x24xf32>,
    %c0_112 = arith.constant 0 : index
    %c1_113 = arith.constant 1 : index
    %239 = vector.load %arg19[%c0_112, %c1_113] : memref<8x4xf32, #tpu.memory_space<vmem>>, vector<8x3xf32>
    %240 = tpu.concatenate %239, %197 in 1 : vector<8x3xf32>, vector<8x1xf32> -> vector<8x4xf32>
    %c0_114 = arith.constant 0 : index
    %c0_115 = arith.constant 0 : index
    %241 = vector.load %arg19[%c0_114, %c0_115] : memref<8x4xf32, #tpu.memory_space<vmem>>, vector<8x4xf32>
    tpu.vector_store %arg19[%c0_114, %c0_115], %240 {strides = array<i32>} : memref<8x4xf32, #tpu.memory_space<vmem>>, vector<8x4xf32>,
    %cst_116 = arith.constant dense<0.000000e+00> : vector<8x4xf32>
    %242 = tpu.matmul %240, %13, %cst_116 {dimension_numbers = #tpu.dot_dimension_numbers<[1], [0], [0], [1], [0, 0, 1, 1], [], []>} : vector<8x4xf32>, vector<4x4xf32>, vector<8x4xf32> -> vector<8x4xf32>
    %cst_117 = arith.constant dense<0xFF800000> : vector<8xf32>
    %243 = vector.multi_reduction <maximumf>, %242, %cst_117 [1] : vector<8x4xf32> to vector<8xf32>
    %cst_118 = arith.constant 0xFF800000 : f32
    %244 = vector.broadcast %cst_118 : f32 to vector<8xf32>
    %245 = arith.maximumf %244, %243 : vector<8xf32>
    %246 = vector.shape_cast %245 : vector<8xf32> to vector<8x1xf32>
    %247 = vector.broadcast %246 : vector<8x1xf32> to vector<8x4xf32>
    %248 = arith.subf %242, %247 : vector<8x4xf32>
    %249 = math.exp %248 : vector<8x4xf32>
    %cst_119 = arith.constant dense<0.000000e+00> : vector<8xf32>
    %250 = vector.multi_reduction <add>, %249, %cst_119 [1] : vector<8x4xf32> to vector<8xf32>
    %251 = vector.shape_cast %250 : vector<8xf32> to vector<8x1xf32>
    %252 = vector.broadcast %251 : vector<8x1xf32> to vector<8x4xf32>
    %253 = arith.divf %249, %252 : vector<8x4xf32>
    %c2_120 = arith.constant 2 : index
    %c0_121 = arith.constant 0 : index
    %c0_122 = arith.constant 0 : index
    %254 = vector.load %arg18[%c2_120, %c0_121, %c0_122] : memref<4x8x24xf32, #tpu.memory_space<vmem>>, vector<1x8x24xf32>
    %255 = vector.shape_cast %254 : vector<1x8x24xf32> to vector<8x24xf32>
    %256 = vector.extract_strided_slice %253 {offsets = [0, 0], sizes = [8, 1], strides = [1, 1]} : vector<8x4xf32> to vector<8x1xf32>
    %257 = vector.broadcast %256 : vector<8x1xf32> to vector<8x24xf32>
    %258 = arith.mulf %255, %257 : vector<8x24xf32>
    %c3_123 = arith.constant 3 : index
    %c0_124 = arith.constant 0 : index
    %c0_125 = arith.constant 0 : index
    %259 = vector.load %arg18[%c3_123, %c0_124, %c0_125] : memref<4x8x24xf32, #tpu.memory_space<vmem>>, vector<1x8x24xf32>
    %260 = vector.shape_cast %259 : vector<1x8x24xf32> to vector<8x24xf32>
    %261 = vector.extract_strided_slice %253 {offsets = [0, 1], sizes = [8, 1], strides = [1, 1]} : vector<8x4xf32> to vector<8x1xf32>
    %262 = vector.broadcast %261 : vector<8x1xf32> to vector<8x24xf32>
    %263 = arith.mulf %260, %262 : vector<8x24xf32>
    %c0_126 = arith.constant 0 : index
    %c0_127 = arith.constant 0 : index
    %c0_128 = arith.constant 0 : index
    %264 = vector.load %arg18[%c0_126, %c0_127, %c0_128] : memref<4x8x24xf32, #tpu.memory_space<vmem>>, vector<1x8x24xf32>
    %265 = vector.shape_cast %264 : vector<1x8x24xf32> to vector<8x24xf32>
    %266 = vector.extract_strided_slice %253 {offsets = [0, 2], sizes = [8, 1], strides = [1, 1]} : vector<8x4xf32> to vector<8x1xf32>
    %267 = vector.broadcast %266 : vector<8x1xf32> to vector<8x24xf32>
    %268 = arith.mulf %265, %267 : vector<8x24xf32>
    %c1_129 = arith.constant 1 : index
    %c0_130 = arith.constant 0 : index
    %c0_131 = arith.constant 0 : index
    %269 = vector.load %arg18[%c1_129, %c0_130, %c0_131] : memref<4x8x24xf32, #tpu.memory_space<vmem>>, vector<1x8x24xf32>
    %270 = vector.shape_cast %269 : vector<1x8x24xf32> to vector<8x24xf32>
    %271 = vector.extract_strided_slice %253 {offsets = [0, 3], sizes = [8, 1], strides = [1, 1]} : vector<8x4xf32> to vector<8x1xf32>
    %272 = vector.broadcast %271 : vector<8x1xf32> to vector<8x24xf32>
    %273 = arith.mulf %270, %272 : vector<8x24xf32>
    %274 = arith.addf %258, %263 : vector<8x24xf32>
    %275 = arith.addf %274, %268 : vector<8x24xf32>
    %276 = arith.addf %275, %273 : vector<8x24xf32>
    %cst_132 = arith.constant 2.500000e-01 : f32
    %277 = vector.broadcast %cst_132 : f32 to vector<8x24xf32>
    %278 = arith.mulf %276, %277 : vector<8x24xf32>
    %279 = tpu.concatenate %258, %263, %268, %273 in 1 : vector<8x24xf32>, vector<8x24xf32>, vector<8x24xf32>, vector<8x24xf32> -> vector<8x96xf32>
    %cst_133 = arith.constant dense<0.000000e+00> : vector<8x4xf32>
    %280 = tpu.matmul %278, %7, %cst_133 {dimension_numbers = #tpu.dot_dimension_numbers<[1], [0], [0], [1], [0, 0, 1, 1], [], []>} : vector<8x24xf32>, vector<24x4xf32>, vector<8x4xf32> -> vector<8x4xf32>
    %281 = vector.broadcast %8 : vector<1x4xf32> to vector<8x4xf32>
    %282 = arith.addf %280, %281 : vector<8x4xf32>
    %cst_134 = arith.constant 0.000000e+00 : f32
    %283 = vector.broadcast %cst_134 : f32 to vector<8x4xf32>
    %284 = arith.maximumf %282, %283 : vector<8x4xf32>
    %cst_135 = arith.constant dense<0.000000e+00> : vector<8x24xf32>
    %285 = tpu.matmul %284, %9, %cst_135 {dimension_numbers = #tpu.dot_dimension_numbers<[1], [0], [0], [1], [0, 0, 1, 1], [], []>} : vector<8x4xf32>, vector<4x24xf32>, vector<8x24xf32> -> vector<8x24xf32>
    %286 = vector.broadcast %10 : vector<1x24xf32> to vector<8x24xf32>
    %287 = arith.addf %285, %286 : vector<8x24xf32>
    %288 = arith.negf %287 : vector<8x24xf32>
    %289 = math.exp %288 : vector<8x24xf32>
    %cst_136 = arith.constant 1.000000e+00 : f32
    %290 = vector.broadcast %cst_136 : f32 to vector<8x24xf32>
    %291 = arith.addf %290, %289 : vector<8x24xf32>
    %292 = arith.divf %290, %291 : vector<8x24xf32>
    %cst_137 = arith.constant dense<0.000000e+00> : vector<8x24xf32>
    %293 = tpu.matmul %279, %11, %cst_137 {dimension_numbers = #tpu.dot_dimension_numbers<[1], [0], [0], [1], [0, 0, 1, 1], [], []>} : vector<8x96xf32>, vector<96x24xf32>, vector<8x24xf32> -> vector<8x24xf32>
    %294 = vector.broadcast %12 : vector<1x24xf32> to vector<8x24xf32>
    %295 = arith.addf %293, %294 : vector<8x24xf32>
    %296 = arith.mulf %292, %295 : vector<8x24xf32>
    %297 = arith.addf %296, %233 : vector<8x24xf32>
    %c0_138 = arith.constant 0 : index
    %c1_139 = arith.constant 1 : index
    %c0_140 = arith.constant 0 : index
    %298 = vector.load %arg14[%c0_138, %c1_139, %c0_140] : memref<8x8x24xf32, #tpu.memory_space<vmem>>, vector<8x1x24xf32>
    %299 = vector.shape_cast %298 : vector<8x1x24xf32> to vector<8x24xf32>
    %300 = vector.shape_cast %297 : vector<8x24xf32> to vector<8x1x24xf32>
    tpu.vector_store %arg14[%c0_138, %c1_139, %c0_140], %300 {strides = array<i32>} : memref<8x8x24xf32, #tpu.memory_space<vmem>>, vector<8x1x24xf32>,
    %c0_141 = arith.constant 0 : index
    %c1_142 = arith.constant 1 : index
    %c0_143 = arith.constant 0 : index
    %301 = vector.load %arg15[%c0_141, %c1_142, %c0_143] : memref<8x8x1xf32, #tpu.memory_space<vmem>>, vector<8x1x1xf32>
    %302 = vector.shape_cast %301 : vector<8x1x1xf32> to vector<8x1xf32>
    %303 = vector.shape_cast %197 : vector<8x1xf32> to vector<8x1x1xf32>
    tpu.vector_store %arg15[%c0_141, %c1_142, %c0_143], %303 {strides = array<i32>} : memref<8x8x1xf32, #tpu.memory_space<vmem>>, vector<8x1x1xf32>,
    %c0_144 = arith.constant 0 : index
    %c2_145 = arith.constant 2 : index
    %c0_146 = arith.constant 0 : index
    %304 = vector.load %arg1[%c0_144, %c2_145, %c0_146] : memref<8x8x16xf32, #tpu.memory_space<vmem>>, vector<8x1x16xf32>
    %305 = vector.shape_cast %304 : vector<8x1x16xf32> to vector<8x16xf32>
    %c0_147 = arith.constant 0 : index
    %c2_148 = arith.constant 2 : index
    %c0_149 = arith.constant 0 : index
    %306 = vector.load %arg2[%c0_147, %c2_148, %c0_149] : memref<8x8x1xf32, #tpu.memory_space<vmem>>, vector<8x1x1xf32>
    %307 = vector.shape_cast %306 : vector<8x1x1xf32> to vector<8x1xf32>
    %c0_150 = arith.constant 0 : index
    %c0_151 = arith.constant 0 : index
    %308 = vector.load %arg17[%c0_150, %c0_151] : memref<8x24xf32, #tpu.memory_space<vmem>>, vector<8x24xf32>
    %c0_152 = arith.constant 0 : index
    %c0_153 = arith.constant 0 : index
    %309 = vector.load %arg16[%c0_152, %c0_153] : memref<8x24xf32, #tpu.memory_space<vmem>>, vector<8x24xf32>
    %310 = tpu.concatenate %305, %308, %307 in 1 : vector<8x16xf32>, vector<8x24xf32>, vector<8x1xf32> -> vector<8x41xf32>
    %cst_154 = arith.constant dense<0.000000e+00> : vector<8x128xf32>
    %311 = tpu.matmul %310, %3, %cst_154 {dimension_numbers = #tpu.dot_dimension_numbers<[1], [0], [0], [1], [0, 0, 1, 1], [], []>} : vector<8x41xf32>, vector<41x128xf32>, vector<8x128xf32> -> vector<8x128xf32>
    %312 = vector.broadcast %4 : vector<1x128xf32> to vector<8x128xf32>
    %313 = arith.addf %311, %312 : vector<8x128xf32>
    %314 = vector.extract_strided_slice %313 {offsets = [0, 0], sizes = [8, 3], strides = [1, 1]} : vector<8x128xf32> to vector<8x3xf32>
    %cst_155 = arith.constant dense<0xFF800000> : vector<8xf32>
    %315 = vector.multi_reduction <maximumf>, %314, %cst_155 [1] : vector<8x3xf32> to vector<8xf32>
    %cst_156 = arith.constant 0xFF800000 : f32
    %316 = vector.broadcast %cst_156 : f32 to vector<8xf32>
    %317 = arith.maximumf %316, %315 : vector<8xf32>
    %318 = vector.shape_cast %317 : vector<8xf32> to vector<8x1xf32>
    %319 = vector.broadcast %318 : vector<8x1xf32> to vector<8x3xf32>
    %320 = arith.subf %314, %319 : vector<8x3xf32>
    %321 = math.exp %320 : vector<8x3xf32>
    %cst_157 = arith.constant dense<0.000000e+00> : vector<8xf32>
    %322 = vector.multi_reduction <add>, %321, %cst_157 [1] : vector<8x3xf32> to vector<8xf32>
    %323 = vector.shape_cast %322 : vector<8xf32> to vector<8x1xf32>
    %324 = vector.broadcast %323 : vector<8x1xf32> to vector<8x3xf32>
    %325 = arith.divf %321, %324 : vector<8x3xf32>
    %326 = vector.extract_strided_slice %313 {offsets = [0, 3], sizes = [8, 3], strides = [1, 1]} : vector<8x128xf32> to vector<8x3xf32>
    %cst_158 = arith.constant dense<0xFF800000> : vector<8xf32>
    %327 = vector.multi_reduction <maximumf>, %326, %cst_158 [1] : vector<8x3xf32> to vector<8xf32>
    %cst_159 = arith.constant 0xFF800000 : f32
    %328 = vector.broadcast %cst_159 : f32 to vector<8xf32>
    %329 = arith.maximumf %328, %327 : vector<8xf32>
    %330 = vector.shape_cast %329 : vector<8xf32> to vector<8x1xf32>
    %331 = vector.broadcast %330 : vector<8x1xf32> to vector<8x3xf32>
    %332 = arith.subf %326, %331 : vector<8x3xf32>
    %333 = math.exp %332 : vector<8x3xf32>
    %cst_160 = arith.constant dense<0.000000e+00> : vector<8xf32>
    %334 = vector.multi_reduction <add>, %333, %cst_160 [1] : vector<8x3xf32> to vector<8xf32>
    %335 = vector.shape_cast %334 : vector<8xf32> to vector<8x1xf32>
    %336 = vector.broadcast %335 : vector<8x1xf32> to vector<8x3xf32>
    %337 = arith.divf %333, %336 : vector<8x3xf32>
    %cst_161 = arith.constant dense<0.000000e+00> : vector<8x25xf32>
    %338 = tpu.matmul %325, %5, %cst_161 {dimension_numbers = #tpu.dot_dimension_numbers<[1], [0], [0], [1], [0, 0, 1, 1], [], []>} : vector<8x3xf32>, vector<3x25xf32>, vector<8x25xf32> -> vector<8x25xf32>
    %339 = vector.extract_strided_slice %338 {offsets = [0, 0], sizes = [8, 24], strides = [1, 1]} : vector<8x25xf32> to vector<8x24xf32>
    %340 = vector.extract_strided_slice %338 {offsets = [0, 24], sizes = [8, 1], strides = [1, 1]} : vector<8x25xf32> to vector<8x1xf32>
    %cst_162 = arith.constant 1.000000e+00 : f32
    %341 = vector.broadcast %cst_162 : f32 to vector<8x1xf32>
    %342 = arith.subf %341, %340 : vector<8x1xf32>
    %cst_163 = arith.constant dense<0.000000e+00> : vector<8x24xf32>
    %343 = tpu.matmul %337, %6, %cst_163 {dimension_numbers = #tpu.dot_dimension_numbers<[1], [0], [0], [1], [0, 0, 1, 1], [], []>} : vector<8x3xf32>, vector<3x24xf32>, vector<8x24xf32> -> vector<8x24xf32>
    %cst_164 = arith.constant 1.000000e+00 : f32
    %344 = vector.broadcast %cst_164 : f32 to vector<8x24xf32>
    %345 = arith.subf %344, %343 : vector<8x24xf32>
    %346 = vector.extract_strided_slice %313 {offsets = [0, 6], sizes = [8, 24], strides = [1, 1]} : vector<8x128xf32> to vector<8x24xf32>
    %347 = arith.negf %346 : vector<8x24xf32>
    %348 = math.exp %347 : vector<8x24xf32>
    %cst_165 = arith.constant 1.000000e+00 : f32
    %349 = vector.broadcast %cst_165 : f32 to vector<8x24xf32>
    %350 = arith.addf %349, %348 : vector<8x24xf32>
    %351 = arith.divf %349, %350 : vector<8x24xf32>
    %352 = vector.extract_strided_slice %313 {offsets = [0, 30], sizes = [8, 24], strides = [1, 1]} : vector<8x128xf32> to vector<8x24xf32>
    %353 = arith.negf %352 : vector<8x24xf32>
    %354 = math.exp %353 : vector<8x24xf32>
    %cst_166 = arith.constant 1.000000e+00 : f32
    %355 = vector.broadcast %cst_166 : f32 to vector<8x24xf32>
    %356 = arith.addf %355, %354 : vector<8x24xf32>
    %357 = arith.divf %355, %356 : vector<8x24xf32>
    %358 = vector.extract_strided_slice %313 {offsets = [0, 54], sizes = [8, 24], strides = [1, 1]} : vector<8x128xf32> to vector<8x24xf32>
    %359 = arith.negf %358 : vector<8x24xf32>
    %360 = math.exp %359 : vector<8x24xf32>
    %cst_167 = arith.constant 1.000000e+00 : f32
    %361 = vector.broadcast %cst_167 : f32 to vector<8x24xf32>
    %362 = arith.addf %361, %360 : vector<8x24xf32>
    %363 = arith.divf %361, %362 : vector<8x24xf32>
    %364 = vector.extract_strided_slice %313 {offsets = [0, 78], sizes = [8, 24], strides = [1, 1]} : vector<8x128xf32> to vector<8x24xf32>
    %365 = math.tanh %364 : vector<8x24xf32>
    %366 = arith.mulf %339, %345 : vector<8x24xf32>
    %367 = arith.mulf %351, %309 : vector<8x24xf32>
    %368 = arith.mulf %357, %365 : vector<8x24xf32>
    %369 = arith.addf %367, %368 : vector<8x24xf32>
    %370 = arith.mulf %366, %369 : vector<8x24xf32>
    %371 = arith.subf %339, %366 : vector<8x24xf32>
    %372 = arith.mulf %371, %309 : vector<8x24xf32>
    %373 = arith.addf %370, %372 : vector<8x24xf32>
    %374 = arith.subf %345, %366 : vector<8x24xf32>
    %375 = arith.mulf %374, %365 : vector<8x24xf32>
    %376 = arith.addf %373, %375 : vector<8x24xf32>
    %377 = math.tanh %376 : vector<8x24xf32>
    %378 = arith.mulf %363, %377 : vector<8x24xf32>
    %c0_168 = arith.constant 0 : index
    %c0_169 = arith.constant 0 : index
    %379 = vector.load %arg16[%c0_168, %c0_169] : memref<8x24xf32, #tpu.memory_space<vmem>>, vector<8x24xf32>
    tpu.vector_store %arg16[%c0_168, %c0_169], %376 {strides = array<i32>} : memref<8x24xf32, #tpu.memory_space<vmem>>, vector<8x24xf32>,
    %c0_170 = arith.constant 0 : index
    %c0_171 = arith.constant 0 : index
    %380 = vector.load %arg17[%c0_170, %c0_171] : memref<8x24xf32, #tpu.memory_space<vmem>>, vector<8x24xf32>
    tpu.vector_store %arg17[%c0_170, %c0_171], %378 {strides = array<i32>} : memref<8x24xf32, #tpu.memory_space<vmem>>, vector<8x24xf32>,
    %c2_172 = arith.constant 2 : index
    %c0_173 = arith.constant 0 : index
    %c0_174 = arith.constant 0 : index
    %381 = vector.load %arg18[%c2_172, %c0_173, %c0_174] : memref<4x8x24xf32, #tpu.memory_space<vmem>>, vector<1x8x24xf32>
    %382 = vector.shape_cast %381 : vector<1x8x24xf32> to vector<8x24xf32>
    %383 = vector.shape_cast %378 : vector<8x24xf32> to vector<1x8x24xf32>
    tpu.vector_store %arg18[%c2_172, %c0_173, %c0_174], %383 {strides = array<i32>} : memref<4x8x24xf32, #tpu.memory_space<vmem>>, vector<1x8x24xf32>,
    %c0_175 = arith.constant 0 : index
    %c1_176 = arith.constant 1 : index
    %384 = vector.load %arg19[%c0_175, %c1_176] : memref<8x4xf32, #tpu.memory_space<vmem>>, vector<8x3xf32>
    %385 = tpu.concatenate %384, %342 in 1 : vector<8x3xf32>, vector<8x1xf32> -> vector<8x4xf32>
    %c0_177 = arith.constant 0 : index
    %c0_178 = arith.constant 0 : index
    %386 = vector.load %arg19[%c0_177, %c0_178] : memref<8x4xf32, #tpu.memory_space<vmem>>, vector<8x4xf32>
    tpu.vector_store %arg19[%c0_177, %c0_178], %385 {strides = array<i32>} : memref<8x4xf32, #tpu.memory_space<vmem>>, vector<8x4xf32>,
    %cst_179 = arith.constant dense<0.000000e+00> : vector<8x4xf32>
    %387 = tpu.matmul %385, %13, %cst_179 {dimension_numbers = #tpu.dot_dimension_numbers<[1], [0], [0], [1], [0, 0, 1, 1], [], []>} : vector<8x4xf32>, vector<4x4xf32>, vector<8x4xf32> -> vector<8x4xf32>
    %cst_180 = arith.constant dense<0xFF800000> : vector<8xf32>
    %388 = vector.multi_reduction <maximumf>, %387, %cst_180 [1] : vector<8x4xf32> to vector<8xf32>
    %cst_181 = arith.constant 0xFF800000 : f32
    %389 = vector.broadcast %cst_181 : f32 to vector<8xf32>
    %390 = arith.maximumf %389, %388 : vector<8xf32>
    %391 = vector.shape_cast %390 : vector<8xf32> to vector<8x1xf32>
    %392 = vector.broadcast %391 : vector<8x1xf32> to vector<8x4xf32>
    %393 = arith.subf %387, %392 : vector<8x4xf32>
    %394 = math.exp %393 : vector<8x4xf32>
    %cst_182 = arith.constant dense<0.000000e+00> : vector<8xf32>
    %395 = vector.multi_reduction <add>, %394, %cst_182 [1] : vector<8x4xf32> to vector<8xf32>
    %396 = vector.shape_cast %395 : vector<8xf32> to vector<8x1xf32>
    %397 = vector.broadcast %396 : vector<8x1xf32> to vector<8x4xf32>
    %398 = arith.divf %394, %397 : vector<8x4xf32>
    %c3_183 = arith.constant 3 : index
    %c0_184 = arith.constant 0 : index
    %c0_185 = arith.constant 0 : index
    %399 = vector.load %arg18[%c3_183, %c0_184, %c0_185] : memref<4x8x24xf32, #tpu.memory_space<vmem>>, vector<1x8x24xf32>
    %400 = vector.shape_cast %399 : vector<1x8x24xf32> to vector<8x24xf32>
    %401 = vector.extract_strided_slice %398 {offsets = [0, 0], sizes = [8, 1], strides = [1, 1]} : vector<8x4xf32> to vector<8x1xf32>
    %402 = vector.broadcast %401 : vector<8x1xf32> to vector<8x24xf32>
    %403 = arith.mulf %400, %402 : vector<8x24xf32>
    %c0_186 = arith.constant 0 : index
    %c0_187 = arith.constant 0 : index
    %c0_188 = arith.constant 0 : index
    %404 = vector.load %arg18[%c0_186, %c0_187, %c0_188] : memref<4x8x24xf32, #tpu.memory_space<vmem>>, vector<1x8x24xf32>
    %405 = vector.shape_cast %404 : vector<1x8x24xf32> to vector<8x24xf32>
    %406 = vector.extract_strided_slice %398 {offsets = [0, 1], sizes = [8, 1], strides = [1, 1]} : vector<8x4xf32> to vector<8x1xf32>
    %407 = vector.broadcast %406 : vector<8x1xf32> to vector<8x24xf32>
    %408 = arith.mulf %405, %407 : vector<8x24xf32>
    %c1_189 = arith.constant 1 : index
    %c0_190 = arith.constant 0 : index
    %c0_191 = arith.constant 0 : index
    %409 = vector.load %arg18[%c1_189, %c0_190, %c0_191] : memref<4x8x24xf32, #tpu.memory_space<vmem>>, vector<1x8x24xf32>
    %410 = vector.shape_cast %409 : vector<1x8x24xf32> to vector<8x24xf32>
    %411 = vector.extract_strided_slice %398 {offsets = [0, 2], sizes = [8, 1], strides = [1, 1]} : vector<8x4xf32> to vector<8x1xf32>
    %412 = vector.broadcast %411 : vector<8x1xf32> to vector<8x24xf32>
    %413 = arith.mulf %410, %412 : vector<8x24xf32>
    %c2_192 = arith.constant 2 : index
    %c0_193 = arith.constant 0 : index
    %c0_194 = arith.constant 0 : index
    %414 = vector.load %arg18[%c2_192, %c0_193, %c0_194] : memref<4x8x24xf32, #tpu.memory_space<vmem>>, vector<1x8x24xf32>
    %415 = vector.shape_cast %414 : vector<1x8x24xf32> to vector<8x24xf32>
    %416 = vector.extract_strided_slice %398 {offsets = [0, 3], sizes = [8, 1], strides = [1, 1]} : vector<8x4xf32> to vector<8x1xf32>
    %417 = vector.broadcast %416 : vector<8x1xf32> to vector<8x24xf32>
    %418 = arith.mulf %415, %417 : vector<8x24xf32>
    %419 = arith.addf %403, %408 : vector<8x24xf32>
    %420 = arith.addf %419, %413 : vector<8x24xf32>
    %421 = arith.addf %420, %418 : vector<8x24xf32>
    %cst_195 = arith.constant 2.500000e-01 : f32
    %422 = vector.broadcast %cst_195 : f32 to vector<8x24xf32>
    %423 = arith.mulf %421, %422 : vector<8x24xf32>
    %424 = tpu.concatenate %403, %408, %413, %418 in 1 : vector<8x24xf32>, vector<8x24xf32>, vector<8x24xf32>, vector<8x24xf32> -> vector<8x96xf32>
    %cst_196 = arith.constant dense<0.000000e+00> : vector<8x4xf32>
    %425 = tpu.matmul %423, %7, %cst_196 {dimension_numbers = #tpu.dot_dimension_numbers<[1], [0], [0], [1], [0, 0, 1, 1], [], []>} : vector<8x24xf32>, vector<24x4xf32>, vector<8x4xf32> -> vector<8x4xf32>
    %426 = vector.broadcast %8 : vector<1x4xf32> to vector<8x4xf32>
    %427 = arith.addf %425, %426 : vector<8x4xf32>
    %cst_197 = arith.constant 0.000000e+00 : f32
    %428 = vector.broadcast %cst_197 : f32 to vector<8x4xf32>
    %429 = arith.maximumf %427, %428 : vector<8x4xf32>
    %cst_198 = arith.constant dense<0.000000e+00> : vector<8x24xf32>
    %430 = tpu.matmul %429, %9, %cst_198 {dimension_numbers = #tpu.dot_dimension_numbers<[1], [0], [0], [1], [0, 0, 1, 1], [], []>} : vector<8x4xf32>, vector<4x24xf32>, vector<8x24xf32> -> vector<8x24xf32>
    %431 = vector.broadcast %10 : vector<1x24xf32> to vector<8x24xf32>
    %432 = arith.addf %430, %431 : vector<8x24xf32>
    %433 = arith.negf %432 : vector<8x24xf32>
    %434 = math.exp %433 : vector<8x24xf32>
    %cst_199 = arith.constant 1.000000e+00 : f32
    %435 = vector.broadcast %cst_199 : f32 to vector<8x24xf32>
    %436 = arith.addf %435, %434 : vector<8x24xf32>
    %437 = arith.divf %435, %436 : vector<8x24xf32>
    %cst_200 = arith.constant dense<0.000000e+00> : vector<8x24xf32>
    %438 = tpu.matmul %424, %11, %cst_200 {dimension_numbers = #tpu.dot_dimension_numbers<[1], [0], [0], [1], [0, 0, 1, 1], [], []>} : vector<8x96xf32>, vector<96x24xf32>, vector<8x24xf32> -> vector<8x24xf32>
    %439 = vector.broadcast %12 : vector<1x24xf32> to vector<8x24xf32>
    %440 = arith.addf %438, %439 : vector<8x24xf32>
    %441 = arith.mulf %437, %440 : vector<8x24xf32>
    %442 = arith.addf %441, %378 : vector<8x24xf32>
    %c0_201 = arith.constant 0 : index
    %c2_202 = arith.constant 2 : index
    %c0_203 = arith.constant 0 : index
    %443 = vector.load %arg14[%c0_201, %c2_202, %c0_203] : memref<8x8x24xf32, #tpu.memory_space<vmem>>, vector<8x1x24xf32>
    %444 = vector.shape_cast %443 : vector<8x1x24xf32> to vector<8x24xf32>
    %445 = vector.shape_cast %442 : vector<8x24xf32> to vector<8x1x24xf32>
    tpu.vector_store %arg14[%c0_201, %c2_202, %c0_203], %445 {strides = array<i32>} : memref<8x8x24xf32, #tpu.memory_space<vmem>>, vector<8x1x24xf32>,
    %c0_204 = arith.constant 0 : index
    %c2_205 = arith.constant 2 : index
    %c0_206 = arith.constant 0 : index
    %446 = vector.load %arg15[%c0_204, %c2_205, %c0_206] : memref<8x8x1xf32, #tpu.memory_space<vmem>>, vector<8x1x1xf32>
    %447 = vector.shape_cast %446 : vector<8x1x1xf32> to vector<8x1xf32>
    %448 = vector.shape_cast %342 : vector<8x1xf32> to vector<8x1x1xf32>
    tpu.vector_store %arg15[%c0_204, %c2_205, %c0_206], %448 {strides = array<i32>} : memref<8x8x1xf32, #tpu.memory_space<vmem>>, vector<8x1x1xf32>,
    %c0_207 = arith.constant 0 : index
    %c3_208 = arith.constant 3 : index
    %c0_209 = arith.constant 0 : index
    %449 = vector.load %arg1[%c0_207, %c3_208, %c0_209] : memref<8x8x16xf32, #tpu.memory_space<vmem>>, vector<8x1x16xf32>
    %450 = vector.shape_cast %449 : vector<8x1x16xf32> to vector<8x16xf32>
    %c0_210 = arith.constant 0 : index
    %c3_211 = arith.constant 3 : index
    %c0_212 = arith.constant 0 : index
    %451 = vector.load %arg2[%c0_210, %c3_211, %c0_212] : memref<8x8x1xf32, #tpu.memory_space<vmem>>, vector<8x1x1xf32>
    %452 = vector.shape_cast %451 : vector<8x1x1xf32> to vector<8x1xf32>
    %c0_213 = arith.constant 0 : index
    %c0_214 = arith.constant 0 : index
    %453 = vector.load %arg17[%c0_213, %c0_214] : memref<8x24xf32, #tpu.memory_space<vmem>>, vector<8x24xf32>
    %c0_215 = arith.constant 0 : index
    %c0_216 = arith.constant 0 : index
    %454 = vector.load %arg16[%c0_215, %c0_216] : memref<8x24xf32, #tpu.memory_space<vmem>>, vector<8x24xf32>
    %455 = tpu.concatenate %450, %453, %452 in 1 : vector<8x16xf32>, vector<8x24xf32>, vector<8x1xf32> -> vector<8x41xf32>
    %cst_217 = arith.constant dense<0.000000e+00> : vector<8x128xf32>
    %456 = tpu.matmul %455, %3, %cst_217 {dimension_numbers = #tpu.dot_dimension_numbers<[1], [0], [0], [1], [0, 0, 1, 1], [], []>} : vector<8x41xf32>, vector<41x128xf32>, vector<8x128xf32> -> vector<8x128xf32>
    %457 = vector.broadcast %4 : vector<1x128xf32> to vector<8x128xf32>
    %458 = arith.addf %456, %457 : vector<8x128xf32>
    %459 = vector.extract_strided_slice %458 {offsets = [0, 0], sizes = [8, 3], strides = [1, 1]} : vector<8x128xf32> to vector<8x3xf32>
    %cst_218 = arith.constant dense<0xFF800000> : vector<8xf32>
    %460 = vector.multi_reduction <maximumf>, %459, %cst_218 [1] : vector<8x3xf32> to vector<8xf32>
    %cst_219 = arith.constant 0xFF800000 : f32
    %461 = vector.broadcast %cst_219 : f32 to vector<8xf32>
    %462 = arith.maximumf %461, %460 : vector<8xf32>
    %463 = vector.shape_cast %462 : vector<8xf32> to vector<8x1xf32>
    %464 = vector.broadcast %463 : vector<8x1xf32> to vector<8x3xf32>
    %465 = arith.subf %459, %464 : vector<8x3xf32>
    %466 = math.exp %465 : vector<8x3xf32>
    %cst_220 = arith.constant dense<0.000000e+00> : vector<8xf32>
    %467 = vector.multi_reduction <add>, %466, %cst_220 [1] : vector<8x3xf32> to vector<8xf32>
    %468 = vector.shape_cast %467 : vector<8xf32> to vector<8x1xf32>
    %469 = vector.broadcast %468 : vector<8x1xf32> to vector<8x3xf32>
    %470 = arith.divf %466, %469 : vector<8x3xf32>
    %471 = vector.extract_strided_slice %458 {offsets = [0, 3], sizes = [8, 3], strides = [1, 1]} : vector<8x128xf32> to vector<8x3xf32>
    %cst_221 = arith.constant dense<0xFF800000> : vector<8xf32>
    %472 = vector.multi_reduction <maximumf>, %471, %cst_221 [1] : vector<8x3xf32> to vector<8xf32>
    %cst_222 = arith.constant 0xFF800000 : f32
    %473 = vector.broadcast %cst_222 : f32 to vector<8xf32>
    %474 = arith.maximumf %473, %472 : vector<8xf32>
    %475 = vector.shape_cast %474 : vector<8xf32> to vector<8x1xf32>
    %476 = vector.broadcast %475 : vector<8x1xf32> to vector<8x3xf32>
    %477 = arith.subf %471, %476 : vector<8x3xf32>
    %478 = math.exp %477 : vector<8x3xf32>
    %cst_223 = arith.constant dense<0.000000e+00> : vector<8xf32>
    %479 = vector.multi_reduction <add>, %478, %cst_223 [1] : vector<8x3xf32> to vector<8xf32>
    %480 = vector.shape_cast %479 : vector<8xf32> to vector<8x1xf32>
    %481 = vector.broadcast %480 : vector<8x1xf32> to vector<8x3xf32>
    %482 = arith.divf %478, %481 : vector<8x3xf32>
    %cst_224 = arith.constant dense<0.000000e+00> : vector<8x25xf32>
    %483 = tpu.matmul %470, %5, %cst_224 {dimension_numbers = #tpu.dot_dimension_numbers<[1], [0], [0], [1], [0, 0, 1, 1], [], []>} : vector<8x3xf32>, vector<3x25xf32>, vector<8x25xf32> -> vector<8x25xf32>
    %484 = vector.extract_strided_slice %483 {offsets = [0, 0], sizes = [8, 24], strides = [1, 1]} : vector<8x25xf32> to vector<8x24xf32>
    %485 = vector.extract_strided_slice %483 {offsets = [0, 24], sizes = [8, 1], strides = [1, 1]} : vector<8x25xf32> to vector<8x1xf32>
    %cst_225 = arith.constant 1.000000e+00 : f32
    %486 = vector.broadcast %cst_225 : f32 to vector<8x1xf32>
    %487 = arith.subf %486, %485 : vector<8x1xf32>
    %cst_226 = arith.constant dense<0.000000e+00> : vector<8x24xf32>
    %488 = tpu.matmul %482, %6, %cst_226 {dimension_numbers = #tpu.dot_dimension_numbers<[1], [0], [0], [1], [0, 0, 1, 1], [], []>} : vector<8x3xf32>, vector<3x24xf32>, vector<8x24xf32> -> vector<8x24xf32>
    %cst_227 = arith.constant 1.000000e+00 : f32
    %489 = vector.broadcast %cst_227 : f32 to vector<8x24xf32>
    %490 = arith.subf %489, %488 : vector<8x24xf32>
    %491 = vector.extract_strided_slice %458 {offsets = [0, 6], sizes = [8, 24], strides = [1, 1]} : vector<8x128xf32> to vector<8x24xf32>
    %492 = arith.negf %491 : vector<8x24xf32>
    %493 = math.exp %492 : vector<8x24xf32>
    %cst_228 = arith.constant 1.000000e+00 : f32
    %494 = vector.broadcast %cst_228 : f32 to vector<8x24xf32>
    %495 = arith.addf %494, %493 : vector<8x24xf32>
    %496 = arith.divf %494, %495 : vector<8x24xf32>
    %497 = vector.extract_strided_slice %458 {offsets = [0, 30], sizes = [8, 24], strides = [1, 1]} : vector<8x128xf32> to vector<8x24xf32>
    %498 = arith.negf %497 : vector<8x24xf32>
    %499 = math.exp %498 : vector<8x24xf32>
    %cst_229 = arith.constant 1.000000e+00 : f32
    %500 = vector.broadcast %cst_229 : f32 to vector<8x24xf32>
    %501 = arith.addf %500, %499 : vector<8x24xf32>
    %502 = arith.divf %500, %501 : vector<8x24xf32>
    %503 = vector.extract_strided_slice %458 {offsets = [0, 54], sizes = [8, 24], strides = [1, 1]} : vector<8x128xf32> to vector<8x24xf32>
    %504 = arith.negf %503 : vector<8x24xf32>
    %505 = math.exp %504 : vector<8x24xf32>
    %cst_230 = arith.constant 1.000000e+00 : f32
    %506 = vector.broadcast %cst_230 : f32 to vector<8x24xf32>
    %507 = arith.addf %506, %505 : vector<8x24xf32>
    %508 = arith.divf %506, %507 : vector<8x24xf32>
    %509 = vector.extract_strided_slice %458 {offsets = [0, 78], sizes = [8, 24], strides = [1, 1]} : vector<8x128xf32> to vector<8x24xf32>
    %510 = math.tanh %509 : vector<8x24xf32>
    %511 = arith.mulf %484, %490 : vector<8x24xf32>
    %512 = arith.mulf %496, %454 : vector<8x24xf32>
    %513 = arith.mulf %502, %510 : vector<8x24xf32>
    %514 = arith.addf %512, %513 : vector<8x24xf32>
    %515 = arith.mulf %511, %514 : vector<8x24xf32>
    %516 = arith.subf %484, %511 : vector<8x24xf32>
    %517 = arith.mulf %516, %454 : vector<8x24xf32>
    %518 = arith.addf %515, %517 : vector<8x24xf32>
    %519 = arith.subf %490, %511 : vector<8x24xf32>
    %520 = arith.mulf %519, %510 : vector<8x24xf32>
    %521 = arith.addf %518, %520 : vector<8x24xf32>
    %522 = math.tanh %521 : vector<8x24xf32>
    %523 = arith.mulf %508, %522 : vector<8x24xf32>
    %c0_231 = arith.constant 0 : index
    %c0_232 = arith.constant 0 : index
    %524 = vector.load %arg16[%c0_231, %c0_232] : memref<8x24xf32, #tpu.memory_space<vmem>>, vector<8x24xf32>
    tpu.vector_store %arg16[%c0_231, %c0_232], %521 {strides = array<i32>} : memref<8x24xf32, #tpu.memory_space<vmem>>, vector<8x24xf32>,
    %c0_233 = arith.constant 0 : index
    %c0_234 = arith.constant 0 : index
    %525 = vector.load %arg17[%c0_233, %c0_234] : memref<8x24xf32, #tpu.memory_space<vmem>>, vector<8x24xf32>
    tpu.vector_store %arg17[%c0_233, %c0_234], %523 {strides = array<i32>} : memref<8x24xf32, #tpu.memory_space<vmem>>, vector<8x24xf32>,
    %c3_235 = arith.constant 3 : index
    %c0_236 = arith.constant 0 : index
    %c0_237 = arith.constant 0 : index
    %526 = vector.load %arg18[%c3_235, %c0_236, %c0_237] : memref<4x8x24xf32, #tpu.memory_space<vmem>>, vector<1x8x24xf32>
    %527 = vector.shape_cast %526 : vector<1x8x24xf32> to vector<8x24xf32>
    %528 = vector.shape_cast %523 : vector<8x24xf32> to vector<1x8x24xf32>
    tpu.vector_store %arg18[%c3_235, %c0_236, %c0_237], %528 {strides = array<i32>} : memref<4x8x24xf32, #tpu.memory_space<vmem>>, vector<1x8x24xf32>,
    %c0_238 = arith.constant 0 : index
    %c1_239 = arith.constant 1 : index
    %529 = vector.load %arg19[%c0_238, %c1_239] : memref<8x4xf32, #tpu.memory_space<vmem>>, vector<8x3xf32>
    %530 = tpu.concatenate %529, %487 in 1 : vector<8x3xf32>, vector<8x1xf32> -> vector<8x4xf32>
    %c0_240 = arith.constant 0 : index
    %c0_241 = arith.constant 0 : index
    %531 = vector.load %arg19[%c0_240, %c0_241] : memref<8x4xf32, #tpu.memory_space<vmem>>, vector<8x4xf32>
    tpu.vector_store %arg19[%c0_240, %c0_241], %530 {strides = array<i32>} : memref<8x4xf32, #tpu.memory_space<vmem>>, vector<8x4xf32>,
    %cst_242 = arith.constant dense<0.000000e+00> : vector<8x4xf32>
    %532 = tpu.matmul %530, %13, %cst_242 {dimension_numbers = #tpu.dot_dimension_numbers<[1], [0], [0], [1], [0, 0, 1, 1], [], []>} : vector<8x4xf32>, vector<4x4xf32>, vector<8x4xf32> -> vector<8x4xf32>
    %cst_243 = arith.constant dense<0xFF800000> : vector<8xf32>
    %533 = vector.multi_reduction <maximumf>, %532, %cst_243 [1] : vector<8x4xf32> to vector<8xf32>
    %cst_244 = arith.constant 0xFF800000 : f32
    %534 = vector.broadcast %cst_244 : f32 to vector<8xf32>
    %535 = arith.maximumf %534, %533 : vector<8xf32>
    %536 = vector.shape_cast %535 : vector<8xf32> to vector<8x1xf32>
    %537 = vector.broadcast %536 : vector<8x1xf32> to vector<8x4xf32>
    %538 = arith.subf %532, %537 : vector<8x4xf32>
    %539 = math.exp %538 : vector<8x4xf32>
    %cst_245 = arith.constant dense<0.000000e+00> : vector<8xf32>
    %540 = vector.multi_reduction <add>, %539, %cst_245 [1] : vector<8x4xf32> to vector<8xf32>
    %541 = vector.shape_cast %540 : vector<8xf32> to vector<8x1xf32>
    %542 = vector.broadcast %541 : vector<8x1xf32> to vector<8x4xf32>
    %543 = arith.divf %539, %542 : vector<8x4xf32>
    %c0_246 = arith.constant 0 : index
    %c0_247 = arith.constant 0 : index
    %c0_248 = arith.constant 0 : index
    %544 = vector.load %arg18[%c0_246, %c0_247, %c0_248] : memref<4x8x24xf32, #tpu.memory_space<vmem>>, vector<1x8x24xf32>
    %545 = vector.shape_cast %544 : vector<1x8x24xf32> to vector<8x24xf32>
    %546 = vector.extract_strided_slice %543 {offsets = [0, 0], sizes = [8, 1], strides = [1, 1]} : vector<8x4xf32> to vector<8x1xf32>
    %547 = vector.broadcast %546 : vector<8x1xf32> to vector<8x24xf32>
    %548 = arith.mulf %545, %547 : vector<8x24xf32>
    %c1_249 = arith.constant 1 : index
    %c0_250 = arith.constant 0 : index
    %c0_251 = arith.constant 0 : index
    %549 = vector.load %arg18[%c1_249, %c0_250, %c0_251] : memref<4x8x24xf32, #tpu.memory_space<vmem>>, vector<1x8x24xf32>
    %550 = vector.shape_cast %549 : vector<1x8x24xf32> to vector<8x24xf32>
    %551 = vector.extract_strided_slice %543 {offsets = [0, 1], sizes = [8, 1], strides = [1, 1]} : vector<8x4xf32> to vector<8x1xf32>
    %552 = vector.broadcast %551 : vector<8x1xf32> to vector<8x24xf32>
    %553 = arith.mulf %550, %552 : vector<8x24xf32>
    %c2_252 = arith.constant 2 : index
    %c0_253 = arith.constant 0 : index
    %c0_254 = arith.constant 0 : index
    %554 = vector.load %arg18[%c2_252, %c0_253, %c0_254] : memref<4x8x24xf32, #tpu.memory_space<vmem>>, vector<1x8x24xf32>
    %555 = vector.shape_cast %554 : vector<1x8x24xf32> to vector<8x24xf32>
    %556 = vector.extract_strided_slice %543 {offsets = [0, 2], sizes = [8, 1], strides = [1, 1]} : vector<8x4xf32> to vector<8x1xf32>
    %557 = vector.broadcast %556 : vector<8x1xf32> to vector<8x24xf32>
    %558 = arith.mulf %555, %557 : vector<8x24xf32>
    %c3_255 = arith.constant 3 : index
    %c0_256 = arith.constant 0 : index
    %c0_257 = arith.constant 0 : index
    %559 = vector.load %arg18[%c3_255, %c0_256, %c0_257] : memref<4x8x24xf32, #tpu.memory_space<vmem>>, vector<1x8x24xf32>
    %560 = vector.shape_cast %559 : vector<1x8x24xf32> to vector<8x24xf32>
    %561 = vector.extract_strided_slice %543 {offsets = [0, 3], sizes = [8, 1], strides = [1, 1]} : vector<8x4xf32> to vector<8x1xf32>
    %562 = vector.broadcast %561 : vector<8x1xf32> to vector<8x24xf32>
    %563 = arith.mulf %560, %562 : vector<8x24xf32>
    %564 = arith.addf %548, %553 : vector<8x24xf32>
    %565 = arith.addf %564, %558 : vector<8x24xf32>
    %566 = arith.addf %565, %563 : vector<8x24xf32>
    %cst_258 = arith.constant 2.500000e-01 : f32
    %567 = vector.broadcast %cst_258 : f32 to vector<8x24xf32>
    %568 = arith.mulf %566, %567 : vector<8x24xf32>
    %569 = tpu.concatenate %548, %553, %558, %563 in 1 : vector<8x24xf32>, vector<8x24xf32>, vector<8x24xf32>, vector<8x24xf32> -> vector<8x96xf32>
    %cst_259 = arith.constant dense<0.000000e+00> : vector<8x4xf32>
    %570 = tpu.matmul %568, %7, %cst_259 {dimension_numbers = #tpu.dot_dimension_numbers<[1], [0], [0], [1], [0, 0, 1, 1], [], []>} : vector<8x24xf32>, vector<24x4xf32>, vector<8x4xf32> -> vector<8x4xf32>
    %571 = vector.broadcast %8 : vector<1x4xf32> to vector<8x4xf32>
    %572 = arith.addf %570, %571 : vector<8x4xf32>
    %cst_260 = arith.constant 0.000000e+00 : f32
    %573 = vector.broadcast %cst_260 : f32 to vector<8x4xf32>
    %574 = arith.maximumf %572, %573 : vector<8x4xf32>
    %cst_261 = arith.constant dense<0.000000e+00> : vector<8x24xf32>
    %575 = tpu.matmul %574, %9, %cst_261 {dimension_numbers = #tpu.dot_dimension_numbers<[1], [0], [0], [1], [0, 0, 1, 1], [], []>} : vector<8x4xf32>, vector<4x24xf32>, vector<8x24xf32> -> vector<8x24xf32>
    %576 = vector.broadcast %10 : vector<1x24xf32> to vector<8x24xf32>
    %577 = arith.addf %575, %576 : vector<8x24xf32>
    %578 = arith.negf %577 : vector<8x24xf32>
    %579 = math.exp %578 : vector<8x24xf32>
    %cst_262 = arith.constant 1.000000e+00 : f32
    %580 = vector.broadcast %cst_262 : f32 to vector<8x24xf32>
    %581 = arith.addf %580, %579 : vector<8x24xf32>
    %582 = arith.divf %580, %581 : vector<8x24xf32>
    %cst_263 = arith.constant dense<0.000000e+00> : vector<8x24xf32>
    %583 = tpu.matmul %569, %11, %cst_263 {dimension_numbers = #tpu.dot_dimension_numbers<[1], [0], [0], [1], [0, 0, 1, 1], [], []>} : vector<8x96xf32>, vector<96x24xf32>, vector<8x24xf32> -> vector<8x24xf32>
    %584 = vector.broadcast %12 : vector<1x24xf32> to vector<8x24xf32>
    %585 = arith.addf %583, %584 : vector<8x24xf32>
    %586 = arith.mulf %582, %585 : vector<8x24xf32>
    %587 = arith.addf %586, %523 : vector<8x24xf32>
    %c0_264 = arith.constant 0 : index
    %c3_265 = arith.constant 3 : index
    %c0_266 = arith.constant 0 : index
    %588 = vector.load %arg14[%c0_264, %c3_265, %c0_266] : memref<8x8x24xf32, #tpu.memory_space<vmem>>, vector<8x1x24xf32>
    %589 = vector.shape_cast %588 : vector<8x1x24xf32> to vector<8x24xf32>
    %590 = vector.shape_cast %587 : vector<8x24xf32> to vector<8x1x24xf32>
    tpu.vector_store %arg14[%c0_264, %c3_265, %c0_266], %590 {strides = array<i32>} : memref<8x8x24xf32, #tpu.memory_space<vmem>>, vector<8x1x24xf32>,
    %c0_267 = arith.constant 0 : index
    %c3_268 = arith.constant 3 : index
    %c0_269 = arith.constant 0 : index
    %591 = vector.load %arg15[%c0_267, %c3_268, %c0_269] : memref<8x8x1xf32, #tpu.memory_space<vmem>>, vector<8x1x1xf32>
    %592 = vector.shape_cast %591 : vector<8x1x1xf32> to vector<8x1xf32>
    %593 = vector.shape_cast %487 : vector<8x1xf32> to vector<8x1x1xf32>
    tpu.vector_store %arg15[%c0_267, %c3_268, %c0_269], %593 {strides = array<i32>} : memref<8x8x1xf32, #tpu.memory_space<vmem>>, vector<8x1x1xf32>,
    %c0_270 = arith.constant 0 : index
    %c4 = arith.constant 4 : index
    %c0_271 = arith.constant 0 : index
    %594 = vector.load %arg1[%c0_270, %c4, %c0_271] : memref<8x8x16xf32, #tpu.memory_space<vmem>>, vector<8x1x16xf32>
    %595 = vector.shape_cast %594 : vector<8x1x16xf32> to vector<8x16xf32>
    %c0_272 = arith.constant 0 : index
    %c4_273 = arith.constant 4 : index
    %c0_274 = arith.constant 0 : index
    %596 = vector.load %arg2[%c0_272, %c4_273, %c0_274] : memref<8x8x1xf32, #tpu.memory_space<vmem>>, vector<8x1x1xf32>
    %597 = vector.shape_cast %596 : vector<8x1x1xf32> to vector<8x1xf32>
    %c0_275 = arith.constant 0 : index
    %c0_276 = arith.constant 0 : index
    %598 = vector.load %arg17[%c0_275, %c0_276] : memref<8x24xf32, #tpu.memory_space<vmem>>, vector<8x24xf32>
    %c0_277 = arith.constant 0 : index
    %c0_278 = arith.constant 0 : index
    %599 = vector.load %arg16[%c0_277, %c0_278] : memref<8x24xf32, #tpu.memory_space<vmem>>, vector<8x24xf32>
    %600 = tpu.concatenate %595, %598, %597 in 1 : vector<8x16xf32>, vector<8x24xf32>, vector<8x1xf32> -> vector<8x41xf32>
    %cst_279 = arith.constant dense<0.000000e+00> : vector<8x128xf32>
    %601 = tpu.matmul %600, %3, %cst_279 {dimension_numbers = #tpu.dot_dimension_numbers<[1], [0], [0], [1], [0, 0, 1, 1], [], []>} : vector<8x41xf32>, vector<41x128xf32>, vector<8x128xf32> -> vector<8x128xf32>
    %602 = vector.broadcast %4 : vector<1x128xf32> to vector<8x128xf32>
    %603 = arith.addf %601, %602 : vector<8x128xf32>
    %604 = vector.extract_strided_slice %603 {offsets = [0, 0], sizes = [8, 3], strides = [1, 1]} : vector<8x128xf32> to vector<8x3xf32>
    %cst_280 = arith.constant dense<0xFF800000> : vector<8xf32>
    %605 = vector.multi_reduction <maximumf>, %604, %cst_280 [1] : vector<8x3xf32> to vector<8xf32>
    %cst_281 = arith.constant 0xFF800000 : f32
    %606 = vector.broadcast %cst_281 : f32 to vector<8xf32>
    %607 = arith.maximumf %606, %605 : vector<8xf32>
    %608 = vector.shape_cast %607 : vector<8xf32> to vector<8x1xf32>
    %609 = vector.broadcast %608 : vector<8x1xf32> to vector<8x3xf32>
    %610 = arith.subf %604, %609 : vector<8x3xf32>
    %611 = math.exp %610 : vector<8x3xf32>
    %cst_282 = arith.constant dense<0.000000e+00> : vector<8xf32>
    %612 = vector.multi_reduction <add>, %611, %cst_282 [1] : vector<8x3xf32> to vector<8xf32>
    %613 = vector.shape_cast %612 : vector<8xf32> to vector<8x1xf32>
    %614 = vector.broadcast %613 : vector<8x1xf32> to vector<8x3xf32>
    %615 = arith.divf %611, %614 : vector<8x3xf32>
    %616 = vector.extract_strided_slice %603 {offsets = [0, 3], sizes = [8, 3], strides = [1, 1]} : vector<8x128xf32> to vector<8x3xf32>
    %cst_283 = arith.constant dense<0xFF800000> : vector<8xf32>
    %617 = vector.multi_reduction <maximumf>, %616, %cst_283 [1] : vector<8x3xf32> to vector<8xf32>
    %cst_284 = arith.constant 0xFF800000 : f32
    %618 = vector.broadcast %cst_284 : f32 to vector<8xf32>
    %619 = arith.maximumf %618, %617 : vector<8xf32>
    %620 = vector.shape_cast %619 : vector<8xf32> to vector<8x1xf32>
    %621 = vector.broadcast %620 : vector<8x1xf32> to vector<8x3xf32>
    %622 = arith.subf %616, %621 : vector<8x3xf32>
    %623 = math.exp %622 : vector<8x3xf32>
    %cst_285 = arith.constant dense<0.000000e+00> : vector<8xf32>
    %624 = vector.multi_reduction <add>, %623, %cst_285 [1] : vector<8x3xf32> to vector<8xf32>
    %625 = vector.shape_cast %624 : vector<8xf32> to vector<8x1xf32>
    %626 = vector.broadcast %625 : vector<8x1xf32> to vector<8x3xf32>
    %627 = arith.divf %623, %626 : vector<8x3xf32>
    %cst_286 = arith.constant dense<0.000000e+00> : vector<8x25xf32>
    %628 = tpu.matmul %615, %5, %cst_286 {dimension_numbers = #tpu.dot_dimension_numbers<[1], [0], [0], [1], [0, 0, 1, 1], [], []>} : vector<8x3xf32>, vector<3x25xf32>, vector<8x25xf32> -> vector<8x25xf32>
    %629 = vector.extract_strided_slice %628 {offsets = [0, 0], sizes = [8, 24], strides = [1, 1]} : vector<8x25xf32> to vector<8x24xf32>
    %630 = vector.extract_strided_slice %628 {offsets = [0, 24], sizes = [8, 1], strides = [1, 1]} : vector<8x25xf32> to vector<8x1xf32>
    %cst_287 = arith.constant 1.000000e+00 : f32
    %631 = vector.broadcast %cst_287 : f32 to vector<8x1xf32>
    %632 = arith.subf %631, %630 : vector<8x1xf32>
    %cst_288 = arith.constant dense<0.000000e+00> : vector<8x24xf32>
    %633 = tpu.matmul %627, %6, %cst_288 {dimension_numbers = #tpu.dot_dimension_numbers<[1], [0], [0], [1], [0, 0, 1, 1], [], []>} : vector<8x3xf32>, vector<3x24xf32>, vector<8x24xf32> -> vector<8x24xf32>
    %cst_289 = arith.constant 1.000000e+00 : f32
    %634 = vector.broadcast %cst_289 : f32 to vector<8x24xf32>
    %635 = arith.subf %634, %633 : vector<8x24xf32>
    %636 = vector.extract_strided_slice %603 {offsets = [0, 6], sizes = [8, 24], strides = [1, 1]} : vector<8x128xf32> to vector<8x24xf32>
    %637 = arith.negf %636 : vector<8x24xf32>
    %638 = math.exp %637 : vector<8x24xf32>
    %cst_290 = arith.constant 1.000000e+00 : f32
    %639 = vector.broadcast %cst_290 : f32 to vector<8x24xf32>
    %640 = arith.addf %639, %638 : vector<8x24xf32>
    %641 = arith.divf %639, %640 : vector<8x24xf32>
    %642 = vector.extract_strided_slice %603 {offsets = [0, 30], sizes = [8, 24], strides = [1, 1]} : vector<8x128xf32> to vector<8x24xf32>
    %643 = arith.negf %642 : vector<8x24xf32>
    %644 = math.exp %643 : vector<8x24xf32>
    %cst_291 = arith.constant 1.000000e+00 : f32
    %645 = vector.broadcast %cst_291 : f32 to vector<8x24xf32>
    %646 = arith.addf %645, %644 : vector<8x24xf32>
    %647 = arith.divf %645, %646 : vector<8x24xf32>
    %648 = vector.extract_strided_slice %603 {offsets = [0, 54], sizes = [8, 24], strides = [1, 1]} : vector<8x128xf32> to vector<8x24xf32>
    %649 = arith.negf %648 : vector<8x24xf32>
    %650 = math.exp %649 : vector<8x24xf32>
    %cst_292 = arith.constant 1.000000e+00 : f32
    %651 = vector.broadcast %cst_292 : f32 to vector<8x24xf32>
    %652 = arith.addf %651, %650 : vector<8x24xf32>
    %653 = arith.divf %651, %652 : vector<8x24xf32>
    %654 = vector.extract_strided_slice %603 {offsets = [0, 78], sizes = [8, 24], strides = [1, 1]} : vector<8x128xf32> to vector<8x24xf32>
    %655 = math.tanh %654 : vector<8x24xf32>
    %656 = arith.mulf %629, %635 : vector<8x24xf32>
    %657 = arith.mulf %641, %599 : vector<8x24xf32>
    %658 = arith.mulf %647, %655 : vector<8x24xf32>
    %659 = arith.addf %657, %658 : vector<8x24xf32>
    %660 = arith.mulf %656, %659 : vector<8x24xf32>
    %661 = arith.subf %629, %656 : vector<8x24xf32>
    %662 = arith.mulf %661, %599 : vector<8x24xf32>
    %663 = arith.addf %660, %662 : vector<8x24xf32>
    %664 = arith.subf %635, %656 : vector<8x24xf32>
    %665 = arith.mulf %664, %655 : vector<8x24xf32>
    %666 = arith.addf %663, %665 : vector<8x24xf32>
    %667 = math.tanh %666 : vector<8x24xf32>
    %668 = arith.mulf %653, %667 : vector<8x24xf32>
    %c0_293 = arith.constant 0 : index
    %c0_294 = arith.constant 0 : index
    %669 = vector.load %arg16[%c0_293, %c0_294] : memref<8x24xf32, #tpu.memory_space<vmem>>, vector<8x24xf32>
    tpu.vector_store %arg16[%c0_293, %c0_294], %666 {strides = array<i32>} : memref<8x24xf32, #tpu.memory_space<vmem>>, vector<8x24xf32>,
    %c0_295 = arith.constant 0 : index
    %c0_296 = arith.constant 0 : index
    %670 = vector.load %arg17[%c0_295, %c0_296] : memref<8x24xf32, #tpu.memory_space<vmem>>, vector<8x24xf32>
    tpu.vector_store %arg17[%c0_295, %c0_296], %668 {strides = array<i32>} : memref<8x24xf32, #tpu.memory_space<vmem>>, vector<8x24xf32>,
    %c0_297 = arith.constant 0 : index
    %c0_298 = arith.constant 0 : index
    %c0_299 = arith.constant 0 : index
    %671 = vector.load %arg18[%c0_297, %c0_298, %c0_299] : memref<4x8x24xf32, #tpu.memory_space<vmem>>, vector<1x8x24xf32>
    %672 = vector.shape_cast %671 : vector<1x8x24xf32> to vector<8x24xf32>
    %673 = vector.shape_cast %668 : vector<8x24xf32> to vector<1x8x24xf32>
    tpu.vector_store %arg18[%c0_297, %c0_298, %c0_299], %673 {strides = array<i32>} : memref<4x8x24xf32, #tpu.memory_space<vmem>>, vector<1x8x24xf32>,
    %c0_300 = arith.constant 0 : index
    %c1_301 = arith.constant 1 : index
    %674 = vector.load %arg19[%c0_300, %c1_301] : memref<8x4xf32, #tpu.memory_space<vmem>>, vector<8x3xf32>
    %675 = tpu.concatenate %674, %632 in 1 : vector<8x3xf32>, vector<8x1xf32> -> vector<8x4xf32>
    %c0_302 = arith.constant 0 : index
    %c0_303 = arith.constant 0 : index
    %676 = vector.load %arg19[%c0_302, %c0_303] : memref<8x4xf32, #tpu.memory_space<vmem>>, vector<8x4xf32>
    tpu.vector_store %arg19[%c0_302, %c0_303], %675 {strides = array<i32>} : memref<8x4xf32, #tpu.memory_space<vmem>>, vector<8x4xf32>,
    %cst_304 = arith.constant dense<0.000000e+00> : vector<8x4xf32>
    %677 = tpu.matmul %675, %13, %cst_304 {dimension_numbers = #tpu.dot_dimension_numbers<[1], [0], [0], [1], [0, 0, 1, 1], [], []>} : vector<8x4xf32>, vector<4x4xf32>, vector<8x4xf32> -> vector<8x4xf32>
    %cst_305 = arith.constant dense<0xFF800000> : vector<8xf32>
    %678 = vector.multi_reduction <maximumf>, %677, %cst_305 [1] : vector<8x4xf32> to vector<8xf32>
    %cst_306 = arith.constant 0xFF800000 : f32
    %679 = vector.broadcast %cst_306 : f32 to vector<8xf32>
    %680 = arith.maximumf %679, %678 : vector<8xf32>
    %681 = vector.shape_cast %680 : vector<8xf32> to vector<8x1xf32>
    %682 = vector.broadcast %681 : vector<8x1xf32> to vector<8x4xf32>
    %683 = arith.subf %677, %682 : vector<8x4xf32>
    %684 = math.exp %683 : vector<8x4xf32>
    %cst_307 = arith.constant dense<0.000000e+00> : vector<8xf32>
    %685 = vector.multi_reduction <add>, %684, %cst_307 [1] : vector<8x4xf32> to vector<8xf32>
    %686 = vector.shape_cast %685 : vector<8xf32> to vector<8x1xf32>
    %687 = vector.broadcast %686 : vector<8x1xf32> to vector<8x4xf32>
    %688 = arith.divf %684, %687 : vector<8x4xf32>
    %c1_308 = arith.constant 1 : index
    %c0_309 = arith.constant 0 : index
    %c0_310 = arith.constant 0 : index
    %689 = vector.load %arg18[%c1_308, %c0_309, %c0_310] : memref<4x8x24xf32, #tpu.memory_space<vmem>>, vector<1x8x24xf32>
    %690 = vector.shape_cast %689 : vector<1x8x24xf32> to vector<8x24xf32>
    %691 = vector.extract_strided_slice %688 {offsets = [0, 0], sizes = [8, 1], strides = [1, 1]} : vector<8x4xf32> to vector<8x1xf32>
    %692 = vector.broadcast %691 : vector<8x1xf32> to vector<8x24xf32>
    %693 = arith.mulf %690, %692 : vector<8x24xf32>
    %c2_311 = arith.constant 2 : index
    %c0_312 = arith.constant 0 : index
    %c0_313 = arith.constant 0 : index
    %694 = vector.load %arg18[%c2_311, %c0_312, %c0_313] : memref<4x8x24xf32, #tpu.memory_space<vmem>>, vector<1x8x24xf32>
    %695 = vector.shape_cast %694 : vector<1x8x24xf32> to vector<8x24xf32>
    %696 = vector.extract_strided_slice %688 {offsets = [0, 1], sizes = [8, 1], strides = [1, 1]} : vector<8x4xf32> to vector<8x1xf32>
    %697 = vector.broadcast %696 : vector<8x1xf32> to vector<8x24xf32>
    %698 = arith.mulf %695, %697 : vector<8x24xf32>
    %c3_314 = arith.constant 3 : index
    %c0_315 = arith.constant 0 : index
    %c0_316 = arith.constant 0 : index
    %699 = vector.load %arg18[%c3_314, %c0_315, %c0_316] : memref<4x8x24xf32, #tpu.memory_space<vmem>>, vector<1x8x24xf32>
    %700 = vector.shape_cast %699 : vector<1x8x24xf32> to vector<8x24xf32>
    %701 = vector.extract_strided_slice %688 {offsets = [0, 2], sizes = [8, 1], strides = [1, 1]} : vector<8x4xf32> to vector<8x1xf32>
    %702 = vector.broadcast %701 : vector<8x1xf32> to vector<8x24xf32>
    %703 = arith.mulf %700, %702 : vector<8x24xf32>
    %c0_317 = arith.constant 0 : index
    %c0_318 = arith.constant 0 : index
    %c0_319 = arith.constant 0 : index
    %704 = vector.load %arg18[%c0_317, %c0_318, %c0_319] : memref<4x8x24xf32, #tpu.memory_space<vmem>>, vector<1x8x24xf32>
    %705 = vector.shape_cast %704 : vector<1x8x24xf32> to vector<8x24xf32>
    %706 = vector.extract_strided_slice %688 {offsets = [0, 3], sizes = [8, 1], strides = [1, 1]} : vector<8x4xf32> to vector<8x1xf32>
    %707 = vector.broadcast %706 : vector<8x1xf32> to vector<8x24xf32>
    %708 = arith.mulf %705, %707 : vector<8x24xf32>
    %709 = arith.addf %693, %698 : vector<8x24xf32>
    %710 = arith.addf %709, %703 : vector<8x24xf32>
    %711 = arith.addf %710, %708 : vector<8x24xf32>
    %cst_320 = arith.constant 2.500000e-01 : f32
    %712 = vector.broadcast %cst_320 : f32 to vector<8x24xf32>
    %713 = arith.mulf %711, %712 : vector<8x24xf32>
    %714 = tpu.concatenate %693, %698, %703, %708 in 1 : vector<8x24xf32>, vector<8x24xf32>, vector<8x24xf32>, vector<8x24xf32> -> vector<8x96xf32>
    %cst_321 = arith.constant dense<0.000000e+00> : vector<8x4xf32>
    %715 = tpu.matmul %713, %7, %cst_321 {dimension_numbers = #tpu.dot_dimension_numbers<[1], [0], [0], [1], [0, 0, 1, 1], [], []>} : vector<8x24xf32>, vector<24x4xf32>, vector<8x4xf32> -> vector<8x4xf32>
    %716 = vector.broadcast %8 : vector<1x4xf32> to vector<8x4xf32>
    %717 = arith.addf %715, %716 : vector<8x4xf32>
    %cst_322 = arith.constant 0.000000e+00 : f32
    %718 = vector.broadcast %cst_322 : f32 to vector<8x4xf32>
    %719 = arith.maximumf %717, %718 : vector<8x4xf32>
    %cst_323 = arith.constant dense<0.000000e+00> : vector<8x24xf32>
    %720 = tpu.matmul %719, %9, %cst_323 {dimension_numbers = #tpu.dot_dimension_numbers<[1], [0], [0], [1], [0, 0, 1, 1], [], []>} : vector<8x4xf32>, vector<4x24xf32>, vector<8x24xf32> -> vector<8x24xf32>
    %721 = vector.broadcast %10 : vector<1x24xf32> to vector<8x24xf32>
    %722 = arith.addf %720, %721 : vector<8x24xf32>
    %723 = arith.negf %722 : vector<8x24xf32>
    %724 = math.exp %723 : vector<8x24xf32>
    %cst_324 = arith.constant 1.000000e+00 : f32
    %725 = vector.broadcast %cst_324 : f32 to vector<8x24xf32>
    %726 = arith.addf %725, %724 : vector<8x24xf32>
    %727 = arith.divf %725, %726 : vector<8x24xf32>
    %cst_325 = arith.constant dense<0.000000e+00> : vector<8x24xf32>
    %728 = tpu.matmul %714, %11, %cst_325 {dimension_numbers = #tpu.dot_dimension_numbers<[1], [0], [0], [1], [0, 0, 1, 1], [], []>} : vector<8x96xf32>, vector<96x24xf32>, vector<8x24xf32> -> vector<8x24xf32>
    %729 = vector.broadcast %12 : vector<1x24xf32> to vector<8x24xf32>
    %730 = arith.addf %728, %729 : vector<8x24xf32>
    %731 = arith.mulf %727, %730 : vector<8x24xf32>
    %732 = arith.addf %731, %668 : vector<8x24xf32>
    %c0_326 = arith.constant 0 : index
    %c4_327 = arith.constant 4 : index
    %c0_328 = arith.constant 0 : index
    %733 = vector.load %arg14[%c0_326, %c4_327, %c0_328] : memref<8x8x24xf32, #tpu.memory_space<vmem>>, vector<8x1x24xf32>
    %734 = vector.shape_cast %733 : vector<8x1x24xf32> to vector<8x24xf32>
    %735 = vector.shape_cast %732 : vector<8x24xf32> to vector<8x1x24xf32>
    tpu.vector_store %arg14[%c0_326, %c4_327, %c0_328], %735 {strides = array<i32>} : memref<8x8x24xf32, #tpu.memory_space<vmem>>, vector<8x1x24xf32>,
    %c0_329 = arith.constant 0 : index
    %c4_330 = arith.constant 4 : index
    %c0_331 = arith.constant 0 : index
    %736 = vector.load %arg15[%c0_329, %c4_330, %c0_331] : memref<8x8x1xf32, #tpu.memory_space<vmem>>, vector<8x1x1xf32>
    %737 = vector.shape_cast %736 : vector<8x1x1xf32> to vector<8x1xf32>
    %738 = vector.shape_cast %632 : vector<8x1xf32> to vector<8x1x1xf32>
    tpu.vector_store %arg15[%c0_329, %c4_330, %c0_331], %738 {strides = array<i32>} : memref<8x8x1xf32, #tpu.memory_space<vmem>>, vector<8x1x1xf32>,
    %c0_332 = arith.constant 0 : index
    %c5 = arith.constant 5 : index
    %c0_333 = arith.constant 0 : index
    %739 = vector.load %arg1[%c0_332, %c5, %c0_333] : memref<8x8x16xf32, #tpu.memory_space<vmem>>, vector<8x1x16xf32>
    %740 = vector.shape_cast %739 : vector<8x1x16xf32> to vector<8x16xf32>
    %c0_334 = arith.constant 0 : index
    %c5_335 = arith.constant 5 : index
    %c0_336 = arith.constant 0 : index
    %741 = vector.load %arg2[%c0_334, %c5_335, %c0_336] : memref<8x8x1xf32, #tpu.memory_space<vmem>>, vector<8x1x1xf32>
    %742 = vector.shape_cast %741 : vector<8x1x1xf32> to vector<8x1xf32>
    %c0_337 = arith.constant 0 : index
    %c0_338 = arith.constant 0 : index
    %743 = vector.load %arg17[%c0_337, %c0_338] : memref<8x24xf32, #tpu.memory_space<vmem>>, vector<8x24xf32>
    %c0_339 = arith.constant 0 : index
    %c0_340 = arith.constant 0 : index
    %744 = vector.load %arg16[%c0_339, %c0_340] : memref<8x24xf32, #tpu.memory_space<vmem>>, vector<8x24xf32>
    %745 = tpu.concatenate %740, %743, %742 in 1 : vector<8x16xf32>, vector<8x24xf32>, vector<8x1xf32> -> vector<8x41xf32>
    %cst_341 = arith.constant dense<0.000000e+00> : vector<8x128xf32>
    %746 = tpu.matmul %745, %3, %cst_341 {dimension_numbers = #tpu.dot_dimension_numbers<[1], [0], [0], [1], [0, 0, 1, 1], [], []>} : vector<8x41xf32>, vector<41x128xf32>, vector<8x128xf32> -> vector<8x128xf32>
    %747 = vector.broadcast %4 : vector<1x128xf32> to vector<8x128xf32>
    %748 = arith.addf %746, %747 : vector<8x128xf32>
    %749 = vector.extract_strided_slice %748 {offsets = [0, 0], sizes = [8, 3], strides = [1, 1]} : vector<8x128xf32> to vector<8x3xf32>
    %cst_342 = arith.constant dense<0xFF800000> : vector<8xf32>
    %750 = vector.multi_reduction <maximumf>, %749, %cst_342 [1] : vector<8x3xf32> to vector<8xf32>
    %cst_343 = arith.constant 0xFF800000 : f32
    %751 = vector.broadcast %cst_343 : f32 to vector<8xf32>
    %752 = arith.maximumf %751, %750 : vector<8xf32>
    %753 = vector.shape_cast %752 : vector<8xf32> to vector<8x1xf32>
    %754 = vector.broadcast %753 : vector<8x1xf32> to vector<8x3xf32>
    %755 = arith.subf %749, %754 : vector<8x3xf32>
    %756 = math.exp %755 : vector<8x3xf32>
    %cst_344 = arith.constant dense<0.000000e+00> : vector<8xf32>
    %757 = vector.multi_reduction <add>, %756, %cst_344 [1] : vector<8x3xf32> to vector<8xf32>
    %758 = vector.shape_cast %757 : vector<8xf32> to vector<8x1xf32>
    %759 = vector.broadcast %758 : vector<8x1xf32> to vector<8x3xf32>
    %760 = arith.divf %756, %759 : vector<8x3xf32>
    %761 = vector.extract_strided_slice %748 {offsets = [0, 3], sizes = [8, 3], strides = [1, 1]} : vector<8x128xf32> to vector<8x3xf32>
    %cst_345 = arith.constant dense<0xFF800000> : vector<8xf32>
    %762 = vector.multi_reduction <maximumf>, %761, %cst_345 [1] : vector<8x3xf32> to vector<8xf32>
    %cst_346 = arith.constant 0xFF800000 : f32
    %763 = vector.broadcast %cst_346 : f32 to vector<8xf32>
    %764 = arith.maximumf %763, %762 : vector<8xf32>
    %765 = vector.shape_cast %764 : vector<8xf32> to vector<8x1xf32>
    %766 = vector.broadcast %765 : vector<8x1xf32> to vector<8x3xf32>
    %767 = arith.subf %761, %766 : vector<8x3xf32>
    %768 = math.exp %767 : vector<8x3xf32>
    %cst_347 = arith.constant dense<0.000000e+00> : vector<8xf32>
    %769 = vector.multi_reduction <add>, %768, %cst_347 [1] : vector<8x3xf32> to vector<8xf32>
    %770 = vector.shape_cast %769 : vector<8xf32> to vector<8x1xf32>
    %771 = vector.broadcast %770 : vector<8x1xf32> to vector<8x3xf32>
    %772 = arith.divf %768, %771 : vector<8x3xf32>
    %cst_348 = arith.constant dense<0.000000e+00> : vector<8x25xf32>
    %773 = tpu.matmul %760, %5, %cst_348 {dimension_numbers = #tpu.dot_dimension_numbers<[1], [0], [0], [1], [0, 0, 1, 1], [], []>} : vector<8x3xf32>, vector<3x25xf32>, vector<8x25xf32> -> vector<8x25xf32>
    %774 = vector.extract_strided_slice %773 {offsets = [0, 0], sizes = [8, 24], strides = [1, 1]} : vector<8x25xf32> to vector<8x24xf32>
    %775 = vector.extract_strided_slice %773 {offsets = [0, 24], sizes = [8, 1], strides = [1, 1]} : vector<8x25xf32> to vector<8x1xf32>
    %cst_349 = arith.constant 1.000000e+00 : f32
    %776 = vector.broadcast %cst_349 : f32 to vector<8x1xf32>
    %777 = arith.subf %776, %775 : vector<8x1xf32>
    %cst_350 = arith.constant dense<0.000000e+00> : vector<8x24xf32>
    %778 = tpu.matmul %772, %6, %cst_350 {dimension_numbers = #tpu.dot_dimension_numbers<[1], [0], [0], [1], [0, 0, 1, 1], [], []>} : vector<8x3xf32>, vector<3x24xf32>, vector<8x24xf32> -> vector<8x24xf32>
    %cst_351 = arith.constant 1.000000e+00 : f32
    %779 = vector.broadcast %cst_351 : f32 to vector<8x24xf32>
    %780 = arith.subf %779, %778 : vector<8x24xf32>
    %781 = vector.extract_strided_slice %748 {offsets = [0, 6], sizes = [8, 24], strides = [1, 1]} : vector<8x128xf32> to vector<8x24xf32>
    %782 = arith.negf %781 : vector<8x24xf32>
    %783 = math.exp %782 : vector<8x24xf32>
    %cst_352 = arith.constant 1.000000e+00 : f32
    %784 = vector.broadcast %cst_352 : f32 to vector<8x24xf32>
    %785 = arith.addf %784, %783 : vector<8x24xf32>
    %786 = arith.divf %784, %785 : vector<8x24xf32>
    %787 = vector.extract_strided_slice %748 {offsets = [0, 30], sizes = [8, 24], strides = [1, 1]} : vector<8x128xf32> to vector<8x24xf32>
    %788 = arith.negf %787 : vector<8x24xf32>
    %789 = math.exp %788 : vector<8x24xf32>
    %cst_353 = arith.constant 1.000000e+00 : f32
    %790 = vector.broadcast %cst_353 : f32 to vector<8x24xf32>
    %791 = arith.addf %790, %789 : vector<8x24xf32>
    %792 = arith.divf %790, %791 : vector<8x24xf32>
    %793 = vector.extract_strided_slice %748 {offsets = [0, 54], sizes = [8, 24], strides = [1, 1]} : vector<8x128xf32> to vector<8x24xf32>
    %794 = arith.negf %793 : vector<8x24xf32>
    %795 = math.exp %794 : vector<8x24xf32>
    %cst_354 = arith.constant 1.000000e+00 : f32
    %796 = vector.broadcast %cst_354 : f32 to vector<8x24xf32>
    %797 = arith.addf %796, %795 : vector<8x24xf32>
    %798 = arith.divf %796, %797 : vector<8x24xf32>
    %799 = vector.extract_strided_slice %748 {offsets = [0, 78], sizes = [8, 24], strides = [1, 1]} : vector<8x128xf32> to vector<8x24xf32>
    %800 = math.tanh %799 : vector<8x24xf32>
    %801 = arith.mulf %774, %780 : vector<8x24xf32>
    %802 = arith.mulf %786, %744 : vector<8x24xf32>
    %803 = arith.mulf %792, %800 : vector<8x24xf32>
    %804 = arith.addf %802, %803 : vector<8x24xf32>
    %805 = arith.mulf %801, %804 : vector<8x24xf32>
    %806 = arith.subf %774, %801 : vector<8x24xf32>
    %807 = arith.mulf %806, %744 : vector<8x24xf32>
    %808 = arith.addf %805, %807 : vector<8x24xf32>
    %809 = arith.subf %780, %801 : vector<8x24xf32>
    %810 = arith.mulf %809, %800 : vector<8x24xf32>
    %811 = arith.addf %808, %810 : vector<8x24xf32>
    %812 = math.tanh %811 : vector<8x24xf32>
    %813 = arith.mulf %798, %812 : vector<8x24xf32>
    %c0_355 = arith.constant 0 : index
    %c0_356 = arith.constant 0 : index
    %814 = vector.load %arg16[%c0_355, %c0_356] : memref<8x24xf32, #tpu.memory_space<vmem>>, vector<8x24xf32>
    tpu.vector_store %arg16[%c0_355, %c0_356], %811 {strides = array<i32>} : memref<8x24xf32, #tpu.memory_space<vmem>>, vector<8x24xf32>,
    %c0_357 = arith.constant 0 : index
    %c0_358 = arith.constant 0 : index
    %815 = vector.load %arg17[%c0_357, %c0_358] : memref<8x24xf32, #tpu.memory_space<vmem>>, vector<8x24xf32>
    tpu.vector_store %arg17[%c0_357, %c0_358], %813 {strides = array<i32>} : memref<8x24xf32, #tpu.memory_space<vmem>>, vector<8x24xf32>,
    %c1_359 = arith.constant 1 : index
    %c0_360 = arith.constant 0 : index
    %c0_361 = arith.constant 0 : index
    %816 = vector.load %arg18[%c1_359, %c0_360, %c0_361] : memref<4x8x24xf32, #tpu.memory_space<vmem>>, vector<1x8x24xf32>
    %817 = vector.shape_cast %816 : vector<1x8x24xf32> to vector<8x24xf32>
    %818 = vector.shape_cast %813 : vector<8x24xf32> to vector<1x8x24xf32>
    tpu.vector_store %arg18[%c1_359, %c0_360, %c0_361], %818 {strides = array<i32>} : memref<4x8x24xf32, #tpu.memory_space<vmem>>, vector<1x8x24xf32>,
    %c0_362 = arith.constant 0 : index
    %c1_363 = arith.constant 1 : index
    %819 = vector.load %arg19[%c0_362, %c1_363] : memref<8x4xf32, #tpu.memory_space<vmem>>, vector<8x3xf32>
    %820 = tpu.concatenate %819, %777 in 1 : vector<8x3xf32>, vector<8x1xf32> -> vector<8x4xf32>
    %c0_364 = arith.constant 0 : index
    %c0_365 = arith.constant 0 : index
    %821 = vector.load %arg19[%c0_364, %c0_365] : memref<8x4xf32, #tpu.memory_space<vmem>>, vector<8x4xf32>
    tpu.vector_store %arg19[%c0_364, %c0_365], %820 {strides = array<i32>} : memref<8x4xf32, #tpu.memory_space<vmem>>, vector<8x4xf32>,
    %cst_366 = arith.constant dense<0.000000e+00> : vector<8x4xf32>
    %822 = tpu.matmul %820, %13, %cst_366 {dimension_numbers = #tpu.dot_dimension_numbers<[1], [0], [0], [1], [0, 0, 1, 1], [], []>} : vector<8x4xf32>, vector<4x4xf32>, vector<8x4xf32> -> vector<8x4xf32>
    %cst_367 = arith.constant dense<0xFF800000> : vector<8xf32>
    %823 = vector.multi_reduction <maximumf>, %822, %cst_367 [1] : vector<8x4xf32> to vector<8xf32>
    %cst_368 = arith.constant 0xFF800000 : f32
    %824 = vector.broadcast %cst_368 : f32 to vector<8xf32>
    %825 = arith.maximumf %824, %823 : vector<8xf32>
    %826 = vector.shape_cast %825 : vector<8xf32> to vector<8x1xf32>
    %827 = vector.broadcast %826 : vector<8x1xf32> to vector<8x4xf32>
    %828 = arith.subf %822, %827 : vector<8x4xf32>
    %829 = math.exp %828 : vector<8x4xf32>
    %cst_369 = arith.constant dense<0.000000e+00> : vector<8xf32>
    %830 = vector.multi_reduction <add>, %829, %cst_369 [1] : vector<8x4xf32> to vector<8xf32>
    %831 = vector.shape_cast %830 : vector<8xf32> to vector<8x1xf32>
    %832 = vector.broadcast %831 : vector<8x1xf32> to vector<8x4xf32>
    %833 = arith.divf %829, %832 : vector<8x4xf32>
    %c2_370 = arith.constant 2 : index
    %c0_371 = arith.constant 0 : index
    %c0_372 = arith.constant 0 : index
    %834 = vector.load %arg18[%c2_370, %c0_371, %c0_372] : memref<4x8x24xf32, #tpu.memory_space<vmem>>, vector<1x8x24xf32>
    %835 = vector.shape_cast %834 : vector<1x8x24xf32> to vector<8x24xf32>
    %836 = vector.extract_strided_slice %833 {offsets = [0, 0], sizes = [8, 1], strides = [1, 1]} : vector<8x4xf32> to vector<8x1xf32>
    %837 = vector.broadcast %836 : vector<8x1xf32> to vector<8x24xf32>
    %838 = arith.mulf %835, %837 : vector<8x24xf32>
    %c3_373 = arith.constant 3 : index
    %c0_374 = arith.constant 0 : index
    %c0_375 = arith.constant 0 : index
    %839 = vector.load %arg18[%c3_373, %c0_374, %c0_375] : memref<4x8x24xf32, #tpu.memory_space<vmem>>, vector<1x8x24xf32>
    %840 = vector.shape_cast %839 : vector<1x8x24xf32> to vector<8x24xf32>
    %841 = vector.extract_strided_slice %833 {offsets = [0, 1], sizes = [8, 1], strides = [1, 1]} : vector<8x4xf32> to vector<8x1xf32>
    %842 = vector.broadcast %841 : vector<8x1xf32> to vector<8x24xf32>
    %843 = arith.mulf %840, %842 : vector<8x24xf32>
    %c0_376 = arith.constant 0 : index
    %c0_377 = arith.constant 0 : index
    %c0_378 = arith.constant 0 : index
    %844 = vector.load %arg18[%c0_376, %c0_377, %c0_378] : memref<4x8x24xf32, #tpu.memory_space<vmem>>, vector<1x8x24xf32>
    %845 = vector.shape_cast %844 : vector<1x8x24xf32> to vector<8x24xf32>
    %846 = vector.extract_strided_slice %833 {offsets = [0, 2], sizes = [8, 1], strides = [1, 1]} : vector<8x4xf32> to vector<8x1xf32>
    %847 = vector.broadcast %846 : vector<8x1xf32> to vector<8x24xf32>
    %848 = arith.mulf %845, %847 : vector<8x24xf32>
    %c1_379 = arith.constant 1 : index
    %c0_380 = arith.constant 0 : index
    %c0_381 = arith.constant 0 : index
    %849 = vector.load %arg18[%c1_379, %c0_380, %c0_381] : memref<4x8x24xf32, #tpu.memory_space<vmem>>, vector<1x8x24xf32>
    %850 = vector.shape_cast %849 : vector<1x8x24xf32> to vector<8x24xf32>
    %851 = vector.extract_strided_slice %833 {offsets = [0, 3], sizes = [8, 1], strides = [1, 1]} : vector<8x4xf32> to vector<8x1xf32>
    %852 = vector.broadcast %851 : vector<8x1xf32> to vector<8x24xf32>
    %853 = arith.mulf %850, %852 : vector<8x24xf32>
    %854 = arith.addf %838, %843 : vector<8x24xf32>
    %855 = arith.addf %854, %848 : vector<8x24xf32>
    %856 = arith.addf %855, %853 : vector<8x24xf32>
    %cst_382 = arith.constant 2.500000e-01 : f32
    %857 = vector.broadcast %cst_382 : f32 to vector<8x24xf32>
    %858 = arith.mulf %856, %857 : vector<8x24xf32>
    %859 = tpu.concatenate %838, %843, %848, %853 in 1 : vector<8x24xf32>, vector<8x24xf32>, vector<8x24xf32>, vector<8x24xf32> -> vector<8x96xf32>
    %cst_383 = arith.constant dense<0.000000e+00> : vector<8x4xf32>
    %860 = tpu.matmul %858, %7, %cst_383 {dimension_numbers = #tpu.dot_dimension_numbers<[1], [0], [0], [1], [0, 0, 1, 1], [], []>} : vector<8x24xf32>, vector<24x4xf32>, vector<8x4xf32> -> vector<8x4xf32>
    %861 = vector.broadcast %8 : vector<1x4xf32> to vector<8x4xf32>
    %862 = arith.addf %860, %861 : vector<8x4xf32>
    %cst_384 = arith.constant 0.000000e+00 : f32
    %863 = vector.broadcast %cst_384 : f32 to vector<8x4xf32>
    %864 = arith.maximumf %862, %863 : vector<8x4xf32>
    %cst_385 = arith.constant dense<0.000000e+00> : vector<8x24xf32>
    %865 = tpu.matmul %864, %9, %cst_385 {dimension_numbers = #tpu.dot_dimension_numbers<[1], [0], [0], [1], [0, 0, 1, 1], [], []>} : vector<8x4xf32>, vector<4x24xf32>, vector<8x24xf32> -> vector<8x24xf32>
    %866 = vector.broadcast %10 : vector<1x24xf32> to vector<8x24xf32>
    %867 = arith.addf %865, %866 : vector<8x24xf32>
    %868 = arith.negf %867 : vector<8x24xf32>
    %869 = math.exp %868 : vector<8x24xf32>
    %cst_386 = arith.constant 1.000000e+00 : f32
    %870 = vector.broadcast %cst_386 : f32 to vector<8x24xf32>
    %871 = arith.addf %870, %869 : vector<8x24xf32>
    %872 = arith.divf %870, %871 : vector<8x24xf32>
    %cst_387 = arith.constant dense<0.000000e+00> : vector<8x24xf32>
    %873 = tpu.matmul %859, %11, %cst_387 {dimension_numbers = #tpu.dot_dimension_numbers<[1], [0], [0], [1], [0, 0, 1, 1], [], []>} : vector<8x96xf32>, vector<96x24xf32>, vector<8x24xf32> -> vector<8x24xf32>
    %874 = vector.broadcast %12 : vector<1x24xf32> to vector<8x24xf32>
    %875 = arith.addf %873, %874 : vector<8x24xf32>
    %876 = arith.mulf %872, %875 : vector<8x24xf32>
    %877 = arith.addf %876, %813 : vector<8x24xf32>
    %c0_388 = arith.constant 0 : index
    %c5_389 = arith.constant 5 : index
    %c0_390 = arith.constant 0 : index
    %878 = vector.load %arg14[%c0_388, %c5_389, %c0_390] : memref<8x8x24xf32, #tpu.memory_space<vmem>>, vector<8x1x24xf32>
    %879 = vector.shape_cast %878 : vector<8x1x24xf32> to vector<8x24xf32>
    %880 = vector.shape_cast %877 : vector<8x24xf32> to vector<8x1x24xf32>
    tpu.vector_store %arg14[%c0_388, %c5_389, %c0_390], %880 {strides = array<i32>} : memref<8x8x24xf32, #tpu.memory_space<vmem>>, vector<8x1x24xf32>,
    %c0_391 = arith.constant 0 : index
    %c5_392 = arith.constant 5 : index
    %c0_393 = arith.constant 0 : index
    %881 = vector.load %arg15[%c0_391, %c5_392, %c0_393] : memref<8x8x1xf32, #tpu.memory_space<vmem>>, vector<8x1x1xf32>
    %882 = vector.shape_cast %881 : vector<8x1x1xf32> to vector<8x1xf32>
    %883 = vector.shape_cast %777 : vector<8x1xf32> to vector<8x1x1xf32>
    tpu.vector_store %arg15[%c0_391, %c5_392, %c0_393], %883 {strides = array<i32>} : memref<8x8x1xf32, #tpu.memory_space<vmem>>, vector<8x1x1xf32>,
    %c0_394 = arith.constant 0 : index
    %c6 = arith.constant 6 : index
    %c0_395 = arith.constant 0 : index
    %884 = vector.load %arg1[%c0_394, %c6, %c0_395] : memref<8x8x16xf32, #tpu.memory_space<vmem>>, vector<8x1x16xf32>
    %885 = vector.shape_cast %884 : vector<8x1x16xf32> to vector<8x16xf32>
    %c0_396 = arith.constant 0 : index
    %c6_397 = arith.constant 6 : index
    %c0_398 = arith.constant 0 : index
    %886 = vector.load %arg2[%c0_396, %c6_397, %c0_398] : memref<8x8x1xf32, #tpu.memory_space<vmem>>, vector<8x1x1xf32>
    %887 = vector.shape_cast %886 : vector<8x1x1xf32> to vector<8x1xf32>
    %c0_399 = arith.constant 0 : index
    %c0_400 = arith.constant 0 : index
    %888 = vector.load %arg17[%c0_399, %c0_400] : memref<8x24xf32, #tpu.memory_space<vmem>>, vector<8x24xf32>
    %c0_401 = arith.constant 0 : index
    %c0_402 = arith.constant 0 : index
    %889 = vector.load %arg16[%c0_401, %c0_402] : memref<8x24xf32, #tpu.memory_space<vmem>>, vector<8x24xf32>
    %890 = tpu.concatenate %885, %888, %887 in 1 : vector<8x16xf32>, vector<8x24xf32>, vector<8x1xf32> -> vector<8x41xf32>
    %cst_403 = arith.constant dense<0.000000e+00> : vector<8x128xf32>
    %891 = tpu.matmul %890, %3, %cst_403 {dimension_numbers = #tpu.dot_dimension_numbers<[1], [0], [0], [1], [0, 0, 1, 1], [], []>} : vector<8x41xf32>, vector<41x128xf32>, vector<8x128xf32> -> vector<8x128xf32>
    %892 = vector.broadcast %4 : vector<1x128xf32> to vector<8x128xf32>
    %893 = arith.addf %891, %892 : vector<8x128xf32>
    %894 = vector.extract_strided_slice %893 {offsets = [0, 0], sizes = [8, 3], strides = [1, 1]} : vector<8x128xf32> to vector<8x3xf32>
    %cst_404 = arith.constant dense<0xFF800000> : vector<8xf32>
    %895 = vector.multi_reduction <maximumf>, %894, %cst_404 [1] : vector<8x3xf32> to vector<8xf32>
    %cst_405 = arith.constant 0xFF800000 : f32
    %896 = vector.broadcast %cst_405 : f32 to vector<8xf32>
    %897 = arith.maximumf %896, %895 : vector<8xf32>
    %898 = vector.shape_cast %897 : vector<8xf32> to vector<8x1xf32>
    %899 = vector.broadcast %898 : vector<8x1xf32> to vector<8x3xf32>
    %900 = arith.subf %894, %899 : vector<8x3xf32>
    %901 = math.exp %900 : vector<8x3xf32>
    %cst_406 = arith.constant dense<0.000000e+00> : vector<8xf32>
    %902 = vector.multi_reduction <add>, %901, %cst_406 [1] : vector<8x3xf32> to vector<8xf32>
    %903 = vector.shape_cast %902 : vector<8xf32> to vector<8x1xf32>
    %904 = vector.broadcast %903 : vector<8x1xf32> to vector<8x3xf32>
    %905 = arith.divf %901, %904 : vector<8x3xf32>
    %906 = vector.extract_strided_slice %893 {offsets = [0, 3], sizes = [8, 3], strides = [1, 1]} : vector<8x128xf32> to vector<8x3xf32>
    %cst_407 = arith.constant dense<0xFF800000> : vector<8xf32>
    %907 = vector.multi_reduction <maximumf>, %906, %cst_407 [1] : vector<8x3xf32> to vector<8xf32>
    %cst_408 = arith.constant 0xFF800000 : f32
    %908 = vector.broadcast %cst_408 : f32 to vector<8xf32>
    %909 = arith.maximumf %908, %907 : vector<8xf32>
    %910 = vector.shape_cast %909 : vector<8xf32> to vector<8x1xf32>
    %911 = vector.broadcast %910 : vector<8x1xf32> to vector<8x3xf32>
    %912 = arith.subf %906, %911 : vector<8x3xf32>
    %913 = math.exp %912 : vector<8x3xf32>
    %cst_409 = arith.constant dense<0.000000e+00> : vector<8xf32>
    %914 = vector.multi_reduction <add>, %913, %cst_409 [1] : vector<8x3xf32> to vector<8xf32>
    %915 = vector.shape_cast %914 : vector<8xf32> to vector<8x1xf32>
    %916 = vector.broadcast %915 : vector<8x1xf32> to vector<8x3xf32>
    %917 = arith.divf %913, %916 : vector<8x3xf32>
    %cst_410 = arith.constant dense<0.000000e+00> : vector<8x25xf32>
    %918 = tpu.matmul %905, %5, %cst_410 {dimension_numbers = #tpu.dot_dimension_numbers<[1], [0], [0], [1], [0, 0, 1, 1], [], []>} : vector<8x3xf32>, vector<3x25xf32>, vector<8x25xf32> -> vector<8x25xf32>
    %919 = vector.extract_strided_slice %918 {offsets = [0, 0], sizes = [8, 24], strides = [1, 1]} : vector<8x25xf32> to vector<8x24xf32>
    %920 = vector.extract_strided_slice %918 {offsets = [0, 24], sizes = [8, 1], strides = [1, 1]} : vector<8x25xf32> to vector<8x1xf32>
    %cst_411 = arith.constant 1.000000e+00 : f32
    %921 = vector.broadcast %cst_411 : f32 to vector<8x1xf32>
    %922 = arith.subf %921, %920 : vector<8x1xf32>
    %cst_412 = arith.constant dense<0.000000e+00> : vector<8x24xf32>
    %923 = tpu.matmul %917, %6, %cst_412 {dimension_numbers = #tpu.dot_dimension_numbers<[1], [0], [0], [1], [0, 0, 1, 1], [], []>} : vector<8x3xf32>, vector<3x24xf32>, vector<8x24xf32> -> vector<8x24xf32>
    %cst_413 = arith.constant 1.000000e+00 : f32
    %924 = vector.broadcast %cst_413 : f32 to vector<8x24xf32>
    %925 = arith.subf %924, %923 : vector<8x24xf32>
    %926 = vector.extract_strided_slice %893 {offsets = [0, 6], sizes = [8, 24], strides = [1, 1]} : vector<8x128xf32> to vector<8x24xf32>
    %927 = arith.negf %926 : vector<8x24xf32>
    %928 = math.exp %927 : vector<8x24xf32>
    %cst_414 = arith.constant 1.000000e+00 : f32
    %929 = vector.broadcast %cst_414 : f32 to vector<8x24xf32>
    %930 = arith.addf %929, %928 : vector<8x24xf32>
    %931 = arith.divf %929, %930 : vector<8x24xf32>
    %932 = vector.extract_strided_slice %893 {offsets = [0, 30], sizes = [8, 24], strides = [1, 1]} : vector<8x128xf32> to vector<8x24xf32>
    %933 = arith.negf %932 : vector<8x24xf32>
    %934 = math.exp %933 : vector<8x24xf32>
    %cst_415 = arith.constant 1.000000e+00 : f32
    %935 = vector.broadcast %cst_415 : f32 to vector<8x24xf32>
    %936 = arith.addf %935, %934 : vector<8x24xf32>
    %937 = arith.divf %935, %936 : vector<8x24xf32>
    %938 = vector.extract_strided_slice %893 {offsets = [0, 54], sizes = [8, 24], strides = [1, 1]} : vector<8x128xf32> to vector<8x24xf32>
    %939 = arith.negf %938 : vector<8x24xf32>
    %940 = math.exp %939 : vector<8x24xf32>
    %cst_416 = arith.constant 1.000000e+00 : f32
    %941 = vector.broadcast %cst_416 : f32 to vector<8x24xf32>
    %942 = arith.addf %941, %940 : vector<8x24xf32>
    %943 = arith.divf %941, %942 : vector<8x24xf32>
    %944 = vector.extract_strided_slice %893 {offsets = [0, 78], sizes = [8, 24], strides = [1, 1]} : vector<8x128xf32> to vector<8x24xf32>
    %945 = math.tanh %944 : vector<8x24xf32>
    %946 = arith.mulf %919, %925 : vector<8x24xf32>
    %947 = arith.mulf %931, %889 : vector<8x24xf32>
    %948 = arith.mulf %937, %945 : vector<8x24xf32>
    %949 = arith.addf %947, %948 : vector<8x24xf32>
    %950 = arith.mulf %946, %949 : vector<8x24xf32>
    %951 = arith.subf %919, %946 : vector<8x24xf32>
    %952 = arith.mulf %951, %889 : vector<8x24xf32>
    %953 = arith.addf %950, %952 : vector<8x24xf32>
    %954 = arith.subf %925, %946 : vector<8x24xf32>
    %955 = arith.mulf %954, %945 : vector<8x24xf32>
    %956 = arith.addf %953, %955 : vector<8x24xf32>
    %957 = math.tanh %956 : vector<8x24xf32>
    %958 = arith.mulf %943, %957 : vector<8x24xf32>
    %c0_417 = arith.constant 0 : index
    %c0_418 = arith.constant 0 : index
    %959 = vector.load %arg16[%c0_417, %c0_418] : memref<8x24xf32, #tpu.memory_space<vmem>>, vector<8x24xf32>
    tpu.vector_store %arg16[%c0_417, %c0_418], %956 {strides = array<i32>} : memref<8x24xf32, #tpu.memory_space<vmem>>, vector<8x24xf32>,
    %c0_419 = arith.constant 0 : index
    %c0_420 = arith.constant 0 : index
    %960 = vector.load %arg17[%c0_419, %c0_420] : memref<8x24xf32, #tpu.memory_space<vmem>>, vector<8x24xf32>
    tpu.vector_store %arg17[%c0_419, %c0_420], %958 {strides = array<i32>} : memref<8x24xf32, #tpu.memory_space<vmem>>, vector<8x24xf32>,
    %c2_421 = arith.constant 2 : index
    %c0_422 = arith.constant 0 : index
    %c0_423 = arith.constant 0 : index
    %961 = vector.load %arg18[%c2_421, %c0_422, %c0_423] : memref<4x8x24xf32, #tpu.memory_space<vmem>>, vector<1x8x24xf32>
    %962 = vector.shape_cast %961 : vector<1x8x24xf32> to vector<8x24xf32>
    %963 = vector.shape_cast %958 : vector<8x24xf32> to vector<1x8x24xf32>
    tpu.vector_store %arg18[%c2_421, %c0_422, %c0_423], %963 {strides = array<i32>} : memref<4x8x24xf32, #tpu.memory_space<vmem>>, vector<1x8x24xf32>,
    %c0_424 = arith.constant 0 : index
    %c1_425 = arith.constant 1 : index
    %964 = vector.load %arg19[%c0_424, %c1_425] : memref<8x4xf32, #tpu.memory_space<vmem>>, vector<8x3xf32>
    %965 = tpu.concatenate %964, %922 in 1 : vector<8x3xf32>, vector<8x1xf32> -> vector<8x4xf32>
    %c0_426 = arith.constant 0 : index
    %c0_427 = arith.constant 0 : index
    %966 = vector.load %arg19[%c0_426, %c0_427] : memref<8x4xf32, #tpu.memory_space<vmem>>, vector<8x4xf32>
    tpu.vector_store %arg19[%c0_426, %c0_427], %965 {strides = array<i32>} : memref<8x4xf32, #tpu.memory_space<vmem>>, vector<8x4xf32>,
    %cst_428 = arith.constant dense<0.000000e+00> : vector<8x4xf32>
    %967 = tpu.matmul %965, %13, %cst_428 {dimension_numbers = #tpu.dot_dimension_numbers<[1], [0], [0], [1], [0, 0, 1, 1], [], []>} : vector<8x4xf32>, vector<4x4xf32>, vector<8x4xf32> -> vector<8x4xf32>
    %cst_429 = arith.constant dense<0xFF800000> : vector<8xf32>
    %968 = vector.multi_reduction <maximumf>, %967, %cst_429 [1] : vector<8x4xf32> to vector<8xf32>
    %cst_430 = arith.constant 0xFF800000 : f32
    %969 = vector.broadcast %cst_430 : f32 to vector<8xf32>
    %970 = arith.maximumf %969, %968 : vector<8xf32>
    %971 = vector.shape_cast %970 : vector<8xf32> to vector<8x1xf32>
    %972 = vector.broadcast %971 : vector<8x1xf32> to vector<8x4xf32>
    %973 = arith.subf %967, %972 : vector<8x4xf32>
    %974 = math.exp %973 : vector<8x4xf32>
    %cst_431 = arith.constant dense<0.000000e+00> : vector<8xf32>
    %975 = vector.multi_reduction <add>, %974, %cst_431 [1] : vector<8x4xf32> to vector<8xf32>
    %976 = vector.shape_cast %975 : vector<8xf32> to vector<8x1xf32>
    %977 = vector.broadcast %976 : vector<8x1xf32> to vector<8x4xf32>
    %978 = arith.divf %974, %977 : vector<8x4xf32>
    %c3_432 = arith.constant 3 : index
    %c0_433 = arith.constant 0 : index
    %c0_434 = arith.constant 0 : index
    %979 = vector.load %arg18[%c3_432, %c0_433, %c0_434] : memref<4x8x24xf32, #tpu.memory_space<vmem>>, vector<1x8x24xf32>
    %980 = vector.shape_cast %979 : vector<1x8x24xf32> to vector<8x24xf32>
    %981 = vector.extract_strided_slice %978 {offsets = [0, 0], sizes = [8, 1], strides = [1, 1]} : vector<8x4xf32> to vector<8x1xf32>
    %982 = vector.broadcast %981 : vector<8x1xf32> to vector<8x24xf32>
    %983 = arith.mulf %980, %982 : vector<8x24xf32>
    %c0_435 = arith.constant 0 : index
    %c0_436 = arith.constant 0 : index
    %c0_437 = arith.constant 0 : index
    %984 = vector.load %arg18[%c0_435, %c0_436, %c0_437] : memref<4x8x24xf32, #tpu.memory_space<vmem>>, vector<1x8x24xf32>
    %985 = vector.shape_cast %984 : vector<1x8x24xf32> to vector<8x24xf32>
    %986 = vector.extract_strided_slice %978 {offsets = [0, 1], sizes = [8, 1], strides = [1, 1]} : vector<8x4xf32> to vector<8x1xf32>
    %987 = vector.broadcast %986 : vector<8x1xf32> to vector<8x24xf32>
    %988 = arith.mulf %985, %987 : vector<8x24xf32>
    %c1_438 = arith.constant 1 : index
    %c0_439 = arith.constant 0 : index
    %c0_440 = arith.constant 0 : index
    %989 = vector.load %arg18[%c1_438, %c0_439, %c0_440] : memref<4x8x24xf32, #tpu.memory_space<vmem>>, vector<1x8x24xf32>
    %990 = vector.shape_cast %989 : vector<1x8x24xf32> to vector<8x24xf32>
    %991 = vector.extract_strided_slice %978 {offsets = [0, 2], sizes = [8, 1], strides = [1, 1]} : vector<8x4xf32> to vector<8x1xf32>
    %992 = vector.broadcast %991 : vector<8x1xf32> to vector<8x24xf32>
    %993 = arith.mulf %990, %992 : vector<8x24xf32>
    %c2_441 = arith.constant 2 : index
    %c0_442 = arith.constant 0 : index
    %c0_443 = arith.constant 0 : index
    %994 = vector.load %arg18[%c2_441, %c0_442, %c0_443] : memref<4x8x24xf32, #tpu.memory_space<vmem>>, vector<1x8x24xf32>
    %995 = vector.shape_cast %994 : vector<1x8x24xf32> to vector<8x24xf32>
    %996 = vector.extract_strided_slice %978 {offsets = [0, 3], sizes = [8, 1], strides = [1, 1]} : vector<8x4xf32> to vector<8x1xf32>
    %997 = vector.broadcast %996 : vector<8x1xf32> to vector<8x24xf32>
    %998 = arith.mulf %995, %997 : vector<8x24xf32>
    %999 = arith.addf %983, %988 : vector<8x24xf32>
    %1000 = arith.addf %999, %993 : vector<8x24xf32>
    %1001 = arith.addf %1000, %998 : vector<8x24xf32>
    %cst_444 = arith.constant 2.500000e-01 : f32
    %1002 = vector.broadcast %cst_444 : f32 to vector<8x24xf32>
    %1003 = arith.mulf %1001, %1002 : vector<8x24xf32>
    %1004 = tpu.concatenate %983, %988, %993, %998 in 1 : vector<8x24xf32>, vector<8x24xf32>, vector<8x24xf32>, vector<8x24xf32> -> vector<8x96xf32>
    %cst_445 = arith.constant dense<0.000000e+00> : vector<8x4xf32>
    %1005 = tpu.matmul %1003, %7, %cst_445 {dimension_numbers = #tpu.dot_dimension_numbers<[1], [0], [0], [1], [0, 0, 1, 1], [], []>} : vector<8x24xf32>, vector<24x4xf32>, vector<8x4xf32> -> vector<8x4xf32>
    %1006 = vector.broadcast %8 : vector<1x4xf32> to vector<8x4xf32>
    %1007 = arith.addf %1005, %1006 : vector<8x4xf32>
    %cst_446 = arith.constant 0.000000e+00 : f32
    %1008 = vector.broadcast %cst_446 : f32 to vector<8x4xf32>
    %1009 = arith.maximumf %1007, %1008 : vector<8x4xf32>
    %cst_447 = arith.constant dense<0.000000e+00> : vector<8x24xf32>
    %1010 = tpu.matmul %1009, %9, %cst_447 {dimension_numbers = #tpu.dot_dimension_numbers<[1], [0], [0], [1], [0, 0, 1, 1], [], []>} : vector<8x4xf32>, vector<4x24xf32>, vector<8x24xf32> -> vector<8x24xf32>
    %1011 = vector.broadcast %10 : vector<1x24xf32> to vector<8x24xf32>
    %1012 = arith.addf %1010, %1011 : vector<8x24xf32>
    %1013 = arith.negf %1012 : vector<8x24xf32>
    %1014 = math.exp %1013 : vector<8x24xf32>
    %cst_448 = arith.constant 1.000000e+00 : f32
    %1015 = vector.broadcast %cst_448 : f32 to vector<8x24xf32>
    %1016 = arith.addf %1015, %1014 : vector<8x24xf32>
    %1017 = arith.divf %1015, %1016 : vector<8x24xf32>
    %cst_449 = arith.constant dense<0.000000e+00> : vector<8x24xf32>
    %1018 = tpu.matmul %1004, %11, %cst_449 {dimension_numbers = #tpu.dot_dimension_numbers<[1], [0], [0], [1], [0, 0, 1, 1], [], []>} : vector<8x96xf32>, vector<96x24xf32>, vector<8x24xf32> -> vector<8x24xf32>
    %1019 = vector.broadcast %12 : vector<1x24xf32> to vector<8x24xf32>
    %1020 = arith.addf %1018, %1019 : vector<8x24xf32>
    %1021 = arith.mulf %1017, %1020 : vector<8x24xf32>
    %1022 = arith.addf %1021, %958 : vector<8x24xf32>
    %c0_450 = arith.constant 0 : index
    %c6_451 = arith.constant 6 : index
    %c0_452 = arith.constant 0 : index
    %1023 = vector.load %arg14[%c0_450, %c6_451, %c0_452] : memref<8x8x24xf32, #tpu.memory_space<vmem>>, vector<8x1x24xf32>
    %1024 = vector.shape_cast %1023 : vector<8x1x24xf32> to vector<8x24xf32>
    %1025 = vector.shape_cast %1022 : vector<8x24xf32> to vector<8x1x24xf32>
    tpu.vector_store %arg14[%c0_450, %c6_451, %c0_452], %1025 {strides = array<i32>} : memref<8x8x24xf32, #tpu.memory_space<vmem>>, vector<8x1x24xf32>,
    %c0_453 = arith.constant 0 : index
    %c6_454 = arith.constant 6 : index
    %c0_455 = arith.constant 0 : index
    %1026 = vector.load %arg15[%c0_453, %c6_454, %c0_455] : memref<8x8x1xf32, #tpu.memory_space<vmem>>, vector<8x1x1xf32>
    %1027 = vector.shape_cast %1026 : vector<8x1x1xf32> to vector<8x1xf32>
    %1028 = vector.shape_cast %922 : vector<8x1xf32> to vector<8x1x1xf32>
    tpu.vector_store %arg15[%c0_453, %c6_454, %c0_455], %1028 {strides = array<i32>} : memref<8x8x1xf32, #tpu.memory_space<vmem>>, vector<8x1x1xf32>,
    %c0_456 = arith.constant 0 : index
    %c7 = arith.constant 7 : index
    %c0_457 = arith.constant 0 : index
    %1029 = vector.load %arg1[%c0_456, %c7, %c0_457] : memref<8x8x16xf32, #tpu.memory_space<vmem>>, vector<8x1x16xf32>
    %1030 = vector.shape_cast %1029 : vector<8x1x16xf32> to vector<8x16xf32>
    %c0_458 = arith.constant 0 : index
    %c7_459 = arith.constant 7 : index
    %c0_460 = arith.constant 0 : index
    %1031 = vector.load %arg2[%c0_458, %c7_459, %c0_460] : memref<8x8x1xf32, #tpu.memory_space<vmem>>, vector<8x1x1xf32>
    %1032 = vector.shape_cast %1031 : vector<8x1x1xf32> to vector<8x1xf32>
    %c0_461 = arith.constant 0 : index
    %c0_462 = arith.constant 0 : index
    %1033 = vector.load %arg17[%c0_461, %c0_462] : memref<8x24xf32, #tpu.memory_space<vmem>>, vector<8x24xf32>
    %c0_463 = arith.constant 0 : index
    %c0_464 = arith.constant 0 : index
    %1034 = vector.load %arg16[%c0_463, %c0_464] : memref<8x24xf32, #tpu.memory_space<vmem>>, vector<8x24xf32>
    %1035 = tpu.concatenate %1030, %1033, %1032 in 1 : vector<8x16xf32>, vector<8x24xf32>, vector<8x1xf32> -> vector<8x41xf32>
    %cst_465 = arith.constant dense<0.000000e+00> : vector<8x128xf32>
    %1036 = tpu.matmul %1035, %3, %cst_465 {dimension_numbers = #tpu.dot_dimension_numbers<[1], [0], [0], [1], [0, 0, 1, 1], [], []>} : vector<8x41xf32>, vector<41x128xf32>, vector<8x128xf32> -> vector<8x128xf32>
    %1037 = vector.broadcast %4 : vector<1x128xf32> to vector<8x128xf32>
    %1038 = arith.addf %1036, %1037 : vector<8x128xf32>
    %1039 = vector.extract_strided_slice %1038 {offsets = [0, 0], sizes = [8, 3], strides = [1, 1]} : vector<8x128xf32> to vector<8x3xf32>
    %cst_466 = arith.constant dense<0xFF800000> : vector<8xf32>
    %1040 = vector.multi_reduction <maximumf>, %1039, %cst_466 [1] : vector<8x3xf32> to vector<8xf32>
    %cst_467 = arith.constant 0xFF800000 : f32
    %1041 = vector.broadcast %cst_467 : f32 to vector<8xf32>
    %1042 = arith.maximumf %1041, %1040 : vector<8xf32>
    %1043 = vector.shape_cast %1042 : vector<8xf32> to vector<8x1xf32>
    %1044 = vector.broadcast %1043 : vector<8x1xf32> to vector<8x3xf32>
    %1045 = arith.subf %1039, %1044 : vector<8x3xf32>
    %1046 = math.exp %1045 : vector<8x3xf32>
    %cst_468 = arith.constant dense<0.000000e+00> : vector<8xf32>
    %1047 = vector.multi_reduction <add>, %1046, %cst_468 [1] : vector<8x3xf32> to vector<8xf32>
    %1048 = vector.shape_cast %1047 : vector<8xf32> to vector<8x1xf32>
    %1049 = vector.broadcast %1048 : vector<8x1xf32> to vector<8x3xf32>
    %1050 = arith.divf %1046, %1049 : vector<8x3xf32>
    %1051 = vector.extract_strided_slice %1038 {offsets = [0, 3], sizes = [8, 3], strides = [1, 1]} : vector<8x128xf32> to vector<8x3xf32>
    %cst_469 = arith.constant dense<0xFF800000> : vector<8xf32>
    %1052 = vector.multi_reduction <maximumf>, %1051, %cst_469 [1] : vector<8x3xf32> to vector<8xf32>
    %cst_470 = arith.constant 0xFF800000 : f32
    %1053 = vector.broadcast %cst_470 : f32 to vector<8xf32>
    %1054 = arith.maximumf %1053, %1052 : vector<8xf32>
    %1055 = vector.shape_cast %1054 : vector<8xf32> to vector<8x1xf32>
    %1056 = vector.broadcast %1055 : vector<8x1xf32> to vector<8x3xf32>
    %1057 = arith.subf %1051, %1056 : vector<8x3xf32>
    %1058 = math.exp %1057 : vector<8x3xf32>
    %cst_471 = arith.constant dense<0.000000e+00> : vector<8xf32>
    %1059 = vector.multi_reduction <add>, %1058, %cst_471 [1] : vector<8x3xf32> to vector<8xf32>
    %1060 = vector.shape_cast %1059 : vector<8xf32> to vector<8x1xf32>
    %1061 = vector.broadcast %1060 : vector<8x1xf32> to vector<8x3xf32>
    %1062 = arith.divf %1058, %1061 : vector<8x3xf32>
    %cst_472 = arith.constant dense<0.000000e+00> : vector<8x25xf32>
    %1063 = tpu.matmul %1050, %5, %cst_472 {dimension_numbers = #tpu.dot_dimension_numbers<[1], [0], [0], [1], [0, 0, 1, 1], [], []>} : vector<8x3xf32>, vector<3x25xf32>, vector<8x25xf32> -> vector<8x25xf32>
    %1064 = vector.extract_strided_slice %1063 {offsets = [0, 0], sizes = [8, 24], strides = [1, 1]} : vector<8x25xf32> to vector<8x24xf32>
    %1065 = vector.extract_strided_slice %1063 {offsets = [0, 24], sizes = [8, 1], strides = [1, 1]} : vector<8x25xf32> to vector<8x1xf32>
    %cst_473 = arith.constant 1.000000e+00 : f32
    %1066 = vector.broadcast %cst_473 : f32 to vector<8x1xf32>
    %1067 = arith.subf %1066, %1065 : vector<8x1xf32>
    %cst_474 = arith.constant dense<0.000000e+00> : vector<8x24xf32>
    %1068 = tpu.matmul %1062, %6, %cst_474 {dimension_numbers = #tpu.dot_dimension_numbers<[1], [0], [0], [1], [0, 0, 1, 1], [], []>} : vector<8x3xf32>, vector<3x24xf32>, vector<8x24xf32> -> vector<8x24xf32>
    %cst_475 = arith.constant 1.000000e+00 : f32
    %1069 = vector.broadcast %cst_475 : f32 to vector<8x24xf32>
    %1070 = arith.subf %1069, %1068 : vector<8x24xf32>
    %1071 = vector.extract_strided_slice %1038 {offsets = [0, 6], sizes = [8, 24], strides = [1, 1]} : vector<8x128xf32> to vector<8x24xf32>
    %1072 = arith.negf %1071 : vector<8x24xf32>
    %1073 = math.exp %1072 : vector<8x24xf32>
    %cst_476 = arith.constant 1.000000e+00 : f32
    %1074 = vector.broadcast %cst_476 : f32 to vector<8x24xf32>
    %1075 = arith.addf %1074, %1073 : vector<8x24xf32>
    %1076 = arith.divf %1074, %1075 : vector<8x24xf32>
    %1077 = vector.extract_strided_slice %1038 {offsets = [0, 30], sizes = [8, 24], strides = [1, 1]} : vector<8x128xf32> to vector<8x24xf32>
    %1078 = arith.negf %1077 : vector<8x24xf32>
    %1079 = math.exp %1078 : vector<8x24xf32>
    %cst_477 = arith.constant 1.000000e+00 : f32
    %1080 = vector.broadcast %cst_477 : f32 to vector<8x24xf32>
    %1081 = arith.addf %1080, %1079 : vector<8x24xf32>
    %1082 = arith.divf %1080, %1081 : vector<8x24xf32>
    %1083 = vector.extract_strided_slice %1038 {offsets = [0, 54], sizes = [8, 24], strides = [1, 1]} : vector<8x128xf32> to vector<8x24xf32>
    %1084 = arith.negf %1083 : vector<8x24xf32>
    %1085 = math.exp %1084 : vector<8x24xf32>
    %cst_478 = arith.constant 1.000000e+00 : f32
    %1086 = vector.broadcast %cst_478 : f32 to vector<8x24xf32>
    %1087 = arith.addf %1086, %1085 : vector<8x24xf32>
    %1088 = arith.divf %1086, %1087 : vector<8x24xf32>
    %1089 = vector.extract_strided_slice %1038 {offsets = [0, 78], sizes = [8, 24], strides = [1, 1]} : vector<8x128xf32> to vector<8x24xf32>
    %1090 = math.tanh %1089 : vector<8x24xf32>
    %1091 = arith.mulf %1064, %1070 : vector<8x24xf32>
    %1092 = arith.mulf %1076, %1034 : vector<8x24xf32>
    %1093 = arith.mulf %1082, %1090 : vector<8x24xf32>
    %1094 = arith.addf %1092, %1093 : vector<8x24xf32>
    %1095 = arith.mulf %1091, %1094 : vector<8x24xf32>
    %1096 = arith.subf %1064, %1091 : vector<8x24xf32>
    %1097 = arith.mulf %1096, %1034 : vector<8x24xf32>
    %1098 = arith.addf %1095, %1097 : vector<8x24xf32>
    %1099 = arith.subf %1070, %1091 : vector<8x24xf32>
    %1100 = arith.mulf %1099, %1090 : vector<8x24xf32>
    %1101 = arith.addf %1098, %1100 : vector<8x24xf32>
    %1102 = math.tanh %1101 : vector<8x24xf32>
    %1103 = arith.mulf %1088, %1102 : vector<8x24xf32>
    %c0_479 = arith.constant 0 : index
    %c0_480 = arith.constant 0 : index
    %1104 = vector.load %arg16[%c0_479, %c0_480] : memref<8x24xf32, #tpu.memory_space<vmem>>, vector<8x24xf32>
    tpu.vector_store %arg16[%c0_479, %c0_480], %1101 {strides = array<i32>} : memref<8x24xf32, #tpu.memory_space<vmem>>, vector<8x24xf32>,
    %c0_481 = arith.constant 0 : index
    %c0_482 = arith.constant 0 : index
    %1105 = vector.load %arg17[%c0_481, %c0_482] : memref<8x24xf32, #tpu.memory_space<vmem>>, vector<8x24xf32>
    tpu.vector_store %arg17[%c0_481, %c0_482], %1103 {strides = array<i32>} : memref<8x24xf32, #tpu.memory_space<vmem>>, vector<8x24xf32>,
    %c3_483 = arith.constant 3 : index
    %c0_484 = arith.constant 0 : index
    %c0_485 = arith.constant 0 : index
    %1106 = vector.load %arg18[%c3_483, %c0_484, %c0_485] : memref<4x8x24xf32, #tpu.memory_space<vmem>>, vector<1x8x24xf32>
    %1107 = vector.shape_cast %1106 : vector<1x8x24xf32> to vector<8x24xf32>
    %1108 = vector.shape_cast %1103 : vector<8x24xf32> to vector<1x8x24xf32>
    tpu.vector_store %arg18[%c3_483, %c0_484, %c0_485], %1108 {strides = array<i32>} : memref<4x8x24xf32, #tpu.memory_space<vmem>>, vector<1x8x24xf32>,
    %c0_486 = arith.constant 0 : index
    %c1_487 = arith.constant 1 : index
    %1109 = vector.load %arg19[%c0_486, %c1_487] : memref<8x4xf32, #tpu.memory_space<vmem>>, vector<8x3xf32>
    %1110 = tpu.concatenate %1109, %1067 in 1 : vector<8x3xf32>, vector<8x1xf32> -> vector<8x4xf32>
    %c0_488 = arith.constant 0 : index
    %c0_489 = arith.constant 0 : index
    %1111 = vector.load %arg19[%c0_488, %c0_489] : memref<8x4xf32, #tpu.memory_space<vmem>>, vector<8x4xf32>
    tpu.vector_store %arg19[%c0_488, %c0_489], %1110 {strides = array<i32>} : memref<8x4xf32, #tpu.memory_space<vmem>>, vector<8x4xf32>,
    %cst_490 = arith.constant dense<0.000000e+00> : vector<8x4xf32>
    %1112 = tpu.matmul %1110, %13, %cst_490 {dimension_numbers = #tpu.dot_dimension_numbers<[1], [0], [0], [1], [0, 0, 1, 1], [], []>} : vector<8x4xf32>, vector<4x4xf32>, vector<8x4xf32> -> vector<8x4xf32>
    %cst_491 = arith.constant dense<0xFF800000> : vector<8xf32>
    %1113 = vector.multi_reduction <maximumf>, %1112, %cst_491 [1] : vector<8x4xf32> to vector<8xf32>
    %cst_492 = arith.constant 0xFF800000 : f32
    %1114 = vector.broadcast %cst_492 : f32 to vector<8xf32>
    %1115 = arith.maximumf %1114, %1113 : vector<8xf32>
    %1116 = vector.shape_cast %1115 : vector<8xf32> to vector<8x1xf32>
    %1117 = vector.broadcast %1116 : vector<8x1xf32> to vector<8x4xf32>
    %1118 = arith.subf %1112, %1117 : vector<8x4xf32>
    %1119 = math.exp %1118 : vector<8x4xf32>
    %cst_493 = arith.constant dense<0.000000e+00> : vector<8xf32>
    %1120 = vector.multi_reduction <add>, %1119, %cst_493 [1] : vector<8x4xf32> to vector<8xf32>
    %1121 = vector.shape_cast %1120 : vector<8xf32> to vector<8x1xf32>
    %1122 = vector.broadcast %1121 : vector<8x1xf32> to vector<8x4xf32>
    %1123 = arith.divf %1119, %1122 : vector<8x4xf32>
    %c0_494 = arith.constant 0 : index
    %c0_495 = arith.constant 0 : index
    %c0_496 = arith.constant 0 : index
    %1124 = vector.load %arg18[%c0_494, %c0_495, %c0_496] : memref<4x8x24xf32, #tpu.memory_space<vmem>>, vector<1x8x24xf32>
    %1125 = vector.shape_cast %1124 : vector<1x8x24xf32> to vector<8x24xf32>
    %1126 = vector.extract_strided_slice %1123 {offsets = [0, 0], sizes = [8, 1], strides = [1, 1]} : vector<8x4xf32> to vector<8x1xf32>
    %1127 = vector.broadcast %1126 : vector<8x1xf32> to vector<8x24xf32>
    %1128 = arith.mulf %1125, %1127 : vector<8x24xf32>
    %c1_497 = arith.constant 1 : index
    %c0_498 = arith.constant 0 : index
    %c0_499 = arith.constant 0 : index
    %1129 = vector.load %arg18[%c1_497, %c0_498, %c0_499] : memref<4x8x24xf32, #tpu.memory_space<vmem>>, vector<1x8x24xf32>
    %1130 = vector.shape_cast %1129 : vector<1x8x24xf32> to vector<8x24xf32>
    %1131 = vector.extract_strided_slice %1123 {offsets = [0, 1], sizes = [8, 1], strides = [1, 1]} : vector<8x4xf32> to vector<8x1xf32>
    %1132 = vector.broadcast %1131 : vector<8x1xf32> to vector<8x24xf32>
    %1133 = arith.mulf %1130, %1132 : vector<8x24xf32>
    %c2_500 = arith.constant 2 : index
    %c0_501 = arith.constant 0 : index
    %c0_502 = arith.constant 0 : index
    %1134 = vector.load %arg18[%c2_500, %c0_501, %c0_502] : memref<4x8x24xf32, #tpu.memory_space<vmem>>, vector<1x8x24xf32>
    %1135 = vector.shape_cast %1134 : vector<1x8x24xf32> to vector<8x24xf32>
    %1136 = vector.extract_strided_slice %1123 {offsets = [0, 2], sizes = [8, 1], strides = [1, 1]} : vector<8x4xf32> to vector<8x1xf32>
    %1137 = vector.broadcast %1136 : vector<8x1xf32> to vector<8x24xf32>
    %1138 = arith.mulf %1135, %1137 : vector<8x24xf32>
    %c3_503 = arith.constant 3 : index
    %c0_504 = arith.constant 0 : index
    %c0_505 = arith.constant 0 : index
    %1139 = vector.load %arg18[%c3_503, %c0_504, %c0_505] : memref<4x8x24xf32, #tpu.memory_space<vmem>>, vector<1x8x24xf32>
    %1140 = vector.shape_cast %1139 : vector<1x8x24xf32> to vector<8x24xf32>
    %1141 = vector.extract_strided_slice %1123 {offsets = [0, 3], sizes = [8, 1], strides = [1, 1]} : vector<8x4xf32> to vector<8x1xf32>
    %1142 = vector.broadcast %1141 : vector<8x1xf32> to vector<8x24xf32>
    %1143 = arith.mulf %1140, %1142 : vector<8x24xf32>
    %1144 = arith.addf %1128, %1133 : vector<8x24xf32>
    %1145 = arith.addf %1144, %1138 : vector<8x24xf32>
    %1146 = arith.addf %1145, %1143 : vector<8x24xf32>
    %cst_506 = arith.constant 2.500000e-01 : f32
    %1147 = vector.broadcast %cst_506 : f32 to vector<8x24xf32>
    %1148 = arith.mulf %1146, %1147 : vector<8x24xf32>
    %1149 = tpu.concatenate %1128, %1133, %1138, %1143 in 1 : vector<8x24xf32>, vector<8x24xf32>, vector<8x24xf32>, vector<8x24xf32> -> vector<8x96xf32>
    %cst_507 = arith.constant dense<0.000000e+00> : vector<8x4xf32>
    %1150 = tpu.matmul %1148, %7, %cst_507 {dimension_numbers = #tpu.dot_dimension_numbers<[1], [0], [0], [1], [0, 0, 1, 1], [], []>} : vector<8x24xf32>, vector<24x4xf32>, vector<8x4xf32> -> vector<8x4xf32>
    %1151 = vector.broadcast %8 : vector<1x4xf32> to vector<8x4xf32>
    %1152 = arith.addf %1150, %1151 : vector<8x4xf32>
    %cst_508 = arith.constant 0.000000e+00 : f32
    %1153 = vector.broadcast %cst_508 : f32 to vector<8x4xf32>
    %1154 = arith.maximumf %1152, %1153 : vector<8x4xf32>
    %cst_509 = arith.constant dense<0.000000e+00> : vector<8x24xf32>
    %1155 = tpu.matmul %1154, %9, %cst_509 {dimension_numbers = #tpu.dot_dimension_numbers<[1], [0], [0], [1], [0, 0, 1, 1], [], []>} : vector<8x4xf32>, vector<4x24xf32>, vector<8x24xf32> -> vector<8x24xf32>
    %1156 = vector.broadcast %10 : vector<1x24xf32> to vector<8x24xf32>
    %1157 = arith.addf %1155, %1156 : vector<8x24xf32>
    %1158 = arith.negf %1157 : vector<8x24xf32>
    %1159 = math.exp %1158 : vector<8x24xf32>
    %cst_510 = arith.constant 1.000000e+00 : f32
    %1160 = vector.broadcast %cst_510 : f32 to vector<8x24xf32>
    %1161 = arith.addf %1160, %1159 : vector<8x24xf32>
    %1162 = arith.divf %1160, %1161 : vector<8x24xf32>
    %cst_511 = arith.constant dense<0.000000e+00> : vector<8x24xf32>
    %1163 = tpu.matmul %1149, %11, %cst_511 {dimension_numbers = #tpu.dot_dimension_numbers<[1], [0], [0], [1], [0, 0, 1, 1], [], []>} : vector<8x96xf32>, vector<96x24xf32>, vector<8x24xf32> -> vector<8x24xf32>
    %1164 = vector.broadcast %12 : vector<1x24xf32> to vector<8x24xf32>
    %1165 = arith.addf %1163, %1164 : vector<8x24xf32>
    %1166 = arith.mulf %1162, %1165 : vector<8x24xf32>
    %1167 = arith.addf %1166, %1103 : vector<8x24xf32>
    %c0_512 = arith.constant 0 : index
    %c7_513 = arith.constant 7 : index
    %c0_514 = arith.constant 0 : index
    %1168 = vector.load %arg14[%c0_512, %c7_513, %c0_514] : memref<8x8x24xf32, #tpu.memory_space<vmem>>, vector<8x1x24xf32>
    %1169 = vector.shape_cast %1168 : vector<8x1x24xf32> to vector<8x24xf32>
    %1170 = vector.shape_cast %1167 : vector<8x24xf32> to vector<8x1x24xf32>
    tpu.vector_store %arg14[%c0_512, %c7_513, %c0_514], %1170 {strides = array<i32>} : memref<8x8x24xf32, #tpu.memory_space<vmem>>, vector<8x1x24xf32>,
    %c0_515 = arith.constant 0 : index
    %c7_516 = arith.constant 7 : index
    %c0_517 = arith.constant 0 : index
    %1171 = vector.load %arg15[%c0_515, %c7_516, %c0_517] : memref<8x8x1xf32, #tpu.memory_space<vmem>>, vector<8x1x1xf32>
    %1172 = vector.shape_cast %1171 : vector<8x1x1xf32> to vector<8x1xf32>
    %1173 = vector.shape_cast %1067 : vector<8x1xf32> to vector<8x1x1xf32>
    tpu.vector_store %arg15[%c0_515, %c7_516, %c0_517], %1173 {strides = array<i32>} : memref<8x8x1xf32, #tpu.memory_space<vmem>>, vector<8x1x1xf32>,
    return
  }
  func.func @transform_0(%arg0: i32) -> (i32, i32, i32) {
    %c0_i32 = arith.constant 0 : i32
    %c0_i32_0 = arith.constant 0 : i32
    %c0_i32_1 = arith.constant 0 : i32
    return %c0_i32, %arg0, %c0_i32_0 : i32, i32, i32
  }
  func.func @transform_1(%arg0: i32) -> (i32, i32, i32) {
    %c0_i32 = arith.constant 0 : i32
    %c0_i32_0 = arith.constant 0 : i32
    %c0_i32_1 = arith.constant 0 : i32
    return %c0_i32, %arg0, %c0_i32_0 : i32, i32, i32
  }
  func.func @transform_2(%arg0: i32) -> (i32, i32) {
    %c0_i32 = arith.constant 0 : i32
    %c0_i32_0 = arith.constant 0 : i32
    %c0_i32_1 = arith.constant 0 : i32
    return %c0_i32, %c0_i32_0 : i32, i32
  }
  func.func @transform_3(%arg0: i32) -> (i32, i32) {
    %c0_i32 = arith.constant 0 : i32
    %c0_i32_0 = arith.constant 0 : i32
    %c0_i32_1 = arith.constant 0 : i32
    return %c0_i32, %c0_i32_0 : i32, i32
  }
  func.func @transform_4(%arg0: i32) -> (i32, i32) {
    %c0_i32 = arith.constant 0 : i32
    %c0_i32_0 = arith.constant 0 : i32
    %c0_i32_1 = arith.constant 0 : i32
    return %c0_i32, %c0_i32_0 : i32, i32
  }
  func.func @transform_5(%arg0: i32) -> (i32, i32) {
    %c0_i32 = arith.constant 0 : i32
    %c0_i32_0 = arith.constant 0 : i32
    %c0_i32_1 = arith.constant 0 : i32
    return %c0_i32, %c0_i32_0 : i32, i32
  }
  func.func @transform_6(%arg0: i32) -> (i32, i32) {
    %c0_i32 = arith.constant 0 : i32
    %c0_i32_0 = arith.constant 0 : i32
    %c0_i32_1 = arith.constant 0 : i32
    return %c0_i32, %c0_i32_0 : i32, i32
  }
  func.func @transform_7(%arg0: i32) -> (i32, i32) {
    %c0_i32 = arith.constant 0 : i32
    %c0_i32_0 = arith.constant 0 : i32
    %c0_i32_1 = arith.constant 0 : i32
    return %c0_i32, %c0_i32_0 : i32, i32
  }
  func.func @transform_8(%arg0: i32) -> (i32, i32) {
    %c0_i32 = arith.constant 0 : i32
    %c0_i32_0 = arith.constant 0 : i32
    %c0_i32_1 = arith.constant 0 : i32
    return %c0_i32, %c0_i32_0 : i32, i32
  }
  func.func @transform_9(%arg0: i32) -> (i32, i32) {
    %c0_i32 = arith.constant 0 : i32
    %c0_i32_0 = arith.constant 0 : i32
    %c0_i32_1 = arith.constant 0 : i32
    return %c0_i32, %c0_i32_0 : i32, i32
  }
  func.func @transform_10(%arg0: i32) -> (i32, i32) {
    %c0_i32 = arith.constant 0 : i32
    %c0_i32_0 = arith.constant 0 : i32
    %c0_i32_1 = arith.constant 0 : i32
    return %c0_i32, %c0_i32_0 : i32, i32
  }
  func.func @transform_11(%arg0: i32) -> (i32, i32) {
    %c0_i32 = arith.constant 0 : i32
    %c0_i32_0 = arith.constant 0 : i32
    %c0_i32_1 = arith.constant 0 : i32
    return %c0_i32, %c0_i32_0 : i32, i32
  }
  func.func @transform_12(%arg0: i32) -> (i32, i32) {
    %c0_i32 = arith.constant 0 : i32
    %c0_i32_0 = arith.constant 0 : i32
    %c0_i32_1 = arith.constant 0 : i32
    return %c0_i32, %c0_i32_0 : i32, i32
  }
  func.func @transform_13(%arg0: i32) -> (i32, i32, i32) {
    %c0_i32 = arith.constant 0 : i32
    %c0_i32_0 = arith.constant 0 : i32
    %c0_i32_1 = arith.constant 0 : i32
    return %c0_i32, %arg0, %c0_i32_0 : i32, i32, i32
  }
  func.func @transform_14(%arg0: i32) -> (i32, i32, i32) {
    %c0_i32 = arith.constant 0 : i32
    %c0_i32_0 = arith.constant 0 : i32
    %c0_i32_1 = arith.constant 0 : i32
    return %c0_i32, %arg0, %c0_i32_0 : i32, i32, i32
  }
}

</mosaic_0001>

<llo_original>
// kernel: tpu_custom_call.1
$region0: #{tpu_custom_call.1}
  #allocation0 [shape = 'u32[]', space=smem, size = 0x4, offset = 0x4, fixed_abs, tag = 'smem constant byte address 0x4 - core index']
  #allocation1 [shape = 'u32[144,128]{1,0:T(1,128)}', space=vmem, size = 0x12000, scoped, tag = 'internal scratch']
  #allocation2 [shape = 'f32[8,24]{1,0:T(8,128)}', space=vmem, size = 0x1000, scoped, tag = 'scratch operand']
  #allocation3 [shape = 'f32[8,24]{1,0:T(8,128)}', space=vmem, size = 0x1000, scoped, tag = 'scratch operand']
  #allocation4 [shape = 'f32[4,8,24]{2,1,0:T(8,128)}', space=vmem, size = 0x4000, scoped, tag = 'scratch operand']
  #allocation5 [shape = 'f32[8,4]{1,0:T(8,128)}', space=vmem, size = 0x1000, scoped, tag = 'scratch operand']
  %s0 = inlined_call_operand.vmem [shape: f32[8,8,16], index: 0, kind: input, shape index: {}]
  %s1 = inlined_call_operand.vmem [shape: f32[8,8,1], index: 1, kind: input, shape index: {}]
  %s2 = inlined_call_operand.vmem [shape: f32[41,128], index: 2, kind: input, shape index: {}]
  %s3 = inlined_call_operand.vmem [shape: f32[1,128], index: 3, kind: input, shape index: {}]
  %s4 = inlined_call_operand.vmem [shape: f32[3,25], index: 4, kind: input, shape index: {}]
  %s5 = inlined_call_operand.vmem [shape: f32[3,24], index: 5, kind: input, shape index: {}]
  %s6 = inlined_call_operand.vmem [shape: f32[24,4], index: 6, kind: input, shape index: {}]
  %s7 = inlined_call_operand.vmem [shape: f32[1,4], index: 7, kind: input, shape index: {}]
  %s8 = inlined_call_operand.vmem [shape: f32[4,24], index: 8, kind: input, shape index: {}]
  %s9 = inlined_call_operand.vmem [shape: f32[1,24], index: 9, kind: input, shape index: {}]
  %s10 = inlined_call_operand.vmem [shape: f32[96,24], index: 10, kind: input, shape index: {}]
  %s11 = inlined_call_operand.vmem [shape: f32[1,24], index: 11, kind: input, shape index: {}]
  %s12 = inlined_call_operand.vmem [shape: f32[4,4], index: 12, kind: input, shape index: {}]
  %s13 = inlined_call_operand.hbm [shape: f32[8,8,24], index: 13, kind: output, shape index: {0}]
  %s14 = inlined_call_operand.vmem [shape: f32[8,8,1], index: 14, kind: output, shape index: {1}]
  %15 = xla_tuple %s13, %s14
  %s16 = sld [smem:[#allocation0]]
  $region74: #{tpu_custom_call.1} parent=0
    _
  %s18 = ssub.s32 1, %s16
  %s19 = scalar_select 0, %s18, %s16
  $region1: #{tpu_custom_call.1} parent=0
    #allocation6 [shape = 'u8[32768]{0}', space=vmem, size = 0x8000, scoped, tag = 'output window, operand 0, single buffered']
    #allocation7 [shape = 's32[1]{0}', space=sflag, size = 0x4, scoped, tag = 'scoped memory for tpu_custom_call.1']
    %20 = vsyncpa [#allocation7], 0
    // Predicated region
    $region2: #{tpu_custom_call.1} parent=1 // pred_check
      _
    $region3: #{tpu_custom_call.1} parent=1 // pred_check_branch
      %22 = sbr.rel (0) target = $region5
    $region4: #{tpu_custom_call.1} parent=1 // pred_region
      _
    $region5: #{tpu_custom_call.1} parent=1 // pred_fallthru
      _
    // Predicated region
    $region6: #{tpu_custom_call.1} parent=1 // pred_check
      _
    $region7: #{tpu_custom_call.1} parent=1 // pred_check_branch
      %24 = sbr.rel (0) target = $region9
    $region8: #{tpu_custom_call.1} parent=1 // pred_region
      _
    $region9: #{tpu_custom_call.1} parent=1 // pred_fallthru
      _
    // Predicated region
    $region10: #{tpu_custom_call.1} parent=1 // pred_check
      _
    $region11: #{tpu_custom_call.1} parent=1 // pred_check_branch
      %26 = sbr.rel (0) target = $region13
    $region12: #{tpu_custom_call.1} parent=1 // pred_region
      _
    $region13: #{tpu_custom_call.1} parent=1 // pred_fallthru
      _
    // Predicated region
    $region14: #{tpu_custom_call.1} parent=1 // pred_check
      _
    $region15: #{tpu_custom_call.1} parent=1 // pred_check_branch
      %28 = sbr.rel (0) target = $region17
    $region16: #{tpu_custom_call.1} parent=1 // pred_region
      _
    $region17: #{tpu_custom_call.1} parent=1 // pred_fallthru
      _
    // Predicated region
    $region18: #{tpu_custom_call.1} parent=1 // pred_check
      _
    $region19: #{tpu_custom_call.1} parent=1 // pred_check_branch
      %30 = sbr.rel (0) target = $region21
    $region20: #{tpu_custom_call.1} parent=1 // pred_region
      _
    $region21: #{tpu_custom_call.1} parent=1 // pred_fallthru
      _
    // Predicated region
    $region22: #{tpu_custom_call.1} parent=1 // pred_check
      _
    $region23: #{tpu_custom_call.1} parent=1 // pred_check_branch
      %32 = sbr.rel (0) target = $region25
    $region24: #{tpu_custom_call.1} parent=1 // pred_region
      _
    $region25: #{tpu_custom_call.1} parent=1 // pred_fallthru
      _
    // Predicated region
    $region26: #{tpu_custom_call.1} parent=1 // pred_check
      _
    $region27: #{tpu_custom_call.1} parent=1 // pred_check_branch
      %34 = sbr.rel (0) target = $region29
    $region28: #{tpu_custom_call.1} parent=1 // pred_region
      _
    $region29: #{tpu_custom_call.1} parent=1 // pred_fallthru
      _
    // Predicated region
    $region30: #{tpu_custom_call.1} parent=1 // pred_check
      _
    $region31: #{tpu_custom_call.1} parent=1 // pred_check_branch
      %36 = sbr.rel (0) target = $region33
    $region32: #{tpu_custom_call.1} parent=1 // pred_region
      _
    $region33: #{tpu_custom_call.1} parent=1 // pred_fallthru
      _
    // Predicated region
    $region34: #{tpu_custom_call.1} parent=1 // pred_check
      _
    $region35: #{tpu_custom_call.1} parent=1 // pred_check_branch
      %38 = sbr.rel (0) target = $region37
    $region36: #{tpu_custom_call.1} parent=1 // pred_region
      _
    $region37: #{tpu_custom_call.1} parent=1 // pred_fallthru
      _
    // Predicated region
    $region38: #{tpu_custom_call.1} parent=1 // pred_check
      _
    $region39: #{tpu_custom_call.1} parent=1 // pred_check_branch
      %40 = sbr.rel (0) target = $region41
    $region40: #{tpu_custom_call.1} parent=1 // pred_region
      _
    $region41: #{tpu_custom_call.1} parent=1 // pred_fallthru
      _
    // Predicated region
    $region42: #{tpu_custom_call.1} parent=1 // pred_check
      _
    $region43: #{tpu_custom_call.1} parent=1 // pred_check_branch
      %42 = sbr.rel (0) target = $region45
    $region44: #{tpu_custom_call.1} parent=1 // pred_region
      _
    $region45: #{tpu_custom_call.1} parent=1 // pred_fallthru
      _
    // Predicated region
    $region46: #{tpu_custom_call.1} parent=1 // pred_check
      _
    $region47: #{tpu_custom_call.1} parent=1 // pred_check_branch
      %44 = sbr.rel (0) target = $region49
    $region48: #{tpu_custom_call.1} parent=1 // pred_region
      _
    $region49: #{tpu_custom_call.1} parent=1 // pred_fallthru
      _
    // Predicated region
    $region50: #{tpu_custom_call.1} parent=1 // pred_check
      _
    $region51: #{tpu_custom_call.1} parent=1 // pred_check_branch
      %46 = sbr.rel (0) target = $region53
    $region52: #{tpu_custom_call.1} parent=1 // pred_region
      _
    $region53: #{tpu_custom_call.1} parent=1 // pred_fallthru
      _
    %p47 = scmp.eq.s32.totalorder 0, 0
    // Predicated region
    $region54: #{tpu_custom_call.1} parent=1 // pred_check
      %p48 = pneg %p47
    $region55: #{tpu_custom_call.1} parent=1 // pred_check_branch
      %50 = sbr.rel (%p48) target = $region57
    $region56: #{tpu_custom_call.1} parent=1 // pred_region
      %vm51 = vcmask 195584
      %52 = vst.msk [vmem:[#allocation2] sm:$0xff] %vm51, 0.0
      %53 = vst.msk [vmem:[#allocation3] sm:$0xff] %vm51, 0.0
      %54 = vst.msk [vmem:[#allocation4] sm:$0xff] %vm51, 0.0
      %55 = vst.msk [vmem:[#allocation4 + $0x8] sm:$0xff] %vm51, 0.0
      %56 = vst.msk [vmem:[#allocation4 + $0x10] sm:$0xff] %vm51, 0.0
      %57 = vst.msk [vmem:[#allocation4 + $0x18] sm:$0xff] %vm51, 0.0
      %vm58 = vcmask 31744
      %59 = vst.msk [vmem:[#allocation5] sm:$0xff] %vm58, 0.0
    $region57: #{tpu_custom_call.1} parent=1 // pred_fallthru
      _
    %v60 = vld [vmem:[%s2] sm:$0xff]
    %v61 = vld [vmem:[%s2 + $0x8] sm:$0xff]
    %v62 = vld [vmem:[%s2 + $0x10] sm:$0xff]
    %v63 = vld [vmem:[%s2 + $0x18] sm:$0xff]
    %v64 = vld [vmem:[%s2 + $0x20] sm:$0xff]
    %v65 = vld [vmem:[%s2 + $0x28] sm:$0x1]
    %v66 = vld [vmem:[%s3] sm:$0x1]
    %v67 = vld [vmem:[%s4] sm:$0x7]
    %v68 = vld [vmem:[%s5] sm:$0x7]
    %v69 = vld [vmem:[%s6] sm:$0xff]
    %v70 = vld [vmem:[%s6 + $0x8] sm:$0xff]
    %v71 = vld [vmem:[%s6 + $0x10] sm:$0xff]
    %v72 = vld [vmem:[%s7] sm:$0x1]
    %v73 = vld [vmem:[%s8] sm:$0xf]
    %v74 = vld [vmem:[%s9] sm:$0x1]
    %v75 = vld [vmem:[%s10] sm:$0xff]
    %v76 = vld [vmem:[%s10 + $0x8] sm:$0xff]
    %v77 = vld [vmem:[%s10 + $0x10] sm:$0xff]
    %v78 = vld [vmem:[%s10 + $0x18] sm:$0xff]
    %v79 = vld [vmem:[%s10 + $0x20] sm:$0xff]
    %v80 = vld [vmem:[%s10 + $0x28] sm:$0xff]
    %v81 = vld [vmem:[%s10 + $0x30] sm:$0xff]
    %v82 = vld [vmem:[%s10 + $0x38] sm:$0xff]
    %v83 = vld [vmem:[%s10 + $0x40] sm:$0xff]
    %v84 = vld [vmem:[%s10 + $0x48] sm:$0xff]
    %v85 = vld [vmem:[%s10 + $0x50] sm:$0xff]
    %v86 = vld [vmem:[%s10 + $0x58] sm:$0xff]
    %v87 = vld [vmem:[%s11] sm:$0x1]
    %v88 = vld [vmem:[%s12] sm:$0xf]
    %v89 = vld [vmem:[%s0] sm:$0x1]
    %v90 = vld [vmem:[%s0 + $0x8] sm:$0x1]
    %v91 = vld [vmem:[%s0 + $0x10] sm:$0x1]
    %v92 = vld [vmem:[%s0 + $0x18] sm:$0x1]
    %v93 = vld [vmem:[%s0 + $0x20] sm:$0x1]
    %v94 = vld [vmem:[%s0 + $0x28] sm:$0x1]
    %v95 = vld [vmem:[%s0 + $0x30] sm:$0x1]
    %v96 = vld [vmem:[%s0 + $0x38] sm:$0x1]
    %v97 = vld [vmem:[%s1] sm:$0x1]
    %v98 = vld [vmem:[%s1 + $0x8] sm:$0x1]
    %v99 = vld [vmem:[%s1 + $0x10] sm:$0x1]
    %v100 = vld [vmem:[%s1 + $0x18] sm:$0x1]
    %v101 = vld [vmem:[%s1 + $0x20] sm:$0x1]
    %v102 = vld [vmem:[%s1 + $0x28] sm:$0x1]
    %v103 = vld [vmem:[%s1 + $0x30] sm:$0x1]
    %v104 = vld [vmem:[%s1 + $0x38] sm:$0x1]
    %v105 = vld [vmem:[#allocation3] sm:$0xff]
    %v106 = vld [vmem:[#allocation2] sm:$0xff]
    %v115 = vrot.slane %v90, 7
    %vm116 = vcmask 1041409
    %v117 = vsel %vm116, %v115, %v89
    %v118 = vrot.slane %v91, 6
    %vm119 = vcmask 1042434
    %v120 = vsel %vm119, %v118, %v117
    %v121 = vrot.slane %v92, 5
    %vm122 = vcmask 1043459
    %v123 = vsel %vm122, %v121, %v120
    %v124 = vrot.slane %v93, 4
    %vm125 = vcmask 1044484
    %v126 = vsel %vm125, %v124, %v123
    %v127 = vrot.slane %v94, 3
    %vm128 = vcmask 1045509
    %v129 = vsel %vm128, %v127, %v126
    %v130 = vrot.slane %v95, 2
    %vm131 = vcmask 1046534
    %v132 = vsel %vm131, %v130, %v129
    %v133 = vrot.slane %v96, 1
    %vm134 = vcmask 1047559
    %v135 = vsel %vm134, %v133, %v132
    %138 = vrot.lane.b32.xlu0 %v105, 16
    %v139 = vpop.permute.xlu0 %138
    %v149 = vrot.slane %v98, 7
    %v150 = vsel %vm116, %v149, %v97
    %v151 = vrot.slane %v99, 6
    %v152 = vsel %vm119, %v151, %v150
    %v153 = vrot.slane %v100, 5
    %v154 = vsel %vm122, %v153, %v152
    %v155 = vrot.slane %v101, 4
    %v156 = vsel %vm125, %v155, %v154
    %v157 = vrot.slane %v102, 3
    %v158 = vsel %vm128, %v157, %v156
    %v159 = vrot.slane %v103, 2
    %v160 = vsel %vm131, %v159, %v158
    %v161 = vrot.slane %v104, 1
    %v162 = vsel %vm134, %v161, %v160
    %163 = vrot.lane.b32.xlu0 %v162, 40
    %v164 = vpop.permute.xlu0 %163
    %vm166 = vcmask 130048
    %v167 = vsel %vm166, %v135, %v139
    %vm168 = vcmask 326656
    %v169 = vsel %vm168, %v167, %v164
    %v171 = vlaneseq
    %v172 = vshrl.u32 %v171, 7
    %v173 = vsub.s32 0, %v172
    %v174 = vrot.slane %v66, %v173
    %vm176 = vcmask 334848
    %v178 = vsel %vm176, %v169, 0
    %vm180 = vcmask 1040384
    %v182 = vsel %vm180, %v65, 0
    %184 = vmatprep.subr.mxu0 0.0
    %185 = vmatpush1.msra.mxu0 0.0
    %186 = vmatprep.subr.mxu0 0.0
    %187 = vmatpush1.msra.mxu0 0.0
    %188 = vmatprep.subr.mxu0 0.0
    %189 = vmatpush1.msra.mxu0 0.0
    %190 = vmatprep.subr.mxu0 0.0
    %191 = vmatpush1.msra.mxu0 0.0
    %192 = vmatprep.subr.mxu0 0.0
    %193 = vmatpush1.msra.mxu0 0.0
    %194 = vmatprep.subr.mxu0 0.0
    %195 = vmatpush1.msra.mxu0 0.0
    %196 = vmatprep.subr.mxu0 0.0
    %197 = vmatpush1.msra.mxu0 0.0
    %198 = vmatprep.subr.mxu0 0.0
    %199 = vmatpush1.msra.mxu0 0.0
    %200 = vmatprep.subr.mxu0 0.0
    %201 = vmatpush1.msra.mxu0 0.0
    %202 = vmatprep.subr.mxu0 0.0
    %203 = vmatpush1.msra.mxu0 0.0
    %204 = vmatprep.subr.mxu0 0.0
    %205 = vmatpush1.msra.mxu0 %v182
    %206 = vmatprep.subr.mxu0 0.0
    %207 = vmatpush1.msra.mxu0 %v64
    %208 = vmatprep.subr.mxu0 0.0
    %209 = vmatpush1.msra.mxu0 %v63
    %210 = vmatprep.subr.mxu0 0.0
    %211 = vmatpush1.msra.mxu0 %v62
    %212 = vmatprep.subr.mxu0 0.0
    %213 = vmatpush1.msra.mxu0 %v61
    %214 = vmatprep.subr.mxu0 0.0
    %215 = vmatpush1.msra.mxu0 %v60
    %216 = vmatprep.subr.mxu0 0.0
    %217 = vmatpush2.msra.mxu0 0.0
    %218 = vmatprep.subr.mxu0 0.0
    %219 = vmatpush2.msra.mxu0 0.0
    %220 = vmatprep.subr.mxu0 0.0
    %221 = vmatpush2.msra.mxu0 0.0
    %222 = vmatprep.subr.mxu0 0.0
    %223 = vmatpush2.msra.mxu0 0.0
    %224 = vmatprep.subr.mxu0 0.0
    %225 = vmatpush2.msra.mxu0 0.0
    %226 = vmatprep.subr.mxu0 0.0
    %227 = vmatpush2.msra.mxu0 0.0
    %228 = vmatprep.subr.mxu0 0.0
    %229 = vmatpush2.msra.mxu0 0.0
    %230 = vmatprep.subr.mxu0 0.0
    %231 = vmatpush2.msra.mxu0 0.0
    %232 = vmatprep.subr.mxu0 0.0
    %233 = vmatpush2.msra.mxu0 0.0
    %234 = vmatprep.subr.mxu0 0.0
    %235 = vmatpush2.msra.mxu0 0.0
    %236 = vmatprep.subr.mxu0 0.0
    %237 = vmatpush2.msra.mxu0 0.0
    %238 = vmatprep.subr.mxu0 0.0
    %239 = vmatpush2.msra.mxu0 0.0
    %240 = vmatprep.subr.mxu0 0.0
    %241 = vmatpush2.msra.mxu0 0.0
    %242 = vmatprep.subr.mxu0 0.0
    %243 = vmatpush2.msra.mxu0 0.0
    %244 = vmatprep.subr.mxu0 0.0
    %245 = vmatpush2.msra.mxu0 0.0
    %246 = vmatprep.subr.mxu0 0.0
    %247 = vmatpush2.msra.mxu0 0.0
    %248 = vmatprep.mubr.f32.mxu0 0.0
    %249 = vmatmul.mubr.f32.gmra.mxu0 %v178
    %v250 = vpop.f32.mrf.mxu0
    %v251 = vadd.f32 %v174, %v250
    %v252 = vpop.f32.mrf.mxu0
    %253 = vdwg.mxu0
    %vm254 = vcmask 23552
    %v255 = vsel %vm254, %v251, -inf
    %256 = vmax.xlane.f32.xlu0 %v255
    %v257 = vpop.xlane.xlu0 %256
    %v258 = vsub.f32 %v251, %v257
    %v259 = vmul.f32 %v258, 1.442695
    %v260 = vpow.pop %v259
    %v261 = vsel %vm254, %v260, 0.0
    %262 = vadd.xlane.f32.xlu0 %v261
    %v263 = vpop.xlane.xlu0 %262
    %v264 = vrcp.pop %v263
    %v265 = vmul.f32 %v260, %v264
    %vm266 = vcmask 48152
    %v267 = vsel %vm266, %v251, -inf
    %268 = vmax.xlane.f32.xlu0 %v267
    %v269 = vpop.xlane.xlu0 %268
    %v270 = vsub.f32 %v251, %v269
    %v271 = vmul.f32 %v270, 1.442695
    %v272 = vpow.pop %v271
    %274 = vrot.lane.b32.xlu0 %v272, 125
    %v275 = vpop.permute.xlu0 %274
    %v277 = vsel %vm254, %v275, 0.0
    %278 = vadd.xlane.f32.xlu0 %v277
    %v279 = vpop.xlane.xlu0 %278
    %v280 = vrcp.pop %v279
    %v281 = vmul.f32 %v272, %v280
    %v283 = vsel %vm254, %v265, 0
    %vm285 = vcmask 1042432
    %v287 = vsel %vm285, %v67, 0
    %289 = vmatprep.subr.mxu0 0.0
    %290 = vmatpush1.msra.mxu0 0.0
    %291 = vmatprep.subr.mxu0 0.0
    %292 = vmatpush1.msra.mxu0 0.0
    %293 = vmatprep.subr.mxu0 0.0
    %294 = vmatpush1.msra.mxu0 0.0
    %295 = vmatprep.subr.mxu0 0.0
    %296 = vmatpush1.msra.mxu0 0.0
    %297 = vmatprep.subr.mxu0 0.0
    %298 = vmatpush1.msra.mxu0 0.0
    %299 = vmatprep.subr.mxu0 0.0
    %300 = vmatpush1.msra.mxu0 0.0
    %301 = vmatprep.subr.mxu0 0.0
    %302 = vmatpush1.msra.mxu0 0.0
    %303 = vmatprep.subr.mxu0 0.0
    %304 = vmatpush1.msra.mxu0 0.0
    %305 = vmatprep.subr.mxu0 0.0
    %306 = vmatpush1.msra.mxu0 0.0
    %307 = vmatprep.subr.mxu0 0.0
    %308 = vmatpush1.msra.mxu0 0.0
    %309 = vmatprep.subr.mxu0 0.0
    %310 = vmatpush1.msra.mxu0 0.0
    %311 = vmatprep.subr.mxu0 0.0
    %312 = vmatpush1.msra.mxu0 0.0
    %313 = vmatprep.subr.mxu0 0.0
    %314 = vmatpush1.msra.mxu0 0.0
    %315 = vmatprep.subr.mxu0 0.0
    %316 = vmatpush1.msra.mxu0 0.0
    %317 = vmatprep.subr.mxu0 0.0
    %318 = vmatpush1.msra.mxu0 0.0
    %319 = vmatprep.subr.mxu0 0.0
    %320 = vmatpush1.msra.mxu0 %v287
    %321 = vmatprep.subr.mxu0 0.0
    %322 = vmatpush2.msra.mxu0 0.0
    %323 = vmatprep.subr.mxu0 0.0
    %324 = vmatpush2.msra.mxu0 0.0
    %325 = vmatprep.subr.mxu0 0.0
    %326 = vmatpush2.msra.mxu0 0.0
    %327 = vmatprep.subr.mxu0 0.0
    %328 = vmatpush2.msra.mxu0 0.0
    %329 = vmatprep.subr.mxu0 0.0
    %330 = vmatpush2.msra.mxu0 0.0
    %331 = vmatprep.subr.mxu0 0.0
    %332 = vmatpush2.msra.mxu0 0.0
    %333 = vmatprep.subr.mxu0 0.0
    %334 = vmatpush2.msra.mxu0 0.0
    %335 = vmatprep.subr.mxu0 0.0
    %336 = vmatpush2.msra.mxu0 0.0
    %337 = vmatprep.subr.mxu0 0.0
    %338 = vmatpush2.msra.mxu0 0.0
    %339 = vmatprep.subr.mxu0 0.0
    %340 = vmatpush2.msra.mxu0 0.0
    %341 = vmatprep.subr.mxu0 0.0
    %342 = vmatpush2.msra.mxu0 0.0
    %343 = vmatprep.subr.mxu0 0.0
    %344 = vmatpush2.msra.mxu0 0.0
    %345 = vmatprep.subr.mxu0 0.0
    %346 = vmatpush2.msra.mxu0 0.0
    %347 = vmatprep.subr.mxu0 0.0
    %348 = vmatpush2.msra.mxu0 0.0
    %349 = vmatprep.subr.mxu0 0.0
    %350 = vmatpush2.msra.mxu0 0.0
    %351 = vmatprep.subr.mxu0 0.0
    %352 = vmatpush2.msra.mxu0 0.0
    %353 = vmatprep.mubr.f32.mxu0 0.0
    %354 = vmatmul.mubr.f32.gmra.mxu0 %v283
    %v355 = vpop.f32.mrf.mxu0
    %v356 = vadd.f32 0.0, %v355
    %v357 = vpop.f32.mrf.mxu0
    %358 = vdwg.mxu0
    %v359 = vsub.f32 1.0, %v356
    %361 = vrot.lane.b32.xlu0 %v281, 125
    %v362 = vpop.permute.xlu0 %361
    %v363 = vsel %vm254, %v362, 0
    %v366 = vsel %vm285, %v68, 0
    %368 = vmatprep.subr.mxu0 0.0
    %369 = vmatpush1.msra.mxu0 0.0
    %370 = vmatprep.subr.mxu0 0.0
    %371 = vmatpush1.msra.mxu0 0.0
    %372 = vmatprep.subr.mxu0 0.0
    %373 = vmatpush1.msra.mxu0 0.0
    %374 = vmatprep.subr.mxu0 0.0
    %375 = vmatpush1.msra.mxu0 0.0
    %376 = vmatprep.subr.mxu0 0.0
    %377 = vmatpush1.msra.mxu0 0.0
    %378 = vmatprep.subr.mxu0 0.0
    %379 = vmatpush1.msra.mxu0 0.0
    %380 = vmatprep.subr.mxu0 0.0
    %381 = vmatpush1.msra.mxu0 0.0
    %382 = vmatprep.subr.mxu0 0.0
    %383 = vmatpush1.msra.mxu0 0.0
    %384 = vmatprep.subr.mxu0 0.0
    %385 = vmatpush1.msra.mxu0 0.0
    %386 = vmatprep.subr.mxu0 0.0
    %387 = vmatpush1.msra.mxu0 0.0
    %388 = vmatprep.subr.mxu0 0.0
    %389 = vmatpush1.msra.mxu0 0.0
    %390 = vmatprep.subr.mxu0 0.0
    %391 = vmatpush1.msra.mxu0 0.0
    %392 = vmatprep.subr.mxu0 0.0
    %393 = vmatpush1.msra.mxu0 0.0
    %394 = vmatprep.subr.mxu0 0.0
    %395 = vmatpush1.msra.mxu0 0.0
    %396 = vmatprep.subr.mxu0 0.0
    %397 = vmatpush1.msra.mxu0 0.0
    %398 = vmatprep.subr.mxu0 0.0
    %399 = vmatpush1.msra.mxu0 %v366
    %400 = vmatprep.subr.mxu0 0.0
    %401 = vmatpush2.msra.mxu0 0.0
    %402 = vmatprep.subr.mxu0 0.0
    %403 = vmatpush2.msra.mxu0 0.0
    %404 = vmatprep.subr.mxu0 0.0
    %405 = vmatpush2.msra.mxu0 0.0
    %406 = vmatprep.subr.mxu0 0.0
    %407 = vmatpush2.msra.mxu0 0.0
    %408 = vmatprep.subr.mxu0 0.0
    %409 = vmatpush2.msra.mxu0 0.0
    %410 = vmatprep.subr.mxu0 0.0
    %411 = vmatpush2.msra.mxu0 0.0
    %412 = vmatprep.subr.mxu0 0.0
    %413 = vmatpush2.msra.mxu0 0.0
    %414 = vmatprep.subr.mxu0 0.0
    %415 = vmatpush2.msra.mxu0 0.0
    %416 = vmatprep.subr.mxu0 0.0
    %417 = vmatpush2.msra.mxu0 0.0
    %418 = vmatprep.subr.mxu0 0.0
    %419 = vmatpush2.msra.mxu0 0.0
    %420 = vmatprep.subr.mxu0 0.0
    %421 = vmatpush2.msra.mxu0 0.0
    %422 = vmatprep.subr.mxu0 0.0
    %423 = vmatpush2.msra.mxu0 0.0
    %424 = vmatprep.subr.mxu0 0.0
    %425 = vmatpush2.msra.mxu0 0.0
    %426 = vmatprep.subr.mxu0 0.0
    %427 = vmatpush2.msra.mxu0 0.0
    %428 = vmatprep.subr.mxu0 0.0
    %429 = vmatpush2.msra.mxu0 0.0
    %430 = vmatprep.subr.mxu0 0.0
    %431 = vmatpush2.msra.mxu0 0.0
    %432 = vmatprep.mubr.f32.mxu0 0.0
    %433 = vmatmul.mubr.f32.gmra.mxu0 %v363
    %v434 = vpop.f32.mrf.mxu0
    %v435 = vadd.f32 0.0, %v434
    %v436 = vpop.f32.mrf.mxu0
    %437 = vdwg.mxu0
    %v438 = vsub.f32 1.0, %v435
    %v439 = vxor.u32 %v251, 2147483648
    %v440 = vmul.f32 %v439, 1.442695
    %v441 = vpow.pop %v440
    %v442 = vadd.f32 %v441, 1.0
    %v443 = vrcp.pop %v442
    %v444 = vmul.f32 1.0, %v443
    %v445 = vtanh.pop %v251
    %v446 = vmul.f32 %v356, %v438
    %448 = vrot.lane.b32.xlu0 %v106, 6
    %v449 = vpop.permute.xlu0 %448
    %v451 = vmul.f32 %v444, %v449
    %453 = vrot.lane.b32.xlu0 %v445, 80
    %v454 = vpop.permute.xlu0 %453
    %v456 = vmul.f32 %v444, %v454
    %458 = vrot.lane.b32.xlu0 %v456, 104
    %v459 = vpop.permute.xlu0 %458
    %v461 = vadd.f32 %v451, %v459
    %463 = vrot.lane.b32.xlu0 %v461, 122
    %v464 = vpop.permute.xlu0 %463
    %v466 = vmul.f32 %v446, %v464
    %v467 = vsub.f32 %v356, %v446
    %v468 = vmul.f32 %v467, %v106
    %v469 = vadd.f32 %v466, %v468
    %v470 = vsub.f32 %v438, %v446
    %471 = vrot.lane.b32.xlu0 %v445, 50
    %v472 = vpop.permute.xlu0 %471
    %v474 = vmul.f32 %v470, %v472
    %v475 = vadd.f32 %v469, %v474
    %v476 = vtanh.pop %v475
    %478 = vrot.lane.b32.xlu0 %v476, 54
    %v479 = vpop.permute.xlu0 %478
    %v481 = vmul.f32 %v444, %v479
    %vm482 = vcmask 195584
    %483 = vst.msk [vmem:[#allocation2] sm:$0xff] %vm482, %v475
    %485 = vrot.lane.b32.xlu0 %v481, 74
    %v486 = vpop.permute.xlu0 %485
    %488 = vst.msk [vmem:[#allocation3] sm:$0xff] %vm482, %v486
    %489 = vst.msk [vmem:[#allocation4] sm:$0xff] %vm482, %v486
    %v490 = vld [vmem:[#allocation5] sm:$0xff]
    %492 = vrot.lane.b32.xlu0 %v490, 127
    %v493 = vpop.permute.xlu0 %492
    %496 = vrot.lane.b32.xlu0 %v359, 107
    %v497 = vpop.permute.xlu0 %496
    %v499 = vsel %vm254, %v493, %v497
    %vm500 = vcmask 31744
    %501 = vst.msk [vmem:[#allocation5] sm:$0xff] %vm500, %v499
    %v503 = vsel %vm500, %v499, 0
    %vm505 = vcmask 1043456
    %v507 = vsel %vm505, %v88, 0
    %509 = vmatprep.subr.mxu0 0.0
    %510 = vmatpush1.msra.mxu0 0.0
    %511 = vmatprep.subr.mxu0 0.0
    %512 = vmatpush1.msra.mxu0 0.0
    %513 = vmatprep.subr.mxu0 0.0
    %514 = vmatpush1.msra.mxu0 0.0
    %515 = vmatprep.subr.mxu0 0.0
    %516 = vmatpush1.msra.mxu0 0.0
    %517 = vmatprep.subr.mxu0 0.0
    %518 = vmatpush1.msra.mxu0 0.0
    %519 = vmatprep.subr.mxu0 0.0
    %520 = vmatpush1.msra.mxu0 0.0
    %521 = vmatprep.subr.mxu0 0.0
    %522 = vmatpush1.msra.mxu0 0.0
    %523 = vmatprep.subr.mxu0 0.0
    %524 = vmatpush1.msra.mxu0 0.0
    %525 = vmatprep.subr.mxu0 0.0
    %526 = vmatpush1.msra.mxu0 0.0
    %527 = vmatprep.subr.mxu0 0.0
    %528 = vmatpush1.msra.mxu0 0.0
    %529 = vmatprep.subr.mxu0 0.0
    %530 = vmatpush1.msra.mxu0 0.0
    %531 = vmatprep.subr.mxu0 0.0
    %532 = vmatpush1.msra.mxu0 0.0
    %533 = vmatprep.subr.mxu0 0.0
    %534 = vmatpush1.msra.mxu0 0.0
    %535 = vmatprep.subr.mxu0 0.0
    %536 = vmatpush1.msra.mxu0 0.0
    %537 = vmatprep.subr.mxu0 0.0
    %538 = vmatpush1.msra.mxu0 0.0
    %539 = vmatprep.subr.mxu0 0.0
    %540 = vmatpush1.msra.mxu0 %v507
    %541 = vmatprep.subr.mxu0 0.0
    %542 = vmatpush2.msra.mxu0 0.0
    %543 = vmatprep.subr.mxu0 0.0
    %544 = vmatpush2.msra.mxu0 0.0
    %545 = vmatprep.subr.mxu0 0.0
    %546 = vmatpush2.msra.mxu0 0.0
    %547 = vmatprep.subr.mxu0 0.0
    %548 = vmatpush2.msra.mxu0 0.0
    %549 = vmatprep.subr.mxu0 0.0
    %550 = vmatpush2.msra.mxu0 0.0
    %551 = vmatprep.subr.mxu0 0.0
    %552 = vmatpush2.msra.mxu0 0.0
    %553 = vmatprep.subr.mxu0 0.0
    %554 = vmatpush2.msra.mxu0 0.0
    %555 = vmatprep.subr.mxu0 0.0
    %556 = vmatpush2.msra.mxu0 0.0
    %557 = vmatprep.subr.mxu0 0.0
    %558 = vmatpush2.msra.mxu0 0.0
    %559 = vmatprep.subr.mxu0 0.0
    %560 = vmatpush2.msra.mxu0 0.0
    %561 = vmatprep.subr.mxu0 0.0
    %562 = vmatpush2.msra.mxu0 0.0
    %563 = vmatprep.subr.mxu0 0.0
    %564 = vmatpush2.msra.mxu0 0.0
    %565 = vmatprep.subr.mxu0 0.0
    %566 = vmatpush2.msra.mxu0 0.0
    %567 = vmatprep.subr.mxu0 0.0
    %568 = vmatpush2.msra.mxu0 0.0
    %569 = vmatprep.subr.mxu0 0.0
    %570 = vmatpush2.msra.mxu0 0.0
    %571 = vmatprep.subr.mxu0 0.0
    %572 = vmatpush2.msra.mxu0 0.0
    %573 = vmatprep.mubr.f32.mxu0 0.0
    %574 = vmatmul.mubr.f32.gmra.mxu0 %v503
    %v575 = vpop.f32.mrf.mxu0
    %v576 = vadd.f32 0.0, %v575
    %v577 = vpop.f32.mrf.mxu0
    %578 = vdwg.mxu0
    %v579 = vsel %vm500, %v576, -inf
    %580 = vmax.xlane.f32.xlu0 %v579
    %v581 = vpop.xlane.xlu0 %580
    %v582 = vsub.f32 %v576, %v581
    %v583 = vmul.f32 %v582, 1.442695
    %v584 = vpow.pop %v583
    %v585 = vsel %vm500, %v584, 0.0
    %586 = vadd.xlane.f32.xlu0 %v585
    %v587 = vpop.xlane.xlu0 %586
    %v588 = vrcp.pop %v587
    %v589 = vmul.f32 %v584, %v588
    %s590 = scalar_lea.vmem [#allocation4], 8
    %v591 = vld [vmem:[%s590] sm:$0xff]
    %593 = vset.pattern.permute.xlu0 0
    %594 = vperm.xlu0 %593, %v589
    %v595 = vpop.permute.xlu0 %594
    %v597 = vmul.f32 %v591, %v595
    %s598 = scalar_lea.vmem [#allocation4], 16
    %v599 = vld [vmem:[%s598] sm:$0xff]
    %600 = vset.pattern.permute.xlu0 1
    %601 = vperm.xlu0 %600, %v589
    %v602 = vpop.permute.xlu0 %601
    %v604 = vmul.f32 %v599, %v602
    %s605 = scalar_lea.vmem [#allocation4], 24
    %v606 = vld [vmem:[%s605] sm:$0xff]
    %607 = vset.pattern.permute.xlu0 2
    %608 = vperm.xlu0 %607, %v589
    %v609 = vpop.permute.xlu0 %608
    %v611 = vmul.f32 %v606, %v609
    %v612 = vld [vmem:[#allocation4] sm:$0xff]
    %613 = vset.pattern.permute.xlu0 3
    %614 = vperm.xlu0 %613, %v589
    %v615 = vpop.permute.xlu0 %614
    %v617 = vmul.f32 %v612, %v615
    %v618 = vadd.f32 %v597, %v604
    %v619 = vadd.f32 %v618, %v611
    %v620 = vadd.f32 %v619, %v617
    %v621 = vmul.f32 %v620, 0.25
    %623 = vrot.lane.b32.xlu0 %v604, 24
    %v624 = vpop.permute.xlu0 %623
    %627 = vrot.lane.b32.xlu0 %v611, 48
    %v628 = vpop.permute.xlu0 %627
    %631 = vrot.lane.b32.xlu0 %v617, 72
    %v632 = vpop.permute.xlu0 %631
    %v634 = vsel %vm482, %v597, %v624
    %vm635 = vcmask 392192
    %v636 = vsel %vm635, %v634, %v628
    %vm637 = vcmask 588800
    %v638 = vsel %vm637, %v636, %v632
    %v640 = vlaneseq
    %v641 = vshrl.u32 %v640, 7
    %v642 = vsub.s32 0, %v641
    %v643 = vrot.slane %v72, %v642
    %v646 = vsel %vm482, %v621, 0
    %648 = vmatprep.subr.mxu0 0.0
    %649 = vmatpush1.msra.mxu0 0.0
    %650 = vmatprep.subr.mxu0 0.0
    %651 = vmatpush1.msra.mxu0 0.0
    %652 = vmatprep.subr.mxu0 0.0
    %653 = vmatpush1.msra.mxu0 0.0
    %654 = vmatprep.subr.mxu0 0.0
    %655 = vmatpush1.msra.mxu0 0.0
    %656 = vmatprep.subr.mxu0 0.0
    %657 = vmatpush1.msra.mxu0 0.0
    %658 = vmatprep.subr.mxu0 0.0
    %659 = vmatpush1.msra.mxu0 0.0
    %660 = vmatprep.subr.mxu0 0.0
    %661 = vmatpush1.msra.mxu0 0.0
    %662 = vmatprep.subr.mxu0 0.0
    %663 = vmatpush1.msra.mxu0 0.0
    %664 = vmatprep.subr.mxu0 0.0
    %665 = vmatpush1.msra.mxu0 0.0
    %666 = vmatprep.subr.mxu0 0.0
    %667 = vmatpush1.msra.mxu0 0.0
    %668 = vmatprep.subr.mxu0 0.0
    %669 = vmatpush1.msra.mxu0 0.0
    %670 = vmatprep.subr.mxu0 0.0
    %671 = vmatpush1.msra.mxu0 0.0
    %672 = vmatprep.subr.mxu0 0.0
    %673 = vmatpush1.msra.mxu0 0.0
    %674 = vmatprep.subr.mxu0 0.0
    %675 = vmatpush1.msra.mxu0 %v71
    %676 = vmatprep.subr.mxu0 0.0
    %677 = vmatpush1.msra.mxu0 %v70
    %678 = vmatprep.subr.mxu0 0.0
    %679 = vmatpush1.msra.mxu0 %v69
    %680 = vmatprep.subr.mxu0 0.0
    %681 = vmatpush2.msra.mxu0 0.0
    %682 = vmatprep.subr.mxu0 0.0
    %683 = vmatpush2.msra.mxu0 0.0
    %684 = vmatprep.subr.mxu0 0.0
    %685 = vmatpush2.msra.mxu0 0.0
    %686 = vmatprep.subr.mxu0 0.0
    %687 = vmatpush2.msra.mxu0 0.0
    %688 = vmatprep.subr.mxu0 0.0
    %689 = vmatpush2.msra.mxu0 0.0
    %690 = vmatprep.subr.mxu0 0.0
    %691 = vmatpush2.msra.mxu0 0.0
    %692 = vmatprep.subr.mxu0 0.0
    %693 = vmatpush2.msra.mxu0 0.0
    %694 = vmatprep.subr.mxu0 0.0
    %695 = vmatpush2.msra.mxu0 0.0
    %696 = vmatprep.subr.mxu0 0.0
    %697 = vmatpush2.msra.mxu0 0.0
    %698 = vmatprep.subr.mxu0 0.0
    %699 = vmatpush2.msra.mxu0 0.0
    %700 = vmatprep.subr.mxu0 0.0
    %701 = vmatpush2.msra.mxu0 0.0
    %702 = vmatprep.subr.mxu0 0.0
    %703 = vmatpush2.msra.mxu0 0.0
    %704 = vmatprep.subr.mxu0 0.0
    %705 = vmatpush2.msra.mxu0 0.0
    %706 = vmatprep.subr.mxu0 0.0
    %707 = vmatpush2.msra.mxu0 0.0
    %708 = vmatprep.subr.mxu0 0.0
    %709 = vmatpush2.msra.mxu0 0.0
    %710 = vmatprep.subr.mxu0 0.0
    %711 = vmatpush2.msra.mxu0 0.0
    %712 = vmatprep.mubr.f32.mxu0 0.0
    %713 = vmatmul.mubr.f32.gmra.mxu0 %v646
    %v714 = vpop.f32.mrf.mxu0
    %v715 = vadd.f32 %v643, %v714
    %v716 = vpop.f32.mrf.mxu0
    %717 = vdwg.mxu0
    %v718 = vmax.f32 %v715, 0.0
    %v720 = vlaneseq
    %v721 = vshrl.u32 %v720, 7
    %v722 = vsub.s32 0, %v721
    %v723 = vrot.slane %v74, %v722
    %v726 = vsel %vm500, %v718, 0
    %v729 = vsel %vm505, %v73, 0
    %731 = vmatprep.subr.mxu0 0.0
    %732 = vmatpush1.msra.mxu0 0.0
    %733 = vmatprep.subr.mxu0 0.0
    %734 = vmatpush1.msra.mxu0 0.0
    %735 = vmatprep.subr.mxu0 0.0
    %736 = vmatpush1.msra.mxu0 0.0
    %737 = vmatprep.subr.mxu0 0.0
    %738 = vmatpush1.msra.mxu0 0.0
    %739 = vmatprep.subr.mxu0 0.0
    %740 = vmatpush1.msra.mxu0 0.0
    %741 = vmatprep.subr.mxu0 0.0
    %742 = vmatpush1.msra.mxu0 0.0
    %743 = vmatprep.subr.mxu0 0.0
    %744 = vmatpush1.msra.mxu0 0.0
    %745 = vmatprep.subr.mxu0 0.0
    %746 = vmatpush1.msra.mxu0 0.0
    %747 = vmatprep.subr.mxu0 0.0
    %748 = vmatpush1.msra.mxu0 0.0
    %749 = vmatprep.subr.mxu0 0.0
    %750 = vmatpush1.msra.mxu0 0.0
    %751 = vmatprep.subr.mxu0 0.0
    %752 = vmatpush1.msra.mxu0 0.0
    %753 = vmatprep.subr.mxu0 0.0
    %754 = vmatpush1.msra.mxu0 0.0
    %755 = vmatprep.subr.mxu0 0.0
    %756 = vmatpush1.msra.mxu0 0.0
    %757 = vmatprep.subr.mxu0 0.0
    %758 = vmatpush1.msra.mxu0 0.0
    %759 = vmatprep.subr.mxu0 0.0
    %760 = vmatpush1.msra.mxu0 0.0
    %761 = vmatprep.subr.mxu0 0.0
    %762 = vmatpush1.msra.mxu0 %v729
    %763 = vmatprep.subr.mxu0 0.0
    %764 = vmatpush2.msra.mxu0 0.0
    %765 = vmatprep.subr.mxu0 0.0
    %766 = vmatpush2.msra.mxu0 0.0
    %767 = vmatprep.subr.mxu0 0.0
    %768 = vmatpush2.msra.mxu0 0.0
    %769 = vmatprep.subr.mxu0 0.0
    %770 = vmatpush2.msra.mxu0 0.0
    %771 = vmatprep.subr.mxu0 0.0
    %772 = vmatpush2.msra.mxu0 0.0
    %773 = vmatprep.subr.mxu0 0.0
    %774 = vmatpush2.msra.mxu0 0.0
    %775 = vmatprep.subr.mxu0 0.0
    %776 = vmatpush2.msra.mxu0 0.0
    %777 = vmatprep.subr.mxu0 0.0
    %778 = vmatpush2.msra.mxu0 0.0
    %779 = vmatprep.subr.mxu0 0.0
    %780 = vmatpush2.msra.mxu0 0.0
    %781 = vmatprep.subr.mxu0 0.0
    %782 = vmatpush2.msra.mxu0 0.0
    %783 = vmatprep.subr.mxu0 0.0
    %784 = vmatpush2.msra.mxu0 0.0
    %785 = vmatprep.subr.mxu0 0.0
    %786 = vmatpush2.msra.mxu0 0.0
    %787 = vmatprep.subr.mxu0 0.0
    %788 = vmatpush2.msra.mxu0 0.0
    %789 = vmatprep.subr.mxu0 0.0
    %790 = vmatpush2.msra.mxu0 0.0
    %791 = vmatprep.subr.mxu0 0.0
    %792 = vmatpush2.msra.mxu0 0.0
    %793 = vmatprep.subr.mxu0 0.0
    %794 = vmatpush2.msra.mxu0 0.0
    %795 = vmatprep.mubr.f32.mxu0 0.0
    %796 = vmatmul.mubr.f32.gmra.mxu0 %v726
    %v797 = vpop.f32.mrf.mxu0
    %v798 = vadd.f32 %v723, %v797
    %v799 = vpop.f32.mrf.mxu0
    %800 = vdwg.mxu0
    %v801 = vxor.u32 %v798, 2147483648
    %v802 = vmul.f32 %v801, 1.442695
    %v803 = vpow.pop %v802
    %v804 = vadd.f32 %v803, 1.0
    %v805 = vrcp.pop %v804
    %v806 = vmul.f32 1.0, %v805
    %v808 = vlaneseq
    %v809 = vshrl.u32 %v808, 7
    %v810 = vsub.s32 0, %v809
    %v811 = vrot.slane %v87, %v810
    %vm813 = vcmask 785408
    %v815 = vsel %vm813, %v638, 0
    %817 = vmatprep.subr.mxu0 0.0
    %818 = vmatpush1.msra.mxu0 0.0
    %819 = vmatprep.subr.mxu0 0.0
    %820 = vmatpush1.msra.mxu0 0.0
    %821 = vmatprep.subr.mxu0 0.0
    %822 = vmatpush1.msra.mxu0 0.0
    %823 = vmatprep.subr.mxu0 0.0
    %824 = vmatpush1.msra.mxu0 0.0
    %825 = vmatprep.subr.mxu0 0.0
    %826 = vmatpush1.msra.mxu0 %v86
    %827 = vmatprep.subr.mxu0 0.0
    %828 = vmatpush1.msra.mxu0 %v85
    %829 = vmatprep.subr.mxu0 0.0
    %830 = vmatpush1.msra.mxu0 %v84
    %831 = vmatprep.subr.mxu0 0.0
    %832 = vmatpush1.msra.mxu0 %v83
    %833 = vmatprep.subr.mxu0 0.0
    %834 = vmatpush1.msra.mxu0 %v82
    %835 = vmatprep.subr.mxu0 0.0
    %836 = vmatpush1.msra.mxu0 %v81
    %837 = vmatprep.subr.mxu0 0.0
    %838 = vmatpush1.msra.mxu0 %v80
    %839 = vmatprep.subr.mxu0 0.0
    %840 = vmatpush1.msra.mxu0 %v79
    %841 = vmatprep.subr.mxu0 0.0
    %842 = vmatpush1.msra.mxu0 %v78
    %843 = vmatprep.subr.mxu0 0.0
    %844 = vmatpush1.msra.mxu0 %v77
    %845 = vmatprep.subr.mxu0 0.0
    %846 = vmatpush1.msra.mxu0 %v76
    %847 = vmatprep.subr.mxu0 0.0
    %848 = vmatpush1.msra.mxu0 %v75
    %849 = vmatprep.subr.mxu0 0.0
    %850 = vmatpush2.msra.mxu0 0.0
    %851 = vmatprep.subr.mxu0 0.0
    %852 = vmatpush2.msra.mxu0 0.0
    %853 = vmatprep.subr.mxu0 0.0
    %854 = vmatpush2.msra.mxu0 0.0
    %855 = vmatprep.subr.mxu0 0.0
    %856 = vmatpush2.msra.mxu0 0.0
    %857 = vmatprep.subr.mxu0 0.0
    %858 = vmatpush2.msra.mxu0 0.0
    %859 = vmatprep.subr.mxu0 0.0
    %860 = vmatpush2.msra.mxu0 0.0
    %861 = vmatprep.subr.mxu0 0.0
    %862 = vmatpush2.msra.mxu0 0.0
    %863 = vmatprep.subr.mxu0 0.0
    %864 = vmatpush2.msra.mxu0 0.0
    %865 = vmatprep.subr.mxu0 0.0
    %866 = vmatpush2.msra.mxu0 0.0
    %867 = vmatprep.subr.mxu0 0.0
    %868 = vmatpush2.msra.mxu0 0.0
    %869 = vmatprep.subr.mxu0 0.0
    %870 = vmatpush2.msra.mxu0 0.0
    %871 = vmatprep.subr.mxu0 0.0
    %872 = vmatpush2.msra.mxu0 0.0
    %873 = vmatprep.subr.mxu0 0.0
    %874 = vmatpush2.msra.mxu0 0.0
    %875 = vmatprep.subr.mxu0 0.0
    %876 = vmatpush2.msra.mxu0 0.0
    %877 = vmatprep.subr.mxu0 0.0
    %878 = vmatpush2.msra.mxu0 0.0
    %879 = vmatprep.subr.mxu0 0.0
    %880 = vmatpush2.msra.mxu0 0.0
    %881 = vmatprep.mubr.f32.mxu0 0.0
    %882 = vmatmul.mubr.f32.gmra.mxu0 %v815
    %v883 = vpop.f32.mrf.mxu0
    %v884 = vadd.f32 %v811, %v883
    %v885 = vpop.f32.mrf.mxu0
    %886 = vdwg.mxu0
    %v887 = vmul.f32 %v806, %v884
    %v888 = vadd.f32 %v887, %v486
    %v890 = vcombine.high %v888, %v888
    %v892 = vunpack.c.l.s4 1966171168
    %v893 = vunpack.c.0.s8 %v892
    %v894 = vlaneseq
    %v895 = vshrl.u32 %v894, 7
    %v896 = vsub.s32 %v893, %v895
    %v897 = vrot.slane %v888, %v896
    %v899 = vunpack.c.l.s4 1966171168
    %v900 = vunpack.c.0.s8 %v899
    %v901 = vlaneseq
    %v902 = vshrl.u32 %v901, 7
    %v903 = vsub.s32 %v900, %v902
    %v904 = vrot.slane %v890, %v903
    %v905 = vcombine.high %v897, %v897
    %v906 = vcombine.high %v904, %v904
    %v908 = vunpack.c.l.s4 1966171168
    %v909 = vunpack.c.0.s8 %v908
    %v910 = vlaneseq
    %v911 = vshrl.u32 %v910, 7
    %v912 = vsub.s32 %v909, %v911
    %v913 = vrot.slane %v897, %v912
    %v915 = vunpack.c.l.s4 1966171168
    %v916 = vunpack.c.0.s8 %v915
    %v917 = vlaneseq
    %v918 = vshrl.u32 %v917, 7
    %v919 = vsub.s32 %v916, %v918
    %v920 = vrot.slane %v904, %v919
    %v922 = vunpack.c.l.s4 1966171168
    %v923 = vunpack.c.0.s8 %v922
    %v924 = vlaneseq
    %v925 = vshrl.u32 %v924, 7
    %v926 = vsub.s32 %v923, %v925
    %v927 = vrot.slane %v905, %v926
    %v929 = vunpack.c.l.s4 1966171168
    %v930 = vunpack.c.0.s8 %v929
    %v931 = vlaneseq
    %v932 = vshrl.u32 %v931, 7
    %v933 = vsub.s32 %v930, %v932
    %v934 = vrot.slane %v906, %v933
    %v935 = vcombine.high %v913, %v913
    %v936 = vcombine.high %v920, %v920
    %v937 = vcombine.high %v927, %v927
    %v938 = vcombine.high %v934, %v934
    %vm947 = vcmask 188416
    %948 = vst.msk [vmem:[#allocation6] sm:$0x1] %vm947, %v913
    %949 = vst.msk [vmem:[#allocation6 + $0x8] sm:$0x1] %vm947, %v927
    %950 = vst.msk [vmem:[#allocation6 + $0x10] sm:$0x1] %vm947, %v935
    %951 = vst.msk [vmem:[#allocation6 + $0x18] sm:$0x1] %vm947, %v937
    %952 = vst.msk [vmem:[#allocation6 + $0x20] sm:$0x1] %vm947, %v920
    %953 = vst.msk [vmem:[#allocation6 + $0x28] sm:$0x1] %vm947, %v934
    %954 = vst.msk [vmem:[#allocation6 + $0x30] sm:$0x1] %vm947, %v936
    %955 = vst.msk [vmem:[#allocation6 + $0x38] sm:$0x1] %vm947, %v938
    %v956 = vcombine.high %v359, %v359
    %v958 = vunpack.c.l.s4 1966171168
    %v959 = vunpack.c.0.s8 %v958
    %v960 = vlaneseq
    %v961 = vshrl.u32 %v960, 7
    %v962 = vsub.s32 %v959, %v961
    %v963 = vrot.slane %v359, %v962
    %v965 = vunpack.c.l.s4 1966171168
    %v966 = vunpack.c.0.s8 %v965
    %v967 = vlaneseq
    %v968 = vshrl.u32 %v967, 7
    %v969 = vsub.s32 %v966, %v968
    %v970 = vrot.slane %v956, %v969
    %v971 = vcombine.high %v963, %v963
    %v972 = vcombine.high %v970, %v970
    %v974 = vunpack.c.l.s4 1966171168
    %v975 = vunpack.c.0.s8 %v974
    %v976 = vlaneseq
    %v977 = vshrl.u32 %v976, 7
    %v978 = vsub.s32 %v975, %v977
    %v979 = vrot.slane %v963, %v978
    %v981 = vunpack.c.l.s4 1966171168
    %v982 = vunpack.c.0.s8 %v981
    %v983 = vlaneseq
    %v984 = vshrl.u32 %v983, 7
    %v985 = vsub.s32 %v982, %v984
    %v986 = vrot.slane %v970, %v985
    %v988 = vunpack.c.l.s4 1966171168
    %v989 = vunpack.c.0.s8 %v988
    %v990 = vlaneseq
    %v991 = vshrl.u32 %v990, 7
    %v992 = vsub.s32 %v989, %v991
    %v993 = vrot.slane %v971, %v992
    %v995 = vunpack.c.l.s4 1966171168
    %v996 = vunpack.c.0.s8 %v995
    %v997 = vlaneseq
    %v998 = vshrl.u32 %v997, 7
    %v999 = vsub.s32 %v996, %v998
    %v1000 = vrot.slane %v972, %v999
    %v1001 = vcombine.high %v979, %v979
    %v1002 = vcombine.high %v986, %v986
    %v1003 = vcombine.high %v993, %v993
    %v1004 = vcombine.high %v1000, %v1000
    %v1005 = vlaneseq
    %v1006 = vshrl.u32 %v1005, 7
    %v1007 = vsub.s32 0, %v1006
    %v1008 = vrot.slane %v979, %v1007
    %v1009 = vlaneseq
    %v1010 = vshrl.u32 %v1009, 7
    %v1011 = vsub.s32 0, %v1010
    %v1012 = vrot.slane %v993, %v1011
    %v1013 = vlaneseq
    %v1014 = vshrl.u32 %v1013, 7
    %v1015 = vsub.s32 0, %v1014
    %v1016 = vrot.slane %v1001, %v1015
    %v1017 = vlaneseq
    %v1018 = vshrl.u32 %v1017, 7
    %v1019 = vsub.s32 0, %v1018
    %v1020 = vrot.slane %v1003, %v1019
    %v1021 = vlaneseq
    %v1022 = vshrl.u32 %v1021, 7
    %v1023 = vsub.s32 0, %v1022
    %v1024 = vrot.slane %v986, %v1023
    %v1025 = vlaneseq
    %v1026 = vshrl.u32 %v1025, 7
    %v1027 = vsub.s32 0, %v1026
    %v1028 = vrot.slane %v1000, %v1027
    %v1029 = vlaneseq
    %v1030 = vshrl.u32 %v1029, 7
    %v1031 = vsub.s32 0, %v1030
    %v1032 = vrot.slane %v1002, %v1031
    %v1033 = vlaneseq
    %v1034 = vshrl.u32 %v1033, 7
    %v1035 = vsub.s32 0, %v1034
    %v1036 = vrot.slane %v1004, %v1035
    %1037 = vrot.lane.b32.xlu0 %v1008, 104
    %v1038 = vpop.permute.xlu0 %1037
    %1039 = vrot.lane.b32.xlu0 %v1012, 104
    %v1040 = vpop.permute.xlu0 %1039
    %1041 = vrot.lane.b32.xlu0 %v1016, 104
    %v1042 = vpop.permute.xlu0 %1041
    %1043 = vrot.lane.b32.xlu0 %v1020, 104
    %v1044 = vpop.permute.xlu0 %1043
    %1045 = vrot.lane.b32.xlu0 %v1024, 104
    %v1046 = vpop.permute.xlu0 %1045
    %1047 = vrot.lane.b32.xlu0 %v1028, 104
    %v1048 = vpop.permute.xlu0 %1047
    %1049 = vrot.lane.b32.xlu0 %v1032, 104
    %v1050 = vpop.permute.xlu0 %1049
    %1051 = vrot.lane.b32.xlu0 %v1036, 104
    %v1052 = vpop.permute.xlu0 %1051
    %vm1061 = vcmask 0
    %1062 = vst.msk [vmem:[%s14] sm:$0x1] %vm1061, %v1038
    %1063 = vst.msk [vmem:[%s14 + $0x8] sm:$0x1] %vm1061, %v1040
    %1064 = vst.msk [vmem:[%s14 + $0x10] sm:$0x1] %vm1061, %v1042
    %1065 = vst.msk [vmem:[%s14 + $0x18] sm:$0x1] %vm1061, %v1044
    %1066 = vst.msk [vmem:[%s14 + $0x20] sm:$0x1] %vm1061, %v1046
    %1067 = vst.msk [vmem:[%s14 + $0x28] sm:$0x1] %vm1061, %v1048
    %1068 = vst.msk [vmem:[%s14 + $0x30] sm:$0x1] %vm1061, %v1050
    %1069 = vst.msk [vmem:[%s14 + $0x38] sm:$0x1] %vm1061, %v1052
    %v1070 = vld [vmem:[%s0 + $0x1] sm:$0x1]
    %v1071 = vld [vmem:[%s0 + $0x9] sm:$0x1]
    %v1072 = vld [vmem:[%s0 + $0x11] sm:$0x1]
    %v1073 = vld [vmem:[%s0 + $0x19] sm:$0x1]
    %v1074 = vld [vmem:[%s0 + $0x21] sm:$0x1]
    %v1075 = vld [vmem:[%s0 + $0x29] sm:$0x1]
    %v1076 = vld [vmem:[%s0 + $0x31] sm:$0x1]
    %v1077 = vld [vmem:[%s0 + $0x39] sm:$0x1]
    %v1078 = vld [vmem:[%s1 + $0x1] sm:$0x1]
    %v1079 = vld [vmem:[%s1 + $0x9] sm:$0x1]
    %v1080 = vld [vmem:[%s1 + $0x11] sm:$0x1]
    %v1081 = vld [vmem:[%s1 + $0x19] sm:$0x1]
    %v1082 = vld [vmem:[%s1 + $0x21] sm:$0x1]
    %v1083 = vld [vmem:[%s1 + $0x29] sm:$0x1]
    %v1084 = vld [vmem:[%s1 + $0x31] sm:$0x1]
    %v1085 = vld [vmem:[%s1 + $0x39] sm:$0x1]
    %v1086 = vld [vmem:[#allocation3] sm:$0xff]
    %v1087 = vld [vmem:[#allocation2] sm:$0xff]
    %v1096 = vrot.slane %v1071, 7
    %v1097 = vsel %vm116, %v1096, %v1070
    %v1098 = vrot.slane %v1072, 6
    %v1099 = vsel %vm119, %v1098, %v1097
    %v1100 = vrot.slane %v1073, 5
    %v1101 = vsel %vm122, %v1100, %v1099
    %v1102 = vrot.slane %v1074, 4
    %v1103 = vsel %vm125, %v1102, %v1101
    %v1104 = vrot.slane %v1075, 3
    %v1105 = vsel %vm128, %v1104, %v1103
    %v1106 = vrot.slane %v1076, 2
    %v1107 = vsel %vm131, %v1106, %v1105
    %v1108 = vrot.slane %v1077, 1
    %v1109 = vsel %vm134, %v1108, %v1107
    %1112 = vrot.lane.b32.xlu0 %v1086, 16
    %v1113 = vpop.permute.xlu0 %1112
    %v1123 = vrot.slane %v1079, 7
    %v1124 = vsel %vm116, %v1123, %v1078
    %v1125 = vrot.slane %v1080, 6
    %v1126 = vsel %vm119, %v1125, %v1124
    %v1127 = vrot.slane %v1081, 5
    %v1128 = vsel %vm122, %v1127, %v1126
    %v1129 = vrot.slane %v1082, 4
    %v1130 = vsel %vm125, %v1129, %v1128
    %v1131 = vrot.slane %v1083, 3
    %v1132 = vsel %vm128, %v1131, %v1130
    %v1133 = vrot.slane %v1084, 2
    %v1134 = vsel %vm131, %v1133, %v1132
    %v1135 = vrot.slane %v1085, 1
    %v1136 = vsel %vm134, %v1135, %v1134
    %1137 = vrot.lane.b32.xlu0 %v1136, 40
    %v1138 = vpop.permute.xlu0 %1137
    %v1140 = vsel %vm166, %v1109, %v1113
    %v1141 = vsel %vm168, %v1140, %v1138
    %v1143 = vsel %vm176, %v1141, 0
    %1145 = vmatprep.subr.mxu0 0.0
    %1146 = vmatpush1.msra.mxu0 0.0
    %1147 = vmatprep.subr.mxu0 0.0
    %1148 = vmatpush1.msra.mxu0 0.0
    %1149 = vmatprep.subr.mxu0 0.0
    %1150 = vmatpush1.msra.mxu0 0.0
    %1151 = vmatprep.subr.mxu0 0.0
    %1152 = vmatpush1.msra.mxu0 0.0
    %1153 = vmatprep.subr.mxu0 0.0
    %1154 = vmatpush1.msra.mxu0 0.0
    %1155 = vmatprep.subr.mxu0 0.0
    %1156 = vmatpush1.msra.mxu0 0.0
    %1157 = vmatprep.subr.mxu0 0.0
    %1158 = vmatpush1.msra.mxu0 0.0
    %1159 = vmatprep.subr.mxu0 0.0
    %1160 = vmatpush1.msra.mxu0 0.0
    %1161 = vmatprep.subr.mxu0 0.0
    %1162 = vmatpush1.msra.mxu0 0.0
    %1163 = vmatprep.subr.mxu0 0.0
    %1164 = vmatpush1.msra.mxu0 0.0
    %1165 = vmatprep.subr.mxu0 0.0
    %1166 = vmatpush1.msra.mxu0 %v182
    %1167 = vmatprep.subr.mxu0 0.0
    %1168 = vmatpush1.msra.mxu0 %v64
    %1169 = vmatprep.subr.mxu0 0.0
    %1170 = vmatpush1.msra.mxu0 %v63
    %1171 = vmatprep.subr.mxu0 0.0
    %1172 = vmatpush1.msra.mxu0 %v62
    %1173 = vmatprep.subr.mxu0 0.0
    %1174 = vmatpush1.msra.mxu0 %v61
    %1175 = vmatprep.subr.mxu0 0.0
    %1176 = vmatpush1.msra.mxu0 %v60
    %1177 = vmatprep.subr.mxu0 0.0
    %1178 = vmatpush2.msra.mxu0 0.0
    %1179 = vmatprep.subr.mxu0 0.0
    %1180 = vmatpush2.msra.mxu0 0.0
    %1181 = vmatprep.subr.mxu0 0.0
    %1182 = vmatpush2.msra.mxu0 0.0
    %1183 = vmatprep.subr.mxu0 0.0
    %1184 = vmatpush2.msra.mxu0 0.0
    %1185 = vmatprep.subr.mxu0 0.0
    %1186 = vmatpush2.msra.mxu0 0.0
    %1187 = vmatprep.subr.mxu0 0.0
    %1188 = vmatpush2.msra.mxu0 0.0
    %1189 = vmatprep.subr.mxu0 0.0
    %1190 = vmatpush2.msra.mxu0 0.0
    %1191 = vmatprep.subr.mxu0 0.0
    %1192 = vmatpush2.msra.mxu0 0.0
    %1193 = vmatprep.subr.mxu0 0.0
    %1194 = vmatpush2.msra.mxu0 0.0
    %1195 = vmatprep.subr.mxu0 0.0
    %1196 = vmatpush2.msra.mxu0 0.0
    %1197 = vmatprep.subr.mxu0 0.0
    %1198 = vmatpush2.msra.mxu0 0.0
    %1199 = vmatprep.subr.mxu0 0.0
    %1200 = vmatpush2.msra.mxu0 0.0
    %1201 = vmatprep.subr.mxu0 0.0
    %1202 = vmatpush2.msra.mxu0 0.0
    %1203 = vmatprep.subr.mxu0 0.0
    %1204 = vmatpush2.msra.mxu0 0.0
    %1205 = vmatprep.subr.mxu0 0.0
    %1206 = vmatpush2.msra.mxu0 0.0
    %1207 = vmatprep.subr.mxu0 0.0
    %1208 = vmatpush2.msra.mxu0 0.0
    %1209 = vmatprep.mubr.f32.mxu0 0.0
    %1210 = vmatmul.mubr.f32.gmra.mxu0 %v1143
    %v1211 = vpop.f32.mrf.mxu0
    %v1212 = vadd.f32 %v174, %v1211
    %v1213 = vpop.f32.mrf.mxu0
    %1214 = vdwg.mxu0
    %v1215 = vsel %vm254, %v1212, -inf
    %1216 = vmax.xlane.f32.xlu0 %v1215
    %v1217 = vpop.xlane.xlu0 %1216
    %v1218 = vsub.f32 %v1212, %v1217
    %v1219 = vmul.f32 %v1218, 1.442695
    %v1220 = vpow.pop %v1219
    %v1221 = vsel %vm254, %v1220, 0.0
    %1222 = vadd.xlane.f32.xlu0 %v1221
    %v1223 = vpop.xlane.xlu0 %1222
    %v1224 = vrcp.pop %v1223
    %v1225 = vmul.f32 %v1220, %v1224
    %v1226 = vsel %vm266, %v1212, -inf
    %1227 = vmax.xlane.f32.xlu0 %v1226
    %v1228 = vpop.xlane.xlu0 %1227
    %v1229 = vsub.f32 %v1212, %v1228
    %v1230 = vmul.f32 %v1229, 1.442695
    %v1231 = vpow.pop %v1230
    %1233 = vrot.lane.b32.xlu0 %v1231, 125
    %v1234 = vpop.permute.xlu0 %1233
    %v1236 = vsel %vm254, %v1234, 0.0
    %1237 = vadd.xlane.f32.xlu0 %v1236
    %v1238 = vpop.xlane.xlu0 %1237
    %v1239 = vrcp.pop %v1238
    %v1240 = vmul.f32 %v1231, %v1239
    %v1242 = vsel %vm254, %v1225, 0
    %1244 = vmatprep.subr.mxu0 0.0
    %1245 = vmatpush1.msra.mxu0 0.0
    %1246 = vmatprep.subr.mxu0 0.0
    %1247 = vmatpush1.msra.mxu0 0.0
    %1248 = vmatprep.subr.mxu0 0.0
    %1249 = vmatpush1.msra.mxu0 0.0
    %1250 = vmatprep.subr.mxu0 0.0
    %1251 = vmatpush1.msra.mxu0 0.0
    %1252 = vmatprep.subr.mxu0 0.0
    %1253 = vmatpush1.msra.mxu0 0.0
    %1254 = vmatprep.subr.mxu0 0.0
    %1255 = vmatpush1.msra.mxu0 0.0
    %1256 = vmatprep.subr.mxu0 0.0
    %1257 = vmatpush1.msra.mxu0 0.0
    %1258 = vmatprep.subr.mxu0 0.0
    %1259 = vmatpush1.msra.mxu0 0.0
    %1260 = vmatprep.subr.mxu0 0.0
    %1261 = vmatpush1.msra.mxu0 0.0
    %1262 = vmatprep.subr.mxu0 0.0
    %1263 = vmatpush1.msra.mxu0 0.0
    %1264 = vmatprep.subr.mxu0 0.0
    %1265 = vmatpush1.msra.mxu0 0.0
    %1266 = vmatprep.subr.mxu0 0.0
    %1267 = vmatpush1.msra.mxu0 0.0
    %1268 = vmatprep.subr.mxu0 0.0
    %1269 = vmatpush1.msra.mxu0 0.0
    %1270 = vmatprep.subr.mxu0 0.0
    %1271 = vmatpush1.msra.mxu0 0.0
    %1272 = vmatprep.subr.mxu0 0.0
    %1273 = vmatpush1.msra.mxu0 0.0
    %1274 = vmatprep.subr.mxu0 0.0
    %1275 = vmatpush1.msra.mxu0 %v287
    %1276 = vmatprep.subr.mxu0 0.0
    %1277 = vmatpush2.msra.mxu0 0.0
    %1278 = vmatprep.subr.mxu0 0.0
    %1279 = vmatpush2.msra.mxu0 0.0
    %1280 = vmatprep.subr.mxu0 0.0
    %1281 = vmatpush2.msra.mxu0 0.0
    %1282 = vmatprep.subr.mxu0 0.0
    %1283 = vmatpush2.msra.mxu0 0.0
    %1284 = vmatprep.subr.mxu0 0.0
    %1285 = vmatpush2.msra.mxu0 0.0
    %1286 = vmatprep.subr.mxu0 0.0
    %1287 = vmatpush2.msra.mxu0 0.0
    %1288 = vmatprep.subr.mxu0 0.0
    %1289 = vmatpush2.msra.mxu0 0.0
    %1290 = vmatprep.subr.mxu0 0.0
    %1291 = vmatpush2.msra.mxu0 0.0
    %1292 = vmatprep.subr.mxu0 0.0
    %1293 = vmatpush2.msra.mxu0 0.0
    %1294 = vmatprep.subr.mxu0 0.0
    %1295 = vmatpush2.msra.mxu0 0.0
    %1296 = vmatprep.subr.mxu0 0.0
    %1297 = vmatpush2.msra.mxu0 0.0
    %1298 = vmatprep.subr.mxu0 0.0
    %1299 = vmatpush2.msra.mxu0 0.0
    %1300 = vmatprep.subr.mxu0 0.0
    %1301 = vmatpush2.msra.mxu0 0.0
    %1302 = vmatprep.subr.mxu0 0.0
    %1303 = vmatpush2.msra.mxu0 0.0
    %1304 = vmatprep.subr.mxu0 0.0
    %1305 = vmatpush2.msra.mxu0 0.0
    %1306 = vmatprep.subr.mxu0 0.0
    %1307 = vmatpush2.msra.mxu0 0.0
    %1308 = vmatprep.mubr.f32.mxu0 0.0
    %1309 = vmatmul.mubr.f32.gmra.mxu0 %v1242
    %v1310 = vpop.f32.mrf.mxu0
    %v1311 = vadd.f32 0.0, %v1310
    %v1312 = vpop.f32.mrf.mxu0
    %1313 = vdwg.mxu0
    %v1314 = vsub.f32 1.0, %v1311
    %1316 = vrot.lane.b32.xlu0 %v1240, 125
    %v1317 = vpop.permute.xlu0 %1316
    %v1318 = vsel %vm254, %v1317, 0
    %1320 = vmatprep.subr.mxu0 0.0
    %1321 = vmatpush1.msra.mxu0 0.0
    %1322 = vmatprep.subr.mxu0 0.0
    %1323 = vmatpush1.msra.mxu0 0.0
    %1324 = vmatprep.subr.mxu0 0.0
    %1325 = vmatpush1.msra.mxu0 0.0
    %1326 = vmatprep.subr.mxu0 0.0
    %1327 = vmatpush1.msra.mxu0 0.0
    %1328 = vmatprep.subr.mxu0 0.0
    %1329 = vmatpush1.msra.mxu0 0.0
    %1330 = vmatprep.subr.mxu0 0.0
    %1331 = vmatpush1.msra.mxu0 0.0
    %1332 = vmatprep.subr.mxu0 0.0
    %1333 = vmatpush1.msra.mxu0 0.0
    %1334 = vmatprep.subr.mxu0 0.0
    %1335 = vmatpush1.msra.mxu0 0.0
    %1336 = vmatprep.subr.mxu0 0.0
    %1337 = vmatpush1.msra.mxu0 0.0
    %1338 = vmatprep.subr.mxu0 0.0
    %1339 = vmatpush1.msra.mxu0 0.0
    %1340 = vmatprep.subr.mxu0 0.0
    %1341 = vmatpush1.msra.mxu0 0.0
    %1342 = vmatprep.subr.mxu0 0.0
    %1343 = vmatpush1.msra.mxu0 0.0
    %1344 = vmatprep.subr.mxu0 0.0
    %1345 = vmatpush1.msra.mxu0 0.0
    %1346 = vmatprep.subr.mxu0 0.0
    %1347 = vmatpush1.msra.mxu0 0.0
    %1348 = vmatprep.subr.mxu0 0.0
    %1349 = vmatpush1.msra.mxu0 0.0
    %1350 = vmatprep.subr.mxu0 0.0
    %1351 = vmatpush1.msra.mxu0 %v366
    %1352 = vmatprep.subr.mxu0 0.0
    %1353 = vmatpush2.msra.mxu0 0.0
    %1354 = vmatprep.subr.mxu0 0.0
    %1355 = vmatpush2.msra.mxu0 0.0
    %1356 = vmatprep.subr.mxu0 0.0
    %1357 = vmatpush2.msra.mxu0 0.0
    %1358 = vmatprep.subr.mxu0 0.0
    %1359 = vmatpush2.msra.mxu0 0.0
    %1360 = vmatprep.subr.mxu0 0.0
    %1361 = vmatpush2.msra.mxu0 0.0
    %1362 = vmatprep.subr.mxu0 0.0
    %1363 = vmatpush2.msra.mxu0 0.0
    %1364 = vmatprep.subr.mxu0 0.0
    %1365 = vmatpush2.msra.mxu0 0.0
    %1366 = vmatprep.subr.mxu0 0.0
    %1367 = vmatpush2.msra.mxu0 0.0
    %1368 = vmatprep.subr.mxu0 0.0
    %1369 = vmatpush2.msra.mxu0 0.0
    %1370 = vmatprep.subr.mxu0 0.0
    %1371 = vmatpush2.msra.mxu0 0.0
    %1372 = vmatprep.subr.mxu0 0.0
    %1373 = vmatpush2.msra.mxu0 0.0
    %1374 = vmatprep.subr.mxu0 0.0
    %1375 = vmatpush2.msra.mxu0 0.0
    %1376 = vmatprep.subr.mxu0 0.0
    %1377 = vmatpush2.msra.mxu0 0.0
    %1378 = vmatprep.subr.mxu0 0.0
    %1379 = vmatpush2.msra.mxu0 0.0
    %1380 = vmatprep.subr.mxu0 0.0
    %1381 = vmatpush2.msra.mxu0 0.0
    %1382 = vmatprep.subr.mxu0 0.0
    %1383 = vmatpush2.msra.mxu0 0.0
    %1384 = vmatprep.mubr.f32.mxu0 0.0
    %1385 = vmatmul.mubr.f32.gmra.mxu0 %v1318
    %v1386 = vpop.f32.mrf.mxu0
    %v1387 = vadd.f32 0.0, %v1386
    %v1388 = vpop.f32.mrf.mxu0
    %1389 = vdwg.mxu0
    %v1390 = vsub.f32 1.0, %v1387
    %v1391 = vxor.u32 %v1212, 2147483648
    %v1392 = vmul.f32 %v1391, 1.442695
    %v1393 = vpow.pop %v1392
    %v1394 = vadd.f32 %v1393, 1.0
    %v1395 = vrcp.pop %v1394
    %v1396 = vmul.f32 1.0, %v1395
    %v1397 = vtanh.pop %v1212
    %v1398 = vmul.f32 %v1311, %v1390
    %1400 = vrot.lane.b32.xlu0 %v1087, 6
    %v1401 = vpop.permute.xlu0 %1400
    %v1403 = vmul.f32 %v1396, %v1401
    %1405 = vrot.lane.b32.xlu0 %v1397, 80
    %v1406 = vpop.permute.xlu0 %1405
    %v1408 = vmul.f32 %v1396, %v1406
    %1410 = vrot.lane.b32.xlu0 %v1408, 104
    %v1411 = vpop.permute.xlu0 %1410
    %v1413 = vadd.f32 %v1403, %v1411
    %1415 = vrot.lane.b32.xlu0 %v1413, 122
    %v1416 = vpop.permute.xlu0 %1415
    %v1418 = vmul.f32 %v1398, %v1416
    %v1419 = vsub.f32 %v1311, %v1398
    %v1420 = vmul.f32 %v1419, %v1087
    %v1421 = vadd.f32 %v1418, %v1420
    %v1422 = vsub.f32 %v1390, %v1398
    %1423 = vrot.lane.b32.xlu0 %v1397, 50
    %v1424 = vpop.permute.xlu0 %1423
    %v1426 = vmul.f32 %v1422, %v1424
    %v1427 = vadd.f32 %v1421, %v1426
    %v1428 = vtanh.pop %v1427
    %1430 = vrot.lane.b32.xlu0 %v1428, 54
    %v1431 = vpop.permute.xlu0 %1430
    %v1433 = vmul.f32 %v1396, %v1431
    %1434 = vst.msk [vmem:[#allocation2] sm:$0xff] %vm482, %v1427
    %1436 = vrot.lane.b32.xlu0 %v1433, 74
    %v1437 = vpop.permute.xlu0 %1436
    %1439 = vst.msk [vmem:[#allocation3] sm:$0xff] %vm482, %v1437
    %1440 = vst.msk [vmem:[%s590] sm:$0xff] %vm482, %v1437
    %v1441 = vld [vmem:[#allocation5] sm:$0xff]
    %1443 = vrot.lane.b32.xlu0 %v1441, 127
    %v1444 = vpop.permute.xlu0 %1443
    %1447 = vrot.lane.b32.xlu0 %v1314, 107
    %v1448 = vpop.permute.xlu0 %1447
    %v1450 = vsel %vm254, %v1444, %v1448
    %1451 = vst.msk [vmem:[#allocation5] sm:$0xff] %vm500, %v1450
    %v1453 = vsel %vm500, %v1450, 0
    %1455 = vmatprep.subr.mxu0 0.0
    %1456 = vmatpush1.msra.mxu0 0.0
    %1457 = vmatprep.subr.mxu0 0.0
    %1458 = vmatpush1.msra.mxu0 0.0
    %1459 = vmatprep.subr.mxu0 0.0
    %1460 = vmatpush1.msra.mxu0 0.0
    %1461 = vmatprep.subr.mxu0 0.0
    %1462 = vmatpush1.msra.mxu0 0.0
    %1463 = vmatprep.subr.mxu0 0.0
    %1464 = vmatpush1.msra.mxu0 0.0
    %1465 = vmatprep.subr.mxu0 0.0
    %1466 = vmatpush1.msra.mxu0 0.0
    %1467 = vmatprep.subr.mxu0 0.0
    %1468 = vmatpush1.msra.mxu0 0.0
    %1469 = vmatprep.subr.mxu0 0.0
    %1470 = vmatpush1.msra.mxu0 0.0
    %1471 = vmatprep.subr.mxu0 0.0
    %1472 = vmatpush1.msra.mxu0 0.0
    %1473 = vmatprep.subr.mxu0 0.0
    %1474 = vmatpush1.msra.mxu0 0.0
    %1475 = vmatprep.subr.mxu0 0.0
    %1476 = vmatpush1.msra.mxu0 0.0
    %1477 = vmatprep.subr.mxu0 0.0
    %1478 = vmatpush1.msra.mxu0 0.0
    %1479 = vmatprep.subr.mxu0 0.0
    %1480 = vmatpush1.msra.mxu0 0.0
    %1481 = vmatprep.subr.mxu0 0.0
    %1482 = vmatpush1.msra.mxu0 0.0
    %1483 = vmatprep.subr.mxu0 0.0
    %1484 = vmatpush1.msra.mxu0 0.0
    %1485 = vmatprep.subr.mxu0 0.0
    %1486 = vmatpush1.msra.mxu0 %v507
    %1487 = vmatprep.subr.mxu0 0.0
    %1488 = vmatpush2.msra.mxu0 0.0
    %1489 = vmatprep.subr.mxu0 0.0
    %1490 = vmatpush2.msra.mxu0 0.0
    %1491 = vmatprep.subr.mxu0 0.0
    %1492 = vmatpush2.msra.mxu0 0.0
    %1493 = vmatprep.subr.mxu0 0.0
    %1494 = vmatpush2.msra.mxu0 0.0
    %1495 = vmatprep.subr.mxu0 0.0
    %1496 = vmatpush2.msra.mxu0 0.0
    %1497 = vmatprep.subr.mxu0 0.0
    %1498 = vmatpush2.msra.mxu0 0.0
    %1499 = vmatprep.subr.mxu0 0.0
    %1500 = vmatpush2.msra.mxu0 0.0
    %1501 = vmatprep.subr.mxu0 0.0
    %1502 = vmatpush2.msra.mxu0 0.0
    %1503 = vmatprep.subr.mxu0 0.0
    %1504 = vmatpush2.msra.mxu0 0.0
    %1505 = vmatprep.subr.mxu0 0.0
    %1506 = vmatpush2.msra.mxu0 0.0
    %1507 = vmatprep.subr.mxu0 0.0
    %1508 = vmatpush2.msra.mxu0 0.0
    %1509 = vmatprep.subr.mxu0 0.0
    %1510 = vmatpush2.msra.mxu0 0.0
    %1511 = vmatprep.subr.mxu0 0.0
    %1512 = vmatpush2.msra.mxu0 0.0
    %1513 = vmatprep.subr.mxu0 0.0
    %1514 = vmatpush2.msra.mxu0 0.0
    %1515 = vmatprep.subr.mxu0 0.0
    %1516 = vmatpush2.msra.mxu0 0.0
    %1517 = vmatprep.subr.mxu0 0.0
    %1518 = vmatpush2.msra.mxu0 0.0
    %1519 = vmatprep.mubr.f32.mxu0 0.0
    %1520 = vmatmul.mubr.f32.gmra.mxu0 %v1453
    %v1521 = vpop.f32.mrf.mxu0
    %v1522 = vadd.f32 0.0, %v1521
    %v1523 = vpop.f32.mrf.mxu0
    %1524 = vdwg.mxu0
    %v1525 = vsel %vm500, %v1522, -inf
    %1526 = vmax.xlane.f32.xlu0 %v1525
    %v1527 = vpop.xlane.xlu0 %1526
    %v1528 = vsub.f32 %v1522, %v1527
    %v1529 = vmul.f32 %v1528, 1.442695
    %v1530 = vpow.pop %v1529
    %v1531 = vsel %vm500, %v1530, 0.0
    %1532 = vadd.xlane.f32.xlu0 %v1531
    %v1533 = vpop.xlane.xlu0 %1532
    %v1534 = vrcp.pop %v1533
    %v1535 = vmul.f32 %v1530, %v1534
    %v1536 = vld [vmem:[%s598] sm:$0xff]
    %1538 = vset.pattern.permute.xlu0 0
    %1539 = vperm.xlu0 %1538, %v1535
    %v1540 = vpop.permute.xlu0 %1539
    %v1542 = vmul.f32 %v1536, %v1540
    %v1543 = vld [vmem:[%s605] sm:$0xff]
    %1544 = vset.pattern.permute.xlu0 1
    %1545 = vperm.xlu0 %1544, %v1535
    %v1546 = vpop.permute.xlu0 %1545
    %v1548 = vmul.f32 %v1543, %v1546
    %v1549 = vld [vmem:[#allocation4] sm:$0xff]
    %1550 = vset.pattern.permute.xlu0 2
    %1551 = vperm.xlu0 %1550, %v1535
    %v1552 = vpop.permute.xlu0 %1551
    %v1554 = vmul.f32 %v1549, %v1552
    %v1555 = vld [vmem:[%s590] sm:$0xff]
    %1556 = vset.pattern.permute.xlu0 3
    %1557 = vperm.xlu0 %1556, %v1535
    %v1558 = vpop.permute.xlu0 %1557
    %v1560 = vmul.f32 %v1555, %v1558
    %v1561 = vadd.f32 %v1542, %v1548
    %v1562 = vadd.f32 %v1561, %v1554
    %v1563 = vadd.f32 %v1562, %v1560
    %v1564 = vmul.f32 %v1563, 0.25
    %1566 = vrot.lane.b32.xlu0 %v1548, 24
    %v1567 = vpop.permute.xlu0 %1566
    %1570 = vrot.lane.b32.xlu0 %v1554, 48
    %v1571 = vpop.permute.xlu0 %1570
    %1574 = vrot.lane.b32.xlu0 %v1560, 72
    %v1575 = vpop.permute.xlu0 %1574
    %v1577 = vsel %vm482, %v1542, %v1567
    %v1578 = vsel %vm635, %v1577, %v1571
    %v1579 = vsel %vm637, %v1578, %v1575
    %v1581 = vsel %vm482, %v1564, 0
    %1583 = vmatprep.subr.mxu0 0.0
    %1584 = vmatpush1.msra.mxu0 0.0
    %1585 = vmatprep.subr.mxu0 0.0
    %1586 = vmatpush1.msra.mxu0 0.0
    %1587 = vmatprep.subr.mxu0 0.0
    %1588 = vmatpush1.msra.mxu0 0.0
    %1589 = vmatprep.subr.mxu0 0.0
    %1590 = vmatpush1.msra.mxu0 0.0
    %1591 = vmatprep.subr.mxu0 0.0
    %1592 = vmatpush1.msra.mxu0 0.0
    %1593 = vmatprep.subr.mxu0 0.0
    %1594 = vmatpush1.msra.mxu0 0.0
    %1595 = vmatprep.subr.mxu0 0.0
    %1596 = vmatpush1.msra.mxu0 0.0
    %1597 = vmatprep.subr.mxu0 0.0
    %1598 = vmatpush1.msra.mxu0 0.0
    %1599 = vmatprep.subr.mxu0 0.0
    %1600 = vmatpush1.msra.mxu0 0.0
    %1601 = vmatprep.subr.mxu0 0.0
    %1602 = vmatpush1.msra.mxu0 0.0
    %1603 = vmatprep.subr.mxu0 0.0
    %1604 = vmatpush1.msra.mxu0 0.0
    %1605 = vmatprep.subr.mxu0 0.0
    %1606 = vmatpush1.msra.mxu0 0.0
    %1607 = vmatprep.subr.mxu0 0.0
    %1608 = vmatpush1.msra.mxu0 0.0
    %1609 = vmatprep.subr.mxu0 0.0
    %1610 = vmatpush1.msra.mxu0 %v71
    %1611 = vmatprep.subr.mxu0 0.0
    %1612 = vmatpush1.msra.mxu0 %v70
    %1613 = vmatprep.subr.mxu0 0.0
    %1614 = vmatpush1.msra.mxu0 %v69
    %1615 = vmatprep.subr.mxu0 0.0
    %1616 = vmatpush2.msra.mxu0 0.0
    %1617 = vmatprep.subr.mxu0 0.0
    %1618 = vmatpush2.msra.mxu0 0.0
    %1619 = vmatprep.subr.mxu0 0.0
    %1620 = vmatpush2.msra.mxu0 0.0
    %1621 = vmatprep.subr.mxu0 0.0
    %1622 = vmatpush2.msra.mxu0 0.0
    %1623 = vmatprep.subr.mxu0 0.0
    %1624 = vmatpush2.msra.mxu0 0.0
    %1625 = vmatprep.subr.mxu0 0.0
    %1626 = vmatpush2.msra.mxu0 0.0
    %1627 = vmatprep.subr.mxu0 0.0
    %1628 = vmatpush2.msra.mxu0 0.0
    %1629 = vmatprep.subr.mxu0 0.0
    %1630 = vmatpush2.msra.mxu0 0.0
    %1631 = vmatprep.subr.mxu0 0.0
    %1632 = vmatpush2.msra.mxu0 0.0
    %1633 = vmatprep.subr.mxu0 0.0
    %1634 = vmatpush2.msra.mxu0 0.0
    %1635 = vmatprep.subr.mxu0 0.0
    %1636 = vmatpush2.msra.mxu0 0.0
    %1637 = vmatprep.subr.mxu0 0.0
    %1638 = vmatpush2.msra.mxu0 0.0
    %1639 = vmatprep.subr.mxu0 0.0
    %1640 = vmatpush2.msra.mxu0 0.0
    %1641 = vmatprep.subr.mxu0 0.0
    %1642 = vmatpush2.msra.mxu0 0.0
    %1643 = vmatprep.subr.mxu0 0.0
    %1644 = vmatpush2.msra.mxu0 0.0
    %1645 = vmatprep.subr.mxu0 0.0
    %1646 = vmatpush2.msra.mxu0 0.0
    %1647 = vmatprep.mubr.f32.mxu0 0.0
    %1648 = vmatmul.mubr.f32.gmra.mxu0 %v1581
    %v1649 = vpop.f32.mrf.mxu0
    %v1650 = vadd.f32 %v643, %v1649
    %v1651 = vpop.f32.mrf.mxu0
    %1652 = vdwg.mxu0
    %v1653 = vmax.f32 %v1650, 0.0
    %v1655 = vsel %vm500, %v1653, 0
    %1657 = vmatprep.subr.mxu0 0.0
    %1658 = vmatpush1.msra.mxu0 0.0
    %1659 = vmatprep.subr.mxu0 0.0
    %1660 = vmatpush1.msra.mxu0 0.0
    %1661 = vmatprep.subr.mxu0 0.0
    %1662 = vmatpush1.msra.mxu0 0.0
    %1663 = vmatprep.subr.mxu0 0.0
    %1664 = vmatpush1.msra.mxu0 0.0
    %1665 = vmatprep.subr.mxu0 0.0
    %1666 = vmatpush1.msra.mxu0 0.0
    %1667 = vmatprep.subr.mxu0 0.0
    %1668 = vmatpush1.msra.mxu0 0.0
    %1669 = vmatprep.subr.mxu0 0.0
    %1670 = vmatpush1.msra.mxu0 0.0
    %1671 = vmatprep.subr.mxu0 0.0
    %1672 = vmatpush1.msra.mxu0 0.0
    %1673 = vmatprep.subr.mxu0 0.0
    %1674 = vmatpush1.msra.mxu0 0.0
    %1675 = vmatprep.subr.mxu0 0.0
    %1676 = vmatpush1.msra.mxu0 0.0
    %1677 = vmatprep.subr.mxu0 0.0
    %1678 = vmatpush1.msra.mxu0 0.0
    %1679 = vmatprep.subr.mxu0 0.0
    %1680 = vmatpush1.msra.mxu0 0.0
    %1681 = vmatprep.subr.mxu0 0.0
    %1682 = vmatpush1.msra.mxu0 0.0
    %1683 = vmatprep.subr.mxu0 0.0
    %1684 = vmatpush1.msra.mxu0 0.0
    %1685 = vmatprep.subr.mxu0 0.0
    %1686 = vmatpush1.msra.mxu0 0.0
    %1687 = vmatprep.subr.mxu0 0.0
    %1688 = vmatpush1.msra.mxu0 %v729
    %1689 = vmatprep.subr.mxu0 0.0
    %1690 = vmatpush2.msra.mxu0 0.0
    %1691 = vmatprep.subr.mxu0 0.0
    %1692 = vmatpush2.msra.mxu0 0.0
    %1693 = vmatprep.subr.mxu0 0.0
    %1694 = vmatpush2.msra.mxu0 0.0
    %1695 = vmatprep.subr.mxu0 0.0
    %1696 = vmatpush2.msra.mxu0 0.0
    %1697 = vmatprep.subr.mxu0 0.0
    %1698 = vmatpush2.msra.mxu0 0.0
    %1699 = vmatprep.subr.mxu0 0.0
    %1700 = vmatpush2.msra.mxu0 0.0
    %1701 = vmatprep.subr.mxu0 0.0
    %1702 = vmatpush2.msra.mxu0 0.0
    %1703 = vmatprep.subr.mxu0 0.0
    %1704 = vmatpush2.msra.mxu0 0.0
    %1705 = vmatprep.subr.mxu0 0.0
    %1706 = vmatpush2.msra.mxu0 0.0
    %1707 = vmatprep.subr.mxu0 0.0
    %1708 = vmatpush2.msra.mxu0 0.0
    %1709 = vmatprep.subr.mxu0 0.0
    %1710 = vmatpush2.msra.mxu0 0.0
    %1711 = vmatprep.subr.mxu0 0.0
    %1712 = vmatpush2.msra.mxu0 0.0
    %1713 = vmatprep.subr.mxu0 0.0
    %1714 = vmatpush2.msra.mxu0 0.0
    %1715 = vmatprep.subr.mxu0 0.0
    %1716 = vmatpush2.msra.mxu0 0.0
    %1717 = vmatprep.subr.mxu0 0.0
    %1718 = vmatpush2.msra.mxu0 0.0
    %1719 = vmatprep.subr.mxu0 0.0
    %1720 = vmatpush2.msra.mxu0 0.0
    %1721 = vmatprep.mubr.f32.mxu0 0.0
    %1722 = vmatmul.mubr.f32.gmra.mxu0 %v1655
    %v1723 = vpop.f32.mrf.mxu0
    %v1724 = vadd.f32 %v723, %v1723
    %v1725 = vpop.f32.mrf.mxu0
    %1726 = vdwg.mxu0
    %v1727 = vxor.u32 %v1724, 2147483648
    %v1728 = vmul.f32 %v1727, 1.442695
    %v1729 = vpow.pop %v1728
    %v1730 = vadd.f32 %v1729, 1.0
    %v1731 = vrcp.pop %v1730
    %v1732 = vmul.f32 1.0, %v1731
    %v1734 = vsel %vm813, %v1579, 0
    %1736 = vmatprep.subr.mxu0 0.0
    %1737 = vmatpush1.msra.mxu0 0.0
    %1738 = vmatprep.subr.mxu0 0.0
    %1739 = vmatpush1.msra.mxu0 0.0
    %1740 = vmatprep.subr.mxu0 0.0
    %1741 = vmatpush1.msra.mxu0 0.0
    %1742 = vmatprep.subr.mxu0 0.0
    %1743 = vmatpush1.msra.mxu0 0.0
    %1744 = vmatprep.subr.mxu0 0.0
    %1745 = vmatpush1.msra.mxu0 %v86
    %1746 = vmatprep.subr.mxu0 0.0
    %1747 = vmatpush1.msra.mxu0 %v85
    %1748 = vmatprep.subr.mxu0 0.0
    %1749 = vmatpush1.msra.mxu0 %v84
    %1750 = vmatprep.subr.mxu0 0.0
    %1751 = vmatpush1.msra.mxu0 %v83
    %1752 = vmatprep.subr.mxu0 0.0
    %1753 = vmatpush1.msra.mxu0 %v82
    %1754 = vmatprep.subr.mxu0 0.0
    %1755 = vmatpush1.msra.mxu0 %v81
    %1756 = vmatprep.subr.mxu0 0.0
    %1757 = vmatpush1.msra.mxu0 %v80
    %1758 = vmatprep.subr.mxu0 0.0
    %1759 = vmatpush1.msra.mxu0 %v79
    %1760 = vmatprep.subr.mxu0 0.0
    %1761 = vmatpush1.msra.mxu0 %v78
    %1762 = vmatprep.subr.mxu0 0.0
    %1763 = vmatpush1.msra.mxu0 %v77
    %1764 = vmatprep.subr.mxu0 0.0
    %1765 = vmatpush1.msra.mxu0 %v76
    %1766 = vmatprep.subr.mxu0 0.0
    %1767 = vmatpush1.msra.mxu0 %v75
    %1768 = vmatprep.subr.mxu0 0.0
    %1769 = vmatpush2.msra.mxu0 0.0
    %1770 = vmatprep.subr.mxu0 0.0
    %1771 = vmatpush2.msra.mxu0 0.0
    %1772 = vmatprep.subr.mxu0 0.0
    %1773 = vmatpush2.msra.mxu0 0.0
    %1774 = vmatprep.subr.mxu0 0.0
    %1775 = vmatpush2.msra.mxu0 0.0
    %1776 = vmatprep.subr.mxu0 0.0
    %1777 = vmatpush2.msra.mxu0 0.0
    %1778 = vmatprep.subr.mxu0 0.0
    %1779 = vmatpush2.msra.mxu0 0.0
    %1780 = vmatprep.subr.mxu0 0.0
    %1781 = vmatpush2.msra.mxu0 0.0
    %1782 = vmatprep.subr.mxu0 0.0
    %1783 = vmatpush2.msra.mxu0 0.0
    %1784 = vmatprep.subr.mxu0 0.0
    %1785 = vmatpush2.msra.mxu0 0.0
    %1786 = vmatprep.subr.mxu0 0.0
    %1787 = vmatpush2.msra.mxu0 0.0
    %1788 = vmatprep.subr.mxu0 0.0
    %1789 = vmatpush2.msra.mxu0 0.0
    %1790 = vmatprep.subr.mxu0 0.0
    %1791 = vmatpush2.msra.mxu0 0.0
    %1792 = vmatprep.subr.mxu0 0.0
    %1793 = vmatpush2.msra.mxu0 0.0
    %1794 = vmatprep.subr.mxu0 0.0
    %1795 = vmatpush2.msra.mxu0 0.0
    %1796 = vmatprep.subr.mxu0 0.0
    %1797 = vmatpush2.msra.mxu0 0.0
    %1798 = vmatprep.subr.mxu0 0.0
    %1799 = vmatpush2.msra.mxu0 0.0
    %1800 = vmatprep.mubr.f32.mxu0 0.0
    %1801 = vmatmul.mubr.f32.gmra.mxu0 %v1734
    %v1802 = vpop.f32.mrf.mxu0
    %v1803 = vadd.f32 %v811, %v1802
    %v1804 = vpop.f32.mrf.mxu0
    %1805 = vdwg.mxu0
    %v1806 = vmul.f32 %v1732, %v1803
    %v1807 = vadd.f32 %v1806, %v1437
    %v1809 = vcombine.high %v1807, %v1807
    %v1811 = vunpack.c.l.s4 1966171168
    %v1812 = vunpack.c.0.s8 %v1811
    %v1813 = vlaneseq
    %v1814 = vshrl.u32 %v1813, 7
    %v1815 = vsub.s32 %v1812, %v1814
    %v1816 = vrot.slane %v1807, %v1815
    %v1818 = vunpack.c.l.s4 1966171168
    %v1819 = vunpack.c.0.s8 %v1818
    %v1820 = vlaneseq
    %v1821 = vshrl.u32 %v1820, 7
    %v1822 = vsub.s32 %v1819, %v1821
    %v1823 = vrot.slane %v1809, %v1822
    %v1824 = vcombine.high %v1816, %v1816
    %v1825 = vcombine.high %v1823, %v1823
    %v1827 = vunpack.c.l.s4 1966171168
    %v1828 = vunpack.c.0.s8 %v1827
    %v1829 = vlaneseq
    %v1830 = vshrl.u32 %v1829, 7
    %v1831 = vsub.s32 %v1828, %v1830
    %v1832 = vrot.slane %v1816, %v1831
    %v1834 = vunpack.c.l.s4 1966171168
    %v1835 = vunpack.c.0.s8 %v1834
    %v1836 = vlaneseq
    %v1837 = vshrl.u32 %v1836, 7
    %v1838 = vsub.s32 %v1835, %v1837
    %v1839 = vrot.slane %v1823, %v1838
    %v1841 = vunpack.c.l.s4 1966171168
    %v1842 = vunpack.c.0.s8 %v1841
    %v1843 = vlaneseq
    %v1844 = vshrl.u32 %v1843, 7
    %v1845 = vsub.s32 %v1842, %v1844
    %v1846 = vrot.slane %v1824, %v1845
    %v1848 = vunpack.c.l.s4 1966171168
    %v1849 = vunpack.c.0.s8 %v1848
    %v1850 = vlaneseq
    %v1851 = vshrl.u32 %v1850, 7
    %v1852 = vsub.s32 %v1849, %v1851
    %v1853 = vrot.slane %v1825, %v1852
    %v1854 = vcombine.high %v1832, %v1832
    %v1855 = vcombine.high %v1839, %v1839
    %v1856 = vcombine.high %v1846, %v1846
    %v1857 = vcombine.high %v1853, %v1853
    %1866 = vst.msk [vmem:[#allocation6 + $0x1] sm:$0x1] %vm947, %v1832
    %1867 = vst.msk [vmem:[#allocation6 + $0x9] sm:$0x1] %vm947, %v1846
    %1868 = vst.msk [vmem:[#allocation6 + $0x11] sm:$0x1] %vm947, %v1854
    %1869 = vst.msk [vmem:[#allocation6 + $0x19] sm:$0x1] %vm947, %v1856
    %1870 = vst.msk [vmem:[#allocation6 + $0x21] sm:$0x1] %vm947, %v1839
    %1871 = vst.msk [vmem:[#allocation6 + $0x29] sm:$0x1] %vm947, %v1853
    %1872 = vst.msk [vmem:[#allocation6 + $0x31] sm:$0x1] %vm947, %v1855
    %1873 = vst.msk [vmem:[#allocation6 + $0x39] sm:$0x1] %vm947, %v1857
    %v1874 = vcombine.high %v1314, %v1314
    %v1876 = vunpack.c.l.s4 1966171168
    %v1877 = vunpack.c.0.s8 %v1876
    %v1878 = vlaneseq
    %v1879 = vshrl.u32 %v1878, 7
    %v1880 = vsub.s32 %v1877, %v1879
    %v1881 = vrot.slane %v1314, %v1880
    %v1883 = vunpack.c.l.s4 1966171168
    %v1884 = vunpack.c.0.s8 %v1883
    %v1885 = vlaneseq
    %v1886 = vshrl.u32 %v1885, 7
    %v1887 = vsub.s32 %v1884, %v1886
    %v1888 = vrot.slane %v1874, %v1887
    %v1889 = vcombine.high %v1881, %v1881
    %v1890 = vcombine.high %v1888, %v1888
    %v1892 = vunpack.c.l.s4 1966171168
    %v1893 = vunpack.c.0.s8 %v1892
    %v1894 = vlaneseq
    %v1895 = vshrl.u32 %v1894, 7
    %v1896 = vsub.s32 %v1893, %v1895
    %v1897 = vrot.slane %v1881, %v1896
    %v1899 = vunpack.c.l.s4 1966171168
    %v1900 = vunpack.c.0.s8 %v1899
    %v1901 = vlaneseq
    %v1902 = vshrl.u32 %v1901, 7
    %v1903 = vsub.s32 %v1900, %v1902
    %v1904 = vrot.slane %v1888, %v1903
    %v1906 = vunpack.c.l.s4 1966171168
    %v1907 = vunpack.c.0.s8 %v1906
    %v1908 = vlaneseq
    %v1909 = vshrl.u32 %v1908, 7
    %v1910 = vsub.s32 %v1907, %v1909
    %v1911 = vrot.slane %v1889, %v1910
    %v1913 = vunpack.c.l.s4 1966171168
    %v1914 = vunpack.c.0.s8 %v1913
    %v1915 = vlaneseq
    %v1916 = vshrl.u32 %v1915, 7
    %v1917 = vsub.s32 %v1914, %v1916
    %v1918 = vrot.slane %v1890, %v1917
    %v1919 = vcombine.high %v1897, %v1897
    %v1920 = vcombine.high %v1904, %v1904
    %v1921 = vcombine.high %v1911, %v1911
    %v1922 = vcombine.high %v1918, %v1918
    %v1923 = vlaneseq
    %v1924 = vshrl.u32 %v1923, 7
    %v1925 = vsub.s32 0, %v1924
    %v1926 = vrot.slane %v1897, %v1925
    %v1927 = vlaneseq
    %v1928 = vshrl.u32 %v1927, 7
    %v1929 = vsub.s32 0, %v1928
    %v1930 = vrot.slane %v1911, %v1929
    %v1931 = vlaneseq
    %v1932 = vshrl.u32 %v1931, 7
    %v1933 = vsub.s32 0, %v1932
    %v1934 = vrot.slane %v1919, %v1933
    %v1935 = vlaneseq
    %v1936 = vshrl.u32 %v1935, 7
    %v1937 = vsub.s32 0, %v1936
    %v1938 = vrot.slane %v1921, %v1937
    %v1939 = vlaneseq
    %v1940 = vshrl.u32 %v1939, 7
    %v1941 = vsub.s32 0, %v1940
    %v1942 = vrot.slane %v1904, %v1941
    %v1943 = vlaneseq
    %v1944 = vshrl.u32 %v1943, 7
    %v1945 = vsub.s32 0, %v1944
    %v1946 = vrot.slane %v1918, %v1945
    %v1947 = vlaneseq
    %v1948 = vshrl.u32 %v1947, 7
    %v1949 = vsub.s32 0, %v1948
    %v1950 = vrot.slane %v1920, %v1949
    %v1951 = vlaneseq
    %v1952 = vshrl.u32 %v1951, 7
    %v1953 = vsub.s32 0, %v1952
    %v1954 = vrot.slane %v1922, %v1953
    %1955 = vrot.lane.b32.xlu0 %v1926, 104
    %v1956 = vpop.permute.xlu0 %1955
    %1957 = vrot.lane.b32.xlu0 %v1930, 104
    %v1958 = vpop.permute.xlu0 %1957
    %1959 = vrot.lane.b32.xlu0 %v1934, 104
    %v1960 = vpop.permute.xlu0 %1959
    %1961 = vrot.lane.b32.xlu0 %v1938, 104
    %v1962 = vpop.permute.xlu0 %1961
    %1963 = vrot.lane.b32.xlu0 %v1942, 104
    %v1964 = vpop.permute.xlu0 %1963
    %1965 = vrot.lane.b32.xlu0 %v1946, 104
    %v1966 = vpop.permute.xlu0 %1965
    %1967 = vrot.lane.b32.xlu0 %v1950, 104
    %v1968 = vpop.permute.xlu0 %1967
    %1969 = vrot.lane.b32.xlu0 %v1954, 104
    %v1970 = vpop.permute.xlu0 %1969
    %1979 = vst.msk [vmem:[%s14 + $0x1] sm:$0x1] %vm1061, %v1956
    %1980 = vst.msk [vmem:[%s14 + $0x9] sm:$0x1] %vm1061, %v1958
    %1981 = vst.msk [vmem:[%s14 + $0x11] sm:$0x1] %vm1061, %v1960
    %1982 = vst.msk [vmem:[%s14 + $0x19] sm:$0x1] %vm1061, %v1962
    %1983 = vst.msk [vmem:[%s14 + $0x21] sm:$0x1] %vm1061, %v1964
    %1984 = vst.msk [vmem:[%s14 + $0x29] sm:$0x1] %vm1061, %v1966
    %1985 = vst.msk [vmem:[%s14 + $0x31] sm:$0x1] %vm1061, %v1968
    %1986 = vst.msk [vmem:[%s14 + $0x39] sm:$0x1] %vm1061, %v1970
    %v1987 = vld [vmem:[%s0 + $0x2] sm:$0x1]
    %v1988 = vld [vmem:[%s0 + $0xa] sm:$0x1]
    %v1989 = vld [vmem:[%s0 + $0x12] sm:$0x1]
    %v1990 = vld [vmem:[%s0 + $0x1a] sm:$0x1]
    %v1991 = vld [vmem:[%s0 + $0x22] sm:$0x1]
    %v1992 = vld [vmem:[%s0 + $0x2a] sm:$0x1]
    %v1993 = vld [vmem:[%s0 + $0x32] sm:$0x1]
    %v1994 = vld [vmem:[%s0 + $0x3a] sm:$0x1]
    %v1995 = vld [vmem:[%s1 + $0x2] sm:$0x1]
    %v1996 = vld [vmem:[%s1 + $0xa] sm:$0x1]
    %v1997 = vld [vmem:[%s1 + $0x12] sm:$0x1]
    %v1998 = vld [vmem:[%s1 + $0x1a] sm:$0x1]
    %v1999 = vld [vmem:[%s1 + $0x22] sm:$0x1]
    %v2000 = vld [vmem:[%s1 + $0x2a] sm:$0x1]
    %v2001 = vld [vmem:[%s1 + $0x32] sm:$0x1]
    %v2002 = vld [vmem:[%s1 + $0x3a] sm:$0x1]
    %v2003 = vld [vmem:[#allocation3] sm:$0xff]
    %v2004 = vld [vmem:[#allocation2] sm:$0xff]
    %v2013 = vrot.slane %v1988, 7
    %v2014 = vsel %vm116, %v2013, %v1987
    %v2015 = vrot.slane %v1989, 6
    %v2016 = vsel %vm119, %v2015, %v2014
    %v2017 = vrot.slane %v1990, 5
    %v2018 = vsel %vm122, %v2017, %v2016
    %v2019 = vrot.slane %v1991, 4
    %v2020 = vsel %vm125, %v2019, %v2018
    %v2021 = vrot.slane %v1992, 3
    %v2022 = vsel %vm128, %v2021, %v2020
    %v2023 = vrot.slane %v1993, 2
    %v2024 = vsel %vm131, %v2023, %v2022
    %v2025 = vrot.slane %v1994, 1
    %v2026 = vsel %vm134, %v2025, %v2024
    %2029 = vrot.lane.b32.xlu0 %v2003, 16
    %v2030 = vpop.permute.xlu0 %2029
    %v2040 = vrot.slane %v1996, 7
    %v2041 = vsel %vm116, %v2040, %v1995
    %v2042 = vrot.slane %v1997, 6
    %v2043 = vsel %vm119, %v2042, %v2041
    %v2044 = vrot.slane %v1998, 5
    %v2045 = vsel %vm122, %v2044, %v2043
    %v2046 = vrot.slane %v1999, 4
    %v2047 = vsel %vm125, %v2046, %v2045
    %v2048 = vrot.slane %v2000, 3
    %v2049 = vsel %vm128, %v2048, %v2047
    %v2050 = vrot.slane %v2001, 2
    %v2051 = vsel %vm131, %v2050, %v2049
    %v2052 = vrot.slane %v2002, 1
    %v2053 = vsel %vm134, %v2052, %v2051
    %2054 = vrot.lane.b32.xlu0 %v2053, 40
    %v2055 = vpop.permute.xlu0 %2054
    %v2057 = vsel %vm166, %v2026, %v2030
    %v2058 = vsel %vm168, %v2057, %v2055
    %v2060 = vsel %vm176, %v2058, 0
    %2062 = vmatprep.subr.mxu0 0.0
    %2063 = vmatpush1.msra.mxu0 0.0
    %2064 = vmatprep.subr.mxu0 0.0
    %2065 = vmatpush1.msra.mxu0 0.0
    %2066 = vmatprep.subr.mxu0 0.0
    %2067 = vmatpush1.msra.mxu0 0.0
    %2068 = vmatprep.subr.mxu0 0.0
    %2069 = vmatpush1.msra.mxu0 0.0
    %2070 = vmatprep.subr.mxu0 0.0
    %2071 = vmatpush1.msra.mxu0 0.0
    %2072 = vmatprep.subr.mxu0 0.0
    %2073 = vmatpush1.msra.mxu0 0.0
    %2074 = vmatprep.subr.mxu0 0.0
    %2075 = vmatpush1.msra.mxu0 0.0
    %2076 = vmatprep.subr.mxu0 0.0
    %2077 = vmatpush1.msra.mxu0 0.0
    %2078 = vmatprep.subr.mxu0 0.0
    %2079 = vmatpush1.msra.mxu0 0.0
    %2080 = vmatprep.subr.mxu0 0.0
    %2081 = vmatpush1.msra.mxu0 0.0
    %2082 = vmatprep.subr.mxu0 0.0
    %2083 = vmatpush1.msra.mxu0 %v182
    %2084 = vmatprep.subr.mxu0 0.0
    %2085 = vmatpush1.msra.mxu0 %v64
    %2086 = vmatprep.subr.mxu0 0.0
    %2087 = vmatpush1.msra.mxu0 %v63
    %2088 = vmatprep.subr.mxu0 0.0
    %2089 = vmatpush1.msra.mxu0 %v62
    %2090 = vmatprep.subr.mxu0 0.0
    %2091 = vmatpush1.msra.mxu0 %v61
    %2092 = vmatprep.subr.mxu0 0.0
    %2093 = vmatpush1.msra.mxu0 %v60
    %2094 = vmatprep.subr.mxu0 0.0
    %2095 = vmatpush2.msra.mxu0 0.0
    %2096 = vmatprep.subr.mxu0 0.0
    %2097 = vmatpush2.msra.mxu0 0.0
    %2098 = vmatprep.subr.mxu0 0.0
    %2099 = vmatpush2.msra.mxu0 0.0
    %2100 = vmatprep.subr.mxu0 0.0
    %2101 = vmatpush2.msra.mxu0 0.0
    %2102 = vmatprep.subr.mxu0 0.0
    %2103 = vmatpush2.msra.mxu0 0.0
    %2104 = vmatprep.subr.mxu0 0.0
    %2105 = vmatpush2.msra.mxu0 0.0
    %2106 = vmatprep.subr.mxu0 0.0
    %2107 = vmatpush2.msra.mxu0 0.0
    %2108 = vmatprep.subr.mxu0 0.0
    %2109 = vmatpush2.msra.mxu0 0.0
    %2110 = vmatprep.subr.mxu0 0.0
    %2111 = vmatpush2.msra.mxu0 0.0
    %2112 = vmatprep.subr.mxu0 0.0
    %2113 = vmatpush2.msra.mxu0 0.0
    %2114 = vmatprep.subr.mxu0 0.0
    %2115 = vmatpush2.msra.mxu0 0.0
    %2116 = vmatprep.subr.mxu0 0.0
    %2117 = vmatpush2.msra.mxu0 0.0
    %2118 = vmatprep.subr.mxu0 0.0
    %2119 = vmatpush2.msra.mxu0 0.0
    %2120 = vmatprep.subr.mxu0 0.0
    %2121 = vmatpush2.msra.mxu0 0.0
    %2122 = vmatprep.subr.mxu0 0.0
    %2123 = vmatpush2.msra.mxu0 0.0
    %2124 = vmatprep.subr.mxu0 0.0
    %2125 = vmatpush2.msra.mxu0 0.0
    %2126 = vmatprep.mubr.f32.mxu0 0.0
    %2127 = vmatmul.mubr.f32.gmra.mxu0 %v2060
    %v2128 = vpop.f32.mrf.mxu0
    %v2129 = vadd.f32 %v174, %v2128
    %v2130 = vpop.f32.mrf.mxu0
    %2131 = vdwg.mxu0
    %v2132 = vsel %vm254, %v2129, -inf
    %2133 = vmax.xlane.f32.xlu0 %v2132
    %v2134 = vpop.xlane.xlu0 %2133
    %v2135 = vsub.f32 %v2129, %v2134
    %v2136 = vmul.f32 %v2135, 1.442695
    %v2137 = vpow.pop %v2136
    %v2138 = vsel %vm254, %v2137, 0.0
    %2139 = vadd.xlane.f32.xlu0 %v2138
    %v2140 = vpop.xlane.xlu0 %2139
    %v2141 = vrcp.pop %v2140
    %v2142 = vmul.f32 %v2137, %v2141
    %v2143 = vsel %vm266, %v2129, -inf
    %2144 = vmax.xlane.f32.xlu0 %v2143
    %v2145 = vpop.xlane.xlu0 %2144
    %v2146 = vsub.f32 %v2129, %v2145
    %v2147 = vmul.f32 %v2146, 1.442695
    %v2148 = vpow.pop %v2147
    %2150 = vrot.lane.b32.xlu0 %v2148, 125
    %v2151 = vpop.permute.xlu0 %2150
    %v2153 = vsel %vm254, %v2151, 0.0
    %2154 = vadd.xlane.f32.xlu0 %v2153
    %v2155 = vpop.xlane.xlu0 %2154
    %v2156 = vrcp.pop %v2155
    %v2157 = vmul.f32 %v2148, %v2156
    %v2159 = vsel %vm254, %v2142, 0
    %2161 = vmatprep.subr.mxu0 0.0
    %2162 = vmatpush1.msra.mxu0 0.0
    %2163 = vmatprep.subr.mxu0 0.0
    %2164 = vmatpush1.msra.mxu0 0.0
    %2165 = vmatprep.subr.mxu0 0.0
    %2166 = vmatpush1.msra.mxu0 0.0
    %2167 = vmatprep.subr.mxu0 0.0
    %2168 = vmatpush1.msra.mxu0 0.0
    %2169 = vmatprep.subr.mxu0 0.0
    %2170 = vmatpush1.msra.mxu0 0.0
    %2171 = vmatprep.subr.mxu0 0.0
    %2172 = vmatpush1.msra.mxu0 0.0
    %2173 = vmatprep.subr.mxu0 0.0
    %2174 = vmatpush1.msra.mxu0 0.0
    %2175 = vmatprep.subr.mxu0 0.0
    %2176 = vmatpush1.msra.mxu0 0.0
    %2177 = vmatprep.subr.mxu0 0.0
    %2178 = vmatpush1.msra.mxu0 0.0
    %2179 = vmatprep.subr.mxu0 0.0
    %2180 = vmatpush1.msra.mxu0 0.0
    %2181 = vmatprep.subr.mxu0 0.0
    %2182 = vmatpush1.msra.mxu0 0.0
    %2183 = vmatprep.subr.mxu0 0.0
    %2184 = vmatpush1.msra.mxu0 0.0
    %2185 = vmatprep.subr.mxu0 0.0
    %2186 = vmatpush1.msra.mxu0 0.0
    %2187 = vmatprep.subr.mxu0 0.0
    %2188 = vmatpush1.msra.mxu0 0.0
    %2189 = vmatprep.subr.mxu0 0.0
    %2190 = vmatpush1.msra.mxu0 0.0
    %2191 = vmatprep.subr.mxu0 0.0
    %2192 = vmatpush1.msra.mxu0 %v287
    %2193 = vmatprep.subr.mxu0 0.0
    %2194 = vmatpush2.msra.mxu0 0.0
    %2195 = vmatprep.subr.mxu0 0.0
    %2196 = vmatpush2.msra.mxu0 0.0
    %2197 = vmatprep.subr.mxu0 0.0
    %2198 = vmatpush2.msra.mxu0 0.0
    %2199 = vmatprep.subr.mxu0 0.0
    %2200 = vmatpush2.msra.mxu0 0.0
    %2201 = vmatprep.subr.mxu0 0.0
    %2202 = vmatpush2.msra.mxu0 0.0
    %2203 = vmatprep.subr.mxu0 0.0
    %2204 = vmatpush2.msra.mxu0 0.0
    %2205 = vmatprep.subr.mxu0 0.0
    %2206 = vmatpush2.msra.mxu0 0.0
    %2207 = vmatprep.subr.mxu0 0.0
    %2208 = vmatpush2.msra.mxu0 0.0
    %2209 = vmatprep.subr.mxu0 0.0
    %2210 = vmatpush2.msra.mxu0 0.0
    %2211 = vmatprep.subr.mxu0 0.0
    %2212 = vmatpush2.msra.mxu0 0.0
    %2213 = vmatprep.subr.mxu0 0.0
    %2214 = vmatpush2.msra.mxu0 0.0
    %2215 = vmatprep.subr.mxu0 0.0
    %2216 = vmatpush2.msra.mxu0 0.0
    %2217 = vmatprep.subr.mxu0 0.0
    %2218 = vmatpush2.msra.mxu0 0.0
    %2219 = vmatprep.subr.mxu0 0.0
    %2220 = vmatpush2.msra.mxu0 0.0
    %2221 = vmatprep.subr.mxu0 0.0
    %2222 = vmatpush2.msra.mxu0 0.0
    %2223 = vmatprep.subr.mxu0 0.0
    %2224 = vmatpush2.msra.mxu0 0.0
    %2225 = vmatprep.mubr.f32.mxu0 0.0
    %2226 = vmatmul.mubr.f32.gmra.mxu0 %v2159
    %v2227 = vpop.f32.mrf.mxu0
    %v2228 = vadd.f32 0.0, %v2227
    %v2229 = vpop.f32.mrf.mxu0
    %2230 = vdwg.mxu0
    %v2231 = vsub.f32 1.0, %v2228
    %2233 = vrot.lane.b32.xlu0 %v2157, 125
    %v2234 = vpop.permute.xlu0 %2233
    %v2235 = vsel %vm254, %v2234, 0
    %2237 = vmatprep.subr.mxu0 0.0
    %2238 = vmatpush1.msra.mxu0 0.0
    %2239 = vmatprep.subr.mxu0 0.0
    %2240 = vmatpush1.msra.mxu0 0.0
    %2241 = vmatprep.subr.mxu0 0.0
    %2242 = vmatpush1.msra.mxu0 0.0
    %2243 = vmatprep.subr.mxu0 0.0
    %2244 = vmatpush1.msra.mxu0 0.0
    %2245 = vmatprep.subr.mxu0 0.0
    %2246 = vmatpush1.msra.mxu0 0.0
    %2247 = vmatprep.subr.mxu0 0.0
    %2248 = vmatpush1.msra.mxu0 0.0
    %2249 = vmatprep.subr.mxu0 0.0
    %2250 = vmatpush1.msra.mxu0 0.0
    %2251 = vmatprep.subr.mxu0 0.0
    %2252 = vmatpush1.msra.mxu0 0.0
    %2253 = vmatprep.subr.mxu0 0.0
    %2254 = vmatpush1.msra.mxu0 0.0
    %2255 = vmatprep.subr.mxu0 0.0
    %2256 = vmatpush1.msra.mxu0 0.0
    %2257 = vmatprep.subr.mxu0 0.0
    %2258 = vmatpush1.msra.mxu0 0.0
    %2259 = vmatprep.subr.mxu0 0.0
    %2260 = vmatpush1.msra.mxu0 0.0
    %2261 = vmatprep.subr.mxu0 0.0
    %2262 = vmatpush1.msra.mxu0 0.0
    %2263 = vmatprep.subr.mxu0 0.0
    %2264 = vmatpush1.msra.mxu0 0.0
    %2265 = vmatprep.subr.mxu0 0.0
    %2266 = vmatpush1.msra.mxu0 0.0
    %2267 = vmatprep.subr.mxu0 0.0
    %2268 = vmatpush1.msra.mxu0 %v366
    %2269 = vmatprep.subr.mxu0 0.0
    %2270 = vmatpush2.msra.mxu0 0.0
    %2271 = vmatprep.subr.mxu0 0.0
    %2272 = vmatpush2.msra.mxu0 0.0
    %2273 = vmatprep.subr.mxu0 0.0
    %2274 = vmatpush2.msra.mxu0 0.0
    %2275 = vmatprep.subr.mxu0 0.0
    %2276 = vmatpush2.msra.mxu0 0.0
    %2277 = vmatprep.subr.mxu0 0.0
    %2278 = vmatpush2.msra.mxu0 0.0
    %2279 = vmatprep.subr.mxu0 0.0
    %2280 = vmatpush2.msra.mxu0 0.0
    %2281 = vmatprep.subr.mxu0 0.0
    %2282 = vmatpush2.msra.mxu0 0.0
    %2283 = vmatprep.subr.mxu0 0.0
    %2284 = vmatpush2.msra.mxu0 0.0
    %2285 = vmatprep.subr.mxu0 0.0
    %2286 = vmatpush2.msra.mxu0 0.0
    %2287 = vmatprep.subr.mxu0 0.0
    %2288 = vmatpush2.msra.mxu0 0.0
    %2289 = vmatprep.subr.mxu0 0.0
    %2290 = vmatpush2.msra.mxu0 0.0
    %2291 = vmatprep.subr.mxu0 0.0
    %2292 = vmatpush2.msra.mxu0 0.0
    %2293 = vmatprep.subr.mxu0 0.0
    %2294 = vmatpush2.msra.mxu0 0.0
    %2295 = vmatprep.subr.mxu0 0.0
    %2296 = vmatpush2.msra.mxu0 0.0
    %2297 = vmatprep.subr.mxu0 0.0
    %2298 = vmatpush2.msra.mxu0 0.0
    %2299 = vmatprep.subr.mxu0 0.0
    %2300 = vmatpush2.msra.mxu0 0.0
    %2301 = vmatprep.mubr.f32.mxu0 0.0
    %2302 = vmatmul.mubr.f32.gmra.mxu0 %v2235
    %v2303 = vpop.f32.mrf.mxu0
    %v2304 = vadd.f32 0.0, %v2303
    %v2305 = vpop.f32.mrf.mxu0
    %2306 = vdwg.mxu0
    %v2307 = vsub.f32 1.0, %v2304
    %v2308 = vxor.u32 %v2129, 2147483648
    %v2309 = vmul.f32 %v2308, 1.442695
    %v2310 = vpow.pop %v2309
    %v2311 = vadd.f32 %v2310, 1.0
    %v2312 = vrcp.pop %v2311
    %v2313 = vmul.f32 1.0, %v2312
    %v2314 = vtanh.pop %v2129
    %v2315 = vmul.f32 %v2228, %v2307
    %2317 = vrot.lane.b32.xlu0 %v2004, 6
    %v2318 = vpop.permute.xlu0 %2317
    %v2320 = vmul.f32 %v2313, %v2318
    %2322 = vrot.lane.b32.xlu0 %v2314, 80
    %v2323 = vpop.permute.xlu0 %2322
    %v2325 = vmul.f32 %v2313, %v2323
    %2327 = vrot.lane.b32.xlu0 %v2325, 104
    %v2328 = vpop.permute.xlu0 %2327
    %v2330 = vadd.f32 %v2320, %v2328
    %2332 = vrot.lane.b32.xlu0 %v2330, 122
    %v2333 = vpop.permute.xlu0 %2332
    %v2335 = vmul.f32 %v2315, %v2333
    %v2336 = vsub.f32 %v2228, %v2315
    %v2337 = vmul.f32 %v2336, %v2004
    %v2338 = vadd.f32 %v2335, %v2337
    %v2339 = vsub.f32 %v2307, %v2315
    %2340 = vrot.lane.b32.xlu0 %v2314, 50
    %v2341 = vpop.permute.xlu0 %2340
    %v2343 = vmul.f32 %v2339, %v2341
    %v2344 = vadd.f32 %v2338, %v2343
    %v2345 = vtanh.pop %v2344
    %2347 = vrot.lane.b32.xlu0 %v2345, 54
    %v2348 = vpop.permute.xlu0 %2347
    %v2350 = vmul.f32 %v2313, %v2348
    %2351 = vst.msk [vmem:[#allocation2] sm:$0xff] %vm482, %v2344
    %2353 = vrot.lane.b32.xlu0 %v2350, 74
    %v2354 = vpop.permute.xlu0 %2353
    %2356 = vst.msk [vmem:[#allocation3] sm:$0xff] %vm482, %v2354
    %2357 = vst.msk [vmem:[%s598] sm:$0xff] %vm482, %v2354
    %v2358 = vld [vmem:[#allocation5] sm:$0xff]
    %2360 = vrot.lane.b32.xlu0 %v2358, 127
    %v2361 = vpop.permute.xlu0 %2360
    %2364 = vrot.lane.b32.xlu0 %v2231, 107
    %v2365 = vpop.permute.xlu0 %2364
    %v2367 = vsel %vm254, %v2361, %v2365
    %2368 = vst.msk [vmem:[#allocation5] sm:$0xff] %vm500, %v2367
    %v2370 = vsel %vm500, %v2367, 0
    %2372 = vmatprep.subr.mxu0 0.0
    %2373 = vmatpush1.msra.mxu0 0.0
    %2374 = vmatprep.subr.mxu0 0.0
    %2375 = vmatpush1.msra.mxu0 0.0
    %2376 = vmatprep.subr.mxu0 0.0
    %2377 = vmatpush1.msra.mxu0 0.0
    %2378 = vmatprep.subr.mxu0 0.0
    %2379 = vmatpush1.msra.mxu0 0.0
    %2380 = vmatprep.subr.mxu0 0.0
    %2381 = vmatpush1.msra.mxu0 0.0
    %2382 = vmatprep.subr.mxu0 0.0
    %2383 = vmatpush1.msra.mxu0 0.0
    %2384 = vmatprep.subr.mxu0 0.0
    %2385 = vmatpush1.msra.mxu0 0.0
    %2386 = vmatprep.subr.mxu0 0.0
    %2387 = vmatpush1.msra.mxu0 0.0
    %2388 = vmatprep.subr.mxu0 0.0
    %2389 = vmatpush1.msra.mxu0 0.0
    %2390 = vmatprep.subr.mxu0 0.0
    %2391 = vmatpush1.msra.mxu0 0.0
    %2392 = vmatprep.subr.mxu0 0.0
    %2393 = vmatpush1.msra.mxu0 0.0
    %2394 = vmatprep.subr.mxu0 0.0
    %2395 = vmatpush1.msra.mxu0 0.0
    %2396 = vmatprep.subr.mxu0 0.0
    %2397 = vmatpush1.msra.mxu0 0.0
    %2398 = vmatprep.subr.mxu0 0.0
    %2399 = vmatpush1.msra.mxu0 0.0
    %2400 = vmatprep.subr.mxu0 0.0
    %2401 = vmatpush1.msra.mxu0 0.0
    %2402 = vmatprep.subr.mxu0 0.0
    %2403 = vmatpush1.msra.mxu0 %v507
    %2404 = vmatprep.subr.mxu0 0.0
    %2405 = vmatpush2.msra.mxu0 0.0
    %2406 = vmatprep.subr.mxu0 0.0
    %2407 = vmatpush2.msra.mxu0 0.0
    %2408 = vmatprep.subr.mxu0 0.0
    %2409 = vmatpush2.msra.mxu0 0.0
    %2410 = vmatprep.subr.mxu0 0.0
    %2411 = vmatpush2.msra.mxu0 0.0
    %2412 = vmatprep.subr.mxu0 0.0
    %2413 = vmatpush2.msra.mxu0 0.0
    %2414 = vmatprep.subr.mxu0 0.0
    %2415 = vmatpush2.msra.mxu0 0.0
    %2416 = vmatprep.subr.mxu0 0.0
    %2417 = vmatpush2.msra.mxu0 0.0
    %2418 = vmatprep.subr.mxu0 0.0
    %2419 = vmatpush2.msra.mxu0 0.0
    %2420 = vmatprep.subr.mxu0 0.0
    %2421 = vmatpush2.msra.mxu0 0.0
    %2422 = vmatprep.subr.mxu0 0.0
    %2423 = vmatpush2.msra.mxu0 0.0
    %2424 = vmatprep.subr.mxu0 0.0
    %2425 = vmatpush2.msra.mxu0 0.0
    %2426 = vmatprep.subr.mxu0 0.0
    %2427 = vmatpush2.msra.mxu0 0.0
    %2428 = vmatprep.subr.mxu0 0.0
    %2429 = vmatpush2.msra.mxu0 0.0
    %2430 = vmatprep.subr.mxu0 0.0
    %2431 = vmatpush2.msra.mxu0 0.0
    %2432 = vmatprep.subr.mxu0 0.0
    %2433 = vmatpush2.msra.mxu0 0.0
    %2434 = vmatprep.subr.mxu0 0.0
    %2435 = vmatpush2.msra.mxu0 0.0
    %2436 = vmatprep.mubr.f32.mxu0 0.0
    %2437 = vmatmul.mubr.f32.gmra.mxu0 %v2370
    %v2438 = vpop.f32.mrf.mxu0
    %v2439 = vadd.f32 0.0, %v2438
    %v2440 = vpop.f32.mrf.mxu0
    %2441 = vdwg.mxu0
    %v2442 = vsel %vm500, %v2439, -inf
    %2443 = vmax.xlane.f32.xlu0 %v2442
    %v2444 = vpop.xlane.xlu0 %2443
    %v2445 = vsub.f32 %v2439, %v2444
    %v2446 = vmul.f32 %v2445, 1.442695
    %v2447 = vpow.pop %v2446
    %v2448 = vsel %vm500, %v2447, 0.0
    %2449 = vadd.xlane.f32.xlu0 %v2448
    %v2450 = vpop.xlane.xlu0 %2449
    %v2451 = vrcp.pop %v2450
    %v2452 = vmul.f32 %v2447, %v2451
    %v2453 = vld [vmem:[%s605] sm:$0xff]
    %2455 = vset.pattern.permute.xlu0 0
    %2456 = vperm.xlu0 %2455, %v2452
    %v2457 = vpop.permute.xlu0 %2456
    %v2459 = vmul.f32 %v2453, %v2457
    %v2460 = vld [vmem:[#allocation4] sm:$0xff]
    %2461 = vset.pattern.permute.xlu0 1
    %2462 = vperm.xlu0 %2461, %v2452
    %v2463 = vpop.permute.xlu0 %2462
    %v2465 = vmul.f32 %v2460, %v2463
    %v2466 = vld [vmem:[%s590] sm:$0xff]
    %2467 = vset.pattern.permute.xlu0 2
    %2468 = vperm.xlu0 %2467, %v2452
    %v2469 = vpop.permute.xlu0 %2468
    %v2471 = vmul.f32 %v2466, %v2469
    %v2472 = vld [vmem:[%s598] sm:$0xff]
    %2473 = vset.pattern.permute.xlu0 3
    %2474 = vperm.xlu0 %2473, %v2452
    %v2475 = vpop.permute.xlu0 %2474
    %v2477 = vmul.f32 %v2472, %v2475
    %v2478 = vadd.f32 %v2459, %v2465
    %v2479 = vadd.f32 %v2478, %v2471
    %v2480 = vadd.f32 %v2479, %v2477
    %v2481 = vmul.f32 %v2480, 0.25
    %2483 = vrot.lane.b32.xlu0 %v2465, 24
    %v2484 = vpop.permute.xlu0 %2483
    %2487 = vrot.lane.b32.xlu0 %v2471, 48
    %v2488 = vpop.permute.xlu0 %2487
    %2491 = vrot.lane.b32.xlu0 %v2477, 72
    %v2492 = vpop.permute.xlu0 %2491
    %v2494 = vsel %vm482, %v2459, %v2484
    %v2495 = vsel %vm635, %v2494, %v2488
    %v2496 = vsel %vm637, %v2495, %v2492
    %v2498 = vsel %vm482, %v2481, 0
    %2500 = vmatprep.subr.mxu0 0.0
    %2501 = vmatpush1.msra.mxu0 0.0
    %2502 = vmatprep.subr.mxu0 0.0
    %2503 = vmatpush1.msra.mxu0 0.0
    %2504 = vmatprep.subr.mxu0 0.0
    %2505 = vmatpush1.msra.mxu0 0.0
    %2506 = vmatprep.subr.mxu0 0.0
    %2507 = vmatpush1.msra.mxu0 0.0
    %2508 = vmatprep.subr.mxu0 0.0
    %2509 = vmatpush1.msra.mxu0 0.0
    %2510 = vmatprep.subr.mxu0 0.0
    %2511 = vmatpush1.msra.mxu0 0.0
    %2512 = vmatprep.subr.mxu0 0.0
    %2513 = vmatpush1.msra.mxu0 0.0
    %2514 = vmatprep.subr.mxu0 0.0
    %2515 = vmatpush1.msra.mxu0 0.0
    %2516 = vmatprep.subr.mxu0 0.0
    %2517 = vmatpush1.msra.mxu0 0.0
    %2518 = vmatprep.subr.mxu0 0.0
    %2519 = vmatpush1.msra.mxu0 0.0
    %2520 = vmatprep.subr.mxu0 0.0
    %2521 = vmatpush1.msra.mxu0 0.0
    %2522 = vmatprep.subr.mxu0 0.0
    %2523 = vmatpush1.msra.mxu0 0.0
    %2524 = vmatprep.subr.mxu0 0.0
    %2525 = vmatpush1.msra.mxu0 0.0
    %2526 = vmatprep.subr.mxu0 0.0
    %2527 = vmatpush1.msra.mxu0 %v71
    %2528 = vmatprep.subr.mxu0 0.0
    %2529 = vmatpush1.msra.mxu0 %v70
    %2530 = vmatprep.subr.mxu0 0.0
    %2531 = vmatpush1.msra.mxu0 %v69
    %2532 = vmatprep.subr.mxu0 0.0
    %2533 = vmatpush2.msra.mxu0 0.0
    %2534 = vmatprep.subr.mxu0 0.0
    %2535 = vmatpush2.msra.mxu0 0.0
    %2536 = vmatprep.subr.mxu0 0.0
    %2537 = vmatpush2.msra.mxu0 0.0
    %2538 = vmatprep.subr.mxu0 0.0
    %2539 = vmatpush2.msra.mxu0 0.0
    %2540 = vmatprep.subr.mxu0 0.0
    %2541 = vmatpush2.msra.mxu0 0.0
    %2542 = vmatprep.subr.mxu0 0.0
    %2543 = vmatpush2.msra.mxu0 0.0
    %2544 = vmatprep.subr.mxu0 0.0
    %2545 = vmatpush2.msra.mxu0 0.0
    %2546 = vmatprep.subr.mxu0 0.0
    %2547 = vmatpush2.msra.mxu0 0.0
    %2548 = vmatprep.subr.mxu0 0.0
    %2549 = vmatpush2.msra.mxu0 0.0
    %2550 = vmatprep.subr.mxu0 0.0
    %2551 = vmatpush2.msra.mxu0 0.0
    %2552 = vmatprep.subr.mxu0 0.0
    %2553 = vmatpush2.msra.mxu0 0.0
    %2554 = vmatprep.subr.mxu0 0.0
    %2555 = vmatpush2.msra.mxu0 0.0
    %2556 = vmatprep.subr.mxu0 0.0
    %2557 = vmatpush2.msra.mxu0 0.0
    %2558 = vmatprep.subr.mxu0 0.0
    %2559 = vmatpush2.msra.mxu0 0.0
    %2560 = vmatprep.subr.mxu0 0.0
    %2561 = vmatpush2.msra.mxu0 0.0
    %2562 = vmatprep.subr.mxu0 0.0
    %2563 = vmatpush2.msra.mxu0 0.0
    %2564 = vmatprep.mubr.f32.mxu0 0.0
    %2565 = vmatmul.mubr.f32.gmra.mxu0 %v2498
    %v2566 = vpop.f32.mrf.mxu0
    %v2567 = vadd.f32 %v643, %v2566
    %v2568 = vpop.f32.mrf.mxu0
    %2569 = vdwg.mxu0
    %v2570 = vmax.f32 %v2567, 0.0
    %v2572 = vsel %vm500, %v2570, 0
    %2574 = vmatprep.subr.mxu0 0.0
    %2575 = vmatpush1.msra.mxu0 0.0
    %2576 = vmatprep.subr.mxu0 0.0
    %2577 = vmatpush1.msra.mxu0 0.0
    %2578 = vmatprep.subr.mxu0 0.0
    %2579 = vmatpush1.msra.mxu0 0.0
    %2580 = vmatprep.subr.mxu0 0.0
    %2581 = vmatpush1.msra.mxu0 0.0
    %2582 = vmatprep.subr.mxu0 0.0
    %2583 = vmatpush1.msra.mxu0 0.0
    %2584 = vmatprep.subr.mxu0 0.0
    %2585 = vmatpush1.msra.mxu0 0.0
    %2586 = vmatprep.subr.mxu0 0.0
    %2587 = vmatpush1.msra.mxu0 0.0
    %2588 = vmatprep.subr.mxu0 0.0
    %2589 = vmatpush1.msra.mxu0 0.0
    %2590 = vmatprep.subr.mxu0 0.0
    %2591 = vmatpush1.msra.mxu0 0.0
    %2592 = vmatprep.subr.mxu0 0.0
    %2593 = vmatpush1.msra.mxu0 0.0
    %2594 = vmatprep.subr.mxu0 0.0
    %2595 = vmatpush1.msra.mxu0 0.0
    %2596 = vmatprep.subr.mxu0 0.0
    %2597 = vmatpush1.msra.mxu0 0.0
    %2598 = vmatprep.subr.mxu0 0.0
    %2599 = vmatpush1.msra.mxu0 0.0
    %2600 = vmatprep.subr.mxu0 0.0
    %2601 = vmatpush1.msra.mxu0 0.0
    %2602 = vmatprep.subr.mxu0 0.0
    %2603 = vmatpush1.msra.mxu0 0.0
    %2604 = vmatprep.subr.mxu0 0.0
    %2605 = vmatpush1.msra.mxu0 %v729
    %2606 = vmatprep.subr.mxu0 0.0
    %2607 = vmatpush2.msra.mxu0 0.0
    %2608 = vmatprep.subr.mxu0 0.0
    %2609 = vmatpush2.msra.mxu0 0.0
    %2610 = vmatprep.subr.mxu0 0.0
    %2611 = vmatpush2.msra.mxu0 0.0
    %2612 = vmatprep.subr.mxu0 0.0
    %2613 = vmatpush2.msra.mxu0 0.0
    %2614 = vmatprep.subr.mxu0 0.0
    %2615 = vmatpush2.msra.mxu0 0.0
    %2616 = vmatprep.subr.mxu0 0.0
    %2617 = vmatpush2.msra.mxu0 0.0
    %2618 = vmatprep.subr.mxu0 0.0
    %2619 = vmatpush2.msra.mxu0 0.0
    %2620 = vmatprep.subr.mxu0 0.0
    %2621 = vmatpush2.msra.mxu0 0.0
    %2622 = vmatprep.subr.mxu0 0.0
    %2623 = vmatpush2.msra.mxu0 0.0
    %2624 = vmatprep.subr.mxu0 0.0
    %2625 = vmatpush2.msra.mxu0 0.0
    %2626 = vmatprep.subr.mxu0 0.0
    %2627 = vmatpush2.msra.mxu0 0.0
    %2628 = vmatprep.subr.mxu0 0.0
    %2629 = vmatpush2.msra.mxu0 0.0
    %2630 = vmatprep.subr.mxu0 0.0
    %2631 = vmatpush2.msra.mxu0 0.0
    %2632 = vmatprep.subr.mxu0 0.0
    %2633 = vmatpush2.msra.mxu0 0.0
    %2634 = vmatprep.subr.mxu0 0.0
    %2635 = vmatpush2.msra.mxu0 0.0
    %2636 = vmatprep.subr.mxu0 0.0
    %2637 = vmatpush2.msra.mxu0 0.0
    %2638 = vmatprep.mubr.f32.mxu0 0.0
    %2639 = vmatmul.mubr.f32.gmra.mxu0 %v2572
    %v2640 = vpop.f32.mrf.mxu0
    %v2641 = vadd.f32 %v723, %v2640
    %v2642 = vpop.f32.mrf.mxu0
    %2643 = vdwg.mxu0
    %v2644 = vxor.u32 %v2641, 2147483648
    %v2645 = vmul.f32 %v2644, 1.442695
    %v2646 = vpow.pop %v2645
    %v2647 = vadd.f32 %v2646, 1.0
    %v2648 = vrcp.pop %v2647
    %v2649 = vmul.f32 1.0, %v2648
    %v2651 = vsel %vm813, %v2496, 0
    %2653 = vmatprep.subr.mxu0 0.0
    %2654 = vmatpush1.msra.mxu0 0.0
    %2655 = vmatprep.subr.mxu0 0.0
    %2656 = vmatpush1.msra.mxu0 0.0
    %2657 = vmatprep.subr.mxu0 0.0
    %2658 = vmatpush1.msra.mxu0 0.0
    %2659 = vmatprep.subr.mxu0 0.0
    %2660 = vmatpush1.msra.mxu0 0.0
    %2661 = vmatprep.subr.mxu0 0.0
    %2662 = vmatpush1.msra.mxu0 %v86
    %2663 = vmatprep.subr.mxu0 0.0
    %2664 = vmatpush1.msra.mxu0 %v85
    %2665 = vmatprep.subr.mxu0 0.0
    %2666 = vmatpush1.msra.mxu0 %v84
    %2667 = vmatprep.subr.mxu0 0.0
    %2668 = vmatpush1.msra.mxu0 %v83
    %2669 = vmatprep.subr.mxu0 0.0
    %2670 = vmatpush1.msra.mxu0 %v82
    %2671 = vmatprep.subr.mxu0 0.0
    %2672 = vmatpush1.msra.mxu0 %v81
    %2673 = vmatprep.subr.mxu0 0.0
    %2674 = vmatpush1.msra.mxu0 %v80
    %2675 = vmatprep.subr.mxu0 0.0
    %2676 = vmatpush1.msra.mxu0 %v79
    %2677 = vmatprep.subr.mxu0 0.0
    %2678 = vmatpush1.msra.mxu0 %v78
    %2679 = vmatprep.subr.mxu0 0.0
    %2680 = vmatpush1.msra.mxu0 %v77
    %2681 = vmatprep.subr.mxu0 0.0
    %2682 = vmatpush1.msra.mxu0 %v76
    %2683 = vmatprep.subr.mxu0 0.0
    %2684 = vmatpush1.msra.mxu0 %v75
    %2685 = vmatprep.subr.mxu0 0.0
    %2686 = vmatpush2.msra.mxu0 0.0
    %2687 = vmatprep.subr.mxu0 0.0
    %2688 = vmatpush2.msra.mxu0 0.0
    %2689 = vmatprep.subr.mxu0 0.0
    %2690 = vmatpush2.msra.mxu0 0.0
    %2691 = vmatprep.subr.mxu0 0.0
    %2692 = vmatpush2.msra.mxu0 0.0
    %2693 = vmatprep.subr.mxu0 0.0
    %2694 = vmatpush2.msra.mxu0 0.0
    %2695 = vmatprep.subr.mxu0 0.0
    %2696 = vmatpush2.msra.mxu0 0.0
    %2697 = vmatprep.subr.mxu0 0.0
    %2698 = vmatpush2.msra.mxu0 0.0
    %2699 = vmatprep.subr.mxu0 0.0
    %2700 = vmatpush2.msra.mxu0 0.0
    %2701 = vmatprep.subr.mxu0 0.0
    %2702 = vmatpush2.msra.mxu0 0.0
    %2703 = vmatprep.subr.mxu0 0.0
    %2704 = vmatpush2.msra.mxu0 0.0
    %2705 = vmatprep.subr.mxu0 0.0
    %2706 = vmatpush2.msra.mxu0 0.0
    %2707 = vmatprep.subr.mxu0 0.0
    %2708 = vmatpush2.msra.mxu0 0.0
    %2709 = vmatprep.subr.mxu0 0.0
    %2710 = vmatpush2.msra.mxu0 0.0
    %2711 = vmatprep.subr.mxu0 0.0
    %2712 = vmatpush2.msra.mxu0 0.0
    %2713 = vmatprep.subr.mxu0 0.0
    %2714 = vmatpush2.msra.mxu0 0.0
    %2715 = vmatprep.subr.mxu0 0.0
    %2716 = vmatpush2.msra.mxu0 0.0
    %2717 = vmatprep.mubr.f32.mxu0 0.0
    %2718 = vmatmul.mubr.f32.gmra.mxu0 %v2651
    %v2719 = vpop.f32.mrf.mxu0
    %v2720 = vadd.f32 %v811, %v2719
    %v2721 = vpop.f32.mrf.mxu0
    %2722 = vdwg.mxu0
    %v2723 = vmul.f32 %v2649, %v2720
    %v2724 = vadd.f32 %v2723, %v2354
    %v2726 = vcombine.high %v2724, %v2724
    %v2728 = vunpack.c.l.s4 1966171168
    %v2729 = vunpack.c.0.s8 %v2728
    %v2730 = vlaneseq
    %v2731 = vshrl.u32 %v2730, 7
    %v2732 = vsub.s32 %v2729, %v2731
    %v2733 = vrot.slane %v2724, %v2732
    %v2735 = vunpack.c.l.s4 1966171168
    %v2736 = vunpack.c.0.s8 %v2735
    %v2737 = vlaneseq
    %v2738 = vshrl.u32 %v2737, 7
    %v2739 = vsub.s32 %v2736, %v2738
    %v2740 = vrot.slane %v2726, %v2739
    %v2741 = vcombine.high %v2733, %v2733
    %v2742 = vcombine.high %v2740, %v2740
    %v2744 = vunpack.c.l.s4 1966171168
    %v2745 = vunpack.c.0.s8 %v2744
    %v2746 = vlaneseq
    %v2747 = vshrl.u32 %v2746, 7
    %v2748 = vsub.s32 %v2745, %v2747
    %v2749 = vrot.slane %v2733, %v2748
    %v2751 = vunpack.c.l.s4 1966171168
    %v2752 = vunpack.c.0.s8 %v2751
    %v2753 = vlaneseq
    %v2754 = vshrl.u32 %v2753, 7
    %v2755 = vsub.s32 %v2752, %v2754
    %v2756 = vrot.slane %v2740, %v2755
    %v2758 = vunpack.c.l.s4 1966171168
    %v2759 = vunpack.c.0.s8 %v2758
    %v2760 = vlaneseq
    %v2761 = vshrl.u32 %v2760, 7
    %v2762 = vsub.s32 %v2759, %v2761
    %v2763 = vrot.slane %v2741, %v2762
    %v2765 = vunpack.c.l.s4 1966171168
    %v2766 = vunpack.c.0.s8 %v2765
    %v2767 = vlaneseq
    %v2768 = vshrl.u32 %v2767, 7
    %v2769 = vsub.s32 %v2766, %v2768
    %v2770 = vrot.slane %v2742, %v2769
    %v2771 = vcombine.high %v2749, %v2749
    %v2772 = vcombine.high %v2756, %v2756
    %v2773 = vcombine.high %v2763, %v2763
    %v2774 = vcombine.high %v2770, %v2770
    %2783 = vst.msk [vmem:[#allocation6 + $0x2] sm:$0x1] %vm947, %v2749
    %2784 = vst.msk [vmem:[#allocation6 + $0xa] sm:$0x1] %vm947, %v2763
    %2785 = vst.msk [vmem:[#allocation6 + $0x12] sm:$0x1] %vm947, %v2771
    %2786 = vst.msk [vmem:[#allocation6 + $0x1a] sm:$0x1] %vm947, %v2773
    %2787 = vst.msk [vmem:[#allocation6 + $0x22] sm:$0x1] %vm947, %v2756
    %2788 = vst.msk [vmem:[#allocation6 + $0x2a] sm:$0x1] %vm947, %v2770
    %2789 = vst.msk [vmem:[#allocation6 + $0x32] sm:$0x1] %vm947, %v2772
    %2790 = vst.msk [vmem:[#allocation6 + $0x3a] sm:$0x1] %vm947, %v2774
    %v2791 = vcombine.high %v2231, %v2231
    %v2793 = vunpack.c.l.s4 1966171168
    %v2794 = vunpack.c.0.s8 %v2793
    %v2795 = vlaneseq
    %v2796 = vshrl.u32 %v2795, 7
    %v2797 = vsub.s32 %v2794, %v2796
    %v2798 = vrot.slane %v2231, %v2797
    %v2800 = vunpack.c.l.s4 1966171168
    %v2801 = vunpack.c.0.s8 %v2800
    %v2802 = vlaneseq
    %v2803 = vshrl.u32 %v2802, 7
    %v2804 = vsub.s32 %v2801, %v2803
    %v2805 = vrot.slane %v2791, %v2804
    %v2806 = vcombine.high %v2798, %v2798
    %v2807 = vcombine.high %v2805, %v2805
    %v2809 = vunpack.c.l.s4 1966171168
    %v2810 = vunpack.c.0.s8 %v2809
    %v2811 = vlaneseq
    %v2812 = vshrl.u32 %v2811, 7
    %v2813 = vsub.s32 %v2810, %v2812
    %v2814 = vrot.slane %v2798, %v2813
    %v2816 = vunpack.c.l.s4 1966171168
    %v2817 = vunpack.c.0.s8 %v2816
    %v2818 = vlaneseq
    %v2819 = vshrl.u32 %v2818, 7
    %v2820 = vsub.s32 %v2817, %v2819
    %v2821 = vrot.slane %v2805, %v2820
    %v2823 = vunpack.c.l.s4 1966171168
    %v2824 = vunpack.c.0.s8 %v2823
    %v2825 = vlaneseq
    %v2826 = vshrl.u32 %v2825, 7
    %v2827 = vsub.s32 %v2824, %v2826
    %v2828 = vrot.slane %v2806, %v2827
    %v2830 = vunpack.c.l.s4 1966171168
    %v2831 = vunpack.c.0.s8 %v2830
    %v2832 = vlaneseq
    %v2833 = vshrl.u32 %v2832, 7
    %v2834 = vsub.s32 %v2831, %v2833
    %v2835 = vrot.slane %v2807, %v2834
    %v2836 = vcombine.high %v2814, %v2814
    %v2837 = vcombine.high %v2821, %v2821
    %v2838 = vcombine.high %v2828, %v2828
    %v2839 = vcombine.high %v2835, %v2835
    %v2840 = vlaneseq
    %v2841 = vshrl.u32 %v2840, 7
    %v2842 = vsub.s32 0, %v2841
    %v2843 = vrot.slane %v2814, %v2842
    %v2844 = vlaneseq
    %v2845 = vshrl.u32 %v2844, 7
    %v2846 = vsub.s32 0, %v2845
    %v2847 = vrot.slane %v2828, %v2846
    %v2848 = vlaneseq
    %v2849 = vshrl.u32 %v2848, 7
    %v2850 = vsub.s32 0, %v2849
    %v2851 = vrot.slane %v2836, %v2850
    %v2852 = vlaneseq
    %v2853 = vshrl.u32 %v2852, 7
    %v2854 = vsub.s32 0, %v2853
    %v2855 = vrot.slane %v2838, %v2854
    %v2856 = vlaneseq
    %v2857 = vshrl.u32 %v2856, 7
    %v2858 = vsub.s32 0, %v2857
    %v2859 = vrot.slane %v2821, %v2858
    %v2860 = vlaneseq
    %v2861 = vshrl.u32 %v2860, 7
    %v2862 = vsub.s32 0, %v2861
    %v2863 = vrot.slane %v2835, %v2862
    %v2864 = vlaneseq
    %v2865 = vshrl.u32 %v2864, 7
    %v2866 = vsub.s32 0, %v2865
    %v2867 = vrot.slane %v2837, %v2866
    %v2868 = vlaneseq
    %v2869 = vshrl.u32 %v2868, 7
    %v2870 = vsub.s32 0, %v2869
    %v2871 = vrot.slane %v2839, %v2870
    %2872 = vrot.lane.b32.xlu0 %v2843, 104
    %v2873 = vpop.permute.xlu0 %2872
    %2874 = vrot.lane.b32.xlu0 %v2847, 104
    %v2875 = vpop.permute.xlu0 %2874
    %2876 = vrot.lane.b32.xlu0 %v2851, 104
    %v2877 = vpop.permute.xlu0 %2876
    %2878 = vrot.lane.b32.xlu0 %v2855, 104
    %v2879 = vpop.permute.xlu0 %2878
    %2880 = vrot.lane.b32.xlu0 %v2859, 104
    %v2881 = vpop.permute.xlu0 %2880
    %2882 = vrot.lane.b32.xlu0 %v2863, 104
    %v2883 = vpop.permute.xlu0 %2882
    %2884 = vrot.lane.b32.xlu0 %v2867, 104
    %v2885 = vpop.permute.xlu0 %2884
    %2886 = vrot.lane.b32.xlu0 %v2871, 104
    %v2887 = vpop.permute.xlu0 %2886
    %2896 = vst.msk [vmem:[%s14 + $0x2] sm:$0x1] %vm1061, %v2873
    %2897 = vst.msk [vmem:[%s14 + $0xa] sm:$0x1] %vm1061, %v2875
    %2898 = vst.msk [vmem:[%s14 + $0x12] sm:$0x1] %vm1061, %v2877
    %2899 = vst.msk [vmem:[%s14 + $0x1a] sm:$0x1] %vm1061, %v2879
    %2900 = vst.msk [vmem:[%s14 + $0x22] sm:$0x1] %vm1061, %v2881
    %2901 = vst.msk [vmem:[%s14 + $0x2a] sm:$0x1] %vm1061, %v2883
    %2902 = vst.msk [vmem:[%s14 + $0x32] sm:$0x1] %vm1061, %v2885
    %2903 = vst.msk [vmem:[%s14 + $0x3a] sm:$0x1] %vm1061, %v2887
    %v2904 = vld [vmem:[%s0 + $0x3] sm:$0x1]
    %v2905 = vld [vmem:[%s0 + $0xb] sm:$0x1]
    %v2906 = vld [vmem:[%s0 + $0x13] sm:$0x1]
    %v2907 = vld [vmem:[%s0 + $0x1b] sm:$0x1]
    %v2908 = vld [vmem:[%s0 + $0x23] sm:$0x1]
    %v2909 = vld [vmem:[%s0 + $0x2b] sm:$0x1]
    %v2910 = vld [vmem:[%s0 + $0x33] sm:$0x1]
    %v2911 = vld [vmem:[%s0 + $0x3b] sm:$0x1]
    %v2912 = vld [vmem:[%s1 + $0x3] sm:$0x1]
    %v2913 = vld [vmem:[%s1 + $0xb] sm:$0x1]
    %v2914 = vld [vmem:[%s1 + $0x13] sm:$0x1]
    %v2915 = vld [vmem:[%s1 + $0x1b] sm:$0x1]
    %v2916 = vld [vmem:[%s1 + $0x23] sm:$0x1]
    %v2917 = vld [vmem:[%s1 + $0x2b] sm:$0x1]
    %v2918 = vld [vmem:[%s1 + $0x33] sm:$0x1]
    %v2919 = vld [vmem:[%s1 + $0x3b] sm:$0x1]
    %v2920 = vld [vmem:[#allocation3] sm:$0xff]
    %v2921 = vld [vmem:[#allocation2] sm:$0xff]
    %v2930 = vrot.slane %v2905, 7
    %v2931 = vsel %vm116, %v2930, %v2904
    %v2932 = vrot.slane %v2906, 6
    %v2933 = vsel %vm119, %v2932, %v2931
    %v2934 = vrot.slane %v2907, 5
    %v2935 = vsel %vm122, %v2934, %v2933
    %v2936 = vrot.slane %v2908, 4
    %v2937 = vsel %vm125, %v2936, %v2935
    %v2938 = vrot.slane %v2909, 3
    %v2939 = vsel %vm128, %v2938, %v2937
    %v2940 = vrot.slane %v2910, 2
    %v2941 = vsel %vm131, %v2940, %v2939
    %v2942 = vrot.slane %v2911, 1
    %v2943 = vsel %vm134, %v2942, %v2941
    %2946 = vrot.lane.b32.xlu0 %v2920, 16
    %v2947 = vpop.permute.xlu0 %2946
    %v2957 = vrot.slane %v2913, 7
    %v2958 = vsel %vm116, %v2957, %v2912
    %v2959 = vrot.slane %v2914, 6
    %v2960 = vsel %vm119, %v2959, %v2958
    %v2961 = vrot.slane %v2915, 5
    %v2962 = vsel %vm122, %v2961, %v2960
    %v2963 = vrot.slane %v2916, 4
    %v2964 = vsel %vm125, %v2963, %v2962
    %v2965 = vrot.slane %v2917, 3
    %v2966 = vsel %vm128, %v2965, %v2964
    %v2967 = vrot.slane %v2918, 2
    %v2968 = vsel %vm131, %v2967, %v2966
    %v2969 = vrot.slane %v2919, 1
    %v2970 = vsel %vm134, %v2969, %v2968
    %2971 = vrot.lane.b32.xlu0 %v2970, 40
    %v2972 = vpop.permute.xlu0 %2971
    %v2974 = vsel %vm166, %v2943, %v2947
    %v2975 = vsel %vm168, %v2974, %v2972
    %v2977 = vsel %vm176, %v2975, 0
    %2979 = vmatprep.subr.mxu0 0.0
    %2980 = vmatpush1.msra.mxu0 0.0
    %2981 = vmatprep.subr.mxu0 0.0
    %2982 = vmatpush1.msra.mxu0 0.0
    %2983 = vmatprep.subr.mxu0 0.0
    %2984 = vmatpush1.msra.mxu0 0.0
    %2985 = vmatprep.subr.mxu0 0.0
    %2986 = vmatpush1.msra.mxu0 0.0
    %2987 = vmatprep.subr.mxu0 0.0
    %2988 = vmatpush1.msra.mxu0 0.0
    %2989 = vmatprep.subr.mxu0 0.0
    %2990 = vmatpush1.msra.mxu0 0.0
    %2991 = vmatprep.subr.mxu0 0.0
    %2992 = vmatpush1.msra.mxu0 0.0
    %2993 = vmatprep.subr.mxu0 0.0
    %2994 = vmatpush1.msra.mxu0 0.0
    %2995 = vmatprep.subr.mxu0 0.0
    %2996 = vmatpush1.msra.mxu0 0.0
    %2997 = vmatprep.subr.mxu0 0.0
    %2998 = vmatpush1.msra.mxu0 0.0
    %2999 = vmatprep.subr.mxu0 0.0
    %3000 = vmatpush1.msra.mxu0 %v182
    %3001 = vmatprep.subr.mxu0 0.0
    %3002 = vmatpush1.msra.mxu0 %v64
    %3003 = vmatprep.subr.mxu0 0.0
    %3004 = vmatpush1.msra.mxu0 %v63
    %3005 = vmatprep.subr.mxu0 0.0
    %3006 = vmatpush1.msra.mxu0 %v62
    %3007 = vmatprep.subr.mxu0 0.0
    %3008 = vmatpush1.msra.mxu0 %v61
    %3009 = vmatprep.subr.mxu0 0.0
    %3010 = vmatpush1.msra.mxu0 %v60
    %3011 = vmatprep.subr.mxu0 0.0
    %3012 = vmatpush2.msra.mxu0 0.0
    %3013 = vmatprep.subr.mxu0 0.0
    %3014 = vmatpush2.msra.mxu0 0.0
    %3015 = vmatprep.subr.mxu0 0.0
    %3016 = vmatpush2.msra.mxu0 0.0
    %3017 = vmatprep.subr.mxu0 0.0
    %3018 = vmatpush2.msra.mxu0 0.0
    %3019 = vmatprep.subr.mxu0 0.0
    %3020 = vmatpush2.msra.mxu0 0.0
    %3021 = vmatprep.subr.mxu0 0.0
    %3022 = vmatpush2.msra.mxu0 0.0
    %3023 = vmatprep.subr.mxu0 0.0
    %3024 = vmatpush2.msra.mxu0 0.0
    %3025 = vmatprep.subr.mxu0 0.0
    %3026 = vmatpush2.msra.mxu0 0.0
    %3027 = vmatprep.subr.mxu0 0.0
    %3028 = vmatpush2.msra.mxu0 0.0
    %3029 = vmatprep.subr.mxu0 0.0
    %3030 = vmatpush2.msra.mxu0 0.0
    %3031 = vmatprep.subr.mxu0 0.0
    %3032 = vmatpush2.msra.mxu0 0.0
    %3033 = vmatprep.subr.mxu0 0.0
    %3034 = vmatpush2.msra.mxu0 0.0
    %3035 = vmatprep.subr.mxu0 0.0
    %3036 = vmatpush2.msra.mxu0 0.0
    %3037 = vmatprep.subr.mxu0 0.0
    %3038 = vmatpush2.msra.mxu0 0.0
    %3039 = vmatprep.subr.mxu0 0.0
    %3040 = vmatpush2.msra.mxu0 0.0
    %3041 = vmatprep.subr.mxu0 0.0
    %3042 = vmatpush2.msra.mxu0 0.0
    %3043 = vmatprep.mubr.f32.mxu0 0.0
    %3044 = vmatmul.mubr.f32.gmra.mxu0 %v2977
    %v3045 = vpop.f32.mrf.mxu0
    %v3046 = vadd.f32 %v174, %v3045
    %v3047 = vpop.f32.mrf.mxu0
    %3048 = vdwg.mxu0
    %v3049 = vsel %vm254, %v3046, -inf
    %3050 = vmax.xlane.f32.xlu0 %v3049
    %v3051 = vpop.xlane.xlu0 %3050
    %v3052 = vsub.f32 %v3046, %v3051
    %v3053 = vmul.f32 %v3052, 1.442695
    %v3054 = vpow.pop %v3053
    %v3055 = vsel %vm254, %v3054, 0.0
    %3056 = vadd.xlane.f32.xlu0 %v3055
    %v3057 = vpop.xlane.xlu0 %3056
    %v3058 = vrcp.pop %v3057
    %v3059 = vmul.f32 %v3054, %v3058
    %v3060 = vsel %vm266, %v3046, -inf
    %3061 = vmax.xlane.f32.xlu0 %v3060
    %v3062 = vpop.xlane.xlu0 %3061
    %v3063 = vsub.f32 %v3046, %v3062
    %v3064 = vmul.f32 %v3063, 1.442695
    %v3065 = vpow.pop %v3064
    %3067 = vrot.lane.b32.xlu0 %v3065, 125
    %v3068 = vpop.permute.xlu0 %3067
    %v3070 = vsel %vm254, %v3068, 0.0
    %3071 = vadd.xlane.f32.xlu0 %v3070
    %v3072 = vpop.xlane.xlu0 %3071
    %v3073 = vrcp.pop %v3072
    %v3074 = vmul.f32 %v3065, %v3073
    %v3076 = vsel %vm254, %v3059, 0
    %3078 = vmatprep.subr.mxu0 0.0
    %3079 = vmatpush1.msra.mxu0 0.0
    %3080 = vmatprep.subr.mxu0 0.0
    %3081 = vmatpush1.msra.mxu0 0.0
    %3082 = vmatprep.subr.mxu0 0.0
    %3083 = vmatpush1.msra.mxu0 0.0
    %3084 = vmatprep.subr.mxu0 0.0
    %3085 = vmatpush1.msra.mxu0 0.0
    %3086 = vmatprep.subr.mxu0 0.0
    %3087 = vmatpush1.msra.mxu0 0.0
    %3088 = vmatprep.subr.mxu0 0.0
    %3089 = vmatpush1.msra.mxu0 0.0
    %3090 = vmatprep.subr.mxu0 0.0
    %3091 = vmatpush1.msra.mxu0 0.0
    %3092 = vmatprep.subr.mxu0 0.0
    %3093 = vmatpush1.msra.mxu0 0.0
    %3094 = vmatprep.subr.mxu0 0.0
    %3095 = vmatpush1.msra.mxu0 0.0
    %3096 = vmatprep.subr.mxu0 0.0
    %3097 = vmatpush1.msra.mxu0 0.0
    %3098 = vmatprep.subr.mxu0 0.0
    %3099 = vmatpush1.msra.mxu0 0.0
    %3100 = vmatprep.subr.mxu0 0.0
    %3101 = vmatpush1.msra.mxu0 0.0
    %3102 = vmatprep.subr.mxu0 0.0
    %3103 = vmatpush1.msra.mxu0 0.0
    %3104 = vmatprep.subr.mxu0 0.0
    %3105 = vmatpush1.msra.mxu0 0.0
    %3106 = vmatprep.subr.mxu0 0.0
    %3107 = vmatpush1.msra.mxu0 0.0
    %3108 = vmatprep.subr.mxu0 0.0
    %3109 = vmatpush1.msra.mxu0 %v287
    %3110 = vmatprep.subr.mxu0 0.0
    %3111 = vmatpush2.msra.mxu0 0.0
    %3112 = vmatprep.subr.mxu0 0.0
    %3113 = vmatpush2.msra.mxu0 0.0
    %3114 = vmatprep.subr.mxu0 0.0
    %3115 = vmatpush2.msra.mxu0 0.0
    %3116 = vmatprep.subr.mxu0 0.0
    %3117 = vmatpush2.msra.mxu0 0.0
    %3118 = vmatprep.subr.mxu0 0.0
    %3119 = vmatpush2.msra.mxu0 0.0
    %3120 = vmatprep.subr.mxu0 0.0
    %3121 = vmatpush2.msra.mxu0 0.0
    %3122 = vmatprep.subr.mxu0 0.0
    %3123 = vmatpush2.msra.mxu0 0.0
    %3124 = vmatprep.subr.mxu0 0.0
    %3125 = vmatpush2.msra.mxu0 0.0
    %3126 = vmatprep.subr.mxu0 0.0
    %3127 = vmatpush2.msra.mxu0 0.0
    %3128 = vmatprep.subr.mxu0 0.0
    %3129 = vmatpush2.msra.mxu0 0.0
    %3130 = vmatprep.subr.mxu0 0.0
    %3131 = vmatpush2.msra.mxu0 0.0
    %3132 = vmatprep.subr.mxu0 0.0
    %3133 = vmatpush2.msra.mxu0 0.0
    %3134 = vmatprep.subr.mxu0 0.0
    %3135 = vmatpush2.msra.mxu0 0.0
    %3136 = vmatprep.subr.mxu0 0.0
    %3137 = vmatpush2.msra.mxu0 0.0
    %3138 = vmatprep.subr.mxu0 0.0
    %3139 = vmatpush2.msra.mxu0 0.0
    %3140 = vmatprep.subr.mxu0 0.0
    %3141 = vmatpush2.msra.mxu0 0.0
    %3142 = vmatprep.mubr.f32.mxu0 0.0
    %3143 = vmatmul.mubr.f32.gmra.mxu0 %v3076
    %v3144 = vpop.f32.mrf.mxu0
    %v3145 = vadd.f32 0.0, %v3144
    %v3146 = vpop.f32.mrf.mxu0
    %3147 = vdwg.mxu0
    %v3148 = vsub.f32 1.0, %v3145
    %3150 = vrot.lane.b32.xlu0 %v3074, 125
    %v3151 = vpop.permute.xlu0 %3150
    %v3152 = vsel %vm254, %v3151, 0
    %3154 = vmatprep.subr.mxu0 0.0
    %3155 = vmatpush1.msra.mxu0 0.0
    %3156 = vmatprep.subr.mxu0 0.0
    %3157 = vmatpush1.msra.mxu0 0.0
    %3158 = vmatprep.subr.mxu0 0.0
    %3159 = vmatpush1.msra.mxu0 0.0
    %3160 = vmatprep.subr.mxu0 0.0
    %3161 = vmatpush1.msra.mxu0 0.0
    %3162 = vmatprep.subr.mxu0 0.0
    %3163 = vmatpush1.msra.mxu0 0.0
    %3164 = vmatprep.subr.mxu0 0.0
    %3165 = vmatpush1.msra.mxu0 0.0
    %3166 = vmatprep.subr.mxu0 0.0
    %3167 = vmatpush1.msra.mxu0 0.0
    %3168 = vmatprep.subr.mxu0 0.0
    %3169 = vmatpush1.msra.mxu0 0.0
    %3170 = vmatprep.subr.mxu0 0.0
    %3171 = vmatpush1.msra.mxu0 0.0
    %3172 = vmatprep.subr.mxu0 0.0
    %3173 = vmatpush1.msra.mxu0 0.0
    %3174 = vmatprep.subr.mxu0 0.0
    %3175 = vmatpush1.msra.mxu0 0.0
    %3176 = vmatprep.subr.mxu0 0.0
    %3177 = vmatpush1.msra.mxu0 0.0
    %3178 = vmatprep.subr.mxu0 0.0
    %3179 = vmatpush1.msra.mxu0 0.0
    %3180 = vmatprep.subr.mxu0 0.0
    %3181 = vmatpush1.msra.mxu0 0.0
    %3182 = vmatprep.subr.mxu0 0.0
    %3183 = vmatpush1.msra.mxu0 0.0
    %3184 = vmatprep.subr.mxu0 0.0
    %3185 = vmatpush1.msra.mxu0 %v366
    %3186 = vmatprep.subr.mxu0 0.0
    %3187 = vmatpush2.msra.mxu0 0.0
    %3188 = vmatprep.subr.mxu0 0.0
    %3189 = vmatpush2.msra.mxu0 0.0
    %3190 = vmatprep.subr.mxu0 0.0
    %3191 = vmatpush2.msra.mxu0 0.0
    %3192 = vmatprep.subr.mxu0 0.0
    %3193 = vmatpush2.msra.mxu0 0.0
    %3194 = vmatprep.subr.mxu0 0.0
    %3195 = vmatpush2.msra.mxu0 0.0
    %3196 = vmatprep.subr.mxu0 0.0
    %3197 = vmatpush2.msra.mxu0 0.0
    %3198 = vmatprep.subr.mxu0 0.0
    %3199 = vmatpush2.msra.mxu0 0.0
    %3200 = vmatprep.subr.mxu0 0.0
    %3201 = vmatpush2.msra.mxu0 0.0
    %3202 = vmatprep.subr.mxu0 0.0
    %3203 = vmatpush2.msra.mxu0 0.0
    %3204 = vmatprep.subr.mxu0 0.0
    %3205 = vmatpush2.msra.mxu0 0.0
    %3206 = vmatprep.subr.mxu0 0.0
    %3207 = vmatpush2.msra.mxu0 0.0
    %3208 = vmatprep.subr.mxu0 0.0
    %3209 = vmatpush2.msra.mxu0 0.0
    %3210 = vmatprep.subr.mxu0 0.0
    %3211 = vmatpush2.msra.mxu0 0.0
    %3212 = vmatprep.subr.mxu0 0.0
    %3213 = vmatpush2.msra.mxu0 0.0
    %3214 = vmatprep.subr.mxu0 0.0
    %3215 = vmatpush2.msra.mxu0 0.0
    %3216 = vmatprep.subr.mxu0 0.0
    %3217 = vmatpush2.msra.mxu0 0.0
    %3218 = vmatprep.mubr.f32.mxu0 0.0
    %3219 = vmatmul.mubr.f32.gmra.mxu0 %v3152
    %v3220 = vpop.f32.mrf.mxu0
    %v3221 = vadd.f32 0.0, %v3220
    %v3222 = vpop.f32.mrf.mxu0
    %3223 = vdwg.mxu0
    %v3224 = vsub.f32 1.0, %v3221
    %v3225 = vxor.u32 %v3046, 2147483648
    %v3226 = vmul.f32 %v3225, 1.442695
    %v3227 = vpow.pop %v3226
    %v3228 = vadd.f32 %v3227, 1.0
    %v3229 = vrcp.pop %v3228
    %v3230 = vmul.f32 1.0, %v3229
    %v3231 = vtanh.pop %v3046
    %v3232 = vmul.f32 %v3145, %v3224
    %3234 = vrot.lane.b32.xlu0 %v2921, 6
    %v3235 = vpop.permute.xlu0 %3234
    %v3237 = vmul.f32 %v3230, %v3235
    %3239 = vrot.lane.b32.xlu0 %v3231, 80
    %v3240 = vpop.permute.xlu0 %3239
    %v3242 = vmul.f32 %v3230, %v3240
    %3244 = vrot.lane.b32.xlu0 %v3242, 104
    %v3245 = vpop.permute.xlu0 %3244
    %v3247 = vadd.f32 %v3237, %v3245
    %3249 = vrot.lane.b32.xlu0 %v3247, 122
    %v3250 = vpop.permute.xlu0 %3249
    %v3252 = vmul.f32 %v3232, %v3250
    %v3253 = vsub.f32 %v3145, %v3232
    %v3254 = vmul.f32 %v3253, %v2921
    %v3255 = vadd.f32 %v3252, %v3254
    %v3256 = vsub.f32 %v3224, %v3232
    %3257 = vrot.lane.b32.xlu0 %v3231, 50
    %v3258 = vpop.permute.xlu0 %3257
    %v3260 = vmul.f32 %v3256, %v3258
    %v3261 = vadd.f32 %v3255, %v3260
    %v3262 = vtanh.pop %v3261
    %3264 = vrot.lane.b32.xlu0 %v3262, 54
    %v3265 = vpop.permute.xlu0 %3264
    %v3267 = vmul.f32 %v3230, %v3265
    %3268 = vst.msk [vmem:[#allocation2] sm:$0xff] %vm482, %v3261
    %3270 = vrot.lane.b32.xlu0 %v3267, 74
    %v3271 = vpop.permute.xlu0 %3270
    %3273 = vst.msk [vmem:[#allocation3] sm:$0xff] %vm482, %v3271
    %3274 = vst.msk [vmem:[%s605] sm:$0xff] %vm482, %v3271
    %v3275 = vld [vmem:[#allocation5] sm:$0xff]
    %3277 = vrot.lane.b32.xlu0 %v3275, 127
    %v3278 = vpop.permute.xlu0 %3277
    %3281 = vrot.lane.b32.xlu0 %v3148, 107
    %v3282 = vpop.permute.xlu0 %3281
    %v3284 = vsel %vm254, %v3278, %v3282
    %3285 = vst.msk [vmem:[#allocation5] sm:$0xff] %vm500, %v3284
    %v3287 = vsel %vm500, %v3284, 0
    %3289 = vmatprep.subr.mxu0 0.0
    %3290 = vmatpush1.msra.mxu0 0.0
    %3291 = vmatprep.subr.mxu0 0.0
    %3292 = vmatpush1.msra.mxu0 0.0
    %3293 = vmatprep.subr.mxu0 0.0
    %3294 = vmatpush1.msra.mxu0 0.0
    %3295 = vmatprep.subr.mxu0 0.0
    %3296 = vmatpush1.msra.mxu0 0.0
    %3297 = vmatprep.subr.mxu0 0.0
    %3298 = vmatpush1.msra.mxu0 0.0
    %3299 = vmatprep.subr.mxu0 0.0
    %3300 = vmatpush1.msra.mxu0 0.0
    %3301 = vmatprep.subr.mxu0 0.0
    %3302 = vmatpush1.msra.mxu0 0.0
    %3303 = vmatprep.subr.mxu0 0.0
    %3304 = vmatpush1.msra.mxu0 0.0
    %3305 = vmatprep.subr.mxu0 0.0
    %3306 = vmatpush1.msra.mxu0 0.0
    %3307 = vmatprep.subr.mxu0 0.0
    %3308 = vmatpush1.msra.mxu0 0.0
    %3309 = vmatprep.subr.mxu0 0.0
    %3310 = vmatpush1.msra.mxu0 0.0
    %3311 = vmatprep.subr.mxu0 0.0
    %3312 = vmatpush1.msra.mxu0 0.0
    %3313 = vmatprep.subr.mxu0 0.0
    %3314 = vmatpush1.msra.mxu0 0.0
    %3315 = vmatprep.subr.mxu0 0.0
    %3316 = vmatpush1.msra.mxu0 0.0
    %3317 = vmatprep.subr.mxu0 0.0
    %3318 = vmatpush1.msra.mxu0 0.0
    %3319 = vmatprep.subr.mxu0 0.0
    %3320 = vmatpush1.msra.mxu0 %v507
    %3321 = vmatprep.subr.mxu0 0.0
    %3322 = vmatpush2.msra.mxu0 0.0
    %3323 = vmatprep.subr.mxu0 0.0
    %3324 = vmatpush2.msra.mxu0 0.0
    %3325 = vmatprep.subr.mxu0 0.0
    %3326 = vmatpush2.msra.mxu0 0.0
    %3327 = vmatprep.subr.mxu0 0.0
    %3328 = vmatpush2.msra.mxu0 0.0
    %3329 = vmatprep.subr.mxu0 0.0
    %3330 = vmatpush2.msra.mxu0 0.0
    %3331 = vmatprep.subr.mxu0 0.0
    %3332 = vmatpush2.msra.mxu0 0.0
    %3333 = vmatprep.subr.mxu0 0.0
    %3334 = vmatpush2.msra.mxu0 0.0
    %3335 = vmatprep.subr.mxu0 0.0
    %3336 = vmatpush2.msra.mxu0 0.0
    %3337 = vmatprep.subr.mxu0 0.0
    %3338 = vmatpush2.msra.mxu0 0.0
    %3339 = vmatprep.subr.mxu0 0.0
    %3340 = vmatpush2.msra.mxu0 0.0
    %3341 = vmatprep.subr.mxu0 0.0
    %3342 = vmatpush2.msra.mxu0 0.0
    %3343 = vmatprep.subr.mxu0 0.0
    %3344 = vmatpush2.msra.mxu0 0.0
    %3345 = vmatprep.subr.mxu0 0.0
    %3346 = vmatpush2.msra.mxu0 0.0
    %3347 = vmatprep.subr.mxu0 0.0
    %3348 = vmatpush2.msra.mxu0 0.0
    %3349 = vmatprep.subr.mxu0 0.0
    %3350 = vmatpush2.msra.mxu0 0.0
    %3351 = vmatprep.subr.mxu0 0.0
    %3352 = vmatpush2.msra.mxu0 0.0
    %3353 = vmatprep.mubr.f32.mxu0 0.0
    %3354 = vmatmul.mubr.f32.gmra.mxu0 %v3287
    %v3355 = vpop.f32.mrf.mxu0
    %v3356 = vadd.f32 0.0, %v3355
    %v3357 = vpop.f32.mrf.mxu0
    %3358 = vdwg.mxu0
    %v3359 = vsel %vm500, %v3356, -inf
    %3360 = vmax.xlane.f32.xlu0 %v3359
    %v3361 = vpop.xlane.xlu0 %3360
    %v3362 = vsub.f32 %v3356, %v3361
    %v3363 = vmul.f32 %v3362, 1.442695
    %v3364 = vpow.pop %v3363
    %v3365 = vsel %vm500, %v3364, 0.0
    %3366 = vadd.xlane.f32.xlu0 %v3365
    %v3367 = vpop.xlane.xlu0 %3366
    %v3368 = vrcp.pop %v3367
    %v3369 = vmul.f32 %v3364, %v3368
    %v3370 = vld [vmem:[#allocation4] sm:$0xff]
    %3372 = vset.pattern.permute.xlu0 0
    %3373 = vperm.xlu0 %3372, %v3369
    %v3374 = vpop.permute.xlu0 %3373
    %v3376 = vmul.f32 %v3370, %v3374
    %v3377 = vld [vmem:[%s590] sm:$0xff]
    %3378 = vset.pattern.permute.xlu0 1
    %3379 = vperm.xlu0 %3378, %v3369
    %v3380 = vpop.permute.xlu0 %3379
    %v3382 = vmul.f32 %v3377, %v3380
    %v3383 = vld [vmem:[%s598] sm:$0xff]
    %3384 = vset.pattern.permute.xlu0 2
    %3385 = vperm.xlu0 %3384, %v3369
    %v3386 = vpop.permute.xlu0 %3385
    %v3388 = vmul.f32 %v3383, %v3386
    %v3389 = vld [vmem:[%s605] sm:$0xff]
    %3390 = vset.pattern.permute.xlu0 3
    %3391 = vperm.xlu0 %3390, %v3369
    %v3392 = vpop.permute.xlu0 %3391
    %v3394 = vmul.f32 %v3389, %v3392
    %v3395 = vadd.f32 %v3376, %v3382
    %v3396 = vadd.f32 %v3395, %v3388
    %v3397 = vadd.f32 %v3396, %v3394
    %v3398 = vmul.f32 %v3397, 0.25
    %3400 = vrot.lane.b32.xlu0 %v3382, 24
    %v3401 = vpop.permute.xlu0 %3400
    %3404 = vrot.lane.b32.xlu0 %v3388, 48
    %v3405 = vpop.permute.xlu0 %3404
    %3408 = vrot.lane.b32.xlu0 %v3394, 72
    %v3409 = vpop.permute.xlu0 %3408
    %v3411 = vsel %vm482, %v3376, %v3401
    %v3412 = vsel %vm635, %v3411, %v3405
    %v3413 = vsel %vm637, %v3412, %v3409
    %v3415 = vsel %vm482, %v3398, 0
    %3417 = vmatprep.subr.mxu0 0.0
    %3418 = vmatpush1.msra.mxu0 0.0
    %3419 = vmatprep.subr.mxu0 0.0
    %3420 = vmatpush1.msra.mxu0 0.0
    %3421 = vmatprep.subr.mxu0 0.0
    %3422 = vmatpush1.msra.mxu0 0.0
    %3423 = vmatprep.subr.mxu0 0.0
    %3424 = vmatpush1.msra.mxu0 0.0
    %3425 = vmatprep.subr.mxu0 0.0
    %3426 = vmatpush1.msra.mxu0 0.0
    %3427 = vmatprep.subr.mxu0 0.0
    %3428 = vmatpush1.msra.mxu0 0.0
    %3429 = vmatprep.subr.mxu0 0.0
    %3430 = vmatpush1.msra.mxu0 0.0
    %3431 = vmatprep.subr.mxu0 0.0
    %3432 = vmatpush1.msra.mxu0 0.0
    %3433 = vmatprep.subr.mxu0 0.0
    %3434 = vmatpush1.msra.mxu0 0.0
    %3435 = vmatprep.subr.mxu0 0.0
    %3436 = vmatpush1.msra.mxu0 0.0
    %3437 = vmatprep.subr.mxu0 0.0
    %3438 = vmatpush1.msra.mxu0 0.0
    %3439 = vmatprep.subr.mxu0 0.0
    %3440 = vmatpush1.msra.mxu0 0.0
    %3441 = vmatprep.subr.mxu0 0.0
    %3442 = vmatpush1.msra.mxu0 0.0
    %3443 = vmatprep.subr.mxu0 0.0
    %3444 = vmatpush1.msra.mxu0 %v71
    %3445 = vmatprep.subr.mxu0 0.0
    %3446 = vmatpush1.msra.mxu0 %v70
    %3447 = vmatprep.subr.mxu0 0.0
    %3448 = vmatpush1.msra.mxu0 %v69
    %3449 = vmatprep.subr.mxu0 0.0
    %3450 = vmatpush2.msra.mxu0 0.0
    %3451 = vmatprep.subr.mxu0 0.0
    %3452 = vmatpush2.msra.mxu0 0.0
    %3453 = vmatprep.subr.mxu0 0.0
    %3454 = vmatpush2.msra.mxu0 0.0
    %3455 = vmatprep.subr.mxu0 0.0
    %3456 = vmatpush2.msra.mxu0 0.0
    %3457 = vmatprep.subr.mxu0 0.0
    %3458 = vmatpush2.msra.mxu0 0.0
    %3459 = vmatprep.subr.mxu0 0.0
    %3460 = vmatpush2.msra.mxu0 0.0
    %3461 = vmatprep.subr.mxu0 0.0
    %3462 = vmatpush2.msra.mxu0 0.0
    %3463 = vmatprep.subr.mxu0 0.0
    %3464 = vmatpush2.msra.mxu0 0.0
    %3465 = vmatprep.subr.mxu0 0.0
    %3466 = vmatpush2.msra.mxu0 0.0
    %3467 = vmatprep.subr.mxu0 0.0
    %3468 = vmatpush2.msra.mxu0 0.0
    %3469 = vmatprep.subr.mxu0 0.0
    %3470 = vmatpush2.msra.mxu0 0.0
    %3471 = vmatprep.subr.mxu0 0.0
    %3472 = vmatpush2.msra.mxu0 0.0
    %3473 = vmatprep.subr.mxu0 0.0
    %3474 = vmatpush2.msra.mxu0 0.0
    %3475 = vmatprep.subr.mxu0 0.0
    %3476 = vmatpush2.msra.mxu0 0.0
    %3477 = vmatprep.subr.mxu0 0.0
    %3478 = vmatpush2.msra.mxu0 0.0
    %3479 = vmatprep.subr.mxu0 0.0
    %3480 = vmatpush2.msra.mxu0 0.0
    %3481 = vmatprep.mubr.f32.mxu0 0.0
    %3482 = vmatmul.mubr.f32.gmra.mxu0 %v3415
    %v3483 = vpop.f32.mrf.mxu0
    %v3484 = vadd.f32 %v643, %v3483
    %v3485 = vpop.f32.mrf.mxu0
    %3486 = vdwg.mxu0
    %v3487 = vmax.f32 %v3484, 0.0
    %v3489 = vsel %vm500, %v3487, 0
    %3491 = vmatprep.subr.mxu0 0.0
    %3492 = vmatpush1.msra.mxu0 0.0
    %3493 = vmatprep.subr.mxu0 0.0
    %3494 = vmatpush1.msra.mxu0 0.0
    %3495 = vmatprep.subr.mxu0 0.0
    %3496 = vmatpush1.msra.mxu0 0.0
    %3497 = vmatprep.subr.mxu0 0.0
    %3498 = vmatpush1.msra.mxu0 0.0
    %3499 = vmatprep.subr.mxu0 0.0
    %3500 = vmatpush1.msra.mxu0 0.0
    %3501 = vmatprep.subr.mxu0 0.0
    %3502 = vmatpush1.msra.mxu0 0.0
    %3503 = vmatprep.subr.mxu0 0.0
    %3504 = vmatpush1.msra.mxu0 0.0
    %3505 = vmatprep.subr.mxu0 0.0
    %3506 = vmatpush1.msra.mxu0 0.0
    %3507 = vmatprep.subr.mxu0 0.0
    %3508 = vmatpush1.msra.mxu0 0.0
    %3509 = vmatprep.subr.mxu0 0.0
    %3510 = vmatpush1.msra.mxu0 0.0
    %3511 = vmatprep.subr.mxu0 0.0
    %3512 = vmatpush1.msra.mxu0 0.0
    %3513 = vmatprep.subr.mxu0 0.0
    %3514 = vmatpush1.msra.mxu0 0.0
    %3515 = vmatprep.subr.mxu0 0.0
    %3516 = vmatpush1.msra.mxu0 0.0
    %3517 = vmatprep.subr.mxu0 0.0
    %3518 = vmatpush1.msra.mxu0 0.0
    %3519 = vmatprep.subr.mxu0 0.0
    %3520 = vmatpush1.msra.mxu0 0.0
    %3521 = vmatprep.subr.mxu0 0.0
    %3522 = vmatpush1.msra.mxu0 %v729
    %3523 = vmatprep.subr.mxu0 0.0
    %3524 = vmatpush2.msra.mxu0 0.0
    %3525 = vmatprep.subr.mxu0 0.0
    %3526 = vmatpush2.msra.mxu0 0.0
    %3527 = vmatprep.subr.mxu0 0.0
    %3528 = vmatpush2.msra.mxu0 0.0
    %3529 = vmatprep.subr.mxu0 0.0
    %3530 = vmatpush2.msra.mxu0 0.0
    %3531 = vmatprep.subr.mxu0 0.0
    %3532 = vmatpush2.msra.mxu0 0.0
    %3533 = vmatprep.subr.mxu0 0.0
    %3534 = vmatpush2.msra.mxu0 0.0
    %3535 = vmatprep.subr.mxu0 0.0
    %3536 = vmatpush2.msra.mxu0 0.0
    %3537 = vmatprep.subr.mxu0 0.0
    %3538 = vmatpush2.msra.mxu0 0.0
    %3539 = vmatprep.subr.mxu0 0.0
    %3540 = vmatpush2.msra.mxu0 0.0
    %3541 = vmatprep.subr.mxu0 0.0
    %3542 = vmatpush2.msra.mxu0 0.0
    %3543 = vmatprep.subr.mxu0 0.0
    %3544 = vmatpush2.msra.mxu0 0.0
    %3545 = vmatprep.subr.mxu0 0.0
    %3546 = vmatpush2.msra.mxu0 0.0
    %3547 = vmatprep.subr.mxu0 0.0
    %3548 = vmatpush2.msra.mxu0 0.0
    %3549 = vmatprep.subr.mxu0 0.0
    %3550 = vmatpush2.msra.mxu0 0.0
    %3551 = vmatprep.subr.mxu0 0.0
    %3552 = vmatpush2.msra.mxu0 0.0
    %3553 = vmatprep.subr.mxu0 0.0
    %3554 = vmatpush2.msra.mxu0 0.0
    %3555 = vmatprep.mubr.f32.mxu0 0.0
    %3556 = vmatmul.mubr.f32.gmra.mxu0 %v3489
    %v3557 = vpop.f32.mrf.mxu0
    %v3558 = vadd.f32 %v723, %v3557
    %v3559 = vpop.f32.mrf.mxu0
    %3560 = vdwg.mxu0
    %v3561 = vxor.u32 %v3558, 2147483648
    %v3562 = vmul.f32 %v3561, 1.442695
    %v3563 = vpow.pop %v3562
    %v3564 = vadd.f32 %v3563, 1.0
    %v3565 = vrcp.pop %v3564
    %v3566 = vmul.f32 1.0, %v3565
    %v3568 = vsel %vm813, %v3413, 0
    %3570 = vmatprep.subr.mxu0 0.0
    %3571 = vmatpush1.msra.mxu0 0.0
    %3572 = vmatprep.subr.mxu0 0.0
    %3573 = vmatpush1.msra.mxu0 0.0
    %3574 = vmatprep.subr.mxu0 0.0
    %3575 = vmatpush1.msra.mxu0 0.0
    %3576 = vmatprep.subr.mxu0 0.0
    %3577 = vmatpush1.msra.mxu0 0.0
    %3578 = vmatprep.subr.mxu0 0.0
    %3579 = vmatpush1.msra.mxu0 %v86
    %3580 = vmatprep.subr.mxu0 0.0
    %3581 = vmatpush1.msra.mxu0 %v85
    %3582 = vmatprep.subr.mxu0 0.0
    %3583 = vmatpush1.msra.mxu0 %v84
    %3584 = vmatprep.subr.mxu0 0.0
    %3585 = vmatpush1.msra.mxu0 %v83
    %3586 = vmatprep.subr.mxu0 0.0
    %3587 = vmatpush1.msra.mxu0 %v82
    %3588 = vmatprep.subr.mxu0 0.0
    %3589 = vmatpush1.msra.mxu0 %v81
    %3590 = vmatprep.subr.mxu0 0.0
    %3591 = vmatpush1.msra.mxu0 %v80
    %3592 = vmatprep.subr.mxu0 0.0
    %3593 = vmatpush1.msra.mxu0 %v79
    %3594 = vmatprep.subr.mxu0 0.0
    %3595 = vmatpush1.msra.mxu0 %v78
    %3596 = vmatprep.subr.mxu0 0.0
    %3597 = vmatpush1.msra.mxu0 %v77
    %3598 = vmatprep.subr.mxu0 0.0
    %3599 = vmatpush1.msra.mxu0 %v76
    %3600 = vmatprep.subr.mxu0 0.0
    %3601 = vmatpush1.msra.mxu0 %v75
    %3602 = vmatprep.subr.mxu0 0.0
    %3603 = vmatpush2.msra.mxu0 0.0
    %3604 = vmatprep.subr.mxu0 0.0
    %3605 = vmatpush2.msra.mxu0 0.0
    %3606 = vmatprep.subr.mxu0 0.0
    %3607 = vmatpush2.msra.mxu0 0.0
    %3608 = vmatprep.subr.mxu0 0.0
    %3609 = vmatpush2.msra.mxu0 0.0
    %3610 = vmatprep.subr.mxu0 0.0
    %3611 = vmatpush2.msra.mxu0 0.0
    %3612 = vmatprep.subr.mxu0 0.0
    %3613 = vmatpush2.msra.mxu0 0.0
    %3614 = vmatprep.subr.mxu0 0.0
    %3615 = vmatpush2.msra.mxu0 0.0
    %3616 = vmatprep.subr.mxu0 0.0
    %3617 = vmatpush2.msra.mxu0 0.0
    %3618 = vmatprep.subr.mxu0 0.0
    %3619 = vmatpush2.msra.mxu0 0.0
    %3620 = vmatprep.subr.mxu0 0.0
    %3621 = vmatpush2.msra.mxu0 0.0
    %3622 = vmatprep.subr.mxu0 0.0
    %3623 = vmatpush2.msra.mxu0 0.0
    %3624 = vmatprep.subr.mxu0 0.0
    %3625 = vmatpush2.msra.mxu0 0.0
    %3626 = vmatprep.subr.mxu0 0.0
    %3627 = vmatpush2.msra.mxu0 0.0
    %3628 = vmatprep.subr.mxu0 0.0
    %3629 = vmatpush2.msra.mxu0 0.0
    %3630 = vmatprep.subr.mxu0 0.0
    %3631 = vmatpush2.msra.mxu0 0.0
    %3632 = vmatprep.subr.mxu0 0.0
    %3633 = vmatpush2.msra.mxu0 0.0
    %3634 = vmatprep.mubr.f32.mxu0 0.0
    %3635 = vmatmul.mubr.f32.gmra.mxu0 %v3568
    %v3636 = vpop.f32.mrf.mxu0
    %v3637 = vadd.f32 %v811, %v3636
    %v3638 = vpop.f32.mrf.mxu0
    %3639 = vdwg.mxu0
    %v3640 = vmul.f32 %v3566, %v3637
    %v3641 = vadd.f32 %v3640, %v3271
    %v3643 = vcombine.high %v3641, %v3641
    %v3645 = vunpack.c.l.s4 1966171168
    %v3646 = vunpack.c.0.s8 %v3645
    %v3647 = vlaneseq
    %v3648 = vshrl.u32 %v3647, 7
    %v3649 = vsub.s32 %v3646, %v3648
    %v3650 = vrot.slane %v3641, %v3649
    %v3652 = vunpack.c.l.s4 1966171168
    %v3653 = vunpack.c.0.s8 %v3652
    %v3654 = vlaneseq
    %v3655 = vshrl.u32 %v3654, 7
    %v3656 = vsub.s32 %v3653, %v3655
    %v3657 = vrot.slane %v3643, %v3656
    %v3658 = vcombine.high %v3650, %v3650
    %v3659 = vcombine.high %v3657, %v3657
    %v3661 = vunpack.c.l.s4 1966171168
    %v3662 = vunpack.c.0.s8 %v3661
    %v3663 = vlaneseq
    %v3664 = vshrl.u32 %v3663, 7
    %v3665 = vsub.s32 %v3662, %v3664
    %v3666 = vrot.slane %v3650, %v3665
    %v3668 = vunpack.c.l.s4 1966171168
    %v3669 = vunpack.c.0.s8 %v3668
    %v3670 = vlaneseq
    %v3671 = vshrl.u32 %v3670, 7
    %v3672 = vsub.s32 %v3669, %v3671
    %v3673 = vrot.slane %v3657, %v3672
    %v3675 = vunpack.c.l.s4 1966171168
    %v3676 = vunpack.c.0.s8 %v3675
    %v3677 = vlaneseq
    %v3678 = vshrl.u32 %v3677, 7
    %v3679 = vsub.s32 %v3676, %v3678
    %v3680 = vrot.slane %v3658, %v3679
    %v3682 = vunpack.c.l.s4 1966171168
    %v3683 = vunpack.c.0.s8 %v3682
    %v3684 = vlaneseq
    %v3685 = vshrl.u32 %v3684, 7
    %v3686 = vsub.s32 %v3683, %v3685
    %v3687 = vrot.slane %v3659, %v3686
    %v3688 = vcombine.high %v3666, %v3666
    %v3689 = vcombine.high %v3673, %v3673
    %v3690 = vcombine.high %v3680, %v3680
    %v3691 = vcombine.high %v3687, %v3687
    %3700 = vst.msk [vmem:[#allocation6 + $0x3] sm:$0x1] %vm947, %v3666
    %3701 = vst.msk [vmem:[#allocation6 + $0xb] sm:$0x1] %vm947, %v3680
    %3702 = vst.msk [vmem:[#allocation6 + $0x13] sm:$0x1] %vm947, %v3688
    %3703 = vst.msk [vmem:[#allocation6 + $0x1b] sm:$0x1] %vm947, %v3690
    %3704 = vst.msk [vmem:[#allocation6 + $0x23] sm:$0x1] %vm947, %v3673
    %3705 = vst.msk [vmem:[#allocation6 + $0x2b] sm:$0x1] %vm947, %v3687
    %3706 = vst.msk [vmem:[#allocation6 + $0x33] sm:$0x1] %vm947, %v3689
    %3707 = vst.msk [vmem:[#allocation6 + $0x3b] sm:$0x1] %vm947, %v3691
    %v3708 = vcombine.high %v3148, %v3148
    %v3710 = vunpack.c.l.s4 1966171168
    %v3711 = vunpack.c.0.s8 %v3710
    %v3712 = vlaneseq
    %v3713 = vshrl.u32 %v3712, 7
    %v3714 = vsub.s32 %v3711, %v3713
    %v3715 = vrot.slane %v3148, %v3714
    %v3717 = vunpack.c.l.s4 1966171168
    %v3718 = vunpack.c.0.s8 %v3717
    %v3719 = vlaneseq
    %v3720 = vshrl.u32 %v3719, 7
    %v3721 = vsub.s32 %v3718, %v3720
    %v3722 = vrot.slane %v3708, %v3721
    %v3723 = vcombine.high %v3715, %v3715
    %v3724 = vcombine.high %v3722, %v3722
    %v3726 = vunpack.c.l.s4 1966171168
    %v3727 = vunpack.c.0.s8 %v3726
    %v3728 = vlaneseq
    %v3729 = vshrl.u32 %v3728, 7
    %v3730 = vsub.s32 %v3727, %v3729
    %v3731 = vrot.slane %v3715, %v3730
    %v3733 = vunpack.c.l.s4 1966171168
    %v3734 = vunpack.c.0.s8 %v3733
    %v3735 = vlaneseq
    %v3736 = vshrl.u32 %v3735, 7
    %v3737 = vsub.s32 %v3734, %v3736
    %v3738 = vrot.slane %v3722, %v3737
    %v3740 = vunpack.c.l.s4 1966171168
    %v3741 = vunpack.c.0.s8 %v3740
    %v3742 = vlaneseq
    %v3743 = vshrl.u32 %v3742, 7
    %v3744 = vsub.s32 %v3741, %v3743
    %v3745 = vrot.slane %v3723, %v3744
    %v3747 = vunpack.c.l.s4 1966171168
    %v3748 = vunpack.c.0.s8 %v3747
    %v3749 = vlaneseq
    %v3750 = vshrl.u32 %v3749, 7
    %v3751 = vsub.s32 %v3748, %v3750
    %v3752 = vrot.slane %v3724, %v3751
    %v3753 = vcombine.high %v3731, %v3731
    %v3754 = vcombine.high %v3738, %v3738
    %v3755 = vcombine.high %v3745, %v3745
    %v3756 = vcombine.high %v3752, %v3752
    %v3757 = vlaneseq
    %v3758 = vshrl.u32 %v3757, 7
    %v3759 = vsub.s32 0, %v3758
    %v3760 = vrot.slane %v3731, %v3759
    %v3761 = vlaneseq
    %v3762 = vshrl.u32 %v3761, 7
    %v3763 = vsub.s32 0, %v3762
    %v3764 = vrot.slane %v3745, %v3763
    %v3765 = vlaneseq
    %v3766 = vshrl.u32 %v3765, 7
    %v3767 = vsub.s32 0, %v3766
    %v3768 = vrot.slane %v3753, %v3767
    %v3769 = vlaneseq
    %v3770 = vshrl.u32 %v3769, 7
    %v3771 = vsub.s32 0, %v3770
    %v3772 = vrot.slane %v3755, %v3771
    %v3773 = vlaneseq
    %v3774 = vshrl.u32 %v3773, 7
    %v3775 = vsub.s32 0, %v3774
    %v3776 = vrot.slane %v3738, %v3775
    %v3777 = vlaneseq
    %v3778 = vshrl.u32 %v3777, 7
    %v3779 = vsub.s32 0, %v3778
    %v3780 = vrot.slane %v3752, %v3779
    %v3781 = vlaneseq
    %v3782 = vshrl.u32 %v3781, 7
    %v3783 = vsub.s32 0, %v3782
    %v3784 = vrot.slane %v3754, %v3783
    %v3785 = vlaneseq
    %v3786 = vshrl.u32 %v3785, 7
    %v3787 = vsub.s32 0, %v3786
    %v3788 = vrot.slane %v3756, %v3787
    %3789 = vrot.lane.b32.xlu0 %v3760, 104
    %v3790 = vpop.permute.xlu0 %3789
    %3791 = vrot.lane.b32.xlu0 %v3764, 104
    %v3792 = vpop.permute.xlu0 %3791
    %3793 = vrot.lane.b32.xlu0 %v3768, 104
    %v3794 = vpop.permute.xlu0 %3793
    %3795 = vrot.lane.b32.xlu0 %v3772, 104
    %v3796 = vpop.permute.xlu0 %3795
    %3797 = vrot.lane.b32.xlu0 %v3776, 104
    %v3798 = vpop.permute.xlu0 %3797
    %3799 = vrot.lane.b32.xlu0 %v3780, 104
    %v3800 = vpop.permute.xlu0 %3799
    %3801 = vrot.lane.b32.xlu0 %v3784, 104
    %v3802 = vpop.permute.xlu0 %3801
    %3803 = vrot.lane.b32.xlu0 %v3788, 104
    %v3804 = vpop.permute.xlu0 %3803
    %3813 = vst.msk [vmem:[%s14 + $0x3] sm:$0x1] %vm1061, %v3790
    %3814 = vst.msk [vmem:[%s14 + $0xb] sm:$0x1] %vm1061, %v3792
    %3815 = vst.msk [vmem:[%s14 + $0x13] sm:$0x1] %vm1061, %v3794
    %3816 = vst.msk [vmem:[%s14 + $0x1b] sm:$0x1] %vm1061, %v3796
    %3817 = vst.msk [vmem:[%s14 + $0x23] sm:$0x1] %vm1061, %v3798
    %3818 = vst.msk [vmem:[%s14 + $0x2b] sm:$0x1] %vm1061, %v3800
    %3819 = vst.msk [vmem:[%s14 + $0x33] sm:$0x1] %vm1061, %v3802
    %3820 = vst.msk [vmem:[%s14 + $0x3b] sm:$0x1] %vm1061, %v3804
    %v3821 = vld [vmem:[%s0 + $0x4] sm:$0x1]
    %v3822 = vld [vmem:[%s0 + $0xc] sm:$0x1]
    %v3823 = vld [vmem:[%s0 + $0x14] sm:$0x1]
    %v3824 = vld [vmem:[%s0 + $0x1c] sm:$0x1]
    %v3825 = vld [vmem:[%s0 + $0x24] sm:$0x1]
    %v3826 = vld [vmem:[%s0 + $0x2c] sm:$0x1]
    %v3827 = vld [vmem:[%s0 + $0x34] sm:$0x1]
    %v3828 = vld [vmem:[%s0 + $0x3c] sm:$0x1]
    %v3829 = vld [vmem:[%s1 + $0x4] sm:$0x1]
    %v3830 = vld [vmem:[%s1 + $0xc] sm:$0x1]
    %v3831 = vld [vmem:[%s1 + $0x14] sm:$0x1]
    %v3832 = vld [vmem:[%s1 + $0x1c] sm:$0x1]
    %v3833 = vld [vmem:[%s1 + $0x24] sm:$0x1]
    %v3834 = vld [vmem:[%s1 + $0x2c] sm:$0x1]
    %v3835 = vld [vmem:[%s1 + $0x34] sm:$0x1]
    %v3836 = vld [vmem:[%s1 + $0x3c] sm:$0x1]
    %v3837 = vld [vmem:[#allocation3] sm:$0xff]
    %v3838 = vld [vmem:[#allocation2] sm:$0xff]
    %v3847 = vrot.slane %v3822, 7
    %v3848 = vsel %vm116, %v3847, %v3821
    %v3849 = vrot.slane %v3823, 6
    %v3850 = vsel %vm119, %v3849, %v3848
    %v3851 = vrot.slane %v3824, 5
    %v3852 = vsel %vm122, %v3851, %v3850
    %v3853 = vrot.slane %v3825, 4
    %v3854 = vsel %vm125, %v3853, %v3852
    %v3855 = vrot.slane %v3826, 3
    %v3856 = vsel %vm128, %v3855, %v3854
    %v3857 = vrot.slane %v3827, 2
    %v3858 = vsel %vm131, %v3857, %v3856
    %v3859 = vrot.slane %v3828, 1
    %v3860 = vsel %vm134, %v3859, %v3858
    %3863 = vrot.lane.b32.xlu0 %v3837, 16
    %v3864 = vpop.permute.xlu0 %3863
    %v3874 = vrot.slane %v3830, 7
    %v3875 = vsel %vm116, %v3874, %v3829
    %v3876 = vrot.slane %v3831, 6
    %v3877 = vsel %vm119, %v3876, %v3875
    %v3878 = vrot.slane %v3832, 5
    %v3879 = vsel %vm122, %v3878, %v3877
    %v3880 = vrot.slane %v3833, 4
    %v3881 = vsel %vm125, %v3880, %v3879
    %v3882 = vrot.slane %v3834, 3
    %v3883 = vsel %vm128, %v3882, %v3881
    %v3884 = vrot.slane %v3835, 2
    %v3885 = vsel %vm131, %v3884, %v3883
    %v3886 = vrot.slane %v3836, 1
    %v3887 = vsel %vm134, %v3886, %v3885
    %3888 = vrot.lane.b32.xlu0 %v3887, 40
    %v3889 = vpop.permute.xlu0 %3888
    %v3891 = vsel %vm166, %v3860, %v3864
    %v3892 = vsel %vm168, %v3891, %v3889
    %v3894 = vsel %vm176, %v3892, 0
    %3896 = vmatprep.subr.mxu0 0.0
    %3897 = vmatpush1.msra.mxu0 0.0
    %3898 = vmatprep.subr.mxu0 0.0
    %3899 = vmatpush1.msra.mxu0 0.0
    %3900 = vmatprep.subr.mxu0 0.0
    %3901 = vmatpush1.msra.mxu0 0.0
    %3902 = vmatprep.subr.mxu0 0.0
    %3903 = vmatpush1.msra.mxu0 0.0
    %3904 = vmatprep.subr.mxu0 0.0
    %3905 = vmatpush1.msra.mxu0 0.0
    %3906 = vmatprep.subr.mxu0 0.0
    %3907 = vmatpush1.msra.mxu0 0.0
    %3908 = vmatprep.subr.mxu0 0.0
    %3909 = vmatpush1.msra.mxu0 0.0
    %3910 = vmatprep.subr.mxu0 0.0
    %3911 = vmatpush1.msra.mxu0 0.0
    %3912 = vmatprep.subr.mxu0 0.0
    %3913 = vmatpush1.msra.mxu0 0.0
    %3914 = vmatprep.subr.mxu0 0.0
    %3915 = vmatpush1.msra.mxu0 0.0
    %3916 = vmatprep.subr.mxu0 0.0
    %3917 = vmatpush1.msra.mxu0 %v182
    %3918 = vmatprep.subr.mxu0 0.0
    %3919 = vmatpush1.msra.mxu0 %v64
    %3920 = vmatprep.subr.mxu0 0.0
    %3921 = vmatpush1.msra.mxu0 %v63
    %3922 = vmatprep.subr.mxu0 0.0
    %3923 = vmatpush1.msra.mxu0 %v62
    %3924 = vmatprep.subr.mxu0 0.0
    %3925 = vmatpush1.msra.mxu0 %v61
    %3926 = vmatprep.subr.mxu0 0.0
    %3927 = vmatpush1.msra.mxu0 %v60
    %3928 = vmatprep.subr.mxu0 0.0
    %3929 = vmatpush2.msra.mxu0 0.0
    %3930 = vmatprep.subr.mxu0 0.0
    %3931 = vmatpush2.msra.mxu0 0.0
    %3932 = vmatprep.subr.mxu0 0.0
    %3933 = vmatpush2.msra.mxu0 0.0
    %3934 = vmatprep.subr.mxu0 0.0
    %3935 = vmatpush2.msra.mxu0 0.0
    %3936 = vmatprep.subr.mxu0 0.0
    %3937 = vmatpush2.msra.mxu0 0.0
    %3938 = vmatprep.subr.mxu0 0.0
    %3939 = vmatpush2.msra.mxu0 0.0
    %3940 = vmatprep.subr.mxu0 0.0
    %3941 = vmatpush2.msra.mxu0 0.0
    %3942 = vmatprep.subr.mxu0 0.0
    %3943 = vmatpush2.msra.mxu0 0.0
    %3944 = vmatprep.subr.mxu0 0.0
    %3945 = vmatpush2.msra.mxu0 0.0
    %3946 = vmatprep.subr.mxu0 0.0
    %3947 = vmatpush2.msra.mxu0 0.0
    %3948 = vmatprep.subr.mxu0 0.0
    %3949 = vmatpush2.msra.mxu0 0.0
    %3950 = vmatprep.subr.mxu0 0.0
    %3951 = vmatpush2.msra.mxu0 0.0
    %3952 = vmatprep.subr.mxu0 0.0
    %3953 = vmatpush2.msra.mxu0 0.0
    %3954 = vmatprep.subr.mxu0 0.0
    %3955 = vmatpush2.msra.mxu0 0.0
    %3956 = vmatprep.subr.mxu0 0.0
    %3957 = vmatpush2.msra.mxu0 0.0
    %3958 = vmatprep.subr.mxu0 0.0
    %3959 = vmatpush2.msra.mxu0 0.0
    %3960 = vmatprep.mubr.f32.mxu0 0.0
    %3961 = vmatmul.mubr.f32.gmra.mxu0 %v3894
    %v3962 = vpop.f32.mrf.mxu0
    %v3963 = vadd.f32 %v174, %v3962
    %v3964 = vpop.f32.mrf.mxu0
    %3965 = vdwg.mxu0
    %v3966 = vsel %vm254, %v3963, -inf
    %3967 = vmax.xlane.f32.xlu0 %v3966
    %v3968 = vpop.xlane.xlu0 %3967
    %v3969 = vsub.f32 %v3963, %v3968
    %v3970 = vmul.f32 %v3969, 1.442695
    %v3971 = vpow.pop %v3970
    %v3972 = vsel %vm254, %v3971, 0.0
    %3973 = vadd.xlane.f32.xlu0 %v3972
    %v3974 = vpop.xlane.xlu0 %3973
    %v3975 = vrcp.pop %v3974
    %v3976 = vmul.f32 %v3971, %v3975
    %v3977 = vsel %vm266, %v3963, -inf
    %3978 = vmax.xlane.f32.xlu0 %v3977
    %v3979 = vpop.xlane.xlu0 %3978
    %v3980 = vsub.f32 %v3963, %v3979
    %v3981 = vmul.f32 %v3980, 1.442695
    %v3982 = vpow.pop %v3981
    %3984 = vrot.lane.b32.xlu0 %v3982, 125
    %v3985 = vpop.permute.xlu0 %3984
    %v3987 = vsel %vm254, %v3985, 0.0
    %3988 = vadd.xlane.f32.xlu0 %v3987
    %v3989 = vpop.xlane.xlu0 %3988
    %v3990 = vrcp.pop %v3989
    %v3991 = vmul.f32 %v3982, %v3990
    %v3993 = vsel %vm254, %v3976, 0
    %3995 = vmatprep.subr.mxu0 0.0
    %3996 = vmatpush1.msra.mxu0 0.0
    %3997 = vmatprep.subr.mxu0 0.0
    %3998 = vmatpush1.msra.mxu0 0.0
    %3999 = vmatprep.subr.mxu0 0.0
    %4000 = vmatpush1.msra.mxu0 0.0
    %4001 = vmatprep.subr.mxu0 0.0
    %4002 = vmatpush1.msra.mxu0 0.0
    %4003 = vmatprep.subr.mxu0 0.0
    %4004 = vmatpush1.msra.mxu0 0.0
    %4005 = vmatprep.subr.mxu0 0.0
    %4006 = vmatpush1.msra.mxu0 0.0
    %4007 = vmatprep.subr.mxu0 0.0
    %4008 = vmatpush1.msra.mxu0 0.0
    %4009 = vmatprep.subr.mxu0 0.0
    %4010 = vmatpush1.msra.mxu0 0.0
    %4011 = vmatprep.subr.mxu0 0.0
    %4012 = vmatpush1.msra.mxu0 0.0
    %4013 = vmatprep.subr.mxu0 0.0
    %4014 = vmatpush1.msra.mxu0 0.0
    %4015 = vmatprep.subr.mxu0 0.0
    %4016 = vmatpush1.msra.mxu0 0.0
    %4017 = vmatprep.subr.mxu0 0.0
    %4018 = vmatpush1.msra.mxu0 0.0
    %4019 = vmatprep.subr.mxu0 0.0
    %4020 = vmatpush1.msra.mxu0 0.0
    %4021 = vmatprep.subr.mxu0 0.0
    %4022 = vmatpush1.msra.mxu0 0.0
    %4023 = vmatprep.subr.mxu0 0.0
    %4024 = vmatpush1.msra.mxu0 0.0
    %4025 = vmatprep.subr.mxu0 0.0
    %4026 = vmatpush1.msra.mxu0 %v287
    %4027 = vmatprep.subr.mxu0 0.0
    %4028 = vmatpush2.msra.mxu0 0.0
    %4029 = vmatprep.subr.mxu0 0.0
    %4030 = vmatpush2.msra.mxu0 0.0
    %4031 = vmatprep.subr.mxu0 0.0
    %4032 = vmatpush2.msra.mxu0 0.0
    %4033 = vmatprep.subr.mxu0 0.0
    %4034 = vmatpush2.msra.mxu0 0.0
    %4035 = vmatprep.subr.mxu0 0.0
    %4036 = vmatpush2.msra.mxu0 0.0
    %4037 = vmatprep.subr.mxu0 0.0
    %4038 = vmatpush2.msra.mxu0 0.0
    %4039 = vmatprep.subr.mxu0 0.0
    %4040 = vmatpush2.msra.mxu0 0.0
    %4041 = vmatprep.subr.mxu0 0.0
    %4042 = vmatpush2.msra.mxu0 0.0
    %4043 = vmatprep.subr.mxu0 0.0
    %4044 = vmatpush2.msra.mxu0 0.0
    %4045 = vmatprep.subr.mxu0 0.0
    %4046 = vmatpush2.msra.mxu0 0.0
    %4047 = vmatprep.subr.mxu0 0.0
    %4048 = vmatpush2.msra.mxu0 0.0
    %4049 = vmatprep.subr.mxu0 0.0
    %4050 = vmatpush2.msra.mxu0 0.0
    %4051 = vmatprep.subr.mxu0 0.0
    %4052 = vmatpush2.msra.mxu0 0.0
    %4053 = vmatprep.subr.mxu0 0.0
    %4054 = vmatpush2.msra.mxu0 0.0
    %4055 = vmatprep.subr.mxu0 0.0
    %4056 = vmatpush2.msra.mxu0 0.0
    %4057 = vmatprep.subr.mxu0 0.0
    %4058 = vmatpush2.msra.mxu0 0.0
    %4059 = vmatprep.mubr.f32.mxu0 0.0
    %4060 = vmatmul.mubr.f32.gmra.mxu0 %v3993
    %v4061 = vpop.f32.mrf.mxu0
    %v4062 = vadd.f32 0.0, %v4061
    %v4063 = vpop.f32.mrf.mxu0
    %4064 = vdwg.mxu0
    %v4065 = vsub.f32 1.0, %v4062
    %4067 = vrot.lane.b32.xlu0 %v3991, 125
    %v4068 = vpop.permute.xlu0 %4067
    %v4069 = vsel %vm254, %v4068, 0
    %4071 = vmatprep.subr.mxu0 0.0
    %4072 = vmatpush1.msra.mxu0 0.0
    %4073 = vmatprep.subr.mxu0 0.0
    %4074 = vmatpush1.msra.mxu0 0.0
    %4075 = vmatprep.subr.mxu0 0.0
    %4076 = vmatpush1.msra.mxu0 0.0
    %4077 = vmatprep.subr.mxu0 0.0
    %4078 = vmatpush1.msra.mxu0 0.0
    %4079 = vmatprep.subr.mxu0 0.0
    %4080 = vmatpush1.msra.mxu0 0.0
    %4081 = vmatprep.subr.mxu0 0.0
    %4082 = vmatpush1.msra.mxu0 0.0
    %4083 = vmatprep.subr.mxu0 0.0
    %4084 = vmatpush1.msra.mxu0 0.0
    %4085 = vmatprep.subr.mxu0 0.0
    %4086 = vmatpush1.msra.mxu0 0.0
    %4087 = vmatprep.subr.mxu0 0.0
    %4088 = vmatpush1.msra.mxu0 0.0
    %4089 = vmatprep.subr.mxu0 0.0
    %4090 = vmatpush1.msra.mxu0 0.0
    %4091 = vmatprep.subr.mxu0 0.0
    %4092 = vmatpush1.msra.mxu0 0.0
    %4093 = vmatprep.subr.mxu0 0.0
    %4094 = vmatpush1.msra.mxu0 0.0
    %4095 = vmatprep.subr.mxu0 0.0
    %4096 = vmatpush1.msra.mxu0 0.0
    %4097 = vmatprep.subr.mxu0 0.0
    %4098 = vmatpush1.msra.mxu0 0.0
    %4099 = vmatprep.subr.mxu0 0.0
    %4100 = vmatpush1.msra.mxu0 0.0
    %4101 = vmatprep.subr.mxu0 0.0
    %4102 = vmatpush1.msra.mxu0 %v366
    %4103 = vmatprep.subr.mxu0 0.0
    %4104 = vmatpush2.msra.mxu0 0.0
    %4105 = vmatprep.subr.mxu0 0.0
    %4106 = vmatpush2.msra.mxu0 0.0
    %4107 = vmatprep.subr.mxu0 0.0
    %4108 = vmatpush2.msra.mxu0 0.0
    %4109 = vmatprep.subr.mxu0 0.0
    %4110 = vmatpush2.msra.mxu0 0.0
    %4111 = vmatprep.subr.mxu0 0.0
    %4112 = vmatpush2.msra.mxu0 0.0
    %4113 = vmatprep.subr.mxu0 0.0
    %4114 = vmatpush2.msra.mxu0 0.0
    %4115 = vmatprep.subr.mxu0 0.0
    %4116 = vmatpush2.msra.mxu0 0.0
    %4117 = vmatprep.subr.mxu0 0.0
    %4118 = vmatpush2.msra.mxu0 0.0
    %4119 = vmatprep.subr.mxu0 0.0
    %4120 = vmatpush2.msra.mxu0 0.0
    %4121 = vmatprep.subr.mxu0 0.0
    %4122 = vmatpush2.msra.mxu0 0.0
    %4123 = vmatprep.subr.mxu0 0.0
    %4124 = vmatpush2.msra.mxu0 0.0
    %4125 = vmatprep.subr.mxu0 0.0
    %4126 = vmatpush2.msra.mxu0 0.0
    %4127 = vmatprep.subr.mxu0 0.0
    %4128 = vmatpush2.msra.mxu0 0.0
    %4129 = vmatprep.subr.mxu0 0.0
    %4130 = vmatpush2.msra.mxu0 0.0
    %4131 = vmatprep.subr.mxu0 0.0
    %4132 = vmatpush2.msra.mxu0 0.0
    %4133 = vmatprep.subr.mxu0 0.0
    %4134 = vmatpush2.msra.mxu0 0.0
    %4135 = vmatprep.mubr.f32.mxu0 0.0
    %4136 = vmatmul.mubr.f32.gmra.mxu0 %v4069
    %v4137 = vpop.f32.mrf.mxu0
    %v4138 = vadd.f32 0.0, %v4137
    %v4139 = vpop.f32.mrf.mxu0
    %4140 = vdwg.mxu0
    %v4141 = vsub.f32 1.0, %v4138
    %v4142 = vxor.u32 %v3963, 2147483648
    %v4143 = vmul.f32 %v4142, 1.442695
    %v4144 = vpow.pop %v4143
    %v4145 = vadd.f32 %v4144, 1.0
    %v4146 = vrcp.pop %v4145
    %v4147 = vmul.f32 1.0, %v4146
    %v4148 = vtanh.pop %v3963
    %v4149 = vmul.f32 %v4062, %v4141
    %4151 = vrot.lane.b32.xlu0 %v3838, 6
    %v4152 = vpop.permute.xlu0 %4151
    %v4154 = vmul.f32 %v4147, %v4152
    %4156 = vrot.lane.b32.xlu0 %v4148, 80
    %v4157 = vpop.permute.xlu0 %4156
    %v4159 = vmul.f32 %v4147, %v4157
    %4161 = vrot.lane.b32.xlu0 %v4159, 104
    %v4162 = vpop.permute.xlu0 %4161
    %v4164 = vadd.f32 %v4154, %v4162
    %4166 = vrot.lane.b32.xlu0 %v4164, 122
    %v4167 = vpop.permute.xlu0 %4166
    %v4169 = vmul.f32 %v4149, %v4167
    %v4170 = vsub.f32 %v4062, %v4149
    %v4171 = vmul.f32 %v4170, %v3838
    %v4172 = vadd.f32 %v4169, %v4171
    %v4173 = vsub.f32 %v4141, %v4149
    %4174 = vrot.lane.b32.xlu0 %v4148, 50
    %v4175 = vpop.permute.xlu0 %4174
    %v4177 = vmul.f32 %v4173, %v4175
    %v4178 = vadd.f32 %v4172, %v4177
    %v4179 = vtanh.pop %v4178
    %4181 = vrot.lane.b32.xlu0 %v4179, 54
    %v4182 = vpop.permute.xlu0 %4181
    %v4184 = vmul.f32 %v4147, %v4182
    %4185 = vst.msk [vmem:[#allocation2] sm:$0xff] %vm482, %v4178
    %4187 = vrot.lane.b32.xlu0 %v4184, 74
    %v4188 = vpop.permute.xlu0 %4187
    %4190 = vst.msk [vmem:[#allocation3] sm:$0xff] %vm482, %v4188
    %4191 = vst.msk [vmem:[#allocation4] sm:$0xff] %vm482, %v4188
    %v4192 = vld [vmem:[#allocation5] sm:$0xff]
    %4194 = vrot.lane.b32.xlu0 %v4192, 127
    %v4195 = vpop.permute.xlu0 %4194
    %4198 = vrot.lane.b32.xlu0 %v4065, 107
    %v4199 = vpop.permute.xlu0 %4198
    %v4201 = vsel %vm254, %v4195, %v4199
    %4202 = vst.msk [vmem:[#allocation5] sm:$0xff] %vm500, %v4201
    %v4204 = vsel %vm500, %v4201, 0
    %4206 = vmatprep.subr.mxu0 0.0
    %4207 = vmatpush1.msra.mxu0 0.0
    %4208 = vmatprep.subr.mxu0 0.0
    %4209 = vmatpush1.msra.mxu0 0.0
    %4210 = vmatprep.subr.mxu0 0.0
    %4211 = vmatpush1.msra.mxu0 0.0
    %4212 = vmatprep.subr.mxu0 0.0
    %4213 = vmatpush1.msra.mxu0 0.0
    %4214 = vmatprep.subr.mxu0 0.0
    %4215 = vmatpush1.msra.mxu0 0.0
    %4216 = vmatprep.subr.mxu0 0.0
    %4217 = vmatpush1.msra.mxu0 0.0
    %4218 = vmatprep.subr.mxu0 0.0
    %4219 = vmatpush1.msra.mxu0 0.0
    %4220 = vmatprep.subr.mxu0 0.0
    %4221 = vmatpush1.msra.mxu0 0.0
    %4222 = vmatprep.subr.mxu0 0.0
    %4223 = vmatpush1.msra.mxu0 0.0
    %4224 = vmatprep.subr.mxu0 0.0
    %4225 = vmatpush1.msra.mxu0 0.0
    %4226 = vmatprep.subr.mxu0 0.0
    %4227 = vmatpush1.msra.mxu0 0.0
    %4228 = vmatprep.subr.mxu0 0.0
    %4229 = vmatpush1.msra.mxu0 0.0
    %4230 = vmatprep.subr.mxu0 0.0
    %4231 = vmatpush1.msra.mxu0 0.0
    %4232 = vmatprep.subr.mxu0 0.0
    %4233 = vmatpush1.msra.mxu0 0.0
    %4234 = vmatprep.subr.mxu0 0.0
    %4235 = vmatpush1.msra.mxu0 0.0
    %4236 = vmatprep.subr.mxu0 0.0
    %4237 = vmatpush1.msra.mxu0 %v507
    %4238 = vmatprep.subr.mxu0 0.0
    %4239 = vmatpush2.msra.mxu0 0.0
    %4240 = vmatprep.subr.mxu0 0.0
    %4241 = vmatpush2.msra.mxu0 0.0
    %4242 = vmatprep.subr.mxu0 0.0
    %4243 = vmatpush2.msra.mxu0 0.0
    %4244 = vmatprep.subr.mxu0 0.0
    %4245 = vmatpush2.msra.mxu0 0.0
    %4246 = vmatprep.subr.mxu0 0.0
    %4247 = vmatpush2.msra.mxu0 0.0
    %4248 = vmatprep.subr.mxu0 0.0
    %4249 = vmatpush2.msra.mxu0 0.0
    %4250 = vmatprep.subr.mxu0 0.0
    %4251 = vmatpush2.msra.mxu0 0.0
    %4252 = vmatprep.subr.mxu0 0.0
    %4253 = vmatpush2.msra.mxu0 0.0
    %4254 = vmatprep.subr.mxu0 0.0
    %4255 = vmatpush2.msra.mxu0 0.0
    %4256 = vmatprep.subr.mxu0 0.0
    %4257 = vmatpush2.msra.mxu0 0.0
    %4258 = vmatprep.subr.mxu0 0.0
    %4259 = vmatpush2.msra.mxu0 0.0
    %4260 = vmatprep.subr.mxu0 0.0
    %4261 = vmatpush2.msra.mxu0 0.0
    %4262 = vmatprep.subr.mxu0 0.0
    %4263 = vmatpush2.msra.mxu0 0.0
    %4264 = vmatprep.subr.mxu0 0.0
    %4265 = vmatpush2.msra.mxu0 0.0
    %4266 = vmatprep.subr.mxu0 0.0
    %4267 = vmatpush2.msra.mxu0 0.0
    %4268 = vmatprep.subr.mxu0 0.0
    %4269 = vmatpush2.msra.mxu0 0.0
    %4270 = vmatprep.mubr.f32.mxu0 0.0
    %4271 = vmatmul.mubr.f32.gmra.mxu0 %v4204
    %v4272 = vpop.f32.mrf.mxu0
    %v4273 = vadd.f32 0.0, %v4272
    %v4274 = vpop.f32.mrf.mxu0
    %4275 = vdwg.mxu0
    %v4276 = vsel %vm500, %v4273, -inf
    %4277 = vmax.xlane.f32.xlu0 %v4276
    %v4278 = vpop.xlane.xlu0 %4277
    %v4279 = vsub.f32 %v4273, %v4278
    %v4280 = vmul.f32 %v4279, 1.442695
    %v4281 = vpow.pop %v4280
    %v4282 = vsel %vm500, %v4281, 0.0
    %4283 = vadd.xlane.f32.xlu0 %v4282
    %v4284 = vpop.xlane.xlu0 %4283
    %v4285 = vrcp.pop %v4284
    %v4286 = vmul.f32 %v4281, %v4285
    %v4287 = vld [vmem:[%s590] sm:$0xff]
    %4289 = vset.pattern.permute.xlu0 0
    %4290 = vperm.xlu0 %4289, %v4286
    %v4291 = vpop.permute.xlu0 %4290
    %v4293 = vmul.f32 %v4287, %v4291
    %v4294 = vld [vmem:[%s598] sm:$0xff]
    %4295 = vset.pattern.permute.xlu0 1
    %4296 = vperm.xlu0 %4295, %v4286
    %v4297 = vpop.permute.xlu0 %4296
    %v4299 = vmul.f32 %v4294, %v4297
    %v4300 = vld [vmem:[%s605] sm:$0xff]
    %4301 = vset.pattern.permute.xlu0 2
    %4302 = vperm.xlu0 %4301, %v4286
    %v4303 = vpop.permute.xlu0 %4302
    %v4305 = vmul.f32 %v4300, %v4303
    %v4306 = vld [vmem:[#allocation4] sm:$0xff]
    %4307 = vset.pattern.permute.xlu0 3
    %4308 = vperm.xlu0 %4307, %v4286
    %v4309 = vpop.permute.xlu0 %4308
    %v4311 = vmul.f32 %v4306, %v4309
    %v4312 = vadd.f32 %v4293, %v4299
    %v4313 = vadd.f32 %v4312, %v4305
    %v4314 = vadd.f32 %v4313, %v4311
    %v4315 = vmul.f32 %v4314, 0.25
    %4317 = vrot.lane.b32.xlu0 %v4299, 24
    %v4318 = vpop.permute.xlu0 %4317
    %4321 = vrot.lane.b32.xlu0 %v4305, 48
    %v4322 = vpop.permute.xlu0 %4321
    %4325 = vrot.lane.b32.xlu0 %v4311, 72
    %v4326 = vpop.permute.xlu0 %4325
    %v4328 = vsel %vm482, %v4293, %v4318
    %v4329 = vsel %vm635, %v4328, %v4322
    %v4330 = vsel %vm637, %v4329, %v4326
    %v4332 = vsel %vm482, %v4315, 0
    %4334 = vmatprep.subr.mxu0 0.0
    %4335 = vmatpush1.msra.mxu0 0.0
    %4336 = vmatprep.subr.mxu0 0.0
    %4337 = vmatpush1.msra.mxu0 0.0
    %4338 = vmatprep.subr.mxu0 0.0
    %4339 = vmatpush1.msra.mxu0 0.0
    %4340 = vmatprep.subr.mxu0 0.0
    %4341 = vmatpush1.msra.mxu0 0.0
    %4342 = vmatprep.subr.mxu0 0.0
    %4343 = vmatpush1.msra.mxu0 0.0
    %4344 = vmatprep.subr.mxu0 0.0
    %4345 = vmatpush1.msra.mxu0 0.0
    %4346 = vmatprep.subr.mxu0 0.0
    %4347 = vmatpush1.msra.mxu0 0.0
    %4348 = vmatprep.subr.mxu0 0.0
    %4349 = vmatpush1.msra.mxu0 0.0
    %4350 = vmatprep.subr.mxu0 0.0
    %4351 = vmatpush1.msra.mxu0 0.0
    %4352 = vmatprep.subr.mxu0 0.0
    %4353 = vmatpush1.msra.mxu0 0.0
    %4354 = vmatprep.subr.mxu0 0.0
    %4355 = vmatpush1.msra.mxu0 0.0
    %4356 = vmatprep.subr.mxu0 0.0
    %4357 = vmatpush1.msra.mxu0 0.0
    %4358 = vmatprep.subr.mxu0 0.0
    %4359 = vmatpush1.msra.mxu0 0.0
    %4360 = vmatprep.subr.mxu0 0.0
    %4361 = vmatpush1.msra.mxu0 %v71
    %4362 = vmatprep.subr.mxu0 0.0
    %4363 = vmatpush1.msra.mxu0 %v70
    %4364 = vmatprep.subr.mxu0 0.0
    %4365 = vmatpush1.msra.mxu0 %v69
    %4366 = vmatprep.subr.mxu0 0.0
    %4367 = vmatpush2.msra.mxu0 0.0
    %4368 = vmatprep.subr.mxu0 0.0
    %4369 = vmatpush2.msra.mxu0 0.0
    %4370 = vmatprep.subr.mxu0 0.0
    %4371 = vmatpush2.msra.mxu0 0.0
    %4372 = vmatprep.subr.mxu0 0.0
    %4373 = vmatpush2.msra.mxu0 0.0
    %4374 = vmatprep.subr.mxu0 0.0
    %4375 = vmatpush2.msra.mxu0 0.0
    %4376 = vmatprep.subr.mxu0 0.0
    %4377 = vmatpush2.msra.mxu0 0.0
    %4378 = vmatprep.subr.mxu0 0.0
    %4379 = vmatpush2.msra.mxu0 0.0
    %4380 = vmatprep.subr.mxu0 0.0
    %4381 = vmatpush2.msra.mxu0 0.0
    %4382 = vmatprep.subr.mxu0 0.0
    %4383 = vmatpush2.msra.mxu0 0.0
    %4384 = vmatprep.subr.mxu0 0.0
    %4385 = vmatpush2.msra.mxu0 0.0
    %4386 = vmatprep.subr.mxu0 0.0
    %4387 = vmatpush2.msra.mxu0 0.0
    %4388 = vmatprep.subr.mxu0 0.0
    %4389 = vmatpush2.msra.mxu0 0.0
    %4390 = vmatprep.subr.mxu0 0.0
    %4391 = vmatpush2.msra.mxu0 0.0
    %4392 = vmatprep.subr.mxu0 0.0
    %4393 = vmatpush2.msra.mxu0 0.0
    %4394 = vmatprep.subr.mxu0 0.0
    %4395 = vmatpush2.msra.mxu0 0.0
    %4396 = vmatprep.subr.mxu0 0.0
    %4397 = vmatpush2.msra.mxu0 0.0
    %4398 = vmatprep.mubr.f32.mxu0 0.0
    %4399 = vmatmul.mubr.f32.gmra.mxu0 %v4332
    %v4400 = vpop.f32.mrf.mxu0
    %v4401 = vadd.f32 %v643, %v4400
    %v4402 = vpop.f32.mrf.mxu0
    %4403 = vdwg.mxu0
    %v4404 = vmax.f32 %v4401, 0.0
    %v4406 = vsel %vm500, %v4404, 0
    %4408 = vmatprep.subr.mxu0 0.0
    %4409 = vmatpush1.msra.mxu0 0.0
    %4410 = vmatprep.subr.mxu0 0.0
    %4411 = vmatpush1.msra.mxu0 0.0
    %4412 = vmatprep.subr.mxu0 0.0
    %4413 = vmatpush1.msra.mxu0 0.0
    %4414 = vmatprep.subr.mxu0 0.0
    %4415 = vmatpush1.msra.mxu0 0.0
    %4416 = vmatprep.subr.mxu0 0.0
    %4417 = vmatpush1.msra.mxu0 0.0
    %4418 = vmatprep.subr.mxu0 0.0
    %4419 = vmatpush1.msra.mxu0 0.0
    %4420 = vmatprep.subr.mxu0 0.0
    %4421 = vmatpush1.msra.mxu0 0.0
    %4422 = vmatprep.subr.mxu0 0.0
    %4423 = vmatpush1.msra.mxu0 0.0
    %4424 = vmatprep.subr.mxu0 0.0
    %4425 = vmatpush1.msra.mxu0 0.0
    %4426 = vmatprep.subr.mxu0 0.0
    %4427 = vmatpush1.msra.mxu0 0.0
    %4428 = vmatprep.subr.mxu0 0.0
    %4429 = vmatpush1.msra.mxu0 0.0
    %4430 = vmatprep.subr.mxu0 0.0
    %4431 = vmatpush1.msra.mxu0 0.0
    %4432 = vmatprep.subr.mxu0 0.0
    %4433 = vmatpush1.msra.mxu0 0.0
    %4434 = vmatprep.subr.mxu0 0.0
    %4435 = vmatpush1.msra.mxu0 0.0
    %4436 = vmatprep.subr.mxu0 0.0
    %4437 = vmatpush1.msra.mxu0 0.0
    %4438 = vmatprep.subr.mxu0 0.0
    %4439 = vmatpush1.msra.mxu0 %v729
    %4440 = vmatprep.subr.mxu0 0.0
    %4441 = vmatpush2.msra.mxu0 0.0
    %4442 = vmatprep.subr.mxu0 0.0
    %4443 = vmatpush2.msra.mxu0 0.0
    %4444 = vmatprep.subr.mxu0 0.0
    %4445 = vmatpush2.msra.mxu0 0.0
    %4446 = vmatprep.subr.mxu0 0.0
    %4447 = vmatpush2.msra.mxu0 0.0
    %4448 = vmatprep.subr.mxu0 0.0
    %4449 = vmatpush2.msra.mxu0 0.0
    %4450 = vmatprep.subr.mxu0 0.0
    %4451 = vmatpush2.msra.mxu0 0.0
    %4452 = vmatprep.subr.mxu0 0.0
    %4453 = vmatpush2.msra.mxu0 0.0
    %4454 = vmatprep.subr.mxu0 0.0
    %4455 = vmatpush2.msra.mxu0 0.0
    %4456 = vmatprep.subr.mxu0 0.0
    %4457 = vmatpush2.msra.mxu0 0.0
    %4458 = vmatprep.subr.mxu0 0.0
    %4459 = vmatpush2.msra.mxu0 0.0
    %4460 = vmatprep.subr.mxu0 0.0
    %4461 = vmatpush2.msra.mxu0 0.0
    %4462 = vmatprep.subr.mxu0 0.0
    %4463 = vmatpush2.msra.mxu0 0.0
    %4464 = vmatprep.subr.mxu0 0.0
    %4465 = vmatpush2.msra.mxu0 0.0
    %4466 = vmatprep.subr.mxu0 0.0
    %4467 = vmatpush2.msra.mxu0 0.0
    %4468 = vmatprep.subr.mxu0 0.0
    %4469 = vmatpush2.msra.mxu0 0.0
    %4470 = vmatprep.subr.mxu0 0.0
    %4471 = vmatpush2.msra.mxu0 0.0
    %4472 = vmatprep.mubr.f32.mxu0 0.0
    %4473 = vmatmul.mubr.f32.gmra.mxu0 %v4406
    %v4474 = vpop.f32.mrf.mxu0
    %v4475 = vadd.f32 %v723, %v4474
    %v4476 = vpop.f32.mrf.mxu0
    %4477 = vdwg.mxu0
    %v4478 = vxor.u32 %v4475, 2147483648
    %v4479 = vmul.f32 %v4478, 1.442695
    %v4480 = vpow.pop %v4479
    %v4481 = vadd.f32 %v4480, 1.0
    %v4482 = vrcp.pop %v4481
    %v4483 = vmul.f32 1.0, %v4482
    %v4485 = vsel %vm813, %v4330, 0
    %4487 = vmatprep.subr.mxu0 0.0
    %4488 = vmatpush1.msra.mxu0 0.0
    %4489 = vmatprep.subr.mxu0 0.0
    %4490 = vmatpush1.msra.mxu0 0.0
    %4491 = vmatprep.subr.mxu0 0.0
    %4492 = vmatpush1.msra.mxu0 0.0
    %4493 = vmatprep.subr.mxu0 0.0
    %4494 = vmatpush1.msra.mxu0 0.0
    %4495 = vmatprep.subr.mxu0 0.0
    %4496 = vmatpush1.msra.mxu0 %v86
    %4497 = vmatprep.subr.mxu0 0.0
    %4498 = vmatpush1.msra.mxu0 %v85
    %4499 = vmatprep.subr.mxu0 0.0
    %4500 = vmatpush1.msra.mxu0 %v84
    %4501 = vmatprep.subr.mxu0 0.0
    %4502 = vmatpush1.msra.mxu0 %v83
    %4503 = vmatprep.subr.mxu0 0.0
    %4504 = vmatpush1.msra.mxu0 %v82
    %4505 = vmatprep.subr.mxu0 0.0
    %4506 = vmatpush1.msra.mxu0 %v81
    %4507 = vmatprep.subr.mxu0 0.0
    %4508 = vmatpush1.msra.mxu0 %v80
    %4509 = vmatprep.subr.mxu0 0.0
    %4510 = vmatpush1.msra.mxu0 %v79
    %4511 = vmatprep.subr.mxu0 0.0
    %4512 = vmatpush1.msra.mxu0 %v78
    %4513 = vmatprep.subr.mxu0 0.0
    %4514 = vmatpush1.msra.mxu0 %v77
    %4515 = vmatprep.subr.mxu0 0.0
    %4516 = vmatpush1.msra.mxu0 %v76
    %4517 = vmatprep.subr.mxu0 0.0
    %4518 = vmatpush1.msra.mxu0 %v75
    %4519 = vmatprep.subr.mxu0 0.0
    %4520 = vmatpush2.msra.mxu0 0.0
    %4521 = vmatprep.subr.mxu0 0.0
    %4522 = vmatpush2.msra.mxu0 0.0
    %4523 = vmatprep.subr.mxu0 0.0
    %4524 = vmatpush2.msra.mxu0 0.0
    %4525 = vmatprep.subr.mxu0 0.0
    %4526 = vmatpush2.msra.mxu0 0.0
    %4527 = vmatprep.subr.mxu0 0.0
    %4528 = vmatpush2.msra.mxu0 0.0
    %4529 = vmatprep.subr.mxu0 0.0
    %4530 = vmatpush2.msra.mxu0 0.0
    %4531 = vmatprep.subr.mxu0 0.0
    %4532 = vmatpush2.msra.mxu0 0.0
    %4533 = vmatprep.subr.mxu0 0.0
    %4534 = vmatpush2.msra.mxu0 0.0
    %4535 = vmatprep.subr.mxu0 0.0
    %4536 = vmatpush2.msra.mxu0 0.0
    %4537 = vmatprep.subr.mxu0 0.0
    %4538 = vmatpush2.msra.mxu0 0.0
    %4539 = vmatprep.subr.mxu0 0.0
    %4540 = vmatpush2.msra.mxu0 0.0
    %4541 = vmatprep.subr.mxu0 0.0
    %4542 = vmatpush2.msra.mxu0 0.0
    %4543 = vmatprep.subr.mxu0 0.0
    %4544 = vmatpush2.msra.mxu0 0.0
    %4545 = vmatprep.subr.mxu0 0.0
    %4546 = vmatpush2.msra.mxu0 0.0
    %4547 = vmatprep.subr.mxu0 0.0
    %4548 = vmatpush2.msra.mxu0 0.0
    %4549 = vmatprep.subr.mxu0 0.0
    %4550 = vmatpush2.msra.mxu0 0.0
    %4551 = vmatprep.mubr.f32.mxu0 0.0
    %4552 = vmatmul.mubr.f32.gmra.mxu0 %v4485
    %v4553 = vpop.f32.mrf.mxu0
    %v4554 = vadd.f32 %v811, %v4553
    %v4555 = vpop.f32.mrf.mxu0
    %4556 = vdwg.mxu0
    %v4557 = vmul.f32 %v4483, %v4554
    %v4558 = vadd.f32 %v4557, %v4188
    %v4560 = vcombine.high %v4558, %v4558
    %v4562 = vunpack.c.l.s4 1966171168
    %v4563 = vunpack.c.0.s8 %v4562
    %v4564 = vlaneseq
    %v4565 = vshrl.u32 %v4564, 7
    %v4566 = vsub.s32 %v4563, %v4565
    %v4567 = vrot.slane %v4558, %v4566
    %v4569 = vunpack.c.l.s4 1966171168
    %v4570 = vunpack.c.0.s8 %v4569
    %v4571 = vlaneseq
    %v4572 = vshrl.u32 %v4571, 7
    %v4573 = vsub.s32 %v4570, %v4572
    %v4574 = vrot.slane %v4560, %v4573
    %v4575 = vcombine.high %v4567, %v4567
    %v4576 = vcombine.high %v4574, %v4574
    %v4578 = vunpack.c.l.s4 1966171168
    %v4579 = vunpack.c.0.s8 %v4578
    %v4580 = vlaneseq
    %v4581 = vshrl.u32 %v4580, 7
    %v4582 = vsub.s32 %v4579, %v4581
    %v4583 = vrot.slane %v4567, %v4582
    %v4585 = vunpack.c.l.s4 1966171168
    %v4586 = vunpack.c.0.s8 %v4585
    %v4587 = vlaneseq
    %v4588 = vshrl.u32 %v4587, 7
    %v4589 = vsub.s32 %v4586, %v4588
    %v4590 = vrot.slane %v4574, %v4589
    %v4592 = vunpack.c.l.s4 1966171168
    %v4593 = vunpack.c.0.s8 %v4592
    %v4594 = vlaneseq
    %v4595 = vshrl.u32 %v4594, 7
    %v4596 = vsub.s32 %v4593, %v4595
    %v4597 = vrot.slane %v4575, %v4596
    %v4599 = vunpack.c.l.s4 1966171168
    %v4600 = vunpack.c.0.s8 %v4599
    %v4601 = vlaneseq
    %v4602 = vshrl.u32 %v4601, 7
    %v4603 = vsub.s32 %v4600, %v4602
    %v4604 = vrot.slane %v4576, %v4603
    %v4605 = vcombine.high %v4583, %v4583
    %v4606 = vcombine.high %v4590, %v4590
    %v4607 = vcombine.high %v4597, %v4597
    %v4608 = vcombine.high %v4604, %v4604
    %4617 = vst.msk [vmem:[#allocation6 + $0x4] sm:$0x1] %vm947, %v4583
    %4618 = vst.msk [vmem:[#allocation6 + $0xc] sm:$0x1] %vm947, %v4597
    %4619 = vst.msk [vmem:[#allocation6 + $0x14] sm:$0x1] %vm947, %v4605
    %4620 = vst.msk [vmem:[#allocation6 + $0x1c] sm:$0x1] %vm947, %v4607
    %4621 = vst.msk [vmem:[#allocation6 + $0x24] sm:$0x1] %vm947, %v4590
    %4622 = vst.msk [vmem:[#allocation6 + $0x2c] sm:$0x1] %vm947, %v4604
    %4623 = vst.msk [vmem:[#allocation6 + $0x34] sm:$0x1] %vm947, %v4606
    %4624 = vst.msk [vmem:[#allocation6 + $0x3c] sm:$0x1] %vm947, %v4608
    %v4625 = vcombine.high %v4065, %v4065
    %v4627 = vunpack.c.l.s4 1966171168
    %v4628 = vunpack.c.0.s8 %v4627
    %v4629 = vlaneseq
    %v4630 = vshrl.u32 %v4629, 7
    %v4631 = vsub.s32 %v4628, %v4630
    %v4632 = vrot.slane %v4065, %v4631
    %v4634 = vunpack.c.l.s4 1966171168
    %v4635 = vunpack.c.0.s8 %v4634
    %v4636 = vlaneseq
    %v4637 = vshrl.u32 %v4636, 7
    %v4638 = vsub.s32 %v4635, %v4637
    %v4639 = vrot.slane %v4625, %v4638
    %v4640 = vcombine.high %v4632, %v4632
    %v4641 = vcombine.high %v4639, %v4639
    %v4643 = vunpack.c.l.s4 1966171168
    %v4644 = vunpack.c.0.s8 %v4643
    %v4645 = vlaneseq
    %v4646 = vshrl.u32 %v4645, 7
    %v4647 = vsub.s32 %v4644, %v4646
    %v4648 = vrot.slane %v4632, %v4647
    %v4650 = vunpack.c.l.s4 1966171168
    %v4651 = vunpack.c.0.s8 %v4650
    %v4652 = vlaneseq
    %v4653 = vshrl.u32 %v4652, 7
    %v4654 = vsub.s32 %v4651, %v4653
    %v4655 = vrot.slane %v4639, %v4654
    %v4657 = vunpack.c.l.s4 1966171168
    %v4658 = vunpack.c.0.s8 %v4657
    %v4659 = vlaneseq
    %v4660 = vshrl.u32 %v4659, 7
    %v4661 = vsub.s32 %v4658, %v4660
    %v4662 = vrot.slane %v4640, %v4661
    %v4664 = vunpack.c.l.s4 1966171168
    %v4665 = vunpack.c.0.s8 %v4664
    %v4666 = vlaneseq
    %v4667 = vshrl.u32 %v4666, 7
    %v4668 = vsub.s32 %v4665, %v4667
    %v4669 = vrot.slane %v4641, %v4668
    %v4670 = vcombine.high %v4648, %v4648
    %v4671 = vcombine.high %v4655, %v4655
    %v4672 = vcombine.high %v4662, %v4662
    %v4673 = vcombine.high %v4669, %v4669
    %v4674 = vlaneseq
    %v4675 = vshrl.u32 %v4674, 7
    %v4676 = vsub.s32 0, %v4675
    %v4677 = vrot.slane %v4648, %v4676
    %v4678 = vlaneseq
    %v4679 = vshrl.u32 %v4678, 7
    %v4680 = vsub.s32 0, %v4679
    %v4681 = vrot.slane %v4662, %v4680
    %v4682 = vlaneseq
    %v4683 = vshrl.u32 %v4682, 7
    %v4684 = vsub.s32 0, %v4683
    %v4685 = vrot.slane %v4670, %v4684
    %v4686 = vlaneseq
    %v4687 = vshrl.u32 %v4686, 7
    %v4688 = vsub.s32 0, %v4687
    %v4689 = vrot.slane %v4672, %v4688
    %v4690 = vlaneseq
    %v4691 = vshrl.u32 %v4690, 7
    %v4692 = vsub.s32 0, %v4691
    %v4693 = vrot.slane %v4655, %v4692
    %v4694 = vlaneseq
    %v4695 = vshrl.u32 %v4694, 7
    %v4696 = vsub.s32 0, %v4695
    %v4697 = vrot.slane %v4669, %v4696
    %v4698 = vlaneseq
    %v4699 = vshrl.u32 %v4698, 7
    %v4700 = vsub.s32 0, %v4699
    %v4701 = vrot.slane %v4671, %v4700
    %v4702 = vlaneseq
    %v4703 = vshrl.u32 %v4702, 7
    %v4704 = vsub.s32 0, %v4703
    %v4705 = vrot.slane %v4673, %v4704
    %4706 = vrot.lane.b32.xlu0 %v4677, 104
    %v4707 = vpop.permute.xlu0 %4706
    %4708 = vrot.lane.b32.xlu0 %v4681, 104
    %v4709 = vpop.permute.xlu0 %4708
    %4710 = vrot.lane.b32.xlu0 %v4685, 104
    %v4711 = vpop.permute.xlu0 %4710
    %4712 = vrot.lane.b32.xlu0 %v4689, 104
    %v4713 = vpop.permute.xlu0 %4712
    %4714 = vrot.lane.b32.xlu0 %v4693, 104
    %v4715 = vpop.permute.xlu0 %4714
    %4716 = vrot.lane.b32.xlu0 %v4697, 104
    %v4717 = vpop.permute.xlu0 %4716
    %4718 = vrot.lane.b32.xlu0 %v4701, 104
    %v4719 = vpop.permute.xlu0 %4718
    %4720 = vrot.lane.b32.xlu0 %v4705, 104
    %v4721 = vpop.permute.xlu0 %4720
    %4730 = vst.msk [vmem:[%s14 + $0x4] sm:$0x1] %vm1061, %v4707
    %4731 = vst.msk [vmem:[%s14 + $0xc] sm:$0x1] %vm1061, %v4709
    %4732 = vst.msk [vmem:[%s14 + $0x14] sm:$0x1] %vm1061, %v4711
    %4733 = vst.msk [vmem:[%s14 + $0x1c] sm:$0x1] %vm1061, %v4713
    %4734 = vst.msk [vmem:[%s14 + $0x24] sm:$0x1] %vm1061, %v4715
    %4735 = vst.msk [vmem:[%s14 + $0x2c] sm:$0x1] %vm1061, %v4717
    %4736 = vst.msk [vmem:[%s14 + $0x34] sm:$0x1] %vm1061, %v4719
    %4737 = vst.msk [vmem:[%s14 + $0x3c] sm:$0x1] %vm1061, %v4721
    %v4738 = vld [vmem:[%s0 + $0x5] sm:$0x1]
    %v4739 = vld [vmem:[%s0 + $0xd] sm:$0x1]
    %v4740 = vld [vmem:[%s0 + $0x15] sm:$0x1]
    %v4741 = vld [vmem:[%s0 + $0x1d] sm:$0x1]
    %v4742 = vld [vmem:[%s0 + $0x25] sm:$0x1]
    %v4743 = vld [vmem:[%s0 + $0x2d] sm:$0x1]
    %v4744 = vld [vmem:[%s0 + $0x35] sm:$0x1]
    %v4745 = vld [vmem:[%s0 + $0x3d] sm:$0x1]
    %v4746 = vld [vmem:[%s1 + $0x5] sm:$0x1]
    %v4747 = vld [vmem:[%s1 + $0xd] sm:$0x1]
    %v4748 = vld [vmem:[%s1 + $0x15] sm:$0x1]
    %v4749 = vld [vmem:[%s1 + $0x1d] sm:$0x1]
    %v4750 = vld [vmem:[%s1 + $0x25] sm:$0x1]
    %v4751 = vld [vmem:[%s1 + $0x2d] sm:$0x1]
    %v4752 = vld [vmem:[%s1 + $0x35] sm:$0x1]
    %v4753 = vld [vmem:[%s1 + $0x3d] sm:$0x1]
    %v4754 = vld [vmem:[#allocation3] sm:$0xff]
    %v4755 = vld [vmem:[#allocation2] sm:$0xff]
    %v4764 = vrot.slane %v4739, 7
    %v4765 = vsel %vm116, %v4764, %v4738
    %v4766 = vrot.slane %v4740, 6
    %v4767 = vsel %vm119, %v4766, %v4765
    %v4768 = vrot.slane %v4741, 5
    %v4769 = vsel %vm122, %v4768, %v4767
    %v4770 = vrot.slane %v4742, 4
    %v4771 = vsel %vm125, %v4770, %v4769
    %v4772 = vrot.slane %v4743, 3
    %v4773 = vsel %vm128, %v4772, %v4771
    %v4774 = vrot.slane %v4744, 2
    %v4775 = vsel %vm131, %v4774, %v4773
    %v4776 = vrot.slane %v4745, 1
    %v4777 = vsel %vm134, %v4776, %v4775
    %4780 = vrot.lane.b32.xlu0 %v4754, 16
    %v4781 = vpop.permute.xlu0 %4780
    %v4791 = vrot.slane %v4747, 7
    %v4792 = vsel %vm116, %v4791, %v4746
    %v4793 = vrot.slane %v4748, 6
    %v4794 = vsel %vm119, %v4793, %v4792
    %v4795 = vrot.slane %v4749, 5
    %v4796 = vsel %vm122, %v4795, %v4794
    %v4797 = vrot.slane %v4750, 4
    %v4798 = vsel %vm125, %v4797, %v4796
    %v4799 = vrot.slane %v4751, 3
    %v4800 = vsel %vm128, %v4799, %v4798
    %v4801 = vrot.slane %v4752, 2
    %v4802 = vsel %vm131, %v4801, %v4800
    %v4803 = vrot.slane %v4753, 1
    %v4804 = vsel %vm134, %v4803, %v4802
    %4805 = vrot.lane.b32.xlu0 %v4804, 40
    %v4806 = vpop.permute.xlu0 %4805
    %v4808 = vsel %vm166, %v4777, %v4781
    %v4809 = vsel %vm168, %v4808, %v4806
    %v4811 = vsel %vm176, %v4809, 0
    %4813 = vmatprep.subr.mxu0 0.0
    %4814 = vmatpush1.msra.mxu0 0.0
    %4815 = vmatprep.subr.mxu0 0.0
    %4816 = vmatpush1.msra.mxu0 0.0
    %4817 = vmatprep.subr.mxu0 0.0
    %4818 = vmatpush1.msra.mxu0 0.0
    %4819 = vmatprep.subr.mxu0 0.0
    %4820 = vmatpush1.msra.mxu0 0.0
    %4821 = vmatprep.subr.mxu0 0.0
    %4822 = vmatpush1.msra.mxu0 0.0
    %4823 = vmatprep.subr.mxu0 0.0
    %4824 = vmatpush1.msra.mxu0 0.0
    %4825 = vmatprep.subr.mxu0 0.0
    %4826 = vmatpush1.msra.mxu0 0.0
    %4827 = vmatprep.subr.mxu0 0.0
    %4828 = vmatpush1.msra.mxu0 0.0
    %4829 = vmatprep.subr.mxu0 0.0
    %4830 = vmatpush1.msra.mxu0 0.0
    %4831 = vmatprep.subr.mxu0 0.0
    %4832 = vmatpush1.msra.mxu0 0.0
    %4833 = vmatprep.subr.mxu0 0.0
    %4834 = vmatpush1.msra.mxu0 %v182
    %4835 = vmatprep.subr.mxu0 0.0
    %4836 = vmatpush1.msra.mxu0 %v64
    %4837 = vmatprep.subr.mxu0 0.0
    %4838 = vmatpush1.msra.mxu0 %v63
    %4839 = vmatprep.subr.mxu0 0.0
    %4840 = vmatpush1.msra.mxu0 %v62
    %4841 = vmatprep.subr.mxu0 0.0
    %4842 = vmatpush1.msra.mxu0 %v61
    %4843 = vmatprep.subr.mxu0 0.0
    %4844 = vmatpush1.msra.mxu0 %v60
    %4845 = vmatprep.subr.mxu0 0.0
    %4846 = vmatpush2.msra.mxu0 0.0
    %4847 = vmatprep.subr.mxu0 0.0
    %4848 = vmatpush2.msra.mxu0 0.0
    %4849 = vmatprep.subr.mxu0 0.0
    %4850 = vmatpush2.msra.mxu0 0.0
    %4851 = vmatprep.subr.mxu0 0.0
    %4852 = vmatpush2.msra.mxu0 0.0
    %4853 = vmatprep.subr.mxu0 0.0
    %4854 = vmatpush2.msra.mxu0 0.0
    %4855 = vmatprep.subr.mxu0 0.0
    %4856 = vmatpush2.msra.mxu0 0.0
    %4857 = vmatprep.subr.mxu0 0.0
    %4858 = vmatpush2.msra.mxu0 0.0
    %4859 = vmatprep.subr.mxu0 0.0
    %4860 = vmatpush2.msra.mxu0 0.0
    %4861 = vmatprep.subr.mxu0 0.0
    %4862 = vmatpush2.msra.mxu0 0.0
    %4863 = vmatprep.subr.mxu0 0.0
    %4864 = vmatpush2.msra.mxu0 0.0
    %4865 = vmatprep.subr.mxu0 0.0
    %4866 = vmatpush2.msra.mxu0 0.0
    %4867 = vmatprep.subr.mxu0 0.0
    %4868 = vmatpush2.msra.mxu0 0.0
    %4869 = vmatprep.subr.mxu0 0.0
    %4870 = vmatpush2.msra.mxu0 0.0
    %4871 = vmatprep.subr.mxu0 0.0
    %4872 = vmatpush2.msra.mxu0 0.0
    %4873 = vmatprep.subr.mxu0 0.0
    %4874 = vmatpush2.msra.mxu0 0.0
    %4875 = vmatprep.subr.mxu0 0.0
    %4876 = vmatpush2.msra.mxu0 0.0
    %4877 = vmatprep.mubr.f32.mxu0 0.0
    %4878 = vmatmul.mubr.f32.gmra.mxu0 %v4811
    %v4879 = vpop.f32.mrf.mxu0
    %v4880 = vadd.f32 %v174, %v4879
    %v4881 = vpop.f32.mrf.mxu0
    %4882 = vdwg.mxu0
    %v4883 = vsel %vm254, %v4880, -inf
    %4884 = vmax.xlane.f32.xlu0 %v4883
    %v4885 = vpop.xlane.xlu0 %4884
    %v4886 = vsub.f32 %v4880, %v4885
    %v4887 = vmul.f32 %v4886, 1.442695
    %v4888 = vpow.pop %v4887
    %v4889 = vsel %vm254, %v4888, 0.0
    %4890 = vadd.xlane.f32.xlu0 %v4889
    %v4891 = vpop.xlane.xlu0 %4890
    %v4892 = vrcp.pop %v4891
    %v4893 = vmul.f32 %v4888, %v4892
    %v4894 = vsel %vm266, %v4880, -inf
    %4895 = vmax.xlane.f32.xlu0 %v4894
    %v4896 = vpop.xlane.xlu0 %4895
    %v4897 = vsub.f32 %v4880, %v4896
    %v4898 = vmul.f32 %v4897, 1.442695
    %v4899 = vpow.pop %v4898
    %4901 = vrot.lane.b32.xlu0 %v4899, 125
    %v4902 = vpop.permute.xlu0 %4901
    %v4904 = vsel %vm254, %v4902, 0.0
    %4905 = vadd.xlane.f32.xlu0 %v4904
    %v4906 = vpop.xlane.xlu0 %4905
    %v4907 = vrcp.pop %v4906
    %v4908 = vmul.f32 %v4899, %v4907
    %v4910 = vsel %vm254, %v4893, 0
    %4912 = vmatprep.subr.mxu0 0.0
    %4913 = vmatpush1.msra.mxu0 0.0
    %4914 = vmatprep.subr.mxu0 0.0
    %4915 = vmatpush1.msra.mxu0 0.0
    %4916 = vmatprep.subr.mxu0 0.0
    %4917 = vmatpush1.msra.mxu0 0.0
    %4918 = vmatprep.subr.mxu0 0.0
    %4919 = vmatpush1.msra.mxu0 0.0
    %4920 = vmatprep.subr.mxu0 0.0
    %4921 = vmatpush1.msra.mxu0 0.0
    %4922 = vmatprep.subr.mxu0 0.0
    %4923 = vmatpush1.msra.mxu0 0.0
    %4924 = vmatprep.subr.mxu0 0.0
    %4925 = vmatpush1.msra.mxu0 0.0
    %4926 = vmatprep.subr.mxu0 0.0
    %4927 = vmatpush1.msra.mxu0 0.0
    %4928 = vmatprep.subr.mxu0 0.0
    %4929 = vmatpush1.msra.mxu0 0.0
    %4930 = vmatprep.subr.mxu0 0.0
    %4931 = vmatpush1.msra.mxu0 0.0
    %4932 = vmatprep.subr.mxu0 0.0
    %4933 = vmatpush1.msra.mxu0 0.0
    %4934 = vmatprep.subr.mxu0 0.0
    %4935 = vmatpush1.msra.mxu0 0.0
    %4936 = vmatprep.subr.mxu0 0.0
    %4937 = vmatpush1.msra.mxu0 0.0
    %4938 = vmatprep.subr.mxu0 0.0
    %4939 = vmatpush1.msra.mxu0 0.0
    %4940 = vmatprep.subr.mxu0 0.0
    %4941 = vmatpush1.msra.mxu0 0.0
    %4942 = vmatprep.subr.mxu0 0.0
    %4943 = vmatpush1.msra.mxu0 %v287
    %4944 = vmatprep.subr.mxu0 0.0
    %4945 = vmatpush2.msra.mxu0 0.0
    %4946 = vmatprep.subr.mxu0 0.0
    %4947 = vmatpush2.msra.mxu0 0.0
    %4948 = vmatprep.subr.mxu0 0.0
    %4949 = vmatpush2.msra.mxu0 0.0
    %4950 = vmatprep.subr.mxu0 0.0
    %4951 = vmatpush2.msra.mxu0 0.0
    %4952 = vmatprep.subr.mxu0 0.0
    %4953 = vmatpush2.msra.mxu0 0.0
    %4954 = vmatprep.subr.mxu0 0.0
    %4955 = vmatpush2.msra.mxu0 0.0
    %4956 = vmatprep.subr.mxu0 0.0
    %4957 = vmatpush2.msra.mxu0 0.0
    %4958 = vmatprep.subr.mxu0 0.0
    %4959 = vmatpush2.msra.mxu0 0.0
    %4960 = vmatprep.subr.mxu0 0.0
    %4961 = vmatpush2.msra.mxu0 0.0
    %4962 = vmatprep.subr.mxu0 0.0
    %4963 = vmatpush2.msra.mxu0 0.0
    %4964 = vmatprep.subr.mxu0 0.0
    %4965 = vmatpush2.msra.mxu0 0.0
    %4966 = vmatprep.subr.mxu0 0.0
    %4967 = vmatpush2.msra.mxu0 0.0
    %4968 = vmatprep.subr.mxu0 0.0
    %4969 = vmatpush2.msra.mxu0 0.0
    %4970 = vmatprep.subr.mxu0 0.0
    %4971 = vmatpush2.msra.mxu0 0.0
    %4972 = vmatprep.subr.mxu0 0.0
    %4973 = vmatpush2.msra.mxu0 0.0
    %4974 = vmatprep.subr.mxu0 0.0
    %4975 = vmatpush2.msra.mxu0 0.0
    %4976 = vmatprep.mubr.f32.mxu0 0.0
    %4977 = vmatmul.mubr.f32.gmra.mxu0 %v4910
    %v4978 = vpop.f32.mrf.mxu0
    %v4979 = vadd.f32 0.0, %v4978
    %v4980 = vpop.f32.mrf.mxu0
    %4981 = vdwg.mxu0
    %v4982 = vsub.f32 1.0, %v4979
    %4984 = vrot.lane.b32.xlu0 %v4908, 125
    %v4985 = vpop.permute.xlu0 %4984
    %v4986 = vsel %vm254, %v4985, 0
    %4988 = vmatprep.subr.mxu0 0.0
    %4989 = vmatpush1.msra.mxu0 0.0
    %4990 = vmatprep.subr.mxu0 0.0
    %4991 = vmatpush1.msra.mxu0 0.0
    %4992 = vmatprep.subr.mxu0 0.0
    %4993 = vmatpush1.msra.mxu0 0.0
    %4994 = vmatprep.subr.mxu0 0.0
    %4995 = vmatpush1.msra.mxu0 0.0
    %4996 = vmatprep.subr.mxu0 0.0
    %4997 = vmatpush1.msra.mxu0 0.0
    %4998 = vmatprep.subr.mxu0 0.0
    %4999 = vmatpush1.msra.mxu0 0.0
    %5000 = vmatprep.subr.mxu0 0.0
    %5001 = vmatpush1.msra.mxu0 0.0
    %5002 = vmatprep.subr.mxu0 0.0
    %5003 = vmatpush1.msra.mxu0 0.0
    %5004 = vmatprep.subr.mxu0 0.0
    %5005 = vmatpush1.msra.mxu0 0.0
    %5006 = vmatprep.subr.mxu0 0.0
    %5007 = vmatpush1.msra.mxu0 0.0
    %5008 = vmatprep.subr.mxu0 0.0
    %5009 = vmatpush1.msra.mxu0 0.0
    %5010 = vmatprep.subr.mxu0 0.0
    %5011 = vmatpush1.msra.mxu0 0.0
    %5012 = vmatprep.subr.mxu0 0.0
    %5013 = vmatpush1.msra.mxu0 0.0
    %5014 = vmatprep.subr.mxu0 0.0
    %5015 = vmatpush1.msra.mxu0 0.0
    %5016 = vmatprep.subr.mxu0 0.0
    %5017 = vmatpush1.msra.mxu0 0.0
    %5018 = vmatprep.subr.mxu0 0.0
    %5019 = vmatpush1.msra.mxu0 %v366
    %5020 = vmatprep.subr.mxu0 0.0
    %5021 = vmatpush2.msra.mxu0 0.0
    %5022 = vmatprep.subr.mxu0 0.0
    %5023 = vmatpush2.msra.mxu0 0.0
    %5024 = vmatprep.subr.mxu0 0.0
    %5025 = vmatpush2.msra.mxu0 0.0
    %5026 = vmatprep.subr.mxu0 0.0
    %5027 = vmatpush2.msra.mxu0 0.0
    %5028 = vmatprep.subr.mxu0 0.0
    %5029 = vmatpush2.msra.mxu0 0.0
    %5030 = vmatprep.subr.mxu0 0.0
    %5031 = vmatpush2.msra.mxu0 0.0
    %5032 = vmatprep.subr.mxu0 0.0
    %5033 = vmatpush2.msra.mxu0 0.0
    %5034 = vmatprep.subr.mxu0 0.0
    %5035 = vmatpush2.msra.mxu0 0.0
    %5036 = vmatprep.subr.mxu0 0.0
    %5037 = vmatpush2.msra.mxu0 0.0
    %5038 = vmatprep.subr.mxu0 0.0
    %5039 = vmatpush2.msra.mxu0 0.0
    %5040 = vmatprep.subr.mxu0 0.0
    %5041 = vmatpush2.msra.mxu0 0.0
    %5042 = vmatprep.subr.mxu0 0.0
    %5043 = vmatpush2.msra.mxu0 0.0
    %5044 = vmatprep.subr.mxu0 0.0
    %5045 = vmatpush2.msra.mxu0 0.0
    %5046 = vmatprep.subr.mxu0 0.0
    %5047 = vmatpush2.msra.mxu0 0.0
    %5048 = vmatprep.subr.mxu0 0.0
    %5049 = vmatpush2.msra.mxu0 0.0
    %5050 = vmatprep.subr.mxu0 0.0
    %5051 = vmatpush2.msra.mxu0 0.0
    %5052 = vmatprep.mubr.f32.mxu0 0.0
    %5053 = vmatmul.mubr.f32.gmra.mxu0 %v4986
    %v5054 = vpop.f32.mrf.mxu0
    %v5055 = vadd.f32 0.0, %v5054
    %v5056 = vpop.f32.mrf.mxu0
    %5057 = vdwg.mxu0
    %v5058 = vsub.f32 1.0, %v5055
    %v5059 = vxor.u32 %v4880, 2147483648
    %v5060 = vmul.f32 %v5059, 1.442695
    %v5061 = vpow.pop %v5060
    %v5062 = vadd.f32 %v5061, 1.0
    %v5063 = vrcp.pop %v5062
    %v5064 = vmul.f32 1.0, %v5063
    %v5065 = vtanh.pop %v4880
    %v5066 = vmul.f32 %v4979, %v5058
    %5068 = vrot.lane.b32.xlu0 %v4755, 6
    %v5069 = vpop.permute.xlu0 %5068
    %v5071 = vmul.f32 %v5064, %v5069
    %5073 = vrot.lane.b32.xlu0 %v5065, 80
    %v5074 = vpop.permute.xlu0 %5073
    %v5076 = vmul.f32 %v5064, %v5074
    %5078 = vrot.lane.b32.xlu0 %v5076, 104
    %v5079 = vpop.permute.xlu0 %5078
    %v5081 = vadd.f32 %v5071, %v5079
    %5083 = vrot.lane.b32.xlu0 %v5081, 122
    %v5084 = vpop.permute.xlu0 %5083
    %v5086 = vmul.f32 %v5066, %v5084
    %v5087 = vsub.f32 %v4979, %v5066
    %v5088 = vmul.f32 %v5087, %v4755
    %v5089 = vadd.f32 %v5086, %v5088
    %v5090 = vsub.f32 %v5058, %v5066
    %5091 = vrot.lane.b32.xlu0 %v5065, 50
    %v5092 = vpop.permute.xlu0 %5091
    %v5094 = vmul.f32 %v5090, %v5092
    %v5095 = vadd.f32 %v5089, %v5094
    %v5096 = vtanh.pop %v5095
    %5098 = vrot.lane.b32.xlu0 %v5096, 54
    %v5099 = vpop.permute.xlu0 %5098
    %v5101 = vmul.f32 %v5064, %v5099
    %5102 = vst.msk [vmem:[#allocation2] sm:$0xff] %vm482, %v5095
    %5104 = vrot.lane.b32.xlu0 %v5101, 74
    %v5105 = vpop.permute.xlu0 %5104
    %5107 = vst.msk [vmem:[#allocation3] sm:$0xff] %vm482, %v5105
    %5108 = vst.msk [vmem:[%s590] sm:$0xff] %vm482, %v5105
    %v5109 = vld [vmem:[#allocation5] sm:$0xff]
    %5111 = vrot.lane.b32.xlu0 %v5109, 127
    %v5112 = vpop.permute.xlu0 %5111
    %5115 = vrot.lane.b32.xlu0 %v4982, 107
    %v5116 = vpop.permute.xlu0 %5115
    %v5118 = vsel %vm254, %v5112, %v5116
    %5119 = vst.msk [vmem:[#allocation5] sm:$0xff] %vm500, %v5118
    %v5121 = vsel %vm500, %v5118, 0
    %5123 = vmatprep.subr.mxu0 0.0
    %5124 = vmatpush1.msra.mxu0 0.0
    %5125 = vmatprep.subr.mxu0 0.0
    %5126 = vmatpush1.msra.mxu0 0.0
    %5127 = vmatprep.subr.mxu0 0.0
    %5128 = vmatpush1.msra.mxu0 0.0
    %5129 = vmatprep.subr.mxu0 0.0
    %5130 = vmatpush1.msra.mxu0 0.0
    %5131 = vmatprep.subr.mxu0 0.0
    %5132 = vmatpush1.msra.mxu0 0.0
    %5133 = vmatprep.subr.mxu0 0.0
    %5134 = vmatpush1.msra.mxu0 0.0
    %5135 = vmatprep.subr.mxu0 0.0
    %5136 = vmatpush1.msra.mxu0 0.0
    %5137 = vmatprep.subr.mxu0 0.0
    %5138 = vmatpush1.msra.mxu0 0.0
    %5139 = vmatprep.subr.mxu0 0.0
    %5140 = vmatpush1.msra.mxu0 0.0
    %5141 = vmatprep.subr.mxu0 0.0
    %5142 = vmatpush1.msra.mxu0 0.0
    %5143 = vmatprep.subr.mxu0 0.0
    %5144 = vmatpush1.msra.mxu0 0.0
    %5145 = vmatprep.subr.mxu0 0.0
    %5146 = vmatpush1.msra.mxu0 0.0
    %5147 = vmatprep.subr.mxu0 0.0
    %5148 = vmatpush1.msra.mxu0 0.0
    %5149 = vmatprep.subr.mxu0 0.0
    %5150 = vmatpush1.msra.mxu0 0.0
    %5151 = vmatprep.subr.mxu0 0.0
    %5152 = vmatpush1.msra.mxu0 0.0
    %5153 = vmatprep.subr.mxu0 0.0
    %5154 = vmatpush1.msra.mxu0 %v507
    %5155 = vmatprep.subr.mxu0 0.0
    %5156 = vmatpush2.msra.mxu0 0.0
    %5157 = vmatprep.subr.mxu0 0.0
    %5158 = vmatpush2.msra.mxu0 0.0
    %5159 = vmatprep.subr.mxu0 0.0
    %5160 = vmatpush2.msra.mxu0 0.0
    %5161 = vmatprep.subr.mxu0 0.0
    %5162 = vmatpush2.msra.mxu0 0.0
    %5163 = vmatprep.subr.mxu0 0.0
    %5164 = vmatpush2.msra.mxu0 0.0
    %5165 = vmatprep.subr.mxu0 0.0
    %5166 = vmatpush2.msra.mxu0 0.0
    %5167 = vmatprep.subr.mxu0 0.0
    %5168 = vmatpush2.msra.mxu0 0.0
    %5169 = vmatprep.subr.mxu0 0.0
    %5170 = vmatpush2.msra.mxu0 0.0
    %5171 = vmatprep.subr.mxu0 0.0
    %5172 = vmatpush2.msra.mxu0 0.0
    %5173 = vmatprep.subr.mxu0 0.0
    %5174 = vmatpush2.msra.mxu0 0.0
    %5175 = vmatprep.subr.mxu0 0.0
    %5176 = vmatpush2.msra.mxu0 0.0
    %5177 = vmatprep.subr.mxu0 0.0
    %5178 = vmatpush2.msra.mxu0 0.0
    %5179 = vmatprep.subr.mxu0 0.0
    %5180 = vmatpush2.msra.mxu0 0.0
    %5181 = vmatprep.subr.mxu0 0.0
    %5182 = vmatpush2.msra.mxu0 0.0
    %5183 = vmatprep.subr.mxu0 0.0
    %5184 = vmatpush2.msra.mxu0 0.0
    %5185 = vmatprep.subr.mxu0 0.0
    %5186 = vmatpush2.msra.mxu0 0.0
    %5187 = vmatprep.mubr.f32.mxu0 0.0
    %5188 = vmatmul.mubr.f32.gmra.mxu0 %v5121
    %v5189 = vpop.f32.mrf.mxu0
    %v5190 = vadd.f32 0.0, %v5189
    %v5191 = vpop.f32.mrf.mxu0
    %5192 = vdwg.mxu0
    %v5193 = vsel %vm500, %v5190, -inf
    %5194 = vmax.xlane.f32.xlu0 %v5193
    %v5195 = vpop.xlane.xlu0 %5194
    %v5196 = vsub.f32 %v5190, %v5195
    %v5197 = vmul.f32 %v5196, 1.442695
    %v5198 = vpow.pop %v5197
    %v5199 = vsel %vm500, %v5198, 0.0
    %5200 = vadd.xlane.f32.xlu0 %v5199
    %v5201 = vpop.xlane.xlu0 %5200
    %v5202 = vrcp.pop %v5201
    %v5203 = vmul.f32 %v5198, %v5202
    %v5204 = vld [vmem:[%s598] sm:$0xff]
    %5206 = vset.pattern.permute.xlu0 0
    %5207 = vperm.xlu0 %5206, %v5203
    %v5208 = vpop.permute.xlu0 %5207
    %v5210 = vmul.f32 %v5204, %v5208
    %v5211 = vld [vmem:[%s605] sm:$0xff]
    %5212 = vset.pattern.permute.xlu0 1
    %5213 = vperm.xlu0 %5212, %v5203
    %v5214 = vpop.permute.xlu0 %5213
    %v5216 = vmul.f32 %v5211, %v5214
    %v5217 = vld [vmem:[#allocation4] sm:$0xff]
    %5218 = vset.pattern.permute.xlu0 2
    %5219 = vperm.xlu0 %5218, %v5203
    %v5220 = vpop.permute.xlu0 %5219
    %v5222 = vmul.f32 %v5217, %v5220
    %v5223 = vld [vmem:[%s590] sm:$0xff]
    %5224 = vset.pattern.permute.xlu0 3
    %5225 = vperm.xlu0 %5224, %v5203
    %v5226 = vpop.permute.xlu0 %5225
    %v5228 = vmul.f32 %v5223, %v5226
    %v5229 = vadd.f32 %v5210, %v5216
    %v5230 = vadd.f32 %v5229, %v5222
    %v5231 = vadd.f32 %v5230, %v5228
    %v5232 = vmul.f32 %v5231, 0.25
    %5234 = vrot.lane.b32.xlu0 %v5216, 24
    %v5235 = vpop.permute.xlu0 %5234
    %5238 = vrot.lane.b32.xlu0 %v5222, 48
    %v5239 = vpop.permute.xlu0 %5238
    %5242 = vrot.lane.b32.xlu0 %v5228, 72
    %v5243 = vpop.permute.xlu0 %5242
    %v5245 = vsel %vm482, %v5210, %v5235
    %v5246 = vsel %vm635, %v5245, %v5239
    %v5247 = vsel %vm637, %v5246, %v5243
    %v5249 = vsel %vm482, %v5232, 0
    %5251 = vmatprep.subr.mxu0 0.0
    %5252 = vmatpush1.msra.mxu0 0.0
    %5253 = vmatprep.subr.mxu0 0.0
    %5254 = vmatpush1.msra.mxu0 0.0
    %5255 = vmatprep.subr.mxu0 0.0
    %5256 = vmatpush1.msra.mxu0 0.0
    %5257 = vmatprep.subr.mxu0 0.0
    %5258 = vmatpush1.msra.mxu0 0.0
    %5259 = vmatprep.subr.mxu0 0.0
    %5260 = vmatpush1.msra.mxu0 0.0
    %5261 = vmatprep.subr.mxu0 0.0
    %5262 = vmatpush1.msra.mxu0 0.0
    %5263 = vmatprep.subr.mxu0 0.0
    %5264 = vmatpush1.msra.mxu0 0.0
    %5265 = vmatprep.subr.mxu0 0.0
    %5266 = vmatpush1.msra.mxu0 0.0
    %5267 = vmatprep.subr.mxu0 0.0
    %5268 = vmatpush1.msra.mxu0 0.0
    %5269 = vmatprep.subr.mxu0 0.0
    %5270 = vmatpush1.msra.mxu0 0.0
    %5271 = vmatprep.subr.mxu0 0.0
    %5272 = vmatpush1.msra.mxu0 0.0
    %5273 = vmatprep.subr.mxu0 0.0
    %5274 = vmatpush1.msra.mxu0 0.0
    %5275 = vmatprep.subr.mxu0 0.0
    %5276 = vmatpush1.msra.mxu0 0.0
    %5277 = vmatprep.subr.mxu0 0.0
    %5278 = vmatpush1.msra.mxu0 %v71
    %5279 = vmatprep.subr.mxu0 0.0
    %5280 = vmatpush1.msra.mxu0 %v70
    %5281 = vmatprep.subr.mxu0 0.0
    %5282 = vmatpush1.msra.mxu0 %v69
    %5283 = vmatprep.subr.mxu0 0.0
    %5284 = vmatpush2.msra.mxu0 0.0
    %5285 = vmatprep.subr.mxu0 0.0
    %5286 = vmatpush2.msra.mxu0 0.0
    %5287 = vmatprep.subr.mxu0 0.0
    %5288 = vmatpush2.msra.mxu0 0.0
    %5289 = vmatprep.subr.mxu0 0.0
    %5290 = vmatpush2.msra.mxu0 0.0
    %5291 = vmatprep.subr.mxu0 0.0
    %5292 = vmatpush2.msra.mxu0 0.0
    %5293 = vmatprep.subr.mxu0 0.0
    %5294 = vmatpush2.msra.mxu0 0.0
    %5295 = vmatprep.subr.mxu0 0.0
    %5296 = vmatpush2.msra.mxu0 0.0
    %5297 = vmatprep.subr.mxu0 0.0
    %5298 = vmatpush2.msra.mxu0 0.0
    %5299 = vmatprep.subr.mxu0 0.0
    %5300 = vmatpush2.msra.mxu0 0.0
    %5301 = vmatprep.subr.mxu0 0.0
    %5302 = vmatpush2.msra.mxu0 0.0
    %5303 = vmatprep.subr.mxu0 0.0
    %5304 = vmatpush2.msra.mxu0 0.0
    %5305 = vmatprep.subr.mxu0 0.0
    %5306 = vmatpush2.msra.mxu0 0.0
    %5307 = vmatprep.subr.mxu0 0.0
    %5308 = vmatpush2.msra.mxu0 0.0
    %5309 = vmatprep.subr.mxu0 0.0
    %5310 = vmatpush2.msra.mxu0 0.0
    %5311 = vmatprep.subr.mxu0 0.0
    %5312 = vmatpush2.msra.mxu0 0.0
    %5313 = vmatprep.subr.mxu0 0.0
    %5314 = vmatpush2.msra.mxu0 0.0
    %5315 = vmatprep.mubr.f32.mxu0 0.0
    %5316 = vmatmul.mubr.f32.gmra.mxu0 %v5249
    %v5317 = vpop.f32.mrf.mxu0
    %v5318 = vadd.f32 %v643, %v5317
    %v5319 = vpop.f32.mrf.mxu0
    %5320 = vdwg.mxu0
    %v5321 = vmax.f32 %v5318, 0.0
    %v5323 = vsel %vm500, %v5321, 0
    %5325 = vmatprep.subr.mxu0 0.0
    %5326 = vmatpush1.msra.mxu0 0.0
    %5327 = vmatprep.subr.mxu0 0.0
    %5328 = vmatpush1.msra.mxu0 0.0
    %5329 = vmatprep.subr.mxu0 0.0
    %5330 = vmatpush1.msra.mxu0 0.0
    %5331 = vmatprep.subr.mxu0 0.0
    %5332 = vmatpush1.msra.mxu0 0.0
    %5333 = vmatprep.subr.mxu0 0.0
    %5334 = vmatpush1.msra.mxu0 0.0
    %5335 = vmatprep.subr.mxu0 0.0
    %5336 = vmatpush1.msra.mxu0 0.0
    %5337 = vmatprep.subr.mxu0 0.0
    %5338 = vmatpush1.msra.mxu0 0.0
    %5339 = vmatprep.subr.mxu0 0.0
    %5340 = vmatpush1.msra.mxu0 0.0
    %5341 = vmatprep.subr.mxu0 0.0
    %5342 = vmatpush1.msra.mxu0 0.0
    %5343 = vmatprep.subr.mxu0 0.0
    %5344 = vmatpush1.msra.mxu0 0.0
    %5345 = vmatprep.subr.mxu0 0.0
    %5346 = vmatpush1.msra.mxu0 0.0
    %5347 = vmatprep.subr.mxu0 0.0
    %5348 = vmatpush1.msra.mxu0 0.0
    %5349 = vmatprep.subr.mxu0 0.0
    %5350 = vmatpush1.msra.mxu0 0.0
    %5351 = vmatprep.subr.mxu0 0.0
    %5352 = vmatpush1.msra.mxu0 0.0
    %5353 = vmatprep.subr.mxu0 0.0
    %5354 = vmatpush1.msra.mxu0 0.0
    %5355 = vmatprep.subr.mxu0 0.0
    %5356 = vmatpush1.msra.mxu0 %v729
    %5357 = vmatprep.subr.mxu0 0.0
    %5358 = vmatpush2.msra.mxu0 0.0
    %5359 = vmatprep.subr.mxu0 0.0
    %5360 = vmatpush2.msra.mxu0 0.0
    %5361 = vmatprep.subr.mxu0 0.0
    %5362 = vmatpush2.msra.mxu0 0.0
    %5363 = vmatprep.subr.mxu0 0.0
    %5364 = vmatpush2.msra.mxu0 0.0
    %5365 = vmatprep.subr.mxu0 0.0
    %5366 = vmatpush2.msra.mxu0 0.0
    %5367 = vmatprep.subr.mxu0 0.0
    %5368 = vmatpush2.msra.mxu0 0.0
    %5369 = vmatprep.subr.mxu0 0.0
    %5370 = vmatpush2.msra.mxu0 0.0
    %5371 = vmatprep.subr.mxu0 0.0
    %5372 = vmatpush2.msra.mxu0 0.0
    %5373 = vmatprep.subr.mxu0 0.0
    %5374 = vmatpush2.msra.mxu0 0.0
    %5375 = vmatprep.subr.mxu0 0.0
    %5376 = vmatpush2.msra.mxu0 0.0
    %5377 = vmatprep.subr.mxu0 0.0
    %5378 = vmatpush2.msra.mxu0 0.0
    %5379 = vmatprep.subr.mxu0 0.0
    %5380 = vmatpush2.msra.mxu0 0.0
    %5381 = vmatprep.subr.mxu0 0.0
    %5382 = vmatpush2.msra.mxu0 0.0
    %5383 = vmatprep.subr.mxu0 0.0
    %5384 = vmatpush2.msra.mxu0 0.0
    %5385 = vmatprep.subr.mxu0 0.0
    %5386 = vmatpush2.msra.mxu0 0.0
    %5387 = vmatprep.subr.mxu0 0.0
    %5388 = vmatpush2.msra.mxu0 0.0
    %5389 = vmatprep.mubr.f32.mxu0 0.0
    %5390 = vmatmul.mubr.f32.gmra.mxu0 %v5323
    %v5391 = vpop.f32.mrf.mxu0
    %v5392 = vadd.f32 %v723, %v5391
    %v5393 = vpop.f32.mrf.mxu0
    %5394 = vdwg.mxu0
    %v5395 = vxor.u32 %v5392, 2147483648
    %v5396 = vmul.f32 %v5395, 1.442695
    %v5397 = vpow.pop %v5396
    %v5398 = vadd.f32 %v5397, 1.0
    %v5399 = vrcp.pop %v5398
    %v5400 = vmul.f32 1.0, %v5399
    %v5402 = vsel %vm813, %v5247, 0
    %5404 = vmatprep.subr.mxu0 0.0
    %5405 = vmatpush1.msra.mxu0 0.0
    %5406 = vmatprep.subr.mxu0 0.0
    %5407 = vmatpush1.msra.mxu0 0.0
    %5408 = vmatprep.subr.mxu0 0.0
    %5409 = vmatpush1.msra.mxu0 0.0
    %5410 = vmatprep.subr.mxu0 0.0
    %5411 = vmatpush1.msra.mxu0 0.0
    %5412 = vmatprep.subr.mxu0 0.0
    %5413 = vmatpush1.msra.mxu0 %v86
    %5414 = vmatprep.subr.mxu0 0.0
    %5415 = vmatpush1.msra.mxu0 %v85
    %5416 = vmatprep.subr.mxu0 0.0
    %5417 = vmatpush1.msra.mxu0 %v84
    %5418 = vmatprep.subr.mxu0 0.0
    %5419 = vmatpush1.msra.mxu0 %v83
    %5420 = vmatprep.subr.mxu0 0.0
    %5421 = vmatpush1.msra.mxu0 %v82
    %5422 = vmatprep.subr.mxu0 0.0
    %5423 = vmatpush1.msra.mxu0 %v81
    %5424 = vmatprep.subr.mxu0 0.0
    %5425 = vmatpush1.msra.mxu0 %v80
    %5426 = vmatprep.subr.mxu0 0.0
    %5427 = vmatpush1.msra.mxu0 %v79
    %5428 = vmatprep.subr.mxu0 0.0
    %5429 = vmatpush1.msra.mxu0 %v78
    %5430 = vmatprep.subr.mxu0 0.0
    %5431 = vmatpush1.msra.mxu0 %v77
    %5432 = vmatprep.subr.mxu0 0.0
    %5433 = vmatpush1.msra.mxu0 %v76
    %5434 = vmatprep.subr.mxu0 0.0
    %5435 = vmatpush1.msra.mxu0 %v75
    %5436 = vmatprep.subr.mxu0 0.0
    %5437 = vmatpush2.msra.mxu0 0.0
    %5438 = vmatprep.subr.mxu0 0.0
    %5439 = vmatpush2.msra.mxu0 0.0
    %5440 = vmatprep.subr.mxu0 0.0
    %5441 = vmatpush2.msra.mxu0 0.0
    %5442 = vmatprep.subr.mxu0 0.0
    %5443 = vmatpush2.msra.mxu0 0.0
    %5444 = vmatprep.subr.mxu0 0.0
    %5445 = vmatpush2.msra.mxu0 0.0
    %5446 = vmatprep.subr.mxu0 0.0
    %5447 = vmatpush2.msra.mxu0 0.0
    %5448 = vmatprep.subr.mxu0 0.0
    %5449 = vmatpush2.msra.mxu0 0.0
    %5450 = vmatprep.subr.mxu0 0.0
    %5451 = vmatpush2.msra.mxu0 0.0
    %5452 = vmatprep.subr.mxu0 0.0
    %5453 = vmatpush2.msra.mxu0 0.0
    %5454 = vmatprep.subr.mxu0 0.0
    %5455 = vmatpush2.msra.mxu0 0.0
    %5456 = vmatprep.subr.mxu0 0.0
    %5457 = vmatpush2.msra.mxu0 0.0
    %5458 = vmatprep.subr.mxu0 0.0
    %5459 = vmatpush2.msra.mxu0 0.0
    %5460 = vmatprep.subr.mxu0 0.0
    %5461 = vmatpush2.msra.mxu0 0.0
    %5462 = vmatprep.subr.mxu0 0.0
    %5463 = vmatpush2.msra.mxu0 0.0
    %5464 = vmatprep.subr.mxu0 0.0
    %5465 = vmatpush2.msra.mxu0 0.0
    %5466 = vmatprep.subr.mxu0 0.0
    %5467 = vmatpush2.msra.mxu0 0.0
    %5468 = vmatprep.mubr.f32.mxu0 0.0
    %5469 = vmatmul.mubr.f32.gmra.mxu0 %v5402
    %v5470 = vpop.f32.mrf.mxu0
    %v5471 = vadd.f32 %v811, %v5470
    %v5472 = vpop.f32.mrf.mxu0
    %5473 = vdwg.mxu0
    %v5474 = vmul.f32 %v5400, %v5471
    %v5475 = vadd.f32 %v5474, %v5105
    %v5477 = vcombine.high %v5475, %v5475
    %v5479 = vunpack.c.l.s4 1966171168
    %v5480 = vunpack.c.0.s8 %v5479
    %v5481 = vlaneseq
    %v5482 = vshrl.u32 %v5481, 7
    %v5483 = vsub.s32 %v5480, %v5482
    %v5484 = vrot.slane %v5475, %v5483
    %v5486 = vunpack.c.l.s4 1966171168
    %v5487 = vunpack.c.0.s8 %v5486
    %v5488 = vlaneseq
    %v5489 = vshrl.u32 %v5488, 7
    %v5490 = vsub.s32 %v5487, %v5489
    %v5491 = vrot.slane %v5477, %v5490
    %v5492 = vcombine.high %v5484, %v5484
    %v5493 = vcombine.high %v5491, %v5491
    %v5495 = vunpack.c.l.s4 1966171168
    %v5496 = vunpack.c.0.s8 %v5495
    %v5497 = vlaneseq
    %v5498 = vshrl.u32 %v5497, 7
    %v5499 = vsub.s32 %v5496, %v5498
    %v5500 = vrot.slane %v5484, %v5499
    %v5502 = vunpack.c.l.s4 1966171168
    %v5503 = vunpack.c.0.s8 %v5502
    %v5504 = vlaneseq
    %v5505 = vshrl.u32 %v5504, 7
    %v5506 = vsub.s32 %v5503, %v5505
    %v5507 = vrot.slane %v5491, %v5506
    %v5509 = vunpack.c.l.s4 1966171168
    %v5510 = vunpack.c.0.s8 %v5509
    %v5511 = vlaneseq
    %v5512 = vshrl.u32 %v5511, 7
    %v5513 = vsub.s32 %v5510, %v5512
    %v5514 = vrot.slane %v5492, %v5513
    %v5516 = vunpack.c.l.s4 1966171168
    %v5517 = vunpack.c.0.s8 %v5516
    %v5518 = vlaneseq
    %v5519 = vshrl.u32 %v5518, 7
    %v5520 = vsub.s32 %v5517, %v5519
    %v5521 = vrot.slane %v5493, %v5520
    %v5522 = vcombine.high %v5500, %v5500
    %v5523 = vcombine.high %v5507, %v5507
    %v5524 = vcombine.high %v5514, %v5514
    %v5525 = vcombine.high %v5521, %v5521
    %5534 = vst.msk [vmem:[#allocation6 + $0x5] sm:$0x1] %vm947, %v5500
    %5535 = vst.msk [vmem:[#allocation6 + $0xd] sm:$0x1] %vm947, %v5514
    %5536 = vst.msk [vmem:[#allocation6 + $0x15] sm:$0x1] %vm947, %v5522
    %5537 = vst.msk [vmem:[#allocation6 + $0x1d] sm:$0x1] %vm947, %v5524
    %5538 = vst.msk [vmem:[#allocation6 + $0x25] sm:$0x1] %vm947, %v5507
    %5539 = vst.msk [vmem:[#allocation6 + $0x2d] sm:$0x1] %vm947, %v5521
    %5540 = vst.msk [vmem:[#allocation6 + $0x35] sm:$0x1] %vm947, %v5523
    %5541 = vst.msk [vmem:[#allocation6 + $0x3d] sm:$0x1] %vm947, %v5525
    %v5542 = vcombine.high %v4982, %v4982
    %v5544 = vunpack.c.l.s4 1966171168
    %v5545 = vunpack.c.0.s8 %v5544
    %v5546 = vlaneseq
    %v5547 = vshrl.u32 %v5546, 7
    %v5548 = vsub.s32 %v5545, %v5547
    %v5549 = vrot.slane %v4982, %v5548
    %v5551 = vunpack.c.l.s4 1966171168
    %v5552 = vunpack.c.0.s8 %v5551
    %v5553 = vlaneseq
    %v5554 = vshrl.u32 %v5553, 7
    %v5555 = vsub.s32 %v5552, %v5554
    %v5556 = vrot.slane %v5542, %v5555
    %v5557 = vcombine.high %v5549, %v5549
    %v5558 = vcombine.high %v5556, %v5556
    %v5560 = vunpack.c.l.s4 1966171168
    %v5561 = vunpack.c.0.s8 %v5560
    %v5562 = vlaneseq
    %v5563 = vshrl.u32 %v5562, 7
    %v5564 = vsub.s32 %v5561, %v5563
    %v5565 = vrot.slane %v5549, %v5564
    %v5567 = vunpack.c.l.s4 1966171168
    %v5568 = vunpack.c.0.s8 %v5567
    %v5569 = vlaneseq
    %v5570 = vshrl.u32 %v5569, 7
    %v5571 = vsub.s32 %v5568, %v5570
    %v5572 = vrot.slane %v5556, %v5571
    %v5574 = vunpack.c.l.s4 1966171168
    %v5575 = vunpack.c.0.s8 %v5574
    %v5576 = vlaneseq
    %v5577 = vshrl.u32 %v5576, 7
    %v5578 = vsub.s32 %v5575, %v5577
    %v5579 = vrot.slane %v5557, %v5578
    %v5581 = vunpack.c.l.s4 1966171168
    %v5582 = vunpack.c.0.s8 %v5581
    %v5583 = vlaneseq
    %v5584 = vshrl.u32 %v5583, 7
    %v5585 = vsub.s32 %v5582, %v5584
    %v5586 = vrot.slane %v5558, %v5585
    %v5587 = vcombine.high %v5565, %v5565
    %v5588 = vcombine.high %v5572, %v5572
    %v5589 = vcombine.high %v5579, %v5579
    %v5590 = vcombine.high %v5586, %v5586
    %v5591 = vlaneseq
    %v5592 = vshrl.u32 %v5591, 7
    %v5593 = vsub.s32 0, %v5592
    %v5594 = vrot.slane %v5565, %v5593
    %v5595 = vlaneseq
    %v5596 = vshrl.u32 %v5595, 7
    %v5597 = vsub.s32 0, %v5596
    %v5598 = vrot.slane %v5579, %v5597
    %v5599 = vlaneseq
    %v5600 = vshrl.u32 %v5599, 7
    %v5601 = vsub.s32 0, %v5600
    %v5602 = vrot.slane %v5587, %v5601
    %v5603 = vlaneseq
    %v5604 = vshrl.u32 %v5603, 7
    %v5605 = vsub.s32 0, %v5604
    %v5606 = vrot.slane %v5589, %v5605
    %v5607 = vlaneseq
    %v5608 = vshrl.u32 %v5607, 7
    %v5609 = vsub.s32 0, %v5608
    %v5610 = vrot.slane %v5572, %v5609
    %v5611 = vlaneseq
    %v5612 = vshrl.u32 %v5611, 7
    %v5613 = vsub.s32 0, %v5612
    %v5614 = vrot.slane %v5586, %v5613
    %v5615 = vlaneseq
    %v5616 = vshrl.u32 %v5615, 7
    %v5617 = vsub.s32 0, %v5616
    %v5618 = vrot.slane %v5588, %v5617
    %v5619 = vlaneseq
    %v5620 = vshrl.u32 %v5619, 7
    %v5621 = vsub.s32 0, %v5620
    %v5622 = vrot.slane %v5590, %v5621
    %5623 = vrot.lane.b32.xlu0 %v5594, 104
    %v5624 = vpop.permute.xlu0 %5623
    %5625 = vrot.lane.b32.xlu0 %v5598, 104
    %v5626 = vpop.permute.xlu0 %5625
    %5627 = vrot.lane.b32.xlu0 %v5602, 104
    %v5628 = vpop.permute.xlu0 %5627
    %5629 = vrot.lane.b32.xlu0 %v5606, 104
    %v5630 = vpop.permute.xlu0 %5629
    %5631 = vrot.lane.b32.xlu0 %v5610, 104
    %v5632 = vpop.permute.xlu0 %5631
    %5633 = vrot.lane.b32.xlu0 %v5614, 104
    %v5634 = vpop.permute.xlu0 %5633
    %5635 = vrot.lane.b32.xlu0 %v5618, 104
    %v5636 = vpop.permute.xlu0 %5635
    %5637 = vrot.lane.b32.xlu0 %v5622, 104
    %v5638 = vpop.permute.xlu0 %5637
    %5647 = vst.msk [vmem:[%s14 + $0x5] sm:$0x1] %vm1061, %v5624
    %5648 = vst.msk [vmem:[%s14 + $0xd] sm:$0x1] %vm1061, %v5626
    %5649 = vst.msk [vmem:[%s14 + $0x15] sm:$0x1] %vm1061, %v5628
    %5650 = vst.msk [vmem:[%s14 + $0x1d] sm:$0x1] %vm1061, %v5630
    %5651 = vst.msk [vmem:[%s14 + $0x25] sm:$0x1] %vm1061, %v5632
    %5652 = vst.msk [vmem:[%s14 + $0x2d] sm:$0x1] %vm1061, %v5634
    %5653 = vst.msk [vmem:[%s14 + $0x35] sm:$0x1] %vm1061, %v5636
    %5654 = vst.msk [vmem:[%s14 + $0x3d] sm:$0x1] %vm1061, %v5638
    %v5655 = vld [vmem:[%s0 + $0x6] sm:$0x1]
    %v5656 = vld [vmem:[%s0 + $0xe] sm:$0x1]
    %v5657 = vld [vmem:[%s0 + $0x16] sm:$0x1]
    %v5658 = vld [vmem:[%s0 + $0x1e] sm:$0x1]
    %v5659 = vld [vmem:[%s0 + $0x26] sm:$0x1]
    %v5660 = vld [vmem:[%s0 + $0x2e] sm:$0x1]
    %v5661 = vld [vmem:[%s0 + $0x36] sm:$0x1]
    %v5662 = vld [vmem:[%s0 + $0x3e] sm:$0x1]
    %v5663 = vld [vmem:[%s1 + $0x6] sm:$0x1]
    %v5664 = vld [vmem:[%s1 + $0xe] sm:$0x1]
    %v5665 = vld [vmem:[%s1 + $0x16] sm:$0x1]
    %v5666 = vld [vmem:[%s1 + $0x1e] sm:$0x1]
    %v5667 = vld [vmem:[%s1 + $0x26] sm:$0x1]
    %v5668 = vld [vmem:[%s1 + $0x2e] sm:$0x1]
    %v5669 = vld [vmem:[%s1 + $0x36] sm:$0x1]
    %v5670 = vld [vmem:[%s1 + $0x3e] sm:$0x1]
    %v5671 = vld [vmem:[#allocation3] sm:$0xff]
    %v5672 = vld [vmem:[#allocation2] sm:$0xff]
    %v5681 = vrot.slane %v5656, 7
    %v5682 = vsel %vm116, %v5681, %v5655
    %v5683 = vrot.slane %v5657, 6
    %v5684 = vsel %vm119, %v5683, %v5682
    %v5685 = vrot.slane %v5658, 5
    %v5686 = vsel %vm122, %v5685, %v5684
    %v5687 = vrot.slane %v5659, 4
    %v5688 = vsel %vm125, %v5687, %v5686
    %v5689 = vrot.slane %v5660, 3
    %v5690 = vsel %vm128, %v5689, %v5688
    %v5691 = vrot.slane %v5661, 2
    %v5692 = vsel %vm131, %v5691, %v5690
    %v5693 = vrot.slane %v5662, 1
    %v5694 = vsel %vm134, %v5693, %v5692
    %5697 = vrot.lane.b32.xlu0 %v5671, 16
    %v5698 = vpop.permute.xlu0 %5697
    %v5708 = vrot.slane %v5664, 7
    %v5709 = vsel %vm116, %v5708, %v5663
    %v5710 = vrot.slane %v5665, 6
    %v5711 = vsel %vm119, %v5710, %v5709
    %v5712 = vrot.slane %v5666, 5
    %v5713 = vsel %vm122, %v5712, %v5711
    %v5714 = vrot.slane %v5667, 4
    %v5715 = vsel %vm125, %v5714, %v5713
    %v5716 = vrot.slane %v5668, 3
    %v5717 = vsel %vm128, %v5716, %v5715
    %v5718 = vrot.slane %v5669, 2
    %v5719 = vsel %vm131, %v5718, %v5717
    %v5720 = vrot.slane %v5670, 1
    %v5721 = vsel %vm134, %v5720, %v5719
    %5722 = vrot.lane.b32.xlu0 %v5721, 40
    %v5723 = vpop.permute.xlu0 %5722
    %v5725 = vsel %vm166, %v5694, %v5698
    %v5726 = vsel %vm168, %v5725, %v5723
    %v5728 = vsel %vm176, %v5726, 0
    %5730 = vmatprep.subr.mxu0 0.0
    %5731 = vmatpush1.msra.mxu0 0.0
    %5732 = vmatprep.subr.mxu0 0.0
    %5733 = vmatpush1.msra.mxu0 0.0
    %5734 = vmatprep.subr.mxu0 0.0
    %5735 = vmatpush1.msra.mxu0 0.0
    %5736 = vmatprep.subr.mxu0 0.0
    %5737 = vmatpush1.msra.mxu0 0.0
    %5738 = vmatprep.subr.mxu0 0.0
    %5739 = vmatpush1.msra.mxu0 0.0
    %5740 = vmatprep.subr.mxu0 0.0
    %5741 = vmatpush1.msra.mxu0 0.0
    %5742 = vmatprep.subr.mxu0 0.0
    %5743 = vmatpush1.msra.mxu0 0.0
    %5744 = vmatprep.subr.mxu0 0.0
    %5745 = vmatpush1.msra.mxu0 0.0
    %5746 = vmatprep.subr.mxu0 0.0
    %5747 = vmatpush1.msra.mxu0 0.0
    %5748 = vmatprep.subr.mxu0 0.0
    %5749 = vmatpush1.msra.mxu0 0.0
    %5750 = vmatprep.subr.mxu0 0.0
    %5751 = vmatpush1.msra.mxu0 %v182
    %5752 = vmatprep.subr.mxu0 0.0
    %5753 = vmatpush1.msra.mxu0 %v64
    %5754 = vmatprep.subr.mxu0 0.0
    %5755 = vmatpush1.msra.mxu0 %v63
    %5756 = vmatprep.subr.mxu0 0.0
    %5757 = vmatpush1.msra.mxu0 %v62
    %5758 = vmatprep.subr.mxu0 0.0
    %5759 = vmatpush1.msra.mxu0 %v61
    %5760 = vmatprep.subr.mxu0 0.0
    %5761 = vmatpush1.msra.mxu0 %v60
    %5762 = vmatprep.subr.mxu0 0.0
    %5763 = vmatpush2.msra.mxu0 0.0
    %5764 = vmatprep.subr.mxu0 0.0
    %5765 = vmatpush2.msra.mxu0 0.0
    %5766 = vmatprep.subr.mxu0 0.0
    %5767 = vmatpush2.msra.mxu0 0.0
    %5768 = vmatprep.subr.mxu0 0.0
    %5769 = vmatpush2.msra.mxu0 0.0
    %5770 = vmatprep.subr.mxu0 0.0
    %5771 = vmatpush2.msra.mxu0 0.0
    %5772 = vmatprep.subr.mxu0 0.0
    %5773 = vmatpush2.msra.mxu0 0.0
    %5774 = vmatprep.subr.mxu0 0.0
    %5775 = vmatpush2.msra.mxu0 0.0
    %5776 = vmatprep.subr.mxu0 0.0
    %5777 = vmatpush2.msra.mxu0 0.0
    %5778 = vmatprep.subr.mxu0 0.0
    %5779 = vmatpush2.msra.mxu0 0.0
    %5780 = vmatprep.subr.mxu0 0.0
    %5781 = vmatpush2.msra.mxu0 0.0
    %5782 = vmatprep.subr.mxu0 0.0
    %5783 = vmatpush2.msra.mxu0 0.0
    %5784 = vmatprep.subr.mxu0 0.0
    %5785 = vmatpush2.msra.mxu0 0.0
    %5786 = vmatprep.subr.mxu0 0.0
    %5787 = vmatpush2.msra.mxu0 0.0
    %5788 = vmatprep.subr.mxu0 0.0
    %5789 = vmatpush2.msra.mxu0 0.0
    %5790 = vmatprep.subr.mxu0 0.0
    %5791 = vmatpush2.msra.mxu0 0.0
    %5792 = vmatprep.subr.mxu0 0.0
    %5793 = vmatpush2.msra.mxu0 0.0
    %5794 = vmatprep.mubr.f32.mxu0 0.0
    %5795 = vmatmul.mubr.f32.gmra.mxu0 %v5728
    %v5796 = vpop.f32.mrf.mxu0
    %v5797 = vadd.f32 %v174, %v5796
    %v5798 = vpop.f32.mrf.mxu0
    %5799 = vdwg.mxu0
    %v5800 = vsel %vm254, %v5797, -inf
    %5801 = vmax.xlane.f32.xlu0 %v5800
    %v5802 = vpop.xlane.xlu0 %5801
    %v5803 = vsub.f32 %v5797, %v5802
    %v5804 = vmul.f32 %v5803, 1.442695
    %v5805 = vpow.pop %v5804
    %v5806 = vsel %vm254, %v5805, 0.0
    %5807 = vadd.xlane.f32.xlu0 %v5806
    %v5808 = vpop.xlane.xlu0 %5807
    %v5809 = vrcp.pop %v5808
    %v5810 = vmul.f32 %v5805, %v5809
    %v5811 = vsel %vm266, %v5797, -inf
    %5812 = vmax.xlane.f32.xlu0 %v5811
    %v5813 = vpop.xlane.xlu0 %5812
    %v5814 = vsub.f32 %v5797, %v5813
    %v5815 = vmul.f32 %v5814, 1.442695
    %v5816 = vpow.pop %v5815
    %5818 = vrot.lane.b32.xlu0 %v5816, 125
    %v5819 = vpop.permute.xlu0 %5818
    %v5821 = vsel %vm254, %v5819, 0.0
    %5822 = vadd.xlane.f32.xlu0 %v5821
    %v5823 = vpop.xlane.xlu0 %5822
    %v5824 = vrcp.pop %v5823
    %v5825 = vmul.f32 %v5816, %v5824
    %v5827 = vsel %vm254, %v5810, 0
    %5829 = vmatprep.subr.mxu0 0.0
    %5830 = vmatpush1.msra.mxu0 0.0
    %5831 = vmatprep.subr.mxu0 0.0
    %5832 = vmatpush1.msra.mxu0 0.0
    %5833 = vmatprep.subr.mxu0 0.0
    %5834 = vmatpush1.msra.mxu0 0.0
    %5835 = vmatprep.subr.mxu0 0.0
    %5836 = vmatpush1.msra.mxu0 0.0
    %5837 = vmatprep.subr.mxu0 0.0
    %5838 = vmatpush1.msra.mxu0 0.0
    %5839 = vmatprep.subr.mxu0 0.0
    %5840 = vmatpush1.msra.mxu0 0.0
    %5841 = vmatprep.subr.mxu0 0.0
    %5842 = vmatpush1.msra.mxu0 0.0
    %5843 = vmatprep.subr.mxu0 0.0
    %5844 = vmatpush1.msra.mxu0 0.0
    %5845 = vmatprep.subr.mxu0 0.0
    %5846 = vmatpush1.msra.mxu0 0.0
    %5847 = vmatprep.subr.mxu0 0.0
    %5848 = vmatpush1.msra.mxu0 0.0
    %5849 = vmatprep.subr.mxu0 0.0
    %5850 = vmatpush1.msra.mxu0 0.0
    %5851 = vmatprep.subr.mxu0 0.0
    %5852 = vmatpush1.msra.mxu0 0.0
    %5853 = vmatprep.subr.mxu0 0.0
    %5854 = vmatpush1.msra.mxu0 0.0
    %5855 = vmatprep.subr.mxu0 0.0
    %5856 = vmatpush1.msra.mxu0 0.0
    %5857 = vmatprep.subr.mxu0 0.0
    %5858 = vmatpush1.msra.mxu0 0.0
    %5859 = vmatprep.subr.mxu0 0.0
    %5860 = vmatpush1.msra.mxu0 %v287
    %5861 = vmatprep.subr.mxu0 0.0
    %5862 = vmatpush2.msra.mxu0 0.0
    %5863 = vmatprep.subr.mxu0 0.0
    %5864 = vmatpush2.msra.mxu0 0.0
    %5865 = vmatprep.subr.mxu0 0.0
    %5866 = vmatpush2.msra.mxu0 0.0
    %5867 = vmatprep.subr.mxu0 0.0
    %5868 = vmatpush2.msra.mxu0 0.0
    %5869 = vmatprep.subr.mxu0 0.0
    %5870 = vmatpush2.msra.mxu0 0.0
    %5871 = vmatprep.subr.mxu0 0.0
    %5872 = vmatpush2.msra.mxu0 0.0
    %5873 = vmatprep.subr.mxu0 0.0
    %5874 = vmatpush2.msra.mxu0 0.0
    %5875 = vmatprep.subr.mxu0 0.0
    %5876 = vmatpush2.msra.mxu0 0.0
    %5877 = vmatprep.subr.mxu0 0.0
    %5878 = vmatpush2.msra.mxu0 0.0
    %5879 = vmatprep.subr.mxu0 0.0
    %5880 = vmatpush2.msra.mxu0 0.0
    %5881 = vmatprep.subr.mxu0 0.0
    %5882 = vmatpush2.msra.mxu0 0.0
    %5883 = vmatprep.subr.mxu0 0.0
    %5884 = vmatpush2.msra.mxu0 0.0
    %5885 = vmatprep.subr.mxu0 0.0
    %5886 = vmatpush2.msra.mxu0 0.0
    %5887 = vmatprep.subr.mxu0 0.0
    %5888 = vmatpush2.msra.mxu0 0.0
    %5889 = vmatprep.subr.mxu0 0.0
    %5890 = vmatpush2.msra.mxu0 0.0
    %5891 = vmatprep.subr.mxu0 0.0
    %5892 = vmatpush2.msra.mxu0 0.0
    %5893 = vmatprep.mubr.f32.mxu0 0.0
    %5894 = vmatmul.mubr.f32.gmra.mxu0 %v5827
    %v5895 = vpop.f32.mrf.mxu0
    %v5896 = vadd.f32 0.0, %v5895
    %v5897 = vpop.f32.mrf.mxu0
    %5898 = vdwg.mxu0
    %v5899 = vsub.f32 1.0, %v5896
    %5901 = vrot.lane.b32.xlu0 %v5825, 125
    %v5902 = vpop.permute.xlu0 %5901
    %v5903 = vsel %vm254, %v5902, 0
    %5905 = vmatprep.subr.mxu0 0.0
    %5906 = vmatpush1.msra.mxu0 0.0
    %5907 = vmatprep.subr.mxu0 0.0
    %5908 = vmatpush1.msra.mxu0 0.0
    %5909 = vmatprep.subr.mxu0 0.0
    %5910 = vmatpush1.msra.mxu0 0.0
    %5911 = vmatprep.subr.mxu0 0.0
    %5912 = vmatpush1.msra.mxu0 0.0
    %5913 = vmatprep.subr.mxu0 0.0
    %5914 = vmatpush1.msra.mxu0 0.0
    %5915 = vmatprep.subr.mxu0 0.0
    %5916 = vmatpush1.msra.mxu0 0.0
    %5917 = vmatprep.subr.mxu0 0.0
    %5918 = vmatpush1.msra.mxu0 0.0
    %5919 = vmatprep.subr.mxu0 0.0
    %5920 = vmatpush1.msra.mxu0 0.0
    %5921 = vmatprep.subr.mxu0 0.0
    %5922 = vmatpush1.msra.mxu0 0.0
    %5923 = vmatprep.subr.mxu0 0.0
    %5924 = vmatpush1.msra.mxu0 0.0
    %5925 = vmatprep.subr.mxu0 0.0
    %5926 = vmatpush1.msra.mxu0 0.0
    %5927 = vmatprep.subr.mxu0 0.0
    %5928 = vmatpush1.msra.mxu0 0.0
    %5929 = vmatprep.subr.mxu0 0.0
    %5930 = vmatpush1.msra.mxu0 0.0
    %5931 = vmatprep.subr.mxu0 0.0
    %5932 = vmatpush1.msra.mxu0 0.0
    %5933 = vmatprep.subr.mxu0 0.0
    %5934 = vmatpush1.msra.mxu0 0.0
    %5935 = vmatprep.subr.mxu0 0.0
    %5936 = vmatpush1.msra.mxu0 %v366
    %5937 = vmatprep.subr.mxu0 0.0
    %5938 = vmatpush2.msra.mxu0 0.0
    %5939 = vmatprep.subr.mxu0 0.0
    %5940 = vmatpush2.msra.mxu0 0.0
    %5941 = vmatprep.subr.mxu0 0.0
    %5942 = vmatpush2.msra.mxu0 0.0
    %5943 = vmatprep.subr.mxu0 0.0
    %5944 = vmatpush2.msra.mxu0 0.0
    %5945 = vmatprep.subr.mxu0 0.0
    %5946 = vmatpush2.msra.mxu0 0.0
    %5947 = vmatprep.subr.mxu0 0.0
    %5948 = vmatpush2.msra.mxu0 0.0
    %5949 = vmatprep.subr.mxu0 0.0
    %5950 = vmatpush2.msra.mxu0 0.0
    %5951 = vmatprep.subr.mxu0 0.0
    %5952 = vmatpush2.msra.mxu0 0.0
    %5953 = vmatprep.subr.mxu0 0.0
    %5954 = vmatpush2.msra.mxu0 0.0
    %5955 = vmatprep.subr.mxu0 0.0
    %5956 = vmatpush2.msra.mxu0 0.0
    %5957 = vmatprep.subr.mxu0 0.0
    %5958 = vmatpush2.msra.mxu0 0.0
    %5959 = vmatprep.subr.mxu0 0.0
    %5960 = vmatpush2.msra.mxu0 0.0
    %5961 = vmatprep.subr.mxu0 0.0
    %5962 = vmatpush2.msra.mxu0 0.0
    %5963 = vmatprep.subr.mxu0 0.0
    %5964 = vmatpush2.msra.mxu0 0.0
    %5965 = vmatprep.subr.mxu0 0.0
    %5966 = vmatpush2.msra.mxu0 0.0
    %5967 = vmatprep.subr.mxu0 0.0
    %5968 = vmatpush2.msra.mxu0 0.0
    %5969 = vmatprep.mubr.f32.mxu0 0.0
    %5970 = vmatmul.mubr.f32.gmra.mxu0 %v5903
    %v5971 = vpop.f32.mrf.mxu0
    %v5972 = vadd.f32 0.0, %v5971
    %v5973 = vpop.f32.mrf.mxu0
    %5974 = vdwg.mxu0
    %v5975 = vsub.f32 1.0, %v5972
    %v5976 = vxor.u32 %v5797, 2147483648
    %v5977 = vmul.f32 %v5976, 1.442695
    %v5978 = vpow.pop %v5977
    %v5979 = vadd.f32 %v5978, 1.0
    %v5980 = vrcp.pop %v5979
    %v5981 = vmul.f32 1.0, %v5980
    %v5982 = vtanh.pop %v5797
    %v5983 = vmul.f32 %v5896, %v5975
    %5985 = vrot.lane.b32.xlu0 %v5672, 6
    %v5986 = vpop.permute.xlu0 %5985
    %v5988 = vmul.f32 %v5981, %v5986
    %5990 = vrot.lane.b32.xlu0 %v5982, 80
    %v5991 = vpop.permute.xlu0 %5990
    %v5993 = vmul.f32 %v5981, %v5991
    %5995 = vrot.lane.b32.xlu0 %v5993, 104
    %v5996 = vpop.permute.xlu0 %5995
    %v5998 = vadd.f32 %v5988, %v5996
    %6000 = vrot.lane.b32.xlu0 %v5998, 122
    %v6001 = vpop.permute.xlu0 %6000
    %v6003 = vmul.f32 %v5983, %v6001
    %v6004 = vsub.f32 %v5896, %v5983
    %v6005 = vmul.f32 %v6004, %v5672
    %v6006 = vadd.f32 %v6003, %v6005
    %v6007 = vsub.f32 %v5975, %v5983
    %6008 = vrot.lane.b32.xlu0 %v5982, 50
    %v6009 = vpop.permute.xlu0 %6008
    %v6011 = vmul.f32 %v6007, %v6009
    %v6012 = vadd.f32 %v6006, %v6011
    %v6013 = vtanh.pop %v6012
    %6015 = vrot.lane.b32.xlu0 %v6013, 54
    %v6016 = vpop.permute.xlu0 %6015
    %v6018 = vmul.f32 %v5981, %v6016
    %6019 = vst.msk [vmem:[#allocation2] sm:$0xff] %vm482, %v6012
    %6021 = vrot.lane.b32.xlu0 %v6018, 74
    %v6022 = vpop.permute.xlu0 %6021
    %6024 = vst.msk [vmem:[#allocation3] sm:$0xff] %vm482, %v6022
    %6025 = vst.msk [vmem:[%s598] sm:$0xff] %vm482, %v6022
    %v6026 = vld [vmem:[#allocation5] sm:$0xff]
    %6028 = vrot.lane.b32.xlu0 %v6026, 127
    %v6029 = vpop.permute.xlu0 %6028
    %6032 = vrot.lane.b32.xlu0 %v5899, 107
    %v6033 = vpop.permute.xlu0 %6032
    %v6035 = vsel %vm254, %v6029, %v6033
    %6036 = vst.msk [vmem:[#allocation5] sm:$0xff] %vm500, %v6035
    %v6038 = vsel %vm500, %v6035, 0
    %6040 = vmatprep.subr.mxu0 0.0
    %6041 = vmatpush1.msra.mxu0 0.0
    %6042 = vmatprep.subr.mxu0 0.0
    %6043 = vmatpush1.msra.mxu0 0.0
    %6044 = vmatprep.subr.mxu0 0.0
    %6045 = vmatpush1.msra.mxu0 0.0
    %6046 = vmatprep.subr.mxu0 0.0
    %6047 = vmatpush1.msra.mxu0 0.0
    %6048 = vmatprep.subr.mxu0 0.0
    %6049 = vmatpush1.msra.mxu0 0.0
    %6050 = vmatprep.subr.mxu0 0.0
    %6051 = vmatpush1.msra.mxu0 0.0
    %6052 = vmatprep.subr.mxu0 0.0
    %6053 = vmatpush1.msra.mxu0 0.0
    %6054 = vmatprep.subr.mxu0 0.0
    %6055 = vmatpush1.msra.mxu0 0.0
    %6056 = vmatprep.subr.mxu0 0.0
    %6057 = vmatpush1.msra.mxu0 0.0
    %6058 = vmatprep.subr.mxu0 0.0
    %6059 = vmatpush1.msra.mxu0 0.0
    %6060 = vmatprep.subr.mxu0 0.0
    %6061 = vmatpush1.msra.mxu0 0.0
    %6062 = vmatprep.subr.mxu0 0.0
    %6063 = vmatpush1.msra.mxu0 0.0
    %6064 = vmatprep.subr.mxu0 0.0
    %6065 = vmatpush1.msra.mxu0 0.0
    %6066 = vmatprep.subr.mxu0 0.0
    %6067 = vmatpush1.msra.mxu0 0.0
    %6068 = vmatprep.subr.mxu0 0.0
    %6069 = vmatpush1.msra.mxu0 0.0
    %6070 = vmatprep.subr.mxu0 0.0
    %6071 = vmatpush1.msra.mxu0 %v507
    %6072 = vmatprep.subr.mxu0 0.0
    %6073 = vmatpush2.msra.mxu0 0.0
    %6074 = vmatprep.subr.mxu0 0.0
    %6075 = vmatpush2.msra.mxu0 0.0
    %6076 = vmatprep.subr.mxu0 0.0
    %6077 = vmatpush2.msra.mxu0 0.0
    %6078 = vmatprep.subr.mxu0 0.0
    %6079 = vmatpush2.msra.mxu0 0.0
    %6080 = vmatprep.subr.mxu0 0.0
    %6081 = vmatpush2.msra.mxu0 0.0
    %6082 = vmatprep.subr.mxu0 0.0
    %6083 = vmatpush2.msra.mxu0 0.0
    %6084 = vmatprep.subr.mxu0 0.0
    %6085 = vmatpush2.msra.mxu0 0.0
    %6086 = vmatprep.subr.mxu0 0.0
    %6087 = vmatpush2.msra.mxu0 0.0
    %6088 = vmatprep.subr.mxu0 0.0
    %6089 = vmatpush2.msra.mxu0 0.0
    %6090 = vmatprep.subr.mxu0 0.0
    %6091 = vmatpush2.msra.mxu0 0.0
    %6092 = vmatprep.subr.mxu0 0.0
    %6093 = vmatpush2.msra.mxu0 0.0
    %6094 = vmatprep.subr.mxu0 0.0
    %6095 = vmatpush2.msra.mxu0 0.0
    %6096 = vmatprep.subr.mxu0 0.0
    %6097 = vmatpush2.msra.mxu0 0.0
    %6098 = vmatprep.subr.mxu0 0.0
    %6099 = vmatpush2.msra.mxu0 0.0
    %6100 = vmatprep.subr.mxu0 0.0
    %6101 = vmatpush2.msra.mxu0 0.0
    %6102 = vmatprep.subr.mxu0 0.0
    %6103 = vmatpush2.msra.mxu0 0.0
    %6104 = vmatprep.mubr.f32.mxu0 0.0
    %6105 = vmatmul.mubr.f32.gmra.mxu0 %v6038
    %v6106 = vpop.f32.mrf.mxu0
    %v6107 = vadd.f32 0.0, %v6106
    %v6108 = vpop.f32.mrf.mxu0
    %6109 = vdwg.mxu0
    %v6110 = vsel %vm500, %v6107, -inf
    %6111 = vmax.xlane.f32.xlu0 %v6110
    %v6112 = vpop.xlane.xlu0 %6111
    %v6113 = vsub.f32 %v6107, %v6112
    %v6114 = vmul.f32 %v6113, 1.442695
    %v6115 = vpow.pop %v6114
    %v6116 = vsel %vm500, %v6115, 0.0
    %6117 = vadd.xlane.f32.xlu0 %v6116
    %v6118 = vpop.xlane.xlu0 %6117
    %v6119 = vrcp.pop %v6118
    %v6120 = vmul.f32 %v6115, %v6119
    %v6121 = vld [vmem:[%s605] sm:$0xff]
    %6123 = vset.pattern.permute.xlu0 0
    %6124 = vperm.xlu0 %6123, %v6120
    %v6125 = vpop.permute.xlu0 %6124
    %v6127 = vmul.f32 %v6121, %v6125
    %v6128 = vld [vmem:[#allocation4] sm:$0xff]
    %6129 = vset.pattern.permute.xlu0 1
    %6130 = vperm.xlu0 %6129, %v6120
    %v6131 = vpop.permute.xlu0 %6130
    %v6133 = vmul.f32 %v6128, %v6131
    %v6134 = vld [vmem:[%s590] sm:$0xff]
    %6135 = vset.pattern.permute.xlu0 2
    %6136 = vperm.xlu0 %6135, %v6120
    %v6137 = vpop.permute.xlu0 %6136
    %v6139 = vmul.f32 %v6134, %v6137
    %v6140 = vld [vmem:[%s598] sm:$0xff]
    %6141 = vset.pattern.permute.xlu0 3
    %6142 = vperm.xlu0 %6141, %v6120
    %v6143 = vpop.permute.xlu0 %6142
    %v6145 = vmul.f32 %v6140, %v6143
    %v6146 = vadd.f32 %v6127, %v6133
    %v6147 = vadd.f32 %v6146, %v6139
    %v6148 = vadd.f32 %v6147, %v6145
    %v6149 = vmul.f32 %v6148, 0.25
    %6151 = vrot.lane.b32.xlu0 %v6133, 24
    %v6152 = vpop.permute.xlu0 %6151
    %6155 = vrot.lane.b32.xlu0 %v6139, 48
    %v6156 = vpop.permute.xlu0 %6155
    %6159 = vrot.lane.b32.xlu0 %v6145, 72
    %v6160 = vpop.permute.xlu0 %6159
    %v6162 = vsel %vm482, %v6127, %v6152
    %v6163 = vsel %vm635, %v6162, %v6156
    %v6164 = vsel %vm637, %v6163, %v6160
    %v6166 = vsel %vm482, %v6149, 0
    %6168 = vmatprep.subr.mxu0 0.0
    %6169 = vmatpush1.msra.mxu0 0.0
    %6170 = vmatprep.subr.mxu0 0.0
    %6171 = vmatpush1.msra.mxu0 0.0
    %6172 = vmatprep.subr.mxu0 0.0
    %6173 = vmatpush1.msra.mxu0 0.0
    %6174 = vmatprep.subr.mxu0 0.0
    %6175 = vmatpush1.msra.mxu0 0.0
    %6176 = vmatprep.subr.mxu0 0.0
    %6177 = vmatpush1.msra.mxu0 0.0
    %6178 = vmatprep.subr.mxu0 0.0
    %6179 = vmatpush1.msra.mxu0 0.0
    %6180 = vmatprep.subr.mxu0 0.0
    %6181 = vmatpush1.msra.mxu0 0.0
    %6182 = vmatprep.subr.mxu0 0.0
    %6183 = vmatpush1.msra.mxu0 0.0
    %6184 = vmatprep.subr.mxu0 0.0
    %6185 = vmatpush1.msra.mxu0 0.0
    %6186 = vmatprep.subr.mxu0 0.0
    %6187 = vmatpush1.msra.mxu0 0.0
    %6188 = vmatprep.subr.mxu0 0.0
    %6189 = vmatpush1.msra.mxu0 0.0
    %6190 = vmatprep.subr.mxu0 0.0
    %6191 = vmatpush1.msra.mxu0 0.0
    %6192 = vmatprep.subr.mxu0 0.0
    %6193 = vmatpush1.msra.mxu0 0.0
    %6194 = vmatprep.subr.mxu0 0.0
    %6195 = vmatpush1.msra.mxu0 %v71
    %6196 = vmatprep.subr.mxu0 0.0
    %6197 = vmatpush1.msra.mxu0 %v70
    %6198 = vmatprep.subr.mxu0 0.0
    %6199 = vmatpush1.msra.mxu0 %v69
    %6200 = vmatprep.subr.mxu0 0.0
    %6201 = vmatpush2.msra.mxu0 0.0
    %6202 = vmatprep.subr.mxu0 0.0
    %6203 = vmatpush2.msra.mxu0 0.0
    %6204 = vmatprep.subr.mxu0 0.0
    %6205 = vmatpush2.msra.mxu0 0.0
    %6206 = vmatprep.subr.mxu0 0.0
    %6207 = vmatpush2.msra.mxu0 0.0
    %6208 = vmatprep.subr.mxu0 0.0
    %6209 = vmatpush2.msra.mxu0 0.0
    %6210 = vmatprep.subr.mxu0 0.0
    %6211 = vmatpush2.msra.mxu0 0.0
    %6212 = vmatprep.subr.mxu0 0.0
    %6213 = vmatpush2.msra.mxu0 0.0
    %6214 = vmatprep.subr.mxu0 0.0
    %6215 = vmatpush2.msra.mxu0 0.0
    %6216 = vmatprep.subr.mxu0 0.0
    %6217 = vmatpush2.msra.mxu0 0.0
    %6218 = vmatprep.subr.mxu0 0.0
    %6219 = vmatpush2.msra.mxu0 0.0
    %6220 = vmatprep.subr.mxu0 0.0
    %6221 = vmatpush2.msra.mxu0 0.0
    %6222 = vmatprep.subr.mxu0 0.0
    %6223 = vmatpush2.msra.mxu0 0.0
    %6224 = vmatprep.subr.mxu0 0.0
    %6225 = vmatpush2.msra.mxu0 0.0
    %6226 = vmatprep.subr.mxu0 0.0
    %6227 = vmatpush2.msra.mxu0 0.0
    %6228 = vmatprep.subr.mxu0 0.0
    %6229 = vmatpush2.msra.mxu0 0.0
    %6230 = vmatprep.subr.mxu0 0.0
    %6231 = vmatpush2.msra.mxu0 0.0
    %6232 = vmatprep.mubr.f32.mxu0 0.0
    %6233 = vmatmul.mubr.f32.gmra.mxu0 %v6166
    %v6234 = vpop.f32.mrf.mxu0
    %v6235 = vadd.f32 %v643, %v6234
    %v6236 = vpop.f32.mrf.mxu0
    %6237 = vdwg.mxu0
    %v6238 = vmax.f32 %v6235, 0.0
    %v6240 = vsel %vm500, %v6238, 0
    %6242 = vmatprep.subr.mxu0 0.0
    %6243 = vmatpush1.msra.mxu0 0.0
    %6244 = vmatprep.subr.mxu0 0.0
    %6245 = vmatpush1.msra.mxu0 0.0
    %6246 = vmatprep.subr.mxu0 0.0
    %6247 = vmatpush1.msra.mxu0 0.0
    %6248 = vmatprep.subr.mxu0 0.0
    %6249 = vmatpush1.msra.mxu0 0.0
    %6250 = vmatprep.subr.mxu0 0.0
    %6251 = vmatpush1.msra.mxu0 0.0
    %6252 = vmatprep.subr.mxu0 0.0
    %6253 = vmatpush1.msra.mxu0 0.0
    %6254 = vmatprep.subr.mxu0 0.0
    %6255 = vmatpush1.msra.mxu0 0.0
    %6256 = vmatprep.subr.mxu0 0.0
    %6257 = vmatpush1.msra.mxu0 0.0
    %6258 = vmatprep.subr.mxu0 0.0
    %6259 = vmatpush1.msra.mxu0 0.0
    %6260 = vmatprep.subr.mxu0 0.0
    %6261 = vmatpush1.msra.mxu0 0.0
    %6262 = vmatprep.subr.mxu0 0.0
    %6263 = vmatpush1.msra.mxu0 0.0
    %6264 = vmatprep.subr.mxu0 0.0
    %6265 = vmatpush1.msra.mxu0 0.0
    %6266 = vmatprep.subr.mxu0 0.0
    %6267 = vmatpush1.msra.mxu0 0.0
    %6268 = vmatprep.subr.mxu0 0.0
    %6269 = vmatpush1.msra.mxu0 0.0
    %6270 = vmatprep.subr.mxu0 0.0
    %6271 = vmatpush1.msra.mxu0 0.0
    %6272 = vmatprep.subr.mxu0 0.0
    %6273 = vmatpush1.msra.mxu0 %v729
    %6274 = vmatprep.subr.mxu0 0.0
    %6275 = vmatpush2.msra.mxu0 0.0
    %6276 = vmatprep.subr.mxu0 0.0
    %6277 = vmatpush2.msra.mxu0 0.0
    %6278 = vmatprep.subr.mxu0 0.0
    %6279 = vmatpush2.msra.mxu0 0.0
    %6280 = vmatprep.subr.mxu0 0.0
    %6281 = vmatpush2.msra.mxu0 0.0
    %6282 = vmatprep.subr.mxu0 0.0
    %6283 = vmatpush2.msra.mxu0 0.0
    %6284 = vmatprep.subr.mxu0 0.0
    %6285 = vmatpush2.msra.mxu0 0.0
    %6286 = vmatprep.subr.mxu0 0.0
    %6287 = vmatpush2.msra.mxu0 0.0
    %6288 = vmatprep.subr.mxu0 0.0
    %6289 = vmatpush2.msra.mxu0 0.0
    %6290 = vmatprep.subr.mxu0 0.0
    %6291 = vmatpush2.msra.mxu0 0.0
    %6292 = vmatprep.subr.mxu0 0.0
    %6293 = vmatpush2.msra.mxu0 0.0
    %6294 = vmatprep.subr.mxu0 0.0
    %6295 = vmatpush2.msra.mxu0 0.0
    %6296 = vmatprep.subr.mxu0 0.0
    %6297 = vmatpush2.msra.mxu0 0.0
    %6298 = vmatprep.subr.mxu0 0.0
    %6299 = vmatpush2.msra.mxu0 0.0
    %6300 = vmatprep.subr.mxu0 0.0
    %6301 = vmatpush2.msra.mxu0 0.0
    %6302 = vmatprep.subr.mxu0 0.0
    %6303 = vmatpush2.msra.mxu0 0.0
    %6304 = vmatprep.subr.mxu0 0.0
    %6305 = vmatpush2.msra.mxu0 0.0
    %6306 = vmatprep.mubr.f32.mxu0 0.0
    %6307 = vmatmul.mubr.f32.gmra.mxu0 %v6240
    %v6308 = vpop.f32.mrf.mxu0
    %v6309 = vadd.f32 %v723, %v6308
    %v6310 = vpop.f32.mrf.mxu0
    %6311 = vdwg.mxu0
    %v6312 = vxor.u32 %v6309, 2147483648
    %v6313 = vmul.f32 %v6312, 1.442695
    %v6314 = vpow.pop %v6313
    %v6315 = vadd.f32 %v6314, 1.0
    %v6316 = vrcp.pop %v6315
    %v6317 = vmul.f32 1.0, %v6316
    %v6319 = vsel %vm813, %v6164, 0
    %6321 = vmatprep.subr.mxu0 0.0
    %6322 = vmatpush1.msra.mxu0 0.0
    %6323 = vmatprep.subr.mxu0 0.0
    %6324 = vmatpush1.msra.mxu0 0.0
    %6325 = vmatprep.subr.mxu0 0.0
    %6326 = vmatpush1.msra.mxu0 0.0
    %6327 = vmatprep.subr.mxu0 0.0
    %6328 = vmatpush1.msra.mxu0 0.0
    %6329 = vmatprep.subr.mxu0 0.0
    %6330 = vmatpush1.msra.mxu0 %v86
    %6331 = vmatprep.subr.mxu0 0.0
    %6332 = vmatpush1.msra.mxu0 %v85
    %6333 = vmatprep.subr.mxu0 0.0
    %6334 = vmatpush1.msra.mxu0 %v84
    %6335 = vmatprep.subr.mxu0 0.0
    %6336 = vmatpush1.msra.mxu0 %v83
    %6337 = vmatprep.subr.mxu0 0.0
    %6338 = vmatpush1.msra.mxu0 %v82
    %6339 = vmatprep.subr.mxu0 0.0
    %6340 = vmatpush1.msra.mxu0 %v81
    %6341 = vmatprep.subr.mxu0 0.0
    %6342 = vmatpush1.msra.mxu0 %v80
    %6343 = vmatprep.subr.mxu0 0.0
    %6344 = vmatpush1.msra.mxu0 %v79
    %6345 = vmatprep.subr.mxu0 0.0
    %6346 = vmatpush1.msra.mxu0 %v78
    %6347 = vmatprep.subr.mxu0 0.0
    %6348 = vmatpush1.msra.mxu0 %v77
    %6349 = vmatprep.subr.mxu0 0.0
    %6350 = vmatpush1.msra.mxu0 %v76
    %6351 = vmatprep.subr.mxu0 0.0
    %6352 = vmatpush1.msra.mxu0 %v75
    %6353 = vmatprep.subr.mxu0 0.0
    %6354 = vmatpush2.msra.mxu0 0.0
    %6355 = vmatprep.subr.mxu0 0.0
    %6356 = vmatpush2.msra.mxu0 0.0
    %6357 = vmatprep.subr.mxu0 0.0
    %6358 = vmatpush2.msra.mxu0 0.0
    %6359 = vmatprep.subr.mxu0 0.0
    %6360 = vmatpush2.msra.mxu0 0.0
    %6361 = vmatprep.subr.mxu0 0.0
    %6362 = vmatpush2.msra.mxu0 0.0
    %6363 = vmatprep.subr.mxu0 0.0
    %6364 = vmatpush2.msra.mxu0 0.0
    %6365 = vmatprep.subr.mxu0 0.0
    %6366 = vmatpush2.msra.mxu0 0.0
    %6367 = vmatprep.subr.mxu0 0.0
    %6368 = vmatpush2.msra.mxu0 0.0
    %6369 = vmatprep.subr.mxu0 0.0
    %6370 = vmatpush2.msra.mxu0 0.0
    %6371 = vmatprep.subr.mxu0 0.0
    %6372 = vmatpush2.msra.mxu0 0.0
    %6373 = vmatprep.subr.mxu0 0.0
    %6374 = vmatpush2.msra.mxu0 0.0
    %6375 = vmatprep.subr.mxu0 0.0
    %6376 = vmatpush2.msra.mxu0 0.0
    %6377 = vmatprep.subr.mxu0 0.0
    %6378 = vmatpush2.msra.mxu0 0.0
    %6379 = vmatprep.subr.mxu0 0.0
    %6380 = vmatpush2.msra.mxu0 0.0
    %6381 = vmatprep.subr.mxu0 0.0
    %6382 = vmatpush2.msra.mxu0 0.0
    %6383 = vmatprep.subr.mxu0 0.0
    %6384 = vmatpush2.msra.mxu0 0.0
    %6385 = vmatprep.mubr.f32.mxu0 0.0
    %6386 = vmatmul.mubr.f32.gmra.mxu0 %v6319
    %v6387 = vpop.f32.mrf.mxu0
    %v6388 = vadd.f32 %v811, %v6387
    %v6389 = vpop.f32.mrf.mxu0
    %6390 = vdwg.mxu0
    %v6391 = vmul.f32 %v6317, %v6388
    %v6392 = vadd.f32 %v6391, %v6022
    %v6394 = vcombine.high %v6392, %v6392
    %v6396 = vunpack.c.l.s4 1966171168
    %v6397 = vunpack.c.0.s8 %v6396
    %v6398 = vlaneseq
    %v6399 = vshrl.u32 %v6398, 7
    %v6400 = vsub.s32 %v6397, %v6399
    %v6401 = vrot.slane %v6392, %v6400
    %v6403 = vunpack.c.l.s4 1966171168
    %v6404 = vunpack.c.0.s8 %v6403
    %v6405 = vlaneseq
    %v6406 = vshrl.u32 %v6405, 7
    %v6407 = vsub.s32 %v6404, %v6406
    %v6408 = vrot.slane %v6394, %v6407
    %v6409 = vcombine.high %v6401, %v6401
    %v6410 = vcombine.high %v6408, %v6408
    %v6412 = vunpack.c.l.s4 1966171168
    %v6413 = vunpack.c.0.s8 %v6412
    %v6414 = vlaneseq
    %v6415 = vshrl.u32 %v6414, 7
    %v6416 = vsub.s32 %v6413, %v6415
    %v6417 = vrot.slane %v6401, %v6416
    %v6419 = vunpack.c.l.s4 1966171168
    %v6420 = vunpack.c.0.s8 %v6419
    %v6421 = vlaneseq
    %v6422 = vshrl.u32 %v6421, 7
    %v6423 = vsub.s32 %v6420, %v6422
    %v6424 = vrot.slane %v6408, %v6423
    %v6426 = vunpack.c.l.s4 1966171168
    %v6427 = vunpack.c.0.s8 %v6426
    %v6428 = vlaneseq
    %v6429 = vshrl.u32 %v6428, 7
    %v6430 = vsub.s32 %v6427, %v6429
    %v6431 = vrot.slane %v6409, %v6430
    %v6433 = vunpack.c.l.s4 1966171168
    %v6434 = vunpack.c.0.s8 %v6433
    %v6435 = vlaneseq
    %v6436 = vshrl.u32 %v6435, 7
    %v6437 = vsub.s32 %v6434, %v6436
    %v6438 = vrot.slane %v6410, %v6437
    %v6439 = vcombine.high %v6417, %v6417
    %v6440 = vcombine.high %v6424, %v6424
    %v6441 = vcombine.high %v6431, %v6431
    %v6442 = vcombine.high %v6438, %v6438
    %6451 = vst.msk [vmem:[#allocation6 + $0x6] sm:$0x1] %vm947, %v6417
    %6452 = vst.msk [vmem:[#allocation6 + $0xe] sm:$0x1] %vm947, %v6431
    %6453 = vst.msk [vmem:[#allocation6 + $0x16] sm:$0x1] %vm947, %v6439
    %6454 = vst.msk [vmem:[#allocation6 + $0x1e] sm:$0x1] %vm947, %v6441
    %6455 = vst.msk [vmem:[#allocation6 + $0x26] sm:$0x1] %vm947, %v6424
    %6456 = vst.msk [vmem:[#allocation6 + $0x2e] sm:$0x1] %vm947, %v6438
    %6457 = vst.msk [vmem:[#allocation6 + $0x36] sm:$0x1] %vm947, %v6440
    %6458 = vst.msk [vmem:[#allocation6 + $0x3e] sm:$0x1] %vm947, %v6442
    %v6459 = vcombine.high %v5899, %v5899
    %v6461 = vunpack.c.l.s4 1966171168
    %v6462 = vunpack.c.0.s8 %v6461
    %v6463 = vlaneseq
    %v6464 = vshrl.u32 %v6463, 7
    %v6465 = vsub.s32 %v6462, %v6464
    %v6466 = vrot.slane %v5899, %v6465
    %v6468 = vunpack.c.l.s4 1966171168
    %v6469 = vunpack.c.0.s8 %v6468
    %v6470 = vlaneseq
    %v6471 = vshrl.u32 %v6470, 7
    %v6472 = vsub.s32 %v6469, %v6471
    %v6473 = vrot.slane %v6459, %v6472
    %v6474 = vcombine.high %v6466, %v6466
    %v6475 = vcombine.high %v6473, %v6473
    %v6477 = vunpack.c.l.s4 1966171168
    %v6478 = vunpack.c.0.s8 %v6477
    %v6479 = vlaneseq
    %v6480 = vshrl.u32 %v6479, 7
    %v6481 = vsub.s32 %v6478, %v6480
    %v6482 = vrot.slane %v6466, %v6481
    %v6484 = vunpack.c.l.s4 1966171168
    %v6485 = vunpack.c.0.s8 %v6484
    %v6486 = vlaneseq
    %v6487 = vshrl.u32 %v6486, 7
    %v6488 = vsub.s32 %v6485, %v6487
    %v6489 = vrot.slane %v6473, %v6488
    %v6491 = vunpack.c.l.s4 1966171168
    %v6492 = vunpack.c.0.s8 %v6491
    %v6493 = vlaneseq
    %v6494 = vshrl.u32 %v6493, 7
    %v6495 = vsub.s32 %v6492, %v6494
    %v6496 = vrot.slane %v6474, %v6495
    %v6498 = vunpack.c.l.s4 1966171168
    %v6499 = vunpack.c.0.s8 %v6498
    %v6500 = vlaneseq
    %v6501 = vshrl.u32 %v6500, 7
    %v6502 = vsub.s32 %v6499, %v6501
    %v6503 = vrot.slane %v6475, %v6502
    %v6504 = vcombine.high %v6482, %v6482
    %v6505 = vcombine.high %v6489, %v6489
    %v6506 = vcombine.high %v6496, %v6496
    %v6507 = vcombine.high %v6503, %v6503
    %v6508 = vlaneseq
    %v6509 = vshrl.u32 %v6508, 7
    %v6510 = vsub.s32 0, %v6509
    %v6511 = vrot.slane %v6482, %v6510
    %v6512 = vlaneseq
    %v6513 = vshrl.u32 %v6512, 7
    %v6514 = vsub.s32 0, %v6513
    %v6515 = vrot.slane %v6496, %v6514
    %v6516 = vlaneseq
    %v6517 = vshrl.u32 %v6516, 7
    %v6518 = vsub.s32 0, %v6517
    %v6519 = vrot.slane %v6504, %v6518
    %v6520 = vlaneseq
    %v6521 = vshrl.u32 %v6520, 7
    %v6522 = vsub.s32 0, %v6521
    %v6523 = vrot.slane %v6506, %v6522
    %v6524 = vlaneseq
    %v6525 = vshrl.u32 %v6524, 7
    %v6526 = vsub.s32 0, %v6525
    %v6527 = vrot.slane %v6489, %v6526
    %v6528 = vlaneseq
    %v6529 = vshrl.u32 %v6528, 7
    %v6530 = vsub.s32 0, %v6529
    %v6531 = vrot.slane %v6503, %v6530
    %v6532 = vlaneseq
    %v6533 = vshrl.u32 %v6532, 7
    %v6534 = vsub.s32 0, %v6533
    %v6535 = vrot.slane %v6505, %v6534
    %v6536 = vlaneseq
    %v6537 = vshrl.u32 %v6536, 7
    %v6538 = vsub.s32 0, %v6537
    %v6539 = vrot.slane %v6507, %v6538
    %6540 = vrot.lane.b32.xlu0 %v6511, 104
    %v6541 = vpop.permute.xlu0 %6540
    %6542 = vrot.lane.b32.xlu0 %v6515, 104
    %v6543 = vpop.permute.xlu0 %6542
    %6544 = vrot.lane.b32.xlu0 %v6519, 104
    %v6545 = vpop.permute.xlu0 %6544
    %6546 = vrot.lane.b32.xlu0 %v6523, 104
    %v6547 = vpop.permute.xlu0 %6546
    %6548 = vrot.lane.b32.xlu0 %v6527, 104
    %v6549 = vpop.permute.xlu0 %6548
    %6550 = vrot.lane.b32.xlu0 %v6531, 104
    %v6551 = vpop.permute.xlu0 %6550
    %6552 = vrot.lane.b32.xlu0 %v6535, 104
    %v6553 = vpop.permute.xlu0 %6552
    %6554 = vrot.lane.b32.xlu0 %v6539, 104
    %v6555 = vpop.permute.xlu0 %6554
    %6564 = vst.msk [vmem:[%s14 + $0x6] sm:$0x1] %vm1061, %v6541
    %6565 = vst.msk [vmem:[%s14 + $0xe] sm:$0x1] %vm1061, %v6543
    %6566 = vst.msk [vmem:[%s14 + $0x16] sm:$0x1] %vm1061, %v6545
    %6567 = vst.msk [vmem:[%s14 + $0x1e] sm:$0x1] %vm1061, %v6547
    %6568 = vst.msk [vmem:[%s14 + $0x26] sm:$0x1] %vm1061, %v6549
    %6569 = vst.msk [vmem:[%s14 + $0x2e] sm:$0x1] %vm1061, %v6551
    %6570 = vst.msk [vmem:[%s14 + $0x36] sm:$0x1] %vm1061, %v6553
    %6571 = vst.msk [vmem:[%s14 + $0x3e] sm:$0x1] %vm1061, %v6555
    %v6572 = vld [vmem:[%s0 + $0x7] sm:$0x1]
    %v6573 = vld [vmem:[%s0 + $0xf] sm:$0x1]
    %v6574 = vld [vmem:[%s0 + $0x17] sm:$0x1]
    %v6575 = vld [vmem:[%s0 + $0x1f] sm:$0x1]
    %v6576 = vld [vmem:[%s0 + $0x27] sm:$0x1]
    %v6577 = vld [vmem:[%s0 + $0x2f] sm:$0x1]
    %v6578 = vld [vmem:[%s0 + $0x37] sm:$0x1]
    %v6579 = vld [vmem:[%s0 + $0x3f] sm:$0x1]
    %v6580 = vld [vmem:[%s1 + $0x7] sm:$0x1]
    %v6581 = vld [vmem:[%s1 + $0xf] sm:$0x1]
    %v6582 = vld [vmem:[%s1 + $0x17] sm:$0x1]
    %v6583 = vld [vmem:[%s1 + $0x1f] sm:$0x1]
    %v6584 = vld [vmem:[%s1 + $0x27] sm:$0x1]
    %v6585 = vld [vmem:[%s1 + $0x2f] sm:$0x1]
    %v6586 = vld [vmem:[%s1 + $0x37] sm:$0x1]
    %v6587 = vld [vmem:[%s1 + $0x3f] sm:$0x1]
    %v6588 = vld [vmem:[#allocation3] sm:$0xff]
    %v6589 = vld [vmem:[#allocation2] sm:$0xff]
    %v6598 = vrot.slane %v6573, 7
    %v6599 = vsel %vm116, %v6598, %v6572
    %v6600 = vrot.slane %v6574, 6
    %v6601 = vsel %vm119, %v6600, %v6599
    %v6602 = vrot.slane %v6575, 5
    %v6603 = vsel %vm122, %v6602, %v6601
    %v6604 = vrot.slane %v6576, 4
    %v6605 = vsel %vm125, %v6604, %v6603
    %v6606 = vrot.slane %v6577, 3
    %v6607 = vsel %vm128, %v6606, %v6605
    %v6608 = vrot.slane %v6578, 2
    %v6609 = vsel %vm131, %v6608, %v6607
    %v6610 = vrot.slane %v6579, 1
    %v6611 = vsel %vm134, %v6610, %v6609
    %6614 = vrot.lane.b32.xlu0 %v6588, 16
    %v6615 = vpop.permute.xlu0 %6614
    %v6625 = vrot.slane %v6581, 7
    %v6626 = vsel %vm116, %v6625, %v6580
    %v6627 = vrot.slane %v6582, 6
    %v6628 = vsel %vm119, %v6627, %v6626
    %v6629 = vrot.slane %v6583, 5
    %v6630 = vsel %vm122, %v6629, %v6628
    %v6631 = vrot.slane %v6584, 4
    %v6632 = vsel %vm125, %v6631, %v6630
    %v6633 = vrot.slane %v6585, 3
    %v6634 = vsel %vm128, %v6633, %v6632
    %v6635 = vrot.slane %v6586, 2
    %v6636 = vsel %vm131, %v6635, %v6634
    %v6637 = vrot.slane %v6587, 1
    %v6638 = vsel %vm134, %v6637, %v6636
    %6639 = vrot.lane.b32.xlu0 %v6638, 40
    %v6640 = vpop.permute.xlu0 %6639
    %v6642 = vsel %vm166, %v6611, %v6615
    %v6643 = vsel %vm168, %v6642, %v6640
    %v6645 = vsel %vm176, %v6643, 0
    %6647 = vmatprep.subr.mxu0 0.0
    %6648 = vmatpush1.msra.mxu0 0.0
    %6649 = vmatprep.subr.mxu0 0.0
    %6650 = vmatpush1.msra.mxu0 0.0
    %6651 = vmatprep.subr.mxu0 0.0
    %6652 = vmatpush1.msra.mxu0 0.0
    %6653 = vmatprep.subr.mxu0 0.0
    %6654 = vmatpush1.msra.mxu0 0.0
    %6655 = vmatprep.subr.mxu0 0.0
    %6656 = vmatpush1.msra.mxu0 0.0
    %6657 = vmatprep.subr.mxu0 0.0
    %6658 = vmatpush1.msra.mxu0 0.0
    %6659 = vmatprep.subr.mxu0 0.0
    %6660 = vmatpush1.msra.mxu0 0.0
    %6661 = vmatprep.subr.mxu0 0.0
    %6662 = vmatpush1.msra.mxu0 0.0
    %6663 = vmatprep.subr.mxu0 0.0
    %6664 = vmatpush1.msra.mxu0 0.0
    %6665 = vmatprep.subr.mxu0 0.0
    %6666 = vmatpush1.msra.mxu0 0.0
    %6667 = vmatprep.subr.mxu0 0.0
    %6668 = vmatpush1.msra.mxu0 %v182
    %6669 = vmatprep.subr.mxu0 0.0
    %6670 = vmatpush1.msra.mxu0 %v64
    %6671 = vmatprep.subr.mxu0 0.0
    %6672 = vmatpush1.msra.mxu0 %v63
    %6673 = vmatprep.subr.mxu0 0.0
    %6674 = vmatpush1.msra.mxu0 %v62
    %6675 = vmatprep.subr.mxu0 0.0
    %6676 = vmatpush1.msra.mxu0 %v61
    %6677 = vmatprep.subr.mxu0 0.0
    %6678 = vmatpush1.msra.mxu0 %v60
    %6679 = vmatprep.subr.mxu0 0.0
    %6680 = vmatpush2.msra.mxu0 0.0
    %6681 = vmatprep.subr.mxu0 0.0
    %6682 = vmatpush2.msra.mxu0 0.0
    %6683 = vmatprep.subr.mxu0 0.0
    %6684 = vmatpush2.msra.mxu0 0.0
    %6685 = vmatprep.subr.mxu0 0.0
    %6686 = vmatpush2.msra.mxu0 0.0
    %6687 = vmatprep.subr.mxu0 0.0
    %6688 = vmatpush2.msra.mxu0 0.0
    %6689 = vmatprep.subr.mxu0 0.0
    %6690 = vmatpush2.msra.mxu0 0.0
    %6691 = vmatprep.subr.mxu0 0.0
    %6692 = vmatpush2.msra.mxu0 0.0
    %6693 = vmatprep.subr.mxu0 0.0
    %6694 = vmatpush2.msra.mxu0 0.0
    %6695 = vmatprep.subr.mxu0 0.0
    %6696 = vmatpush2.msra.mxu0 0.0
    %6697 = vmatprep.subr.mxu0 0.0
    %6698 = vmatpush2.msra.mxu0 0.0
    %6699 = vmatprep.subr.mxu0 0.0
    %6700 = vmatpush2.msra.mxu0 0.0
    %6701 = vmatprep.subr.mxu0 0.0
    %6702 = vmatpush2.msra.mxu0 0.0
    %6703 = vmatprep.subr.mxu0 0.0
    %6704 = vmatpush2.msra.mxu0 0.0
    %6705 = vmatprep.subr.mxu0 0.0
    %6706 = vmatpush2.msra.mxu0 0.0
    %6707 = vmatprep.subr.mxu0 0.0
    %6708 = vmatpush2.msra.mxu0 0.0
    %6709 = vmatprep.subr.mxu0 0.0
    %6710 = vmatpush2.msra.mxu0 0.0
    %6711 = vmatprep.mubr.f32.mxu0 0.0
    %6712 = vmatmul.mubr.f32.gmra.mxu0 %v6645
    %v6713 = vpop.f32.mrf.mxu0
    %v6714 = vadd.f32 %v174, %v6713
    %v6715 = vpop.f32.mrf.mxu0
    %6716 = vdwg.mxu0
    %v6717 = vsel %vm254, %v6714, -inf
    %6718 = vmax.xlane.f32.xlu0 %v6717
    %v6719 = vpop.xlane.xlu0 %6718
    %v6720 = vsub.f32 %v6714, %v6719
    %v6721 = vmul.f32 %v6720, 1.442695
    %v6722 = vpow.pop %v6721
    %v6723 = vsel %vm254, %v6722, 0.0
    %6724 = vadd.xlane.f32.xlu0 %v6723
    %v6725 = vpop.xlane.xlu0 %6724
    %v6726 = vrcp.pop %v6725
    %v6727 = vmul.f32 %v6722, %v6726
    %v6728 = vsel %vm266, %v6714, -inf
    %6729 = vmax.xlane.f32.xlu0 %v6728
    %v6730 = vpop.xlane.xlu0 %6729
    %v6731 = vsub.f32 %v6714, %v6730
    %v6732 = vmul.f32 %v6731, 1.442695
    %v6733 = vpow.pop %v6732
    %6735 = vrot.lane.b32.xlu0 %v6733, 125
    %v6736 = vpop.permute.xlu0 %6735
    %v6738 = vsel %vm254, %v6736, 0.0
    %6739 = vadd.xlane.f32.xlu0 %v6738
    %v6740 = vpop.xlane.xlu0 %6739
    %v6741 = vrcp.pop %v6740
    %v6742 = vmul.f32 %v6733, %v6741
    %v6744 = vsel %vm254, %v6727, 0
    %6746 = vmatprep.subr.mxu0 0.0
    %6747 = vmatpush1.msra.mxu0 0.0
    %6748 = vmatprep.subr.mxu0 0.0
    %6749 = vmatpush1.msra.mxu0 0.0
    %6750 = vmatprep.subr.mxu0 0.0
    %6751 = vmatpush1.msra.mxu0 0.0
    %6752 = vmatprep.subr.mxu0 0.0
    %6753 = vmatpush1.msra.mxu0 0.0
    %6754 = vmatprep.subr.mxu0 0.0
    %6755 = vmatpush1.msra.mxu0 0.0
    %6756 = vmatprep.subr.mxu0 0.0
    %6757 = vmatpush1.msra.mxu0 0.0
    %6758 = vmatprep.subr.mxu0 0.0
    %6759 = vmatpush1.msra.mxu0 0.0
    %6760 = vmatprep.subr.mxu0 0.0
    %6761 = vmatpush1.msra.mxu0 0.0
    %6762 = vmatprep.subr.mxu0 0.0
    %6763 = vmatpush1.msra.mxu0 0.0
    %6764 = vmatprep.subr.mxu0 0.0
    %6765 = vmatpush1.msra.mxu0 0.0
    %6766 = vmatprep.subr.mxu0 0.0
    %6767 = vmatpush1.msra.mxu0 0.0
    %6768 = vmatprep.subr.mxu0 0.0
    %6769 = vmatpush1.msra.mxu0 0.0
    %6770 = vmatprep.subr.mxu0 0.0
    %6771 = vmatpush1.msra.mxu0 0.0
    %6772 = vmatprep.subr.mxu0 0.0
    %6773 = vmatpush1.msra.mxu0 0.0
    %6774 = vmatprep.subr.mxu0 0.0
    %6775 = vmatpush1.msra.mxu0 0.0
    %6776 = vmatprep.subr.mxu0 0.0
    %6777 = vmatpush1.msra.mxu0 %v287
    %6778 = vmatprep.subr.mxu0 0.0
    %6779 = vmatpush2.msra.mxu0 0.0
    %6780 = vmatprep.subr.mxu0 0.0
    %6781 = vmatpush2.msra.mxu0 0.0
    %6782 = vmatprep.subr.mxu0 0.0
    %6783 = vmatpush2.msra.mxu0 0.0
    %6784 = vmatprep.subr.mxu0 0.0
    %6785 = vmatpush2.msra.mxu0 0.0
    %6786 = vmatprep.subr.mxu0 0.0
    %6787 = vmatpush2.msra.mxu0 0.0
    %6788 = vmatprep.subr.mxu0 0.0
    %6789 = vmatpush2.msra.mxu0 0.0
    %6790 = vmatprep.subr.mxu0 0.0
    %6791 = vmatpush2.msra.mxu0 0.0
    %6792 = vmatprep.subr.mxu0 0.0
    %6793 = vmatpush2.msra.mxu0 0.0
    %6794 = vmatprep.subr.mxu0 0.0
    %6795 = vmatpush2.msra.mxu0 0.0
    %6796 = vmatprep.subr.mxu0 0.0
    %6797 = vmatpush2.msra.mxu0 0.0
    %6798 = vmatprep.subr.mxu0 0.0
    %6799 = vmatpush2.msra.mxu0 0.0
    %6800 = vmatprep.subr.mxu0 0.0
    %6801 = vmatpush2.msra.mxu0 0.0
    %6802 = vmatprep.subr.mxu0 0.0
    %6803 = vmatpush2.msra.mxu0 0.0
    %6804 = vmatprep.subr.mxu0 0.0
    %6805 = vmatpush2.msra.mxu0 0.0
    %6806 = vmatprep.subr.mxu0 0.0
    %6807 = vmatpush2.msra.mxu0 0.0
    %6808 = vmatprep.subr.mxu0 0.0
    %6809 = vmatpush2.msra.mxu0 0.0
    %6810 = vmatprep.mubr.f32.mxu0 0.0
    %6811 = vmatmul.mubr.f32.gmra.mxu0 %v6744
    %v6812 = vpop.f32.mrf.mxu0
    %v6813 = vadd.f32 0.0, %v6812
    %v6814 = vpop.f32.mrf.mxu0
    %6815 = vdwg.mxu0
    %v6816 = vsub.f32 1.0, %v6813
    %6818 = vrot.lane.b32.xlu0 %v6742, 125
    %v6819 = vpop.permute.xlu0 %6818
    %v6820 = vsel %vm254, %v6819, 0
    %6822 = vmatprep.subr.mxu0 0.0
    %6823 = vmatpush1.msra.mxu0 0.0
    %6824 = vmatprep.subr.mxu0 0.0
    %6825 = vmatpush1.msra.mxu0 0.0
    %6826 = vmatprep.subr.mxu0 0.0
    %6827 = vmatpush1.msra.mxu0 0.0
    %6828 = vmatprep.subr.mxu0 0.0
    %6829 = vmatpush1.msra.mxu0 0.0
    %6830 = vmatprep.subr.mxu0 0.0
    %6831 = vmatpush1.msra.mxu0 0.0
    %6832 = vmatprep.subr.mxu0 0.0
    %6833 = vmatpush1.msra.mxu0 0.0
    %6834 = vmatprep.subr.mxu0 0.0
    %6835 = vmatpush1.msra.mxu0 0.0
    %6836 = vmatprep.subr.mxu0 0.0
    %6837 = vmatpush1.msra.mxu0 0.0
    %6838 = vmatprep.subr.mxu0 0.0
    %6839 = vmatpush1.msra.mxu0 0.0
    %6840 = vmatprep.subr.mxu0 0.0
    %6841 = vmatpush1.msra.mxu0 0.0
    %6842 = vmatprep.subr.mxu0 0.0
    %6843 = vmatpush1.msra.mxu0 0.0
    %6844 = vmatprep.subr.mxu0 0.0
    %6845 = vmatpush1.msra.mxu0 0.0
    %6846 = vmatprep.subr.mxu0 0.0
    %6847 = vmatpush1.msra.mxu0 0.0
    %6848 = vmatprep.subr.mxu0 0.0
    %6849 = vmatpush1.msra.mxu0 0.0
    %6850 = vmatprep.subr.mxu0 0.0
    %6851 = vmatpush1.msra.mxu0 0.0
    %6852 = vmatprep.subr.mxu0 0.0
    %6853 = vmatpush1.msra.mxu0 %v366
    %6854 = vmatprep.subr.mxu0 0.0
    %6855 = vmatpush2.msra.mxu0 0.0
    %6856 = vmatprep.subr.mxu0 0.0
    %6857 = vmatpush2.msra.mxu0 0.0
    %6858 = vmatprep.subr.mxu0 0.0
    %6859 = vmatpush2.msra.mxu0 0.0
    %6860 = vmatprep.subr.mxu0 0.0
    %6861 = vmatpush2.msra.mxu0 0.0
    %6862 = vmatprep.subr.mxu0 0.0
    %6863 = vmatpush2.msra.mxu0 0.0
    %6864 = vmatprep.subr.mxu0 0.0
    %6865 = vmatpush2.msra.mxu0 0.0
    %6866 = vmatprep.subr.mxu0 0.0
    %6867 = vmatpush2.msra.mxu0 0.0
    %6868 = vmatprep.subr.mxu0 0.0
    %6869 = vmatpush2.msra.mxu0 0.0
    %6870 = vmatprep.subr.mxu0 0.0
    %6871 = vmatpush2.msra.mxu0 0.0
    %6872 = vmatprep.subr.mxu0 0.0
    %6873 = vmatpush2.msra.mxu0 0.0
    %6874 = vmatprep.subr.mxu0 0.0
    %6875 = vmatpush2.msra.mxu0 0.0
    %6876 = vmatprep.subr.mxu0 0.0
    %6877 = vmatpush2.msra.mxu0 0.0
    %6878 = vmatprep.subr.mxu0 0.0
    %6879 = vmatpush2.msra.mxu0 0.0
    %6880 = vmatprep.subr.mxu0 0.0
    %6881 = vmatpush2.msra.mxu0 0.0
    %6882 = vmatprep.subr.mxu0 0.0
    %6883 = vmatpush2.msra.mxu0 0.0
    %6884 = vmatprep.subr.mxu0 0.0
    %6885 = vmatpush2.msra.mxu0 0.0
    %6886 = vmatprep.mubr.f32.mxu0 0.0
    %6887 = vmatmul.mubr.f32.gmra.mxu0 %v6820
    %v6888 = vpop.f32.mrf.mxu0
    %v6889 = vadd.f32 0.0, %v6888
    %v6890 = vpop.f32.mrf.mxu0
    %6891 = vdwg.mxu0
    %v6892 = vsub.f32 1.0, %v6889
    %v6893 = vxor.u32 %v6714, 2147483648
    %v6894 = vmul.f32 %v6893, 1.442695
    %v6895 = vpow.pop %v6894
    %v6896 = vadd.f32 %v6895, 1.0
    %v6897 = vrcp.pop %v6896
    %v6898 = vmul.f32 1.0, %v6897
    %v6899 = vtanh.pop %v6714
    %v6900 = vmul.f32 %v6813, %v6892
    %6902 = vrot.lane.b32.xlu0 %v6589, 6
    %v6903 = vpop.permute.xlu0 %6902
    %v6905 = vmul.f32 %v6898, %v6903
    %6907 = vrot.lane.b32.xlu0 %v6899, 80
    %v6908 = vpop.permute.xlu0 %6907
    %v6910 = vmul.f32 %v6898, %v6908
    %6912 = vrot.lane.b32.xlu0 %v6910, 104
    %v6913 = vpop.permute.xlu0 %6912
    %v6915 = vadd.f32 %v6905, %v6913
    %6917 = vrot.lane.b32.xlu0 %v6915, 122
    %v6918 = vpop.permute.xlu0 %6917
    %v6920 = vmul.f32 %v6900, %v6918
    %v6921 = vsub.f32 %v6813, %v6900
    %v6922 = vmul.f32 %v6921, %v6589
    %v6923 = vadd.f32 %v6920, %v6922
    %v6924 = vsub.f32 %v6892, %v6900
    %6925 = vrot.lane.b32.xlu0 %v6899, 50
    %v6926 = vpop.permute.xlu0 %6925
    %v6928 = vmul.f32 %v6924, %v6926
    %v6929 = vadd.f32 %v6923, %v6928
    %v6930 = vtanh.pop %v6929
    %6932 = vrot.lane.b32.xlu0 %v6930, 54
    %v6933 = vpop.permute.xlu0 %6932
    %v6935 = vmul.f32 %v6898, %v6933
    %6936 = vst.msk [vmem:[#allocation2] sm:$0xff] %vm482, %v6929
    %6938 = vrot.lane.b32.xlu0 %v6935, 74
    %v6939 = vpop.permute.xlu0 %6938
    %6941 = vst.msk [vmem:[#allocation3] sm:$0xff] %vm482, %v6939
    %6942 = vst.msk [vmem:[%s605] sm:$0xff] %vm482, %v6939
    %v6943 = vld [vmem:[#allocation5] sm:$0xff]
    %6945 = vrot.lane.b32.xlu0 %v6943, 127
    %v6946 = vpop.permute.xlu0 %6945
    %6949 = vrot.lane.b32.xlu0 %v6816, 107
    %v6950 = vpop.permute.xlu0 %6949
    %v6952 = vsel %vm254, %v6946, %v6950
    %6953 = vst.msk [vmem:[#allocation5] sm:$0xff] %vm500, %v6952
    %v6955 = vsel %vm500, %v6952, 0
    %6957 = vmatprep.subr.mxu0 0.0
    %6958 = vmatpush1.msra.mxu0 0.0
    %6959 = vmatprep.subr.mxu0 0.0
    %6960 = vmatpush1.msra.mxu0 0.0
    %6961 = vmatprep.subr.mxu0 0.0
    %6962 = vmatpush1.msra.mxu0 0.0
    %6963 = vmatprep.subr.mxu0 0.0
    %6964 = vmatpush1.msra.mxu0 0.0
    %6965 = vmatprep.subr.mxu0 0.0
    %6966 = vmatpush1.msra.mxu0 0.0
    %6967 = vmatprep.subr.mxu0 0.0
    %6968 = vmatpush1.msra.mxu0 0.0
    %6969 = vmatprep.subr.mxu0 0.0
    %6970 = vmatpush1.msra.mxu0 0.0
    %6971 = vmatprep.subr.mxu0 0.0
    %6972 = vmatpush1.msra.mxu0 0.0
    %6973 = vmatprep.subr.mxu0 0.0
    %6974 = vmatpush1.msra.mxu0 0.0
    %6975 = vmatprep.subr.mxu0 0.0
    %6976 = vmatpush1.msra.mxu0 0.0
    %6977 = vmatprep.subr.mxu0 0.0
    %6978 = vmatpush1.msra.mxu0 0.0
    %6979 = vmatprep.subr.mxu0 0.0
    %6980 = vmatpush1.msra.mxu0 0.0
    %6981 = vmatprep.subr.mxu0 0.0
    %6982 = vmatpush1.msra.mxu0 0.0
    %6983 = vmatprep.subr.mxu0 0.0
    %6984 = vmatpush1.msra.mxu0 0.0
    %6985 = vmatprep.subr.mxu0 0.0
    %6986 = vmatpush1.msra.mxu0 0.0
    %6987 = vmatprep.subr.mxu0 0.0
    %6988 = vmatpush1.msra.mxu0 %v507
    %6989 = vmatprep.subr.mxu0 0.0
    %6990 = vmatpush2.msra.mxu0 0.0
    %6991 = vmatprep.subr.mxu0 0.0
    %6992 = vmatpush2.msra.mxu0 0.0
    %6993 = vmatprep.subr.mxu0 0.0
    %6994 = vmatpush2.msra.mxu0 0.0
    %6995 = vmatprep.subr.mxu0 0.0
    %6996 = vmatpush2.msra.mxu0 0.0
    %6997 = vmatprep.subr.mxu0 0.0
    %6998 = vmatpush2.msra.mxu0 0.0
    %6999 = vmatprep.subr.mxu0 0.0
    %7000 = vmatpush2.msra.mxu0 0.0
    %7001 = vmatprep.subr.mxu0 0.0
    %7002 = vmatpush2.msra.mxu0 0.0
    %7003 = vmatprep.subr.mxu0 0.0
    %7004 = vmatpush2.msra.mxu0 0.0
    %7005 = vmatprep.subr.mxu0 0.0
    %7006 = vmatpush2.msra.mxu0 0.0
    %7007 = vmatprep.subr.mxu0 0.0
    %7008 = vmatpush2.msra.mxu0 0.0
    %7009 = vmatprep.subr.mxu0 0.0
    %7010 = vmatpush2.msra.mxu0 0.0
    %7011 = vmatprep.subr.mxu0 0.0
    %7012 = vmatpush2.msra.mxu0 0.0
    %7013 = vmatprep.subr.mxu0 0.0
    %7014 = vmatpush2.msra.mxu0 0.0
    %7015 = vmatprep.subr.mxu0 0.0
    %7016 = vmatpush2.msra.mxu0 0.0
    %7017 = vmatprep.subr.mxu0 0.0
    %7018 = vmatpush2.msra.mxu0 0.0
    %7019 = vmatprep.subr.mxu0 0.0
    %7020 = vmatpush2.msra.mxu0 0.0
    %7021 = vmatprep.mubr.f32.mxu0 0.0
    %7022 = vmatmul.mubr.f32.gmra.mxu0 %v6955
    %v7023 = vpop.f32.mrf.mxu0
    %v7024 = vadd.f32 0.0, %v7023
    %v7025 = vpop.f32.mrf.mxu0
    %7026 = vdwg.mxu0
    %v7027 = vsel %vm500, %v7024, -inf
    %7028 = vmax.xlane.f32.xlu0 %v7027
    %v7029 = vpop.xlane.xlu0 %7028
    %v7030 = vsub.f32 %v7024, %v7029
    %v7031 = vmul.f32 %v7030, 1.442695
    %v7032 = vpow.pop %v7031
    %v7033 = vsel %vm500, %v7032, 0.0
    %7034 = vadd.xlane.f32.xlu0 %v7033
    %v7035 = vpop.xlane.xlu0 %7034
    %v7036 = vrcp.pop %v7035
    %v7037 = vmul.f32 %v7032, %v7036
    %v7038 = vld [vmem:[#allocation4] sm:$0xff]
    %7040 = vset.pattern.permute.xlu0 0
    %7041 = vperm.xlu0 %7040, %v7037
    %v7042 = vpop.permute.xlu0 %7041
    %v7044 = vmul.f32 %v7038, %v7042
    %v7045 = vld [vmem:[%s590] sm:$0xff]
    %7046 = vset.pattern.permute.xlu0 1
    %7047 = vperm.xlu0 %7046, %v7037
    %v7048 = vpop.permute.xlu0 %7047
    %v7050 = vmul.f32 %v7045, %v7048
    %v7051 = vld [vmem:[%s598] sm:$0xff]
    %7052 = vset.pattern.permute.xlu0 2
    %7053 = vperm.xlu0 %7052, %v7037
    %v7054 = vpop.permute.xlu0 %7053
    %v7056 = vmul.f32 %v7051, %v7054
    %v7057 = vld [vmem:[%s605] sm:$0xff]
    %7058 = vset.pattern.permute.xlu0 3
    %7059 = vperm.xlu0 %7058, %v7037
    %v7060 = vpop.permute.xlu0 %7059
    %v7062 = vmul.f32 %v7057, %v7060
    %v7063 = vadd.f32 %v7044, %v7050
    %v7064 = vadd.f32 %v7063, %v7056
    %v7065 = vadd.f32 %v7064, %v7062
    %v7066 = vmul.f32 %v7065, 0.25
    %7068 = vrot.lane.b32.xlu0 %v7050, 24
    %v7069 = vpop.permute.xlu0 %7068
    %7072 = vrot.lane.b32.xlu0 %v7056, 48
    %v7073 = vpop.permute.xlu0 %7072
    %7076 = vrot.lane.b32.xlu0 %v7062, 72
    %v7077 = vpop.permute.xlu0 %7076
    %v7079 = vsel %vm482, %v7044, %v7069
    %v7080 = vsel %vm635, %v7079, %v7073
    %v7081 = vsel %vm637, %v7080, %v7077
    %v7083 = vsel %vm482, %v7066, 0
    %7085 = vmatprep.subr.mxu0 0.0
    %7086 = vmatpush1.msra.mxu0 0.0
    %7087 = vmatprep.subr.mxu0 0.0
    %7088 = vmatpush1.msra.mxu0 0.0
    %7089 = vmatprep.subr.mxu0 0.0
    %7090 = vmatpush1.msra.mxu0 0.0
    %7091 = vmatprep.subr.mxu0 0.0
    %7092 = vmatpush1.msra.mxu0 0.0
    %7093 = vmatprep.subr.mxu0 0.0
    %7094 = vmatpush1.msra.mxu0 0.0
    %7095 = vmatprep.subr.mxu0 0.0
    %7096 = vmatpush1.msra.mxu0 0.0
    %7097 = vmatprep.subr.mxu0 0.0
    %7098 = vmatpush1.msra.mxu0 0.0
    %7099 = vmatprep.subr.mxu0 0.0
    %7100 = vmatpush1.msra.mxu0 0.0
    %7101 = vmatprep.subr.mxu0 0.0
    %7102 = vmatpush1.msra.mxu0 0.0
    %7103 = vmatprep.subr.mxu0 0.0
    %7104 = vmatpush1.msra.mxu0 0.0
    %7105 = vmatprep.subr.mxu0 0.0
    %7106 = vmatpush1.msra.mxu0 0.0
    %7107 = vmatprep.subr.mxu0 0.0
    %7108 = vmatpush1.msra.mxu0 0.0
    %7109 = vmatprep.subr.mxu0 0.0
    %7110 = vmatpush1.msra.mxu0 0.0
    %7111 = vmatprep.subr.mxu0 0.0
    %7112 = vmatpush1.msra.mxu0 %v71
    %7113 = vmatprep.subr.mxu0 0.0
    %7114 = vmatpush1.msra.mxu0 %v70
    %7115 = vmatprep.subr.mxu0 0.0
    %7116 = vmatpush1.msra.mxu0 %v69
    %7117 = vmatprep.subr.mxu0 0.0
    %7118 = vmatpush2.msra.mxu0 0.0
    %7119 = vmatprep.subr.mxu0 0.0
    %7120 = vmatpush2.msra.mxu0 0.0
    %7121 = vmatprep.subr.mxu0 0.0
    %7122 = vmatpush2.msra.mxu0 0.0
    %7123 = vmatprep.subr.mxu0 0.0
    %7124 = vmatpush2.msra.mxu0 0.0
    %7125 = vmatprep.subr.mxu0 0.0
    %7126 = vmatpush2.msra.mxu0 0.0
    %7127 = vmatprep.subr.mxu0 0.0
    %7128 = vmatpush2.msra.mxu0 0.0
    %7129 = vmatprep.subr.mxu0 0.0
    %7130 = vmatpush2.msra.mxu0 0.0
    %7131 = vmatprep.subr.mxu0 0.0
    %7132 = vmatpush2.msra.mxu0 0.0
    %7133 = vmatprep.subr.mxu0 0.0
    %7134 = vmatpush2.msra.mxu0 0.0
    %7135 = vmatprep.subr.mxu0 0.0
    %7136 = vmatpush2.msra.mxu0 0.0
    %7137 = vmatprep.subr.mxu0 0.0
    %7138 = vmatpush2.msra.mxu0 0.0
    %7139 = vmatprep.subr.mxu0 0.0
    %7140 = vmatpush2.msra.mxu0 0.0
    %7141 = vmatprep.subr.mxu0 0.0
    %7142 = vmatpush2.msra.mxu0 0.0
    %7143 = vmatprep.subr.mxu0 0.0
    %7144 = vmatpush2.msra.mxu0 0.0
    %7145 = vmatprep.subr.mxu0 0.0
    %7146 = vmatpush2.msra.mxu0 0.0
    %7147 = vmatprep.subr.mxu0 0.0
    %7148 = vmatpush2.msra.mxu0 0.0
    %7149 = vmatprep.mubr.f32.mxu0 0.0
    %7150 = vmatmul.mubr.f32.gmra.mxu0 %v7083
    %v7151 = vpop.f32.mrf.mxu0
    %v7152 = vadd.f32 %v643, %v7151
    %v7153 = vpop.f32.mrf.mxu0
    %7154 = vdwg.mxu0
    %v7155 = vmax.f32 %v7152, 0.0
    %v7157 = vsel %vm500, %v7155, 0
    %7159 = vmatprep.subr.mxu0 0.0
    %7160 = vmatpush1.msra.mxu0 0.0
    %7161 = vmatprep.subr.mxu0 0.0
    %7162 = vmatpush1.msra.mxu0 0.0
    %7163 = vmatprep.subr.mxu0 0.0
    %7164 = vmatpush1.msra.mxu0 0.0
    %7165 = vmatprep.subr.mxu0 0.0
    %7166 = vmatpush1.msra.mxu0 0.0
    %7167 = vmatprep.subr.mxu0 0.0
    %7168 = vmatpush1.msra.mxu0 0.0
    %7169 = vmatprep.subr.mxu0 0.0
    %7170 = vmatpush1.msra.mxu0 0.0
    %7171 = vmatprep.subr.mxu0 0.0
    %7172 = vmatpush1.msra.mxu0 0.0
    %7173 = vmatprep.subr.mxu0 0.0
    %7174 = vmatpush1.msra.mxu0 0.0
    %7175 = vmatprep.subr.mxu0 0.0
    %7176 = vmatpush1.msra.mxu0 0.0
    %7177 = vmatprep.subr.mxu0 0.0
    %7178 = vmatpush1.msra.mxu0 0.0
    %7179 = vmatprep.subr.mxu0 0.0
    %7180 = vmatpush1.msra.mxu0 0.0
    %7181 = vmatprep.subr.mxu0 0.0
    %7182 = vmatpush1.msra.mxu0 0.0
    %7183 = vmatprep.subr.mxu0 0.0
    %7184 = vmatpush1.msra.mxu0 0.0
    %7185 = vmatprep.subr.mxu0 0.0
    %7186 = vmatpush1.msra.mxu0 0.0
    %7187 = vmatprep.subr.mxu0 0.0
    %7188 = vmatpush1.msra.mxu0 0.0
    %7189 = vmatprep.subr.mxu0 0.0
    %7190 = vmatpush1.msra.mxu0 %v729
    %7191 = vmatprep.subr.mxu0 0.0
    %7192 = vmatpush2.msra.mxu0 0.0
    %7193 = vmatprep.subr.mxu0 0.0
    %7194 = vmatpush2.msra.mxu0 0.0
    %7195 = vmatprep.subr.mxu0 0.0
    %7196 = vmatpush2.msra.mxu0 0.0
    %7197 = vmatprep.subr.mxu0 0.0
    %7198 = vmatpush2.msra.mxu0 0.0
    %7199 = vmatprep.subr.mxu0 0.0
    %7200 = vmatpush2.msra.mxu0 0.0
    %7201 = vmatprep.subr.mxu0 0.0
    %7202 = vmatpush2.msra.mxu0 0.0
    %7203 = vmatprep.subr.mxu0 0.0
    %7204 = vmatpush2.msra.mxu0 0.0
    %7205 = vmatprep.subr.mxu0 0.0
    %7206 = vmatpush2.msra.mxu0 0.0
    %7207 = vmatprep.subr.mxu0 0.0
    %7208 = vmatpush2.msra.mxu0 0.0
    %7209 = vmatprep.subr.mxu0 0.0
    %7210 = vmatpush2.msra.mxu0 0.0
    %7211 = vmatprep.subr.mxu0 0.0
    %7212 = vmatpush2.msra.mxu0 0.0
    %7213 = vmatprep.subr.mxu0 0.0
    %7214 = vmatpush2.msra.mxu0 0.0
    %7215 = vmatprep.subr.mxu0 0.0
    %7216 = vmatpush2.msra.mxu0 0.0
    %7217 = vmatprep.subr.mxu0 0.0
    %7218 = vmatpush2.msra.mxu0 0.0
    %7219 = vmatprep.subr.mxu0 0.0
    %7220 = vmatpush2.msra.mxu0 0.0
    %7221 = vmatprep.subr.mxu0 0.0
    %7222 = vmatpush2.msra.mxu0 0.0
    %7223 = vmatprep.mubr.f32.mxu0 0.0
    %7224 = vmatmul.mubr.f32.gmra.mxu0 %v7157
    %v7225 = vpop.f32.mrf.mxu0
    %v7226 = vadd.f32 %v723, %v7225
    %v7227 = vpop.f32.mrf.mxu0
    %7228 = vdwg.mxu0
    %v7229 = vxor.u32 %v7226, 2147483648
    %v7230 = vmul.f32 %v7229, 1.442695
    %v7231 = vpow.pop %v7230
    %v7232 = vadd.f32 %v7231, 1.0
    %v7233 = vrcp.pop %v7232
    %v7234 = vmul.f32 1.0, %v7233
    %v7236 = vsel %vm813, %v7081, 0
    %7238 = vmatprep.subr.mxu0 0.0
    %7239 = vmatpush1.msra.mxu0 0.0
    %7240 = vmatprep.subr.mxu0 0.0
    %7241 = vmatpush1.msra.mxu0 0.0
    %7242 = vmatprep.subr.mxu0 0.0
    %7243 = vmatpush1.msra.mxu0 0.0
    %7244 = vmatprep.subr.mxu0 0.0
    %7245 = vmatpush1.msra.mxu0 0.0
    %7246 = vmatprep.subr.mxu0 0.0
    %7247 = vmatpush1.msra.mxu0 %v86
    %7248 = vmatprep.subr.mxu0 0.0
    %7249 = vmatpush1.msra.mxu0 %v85
    %7250 = vmatprep.subr.mxu0 0.0
    %7251 = vmatpush1.msra.mxu0 %v84
    %7252 = vmatprep.subr.mxu0 0.0
    %7253 = vmatpush1.msra.mxu0 %v83
    %7254 = vmatprep.subr.mxu0 0.0
    %7255 = vmatpush1.msra.mxu0 %v82
    %7256 = vmatprep.subr.mxu0 0.0
    %7257 = vmatpush1.msra.mxu0 %v81
    %7258 = vmatprep.subr.mxu0 0.0
    %7259 = vmatpush1.msra.mxu0 %v80
    %7260 = vmatprep.subr.mxu0 0.0
    %7261 = vmatpush1.msra.mxu0 %v79
    %7262 = vmatprep.subr.mxu0 0.0
    %7263 = vmatpush1.msra.mxu0 %v78
    %7264 = vmatprep.subr.mxu0 0.0
    %7265 = vmatpush1.msra.mxu0 %v77
    %7266 = vmatprep.subr.mxu0 0.0
    %7267 = vmatpush1.msra.mxu0 %v76
    %7268 = vmatprep.subr.mxu0 0.0
    %7269 = vmatpush1.msra.mxu0 %v75
    %7270 = vmatprep.subr.mxu0 0.0
    %7271 = vmatpush2.msra.mxu0 0.0
    %7272 = vmatprep.subr.mxu0 0.0
    %7273 = vmatpush2.msra.mxu0 0.0
    %7274 = vmatprep.subr.mxu0 0.0
    %7275 = vmatpush2.msra.mxu0 0.0
    %7276 = vmatprep.subr.mxu0 0.0
    %7277 = vmatpush2.msra.mxu0 0.0
    %7278 = vmatprep.subr.mxu0 0.0
    %7279 = vmatpush2.msra.mxu0 0.0
    %7280 = vmatprep.subr.mxu0 0.0
    %7281 = vmatpush2.msra.mxu0 0.0
    %7282 = vmatprep.subr.mxu0 0.0
    %7283 = vmatpush2.msra.mxu0 0.0
    %7284 = vmatprep.subr.mxu0 0.0
    %7285 = vmatpush2.msra.mxu0 0.0
    %7286 = vmatprep.subr.mxu0 0.0
    %7287 = vmatpush2.msra.mxu0 0.0
    %7288 = vmatprep.subr.mxu0 0.0
    %7289 = vmatpush2.msra.mxu0 0.0
    %7290 = vmatprep.subr.mxu0 0.0
    %7291 = vmatpush2.msra.mxu0 0.0
    %7292 = vmatprep.subr.mxu0 0.0
    %7293 = vmatpush2.msra.mxu0 0.0
    %7294 = vmatprep.subr.mxu0 0.0
    %7295 = vmatpush2.msra.mxu0 0.0
    %7296 = vmatprep.subr.mxu0 0.0
    %7297 = vmatpush2.msra.mxu0 0.0
    %7298 = vmatprep.subr.mxu0 0.0
    %7299 = vmatpush2.msra.mxu0 0.0
    %7300 = vmatprep.subr.mxu0 0.0
    %7301 = vmatpush2.msra.mxu0 0.0
    %7302 = vmatprep.mubr.f32.mxu0 0.0
    %7303 = vmatmul.mubr.f32.gmra.mxu0 %v7236
    %v7304 = vpop.f32.mrf.mxu0
    %v7305 = vadd.f32 %v811, %v7304
    %v7306 = vpop.f32.mrf.mxu0
    %7307 = vdwg.mxu0
    %v7308 = vmul.f32 %v7234, %v7305
    %v7309 = vadd.f32 %v7308, %v6939
    %v7311 = vcombine.high %v7309, %v7309
    %v7313 = vunpack.c.l.s4 1966171168
    %v7314 = vunpack.c.0.s8 %v7313
    %v7315 = vlaneseq
    %v7316 = vshrl.u32 %v7315, 7
    %v7317 = vsub.s32 %v7314, %v7316
    %v7318 = vrot.slane %v7309, %v7317
    %v7320 = vunpack.c.l.s4 1966171168
    %v7321 = vunpack.c.0.s8 %v7320
    %v7322 = vlaneseq
    %v7323 = vshrl.u32 %v7322, 7
    %v7324 = vsub.s32 %v7321, %v7323
    %v7325 = vrot.slane %v7311, %v7324
    %v7326 = vcombine.high %v7318, %v7318
    %v7327 = vcombine.high %v7325, %v7325
    %v7329 = vunpack.c.l.s4 1966171168
    %v7330 = vunpack.c.0.s8 %v7329
    %v7331 = vlaneseq
    %v7332 = vshrl.u32 %v7331, 7
    %v7333 = vsub.s32 %v7330, %v7332
    %v7334 = vrot.slane %v7318, %v7333
    %v7336 = vunpack.c.l.s4 1966171168
    %v7337 = vunpack.c.0.s8 %v7336
    %v7338 = vlaneseq
    %v7339 = vshrl.u32 %v7338, 7
    %v7340 = vsub.s32 %v7337, %v7339
    %v7341 = vrot.slane %v7325, %v7340
    %v7343 = vunpack.c.l.s4 1966171168
    %v7344 = vunpack.c.0.s8 %v7343
    %v7345 = vlaneseq
    %v7346 = vshrl.u32 %v7345, 7
    %v7347 = vsub.s32 %v7344, %v7346
    %v7348 = vrot.slane %v7326, %v7347
    %v7350 = vunpack.c.l.s4 1966171168
    %v7351 = vunpack.c.0.s8 %v7350
    %v7352 = vlaneseq
    %v7353 = vshrl.u32 %v7352, 7
    %v7354 = vsub.s32 %v7351, %v7353
    %v7355 = vrot.slane %v7327, %v7354
    %v7356 = vcombine.high %v7334, %v7334
    %v7357 = vcombine.high %v7341, %v7341
    %v7358 = vcombine.high %v7348, %v7348
    %v7359 = vcombine.high %v7355, %v7355
    %7368 = vst.msk [vmem:[#allocation6 + $0x7] sm:$0x1] %vm947, %v7334
    %7369 = vst.msk [vmem:[#allocation6 + $0xf] sm:$0x1] %vm947, %v7348
    %7370 = vst.msk [vmem:[#allocation6 + $0x17] sm:$0x1] %vm947, %v7356
    %7371 = vst.msk [vmem:[#allocation6 + $0x1f] sm:$0x1] %vm947, %v7358
    %7372 = vst.msk [vmem:[#allocation6 + $0x27] sm:$0x1] %vm947, %v7341
    %7373 = vst.msk [vmem:[#allocation6 + $0x2f] sm:$0x1] %vm947, %v7355
    %7374 = vst.msk [vmem:[#allocation6 + $0x37] sm:$0x1] %vm947, %v7357
    %7375 = vst.msk [vmem:[#allocation6 + $0x3f] sm:$0x1] %vm947, %v7359
    %v7376 = vcombine.high %v6816, %v6816
    %v7378 = vunpack.c.l.s4 1966171168
    %v7379 = vunpack.c.0.s8 %v7378
    %v7380 = vlaneseq
    %v7381 = vshrl.u32 %v7380, 7
    %v7382 = vsub.s32 %v7379, %v7381
    %v7383 = vrot.slane %v6816, %v7382
    %v7385 = vunpack.c.l.s4 1966171168
    %v7386 = vunpack.c.0.s8 %v7385
    %v7387 = vlaneseq
    %v7388 = vshrl.u32 %v7387, 7
    %v7389 = vsub.s32 %v7386, %v7388
    %v7390 = vrot.slane %v7376, %v7389
    %v7391 = vcombine.high %v7383, %v7383
    %v7392 = vcombine.high %v7390, %v7390
    %v7394 = vunpack.c.l.s4 1966171168
    %v7395 = vunpack.c.0.s8 %v7394
    %v7396 = vlaneseq
    %v7397 = vshrl.u32 %v7396, 7
    %v7398 = vsub.s32 %v7395, %v7397
    %v7399 = vrot.slane %v7383, %v7398
    %v7401 = vunpack.c.l.s4 1966171168
    %v7402 = vunpack.c.0.s8 %v7401
    %v7403 = vlaneseq
    %v7404 = vshrl.u32 %v7403, 7
    %v7405 = vsub.s32 %v7402, %v7404
    %v7406 = vrot.slane %v7390, %v7405
    %v7408 = vunpack.c.l.s4 1966171168
    %v7409 = vunpack.c.0.s8 %v7408
    %v7410 = vlaneseq
    %v7411 = vshrl.u32 %v7410, 7
    %v7412 = vsub.s32 %v7409, %v7411
    %v7413 = vrot.slane %v7391, %v7412
    %v7415 = vunpack.c.l.s4 1966171168
    %v7416 = vunpack.c.0.s8 %v7415
    %v7417 = vlaneseq
    %v7418 = vshrl.u32 %v7417, 7
    %v7419 = vsub.s32 %v7416, %v7418
    %v7420 = vrot.slane %v7392, %v7419
    %v7421 = vcombine.high %v7399, %v7399
    %v7422 = vcombine.high %v7406, %v7406
    %v7423 = vcombine.high %v7413, %v7413
    %v7424 = vcombine.high %v7420, %v7420
    %v7425 = vlaneseq
    %v7426 = vshrl.u32 %v7425, 7
    %v7427 = vsub.s32 0, %v7426
    %v7428 = vrot.slane %v7399, %v7427
    %v7429 = vlaneseq
    %v7430 = vshrl.u32 %v7429, 7
    %v7431 = vsub.s32 0, %v7430
    %v7432 = vrot.slane %v7413, %v7431
    %v7433 = vlaneseq
    %v7434 = vshrl.u32 %v7433, 7
    %v7435 = vsub.s32 0, %v7434
    %v7436 = vrot.slane %v7421, %v7435
    %v7437 = vlaneseq
    %v7438 = vshrl.u32 %v7437, 7
    %v7439 = vsub.s32 0, %v7438
    %v7440 = vrot.slane %v7423, %v7439
    %v7441 = vlaneseq
    %v7442 = vshrl.u32 %v7441, 7
    %v7443 = vsub.s32 0, %v7442
    %v7444 = vrot.slane %v7406, %v7443
    %v7445 = vlaneseq
    %v7446 = vshrl.u32 %v7445, 7
    %v7447 = vsub.s32 0, %v7446
    %v7448 = vrot.slane %v7420, %v7447
    %v7449 = vlaneseq
    %v7450 = vshrl.u32 %v7449, 7
    %v7451 = vsub.s32 0, %v7450
    %v7452 = vrot.slane %v7422, %v7451
    %v7453 = vlaneseq
    %v7454 = vshrl.u32 %v7453, 7
    %v7455 = vsub.s32 0, %v7454
    %v7456 = vrot.slane %v7424, %v7455
    %7457 = vrot.lane.b32.xlu0 %v7428, 104
    %v7458 = vpop.permute.xlu0 %7457
    %7459 = vrot.lane.b32.xlu0 %v7432, 104
    %v7460 = vpop.permute.xlu0 %7459
    %7461 = vrot.lane.b32.xlu0 %v7436, 104
    %v7462 = vpop.permute.xlu0 %7461
    %7463 = vrot.lane.b32.xlu0 %v7440, 104
    %v7464 = vpop.permute.xlu0 %7463
    %7465 = vrot.lane.b32.xlu0 %v7444, 104
    %v7466 = vpop.permute.xlu0 %7465
    %7467 = vrot.lane.b32.xlu0 %v7448, 104
    %v7468 = vpop.permute.xlu0 %7467
    %7469 = vrot.lane.b32.xlu0 %v7452, 104
    %v7470 = vpop.permute.xlu0 %7469
    %7471 = vrot.lane.b32.xlu0 %v7456, 104
    %v7472 = vpop.permute.xlu0 %7471
    %7481 = vst.msk [vmem:[%s14 + $0x7] sm:$0x1] %vm1061, %v7458
    %7482 = vst.msk [vmem:[%s14 + $0xf] sm:$0x1] %vm1061, %v7460
    %7483 = vst.msk [vmem:[%s14 + $0x17] sm:$0x1] %vm1061, %v7462
    %7484 = vst.msk [vmem:[%s14 + $0x1f] sm:$0x1] %vm1061, %v7464
    %7485 = vst.msk [vmem:[%s14 + $0x27] sm:$0x1] %vm1061, %v7466
    %7486 = vst.msk [vmem:[%s14 + $0x2f] sm:$0x1] %vm1061, %v7468
    %7487 = vst.msk [vmem:[%s14 + $0x37] sm:$0x1] %vm1061, %v7470
    %7488 = vst.msk [vmem:[%s14 + $0x3f] sm:$0x1] %vm1061, %v7472
    // Predicated region
    $region58: #{tpu_custom_call.1} parent=1 // pred_check
      _
    $region59: #{tpu_custom_call.1} parent=1 // pred_check_branch
      %7490 = sbr.rel (0) target = $region61
    $region60: #{tpu_custom_call.1} parent=1 // pred_region
      %s7492 = ssub.s32 1024, 1024
      %7493 = vsyncadd [#allocation7], %s7492
      %s7494 = sshll.u32 [#allocation6], 4
      %s7495 = int_to_ptr.vmem [resolvable:$true] %s7494
      %7500 = dma.vmem_to_hbm [thread:$0]  %s7495, 1024, %s13, [#allocation7], 128, 128, 8
    $region61: #{tpu_custom_call.1} parent=1 // pred_fallthru
      _
    // Predicated region
    $region62: #{tpu_custom_call.1} parent=1 // pred_check
      _
    $region63: #{tpu_custom_call.1} parent=1 // pred_check_branch
      %7502 = sbr.rel (0) target = $region65
    $region64: #{tpu_custom_call.1} parent=1 // pred_region
      _
    $region65: #{tpu_custom_call.1} parent=1 // pred_fallthru
      _
    // Predicated region
    $region66: #{tpu_custom_call.1} parent=1 // pred_check
      _
    $region67: #{tpu_custom_call.1} parent=1 // pred_check_branch
      %7504 = sbr.rel (0) target = $region69
    $region68: #{tpu_custom_call.1} parent=1 // pred_region
      %7505 = dma.done [#allocation7], 1024
    $region69: #{tpu_custom_call.1} parent=1 // pred_fallthru
      _
    // Predicated region
    $region70: #{tpu_custom_call.1} parent=1 // pred_check
      _
    $region71: #{tpu_custom_call.1} parent=1 // pred_check_branch
      %7507 = sbr.rel (0) target = $region73
    $region72: #{tpu_custom_call.1} parent=1 // pred_region
      _
    $region73: #{tpu_custom_call.1} parent=1 // pred_fallthru
      _
    %7508 = vsyncpa [#allocation7], 1

</llo_original>
